<compile_context>
chip_gen: v5e
topology: v5e:2x2
jax: 0.10.0
libtpu: 0.0.40
codegen_flags: <defaults>
</compile_context>

<pallas_src>
import functools
import math

import jax
import jax.numpy as jnp
from jax.experimental import pallas as pl
from jax.experimental.pallas import tpu as pltpu

NEG_INF_MASK = -1e18
_GELU_C = math.sqrt(2.0 / math.pi)


def _gelu(x):
    # tanh-form GELU, exactly as in the PyTorch module.
    return 0.5 * x * (1.0 + jnp.tanh(_GELU_C * (x + 0.044715 * x * x * x)))


def _layer_norm(x, gamma, beta, eps=1e-6):
    mean = jnp.mean(x, axis=-1, keepdims=True)
    cent = x - mean
    var = jnp.mean(cent * cent, axis=-1, keepdims=True)
    return cent * jax.lax.rsqrt(var + eps) * gamma + beta


@functools.lru_cache(maxsize=None)
def _vmem_limit_bytes():
    """Generation-aware scoped-VMEM cap (v5e/v6e: 128 MiB physical, v7x: 64 MiB)."""
    try:
        kind = jax.devices()[0].device_kind.lower()
    except Exception:  # pragma: no cover - non-TPU fallback
        kind = ""
    if "v7" in kind or "7x" in kind:
        return 56 * 1024 * 1024
    if "v5" in kind or "v6" in kind:
        return 100 * 1024 * 1024
    return 48 * 1024 * 1024


def _compiler_params(semantics):
    return pltpu.CompilerParams(dimension_semantics=semantics,
                                vmem_limit_bytes=_vmem_limit_bytes())


def _const_spec(block_shape, index_map):
    """BlockSpec for blocks whose index never changes: single-buffer them."""
    try:
        return pl.BlockSpec(block_shape, index_map, pipeline_mode=pl.Buffered(1))
    except TypeError:  # older BlockSpec without pipeline_mode support
        return pl.BlockSpec(block_shape, index_map)


# ---------------------------------------------------------------------------
# standalone embedding (only used when num_layers == 0)
# ---------------------------------------------------------------------------
def _embed_kernel(top_ref, mask_ref, pos_ref, out_ref):
    out_ref[0] = top_ref[0] * mask_ref[0] + pos_ref[0]


def _embed(top_vecs, mask3, pos, *, block_s):
    B, S, D = top_vecs.shape
    ts = min(block_s, S)
    assert S % ts == 0
    return pl.pallas_call(
        _embed_kernel,
        out_shape=jax.ShapeDtypeStruct((B, S, D), jnp.float32),
        grid_spec=pltpu.PrefetchScalarGridSpec(
            num_scalar_prefetch=0,
            grid=(B, S // ts),
            in_specs=[
                pl.BlockSpec((1, ts, D), lambda b, s: (b, s, 0)),
                pl.BlockSpec((1, ts, 1), lambda b, s: (b, s, 0)),
                pl.BlockSpec((1, ts, D), lambda b, s: (0, s, 0)),
            ],
            out_specs=pl.BlockSpec((1, ts, D), lambda b, s: (b, s, 0)),
        ),
        compiler_params=_compiler_params(("parallel", "parallel")),
    )(top_vecs, mask3, pos)


# ---------------------------------------------------------------------------
# pre-LayerNorm + packed Q/K/V projection (head-major output, no in-kernel transpose)
# grid: (batch, token-tiles, 3*head_count chunks); chunk axis is sequential
# ---------------------------------------------------------------------------
def _qkv_proj_kernel(x_ref, g_ref, b_ref, w_ref, bias_ref, qkv_ref, xn_sc, *,
                     compute_dtype):
    @pl.when(pl.program_id(2) == 0)
    def _():
        xn_sc[...] = _layer_norm(x_ref[0], g_ref[...], b_ref[...]).astype(compute_dtype)

    qkv_ref[0, 0] = (jnp.dot(xn_sc[...], w_ref[0],
                             preferred_element_type=jnp.float32)
                     + bias_ref[0]).astype(qkv_ref.dtype)


def _qkv_projection(x, gamma, beta, wqkv3, bqkv3, *, block_s, compute_dtype):
    B, S, D = x.shape
    n_chunks, _, dph = wqkv3.shape                      # n_chunks == 3 * head_count
    ts = min(block_s, S)
    assert S % ts == 0
    kernel = functools.partial(_qkv_proj_kernel, compute_dtype=compute_dtype)
    return pl.pallas_call(
        kernel,
        out_shape=jax.ShapeDtypeStruct((B, n_chunks, S, dph), compute_dtype),
        grid_spec=pltpu.PrefetchScalarGridSpec(
            num_scalar_prefetch=0,
            grid=(B, S // ts, n_chunks),
            in_specs=[
                pl.BlockSpec((1, ts, D), lambda b, s, c: (b, s, 0)),
                _const_spec((1, D), lambda b, s, c: (0, 0)),
                _const_spec((1, D), lambda b, s, c: (0, 0)),
                pl.BlockSpec((1, D, dph), lambda b, s, c: (c, 0, 0)),
                pl.BlockSpec((1, 1, dph), lambda b, s, c: (c, 0, 0)),
            ],
            out_specs=pl.BlockSpec((1, 1, ts, dph), lambda b, s, c: (b, c, s, 0)),
            scratch_shapes=[pltpu.VMEM((ts, D), compute_dtype)],
        ),
        compiler_params=_compiler_params(("parallel", "parallel", "arbitrary")),
    )(x, gamma, beta, wqkv3, bqkv3)


# ---------------------------------------------------------------------------
# layer 0: embedding (top*mask + pe) fused with the packed Q/K/V projection
# (layer 0 applies no pre-LayerNorm); also writes the embedded x for the residual
# ---------------------------------------------------------------------------
def _embed_qkv_kernel(top_ref, mask_ref, pos_ref, w_ref, bias_ref,
                      x_ref, qkv_ref, xn_sc, *, compute_dtype):
    @pl.when(pl.program_id(2) == 0)
    def _():
        x = top_ref[0] * mask_ref[0] + pos_ref[0]
        x_ref[0] = x
        xn_sc[...] = x.astype(compute_dtype)

    qkv_ref[0, 0] = (jnp.dot(xn_sc[...], w_ref[0],
                             preferred_element_type=jnp.float32)
                     + bias_ref[0]).astype(qkv_ref.dtype)


def _embed_qkv_projection(top_vecs, mask3, pos, wqkv3, bqkv3, *, block_s, compute_dtype):
    B, S, D = top_vecs.shape
    n_chunks, _, dph = wqkv3.shape
    ts = min(block_s, S)
    assert S % ts == 0
    kernel = functools.partial(_embed_qkv_kernel, compute_dtype=compute_dtype)
    return pl.pallas_call(
        kernel,
        out_shape=(jax.ShapeDtypeStruct((B, S, D), jnp.float32),
                   jax.ShapeDtypeStruct((B, n_chunks, S, dph), compute_dtype)),
        grid_spec=pltpu.PrefetchScalarGridSpec(
            num_scalar_prefetch=0,
            grid=(B, S // ts, n_chunks),
            in_specs=[
                pl.BlockSpec((1, ts, D), lambda b, s, c: (b, s, 0)),
                pl.BlockSpec((1, ts, 1), lambda b, s, c: (b, s, 0)),
                pl.BlockSpec((1, ts, D), lambda b, s, c: (0, s, 0)),
                pl.BlockSpec((1, D, dph), lambda b, s, c: (c, 0, 0)),
                pl.BlockSpec((1, 1, dph), lambda b, s, c: (c, 0, 0)),
            ],
            out_specs=(pl.BlockSpec((1, ts, D), lambda b, s, c: (b, s, 0)),
                       pl.BlockSpec((1, 1, ts, dph), lambda b, s, c: (b, c, s, 0))),
            scratch_shapes=[pltpu.VMEM((ts, D), compute_dtype)],
        ),
        compiler_params=_compiler_params(("parallel", "parallel", "arbitrary")),
    )(top_vecs, mask3, pos, wqkv3, bqkv3)


# ---------------------------------------------------------------------------
# flash attention (online softmax over all heads) + single full-D output
# projection + residual.  grid: (batch, q-tiles, kv-tiles); kv axis is a reduction.
# ---------------------------------------------------------------------------
def _flash_attn_kernel(q_ref, k_ref, v_ref, kb_ref, res_ref, wo_ref, bo_ref,
                       out_ref, m_sc, l_sc, acc_sc, *,
                       n_heads, dph, compute_dtype, approx_recip):
    ki = pl.program_id(2)

    @pl.when(ki == 0)
    def _init():
        m_sc[...] = jnp.full(m_sc.shape, -jnp.inf, jnp.float32)
        l_sc[...] = jnp.zeros(l_sc.shape, jnp.float32)
        acc_sc[...] = jnp.zeros(acc_sc.shape, jnp.float32)

    kb = kb_ref[0]                                     # (1, tk), lane-major key bias

    for h in range(n_heads):                           # static unroll; static column slices
        col = slice(h * dph, (h + 1) * dph)
        q = q_ref[0, h]                                # (tq, dph); 1/sqrt(dph) folded in W_q
        k = k_ref[0, h]                                # (tk, dph)
        v = v_ref[0, h]                                # (tk, dph)

        s = jax.lax.dot_general(q, k, (((1,), (1,)), ((), ())),
                                preferred_element_type=jnp.float32)   # (tq, tk)
        s = s + kb                                     # additive -1e18 on padded keys

        m_prev = m_sc[h]                               # (tq, 1)
        m_new = jnp.maximum(m_prev, jnp.max(s, axis=-1, keepdims=True))
        alpha = jnp.exp(m_prev - m_new)
        p = jnp.exp(s - m_new)                         # unnormalized probabilities, f32
        l_sc[h] = alpha * l_sc[h] + jnp.sum(p, axis=-1, keepdims=True)
        acc_sc[:, col] = alpha * acc_sc[:, col] + jnp.dot(
            p.astype(compute_dtype), v, preferred_element_type=jnp.float32)
        m_sc[h] = m_new

    # TODO(synk): attention dropout is identity (eval mode).

    @pl.when(ki == pl.num_programs(2) - 1)
    def _finalize():
        for h in range(n_heads):
            col = slice(h * dph, (h + 1) * dph)
            acc_sc[:, col] = acc_sc[:, col] * pl.reciprocal(l_sc[h], approx=approx_recip)
        # one full-D contraction for the output projection (no per-head K=dph dots)
        out = jnp.dot(acc_sc[...].astype(compute_dtype), wo_ref[...],
                      preferred_element_type=jnp.float32)
        out_ref[0] = (out + bo_ref[...] + res_ref[0]).astype(out_ref.dtype)


def _attention(qkv, x_resid, key_bias, wo, bo, *, n_heads, block_q, block_k,
               compute_dtype, approx_recip):
    B, S, D = x_resid.shape
    assert qkv.shape[1] == 3 * n_heads
    dph = qkv.shape[3]
    tq = min(block_q, S)
    tk = min(block_k, S)
    assert S % tq == 0 and S % tk == 0
    assert tk == S or tk % 128 == 0, "lane-major key bias needs tk == S or tk % 128 == 0"
    kernel = functools.partial(_flash_attn_kernel, n_heads=n_heads, dph=dph,
                               compute_dtype=compute_dtype, approx_recip=approx_recip)
    return pl.pallas_call(
        kernel,
        out_shape=jax.ShapeDtypeStruct((B, S, D), jnp.float32),
        grid_spec=pltpu.PrefetchScalarGridSpec(
            num_scalar_prefetch=0,
            grid=(B, S // tq, S // tk),
            in_specs=[
                pl.BlockSpec((1, n_heads, tq, dph), lambda b, qi, ki: (b, 0, qi, 0)),
                pl.BlockSpec((1, n_heads, tk, dph), lambda b, qi, ki: (b, 1, ki, 0)),
                pl.BlockSpec((1, n_heads, tk, dph), lambda b, qi, ki: (b, 2, ki, 0)),
                pl.BlockSpec((1, 1, tk), lambda b, qi, ki: (b, 0, ki)),
                pl.BlockSpec((1, tq, D), lambda b, qi, ki: (b, qi, 0)),
                _const_spec((D, D), lambda b, qi, ki: (0, 0)),
                _const_spec((1, D), lambda b, qi, ki: (0, 0)),
            ],
            out_specs=pl.BlockSpec((1, tq, D), lambda b, qi, ki: (b, qi, 0)),
            scratch_shapes=[
                pltpu.VMEM((n_heads, tq, 1), jnp.float32),   # running max (per head)
                pltpu.VMEM((n_heads, tq, 1), jnp.float32),   # running sum (per head)
                pltpu.VMEM((tq, D), jnp.float32),            # head-major context accumulator
            ]),
        compiler_params=_compiler_params(("parallel", "parallel", "arbitrary")),
    )(qkv, qkv, qkv, key_bias, x_resid, wo, bo)


# ---------------------------------------------------------------------------
# position-wise feed-forward: LayerNorm -> W1 -> tanh-GELU -> W2 -> +residual
# ---------------------------------------------------------------------------
def _ffn_kernel(x_ref, g_ref, b_ref, w1_ref, b1_ref, w2_ref, b2_ref, out_ref, *,
                compute_dtype):
    x = x_ref[0]                                               # (ts, D) f32
    xn = _layer_norm(x, g_ref[...], b_ref[...])
    hmid = jnp.dot(xn.astype(compute_dtype), w1_ref[...],
                   preferred_element_type=jnp.float32) + b1_ref[...]
    hmid = _gelu(hmid)                                         # f32 (tanh on EUP)
    y = jnp.dot(hmid.astype(compute_dtype), w2_ref[...],
                preferred_element_type=jnp.float32) + b2_ref[...]
    # TODO(synk): dropout_1 / dropout_2 are identity (eval mode).
    out_ref[0] = (y + x).astype(out_ref.dtype)


def _ffn(x, gamma, beta, w1, b1, w2, b2, *, block_s, compute_dtype):
    B, S, D = x.shape
    F = w1.shape[1]
    ts = min(block_s, S)
    assert S % ts == 0
    kernel = functools.partial(_ffn_kernel, compute_dtype=compute_dtype)
    return pl.pallas_call(
        kernel,
        out_shape=jax.ShapeDtypeStruct((B, S, D), jnp.float32),
        grid_spec=pltpu.PrefetchScalarGridSpec(
            num_scalar_prefetch=0,
            grid=(B, S // ts),
            in_specs=[
                pl.BlockSpec((1, ts, D), lambda b, s: (b, s, 0)),
                _const_spec((1, D), lambda b, s: (0, 0)),
                _const_spec((1, D), lambda b, s: (0, 0)),
                _const_spec((D, F), lambda b, s: (0, 0)),
                _const_spec((1, F), lambda b, s: (0, 0)),
                _const_spec((F, D), lambda b, s: (0, 0)),
                _const_spec((1, D), lambda b, s: (0, 0)),
            ],
            out_specs=pl.BlockSpec((1, ts, D), lambda b, s: (b, s, 0)),
        ),
        compiler_params=_compiler_params(("parallel", "parallel")),
    )(x, gamma, beta, w1, b1, w2, b2)


# ---------------------------------------------------------------------------
# final LayerNorm + w_o (D -> 1, as a VPU reduce) + sigmoid + mask
# ---------------------------------------------------------------------------
def _head_kernel(x_ref, g_ref, b_ref, w_ref, bias_ref, mask_ref, out_ref):
    xn = _layer_norm(x_ref[0], g_ref[...], b_ref[...])          # (ts, D) f32
    # VPU multiply + lane reduction instead of an N=1 MXU dot
    logit = jnp.sum(xn * w_ref[...], axis=-1, keepdims=True) + bias_ref[...]   # (ts, 1)
    score = 1.0 / (1.0 + jnp.exp(-logit))
    out_ref[0] = (score * mask_ref[0]).astype(out_ref.dtype)
    # TODO(synk): output kept (B, S, 1); a lane-dense (B, 1, S) layout would make the
    #             (tiny) final store unmasked.


def _head(x, gamma, beta, w_head, b_head, mask3, *, block_s):
    B, S, D = x.shape
    ts = min(block_s, S)
    assert S % ts == 0
    return pl.pallas_call(
        _head_kernel,
        out_shape=jax.ShapeDtypeStruct((B, S, 1), jnp.float32),
        grid_spec=pltpu.PrefetchScalarGridSpec(
            num_scalar_prefetch=0,
            grid=(B, S // ts),
            in_specs=[
                pl.BlockSpec((1, ts, D), lambda b, s: (b, s, 0)),
                _const_spec((1, D), lambda b, s: (0, 0)),
                _const_spec((1, D), lambda b, s: (0, 0)),
                _const_spec((1, D), lambda b, s: (0, 0)),
                _const_spec((1, 1), lambda b, s: (0, 0)),
                pl.BlockSpec((1, ts, 1), lambda b, s: (b, s, 0)),
            ],
            out_specs=pl.BlockSpec((1, ts, 1), lambda b, s: (b, s, 0)),
        ),
        compiler_params=_compiler_params(("parallel", "parallel")),
    )(x, gamma, beta, w_head, b_head, mask3)


# ---------------------------------------------------------------------------
# full forward
# ---------------------------------------------------------------------------
def ext_transformer_encoder_forward(params, top_vecs, mask, *, num_layers,
                                    head_count, block_s=512, block_q=256,
                                    block_k=512, compute_dtype=jnp.bfloat16,
                                    approx_recip=True):
    """Pallas forward of ExtTransformerEncoder (eval mode).

    top_vecs: [B, S, D] f32; mask: [B, S] (1 = real sentence, 0 = padding).
    Returns sentence scores [B, S] f32.
    """
    B, S, D = top_vecs.shape
    mask_f = mask.astype(jnp.float32)
    mask3 = mask_f[:, :, None]                                         # (B, S, 1)
    key_bias = jnp.where(mask_f > 0, 0.0, NEG_INF_MASK).astype(jnp.float32)[:, None, :]
    pos = params['pe'][:, :S]

    x = None
    if num_layers == 0:
        x = _embed(top_vecs, mask3, pos, block_s=block_s)
    for i in range(num_layers):
        lyr = params['layers'][i]
        if i == 0:
            # embedding fused with layer 0's packed Q/K/V projection
            x, qkv = _embed_qkv_projection(top_vecs, mask3, pos, lyr['wqkv'],
                                           lyr['bqkv'], block_s=block_s,
                                           compute_dtype=compute_dtype)
        else:
            qkv = _qkv_projection(x, lyr['ln_g'], lyr['ln_b'], lyr['wqkv'],
                                  lyr['bqkv'], block_s=block_s,
                                  compute_dtype=compute_dtype)
        x = _attention(qkv, x, key_bias, lyr['wo'], lyr['bo'], n_heads=head_count,
                       block_q=block_q, block_k=block_k,
                       compute_dtype=compute_dtype, approx_recip=approx_recip)
        x = _ffn(x, lyr['ffn_ln_g'], lyr['ffn_ln_b'], lyr['w1'], lyr['b1'],
                 lyr['w2'], lyr['b2'], block_s=block_s,
                 compute_dtype=compute_dtype)
    scores = _head(x, params['ln_g'], params['ln_b'], params['w_head'],
                   params['b_head'], mask3, block_s=block_s)
    return scores[..., 0]


# ---------------------------------------------------------------------------
# parameters
# ---------------------------------------------------------------------------
def _positional_encoding(max_len, dim):
    position = jnp.arange(max_len, dtype=jnp.float32)[:, None]
    div_term = jnp.exp(jnp.arange(0, dim, 2, dtype=jnp.float32)
                       * -(math.log(10000.0) / dim))
    ang = position * div_term
    pe = jnp.zeros((max_len, dim), jnp.float32)
    pe = pe.at[:, 0::2].set(jnp.sin(ang))
    pe = pe.at[:, 1::2].set(jnp.cos(ang))
    return pe[None]


def init_raw_params(key, *, d_model, d_ff, num_layers, max_len):
    """PyTorch-convention parameters: Linear weight [out, in], y = x @ W.T + b."""
    keys = iter(jax.random.split(key, num_layers * 8 + 4))

    def linear(k, out_dim, in_dim):
        kw, kb = jax.random.split(k)
        lim = 1.0 / math.sqrt(in_dim)
        w = jax.random.uniform(kw, (out_dim, in_dim), jnp.float32, -lim, lim)
        b = jax.random.uniform(kb, (out_dim,), jnp.float32, -lim, lim)
        return w, b

    def ln_params(k, dim):
        kg, kb = jax.random.split(k)
        return (1.0 + 0.1 * jax.random.normal(kg, (dim,), jnp.float32),
                0.1 * jax.random.normal(kb, (dim,), jnp.float32))

    layers = []
    for _ in range(num_layers):
        lyr = {}
        lyr['wq'], lyr['bq'] = linear(next(keys), d_model, d_model)
        lyr['wk'], lyr['bk'] = linear(next(keys), d_model, d_model)
        lyr['wv'], lyr['bv'] = linear(next(keys), d_model, d_model)
        lyr['wo'], lyr['bo'] = linear(next(keys), d_model, d_model)
        lyr['ln_g'], lyr['ln_b'] = ln_params(next(keys), d_model)
        lyr['ffn_ln_g'], lyr['ffn_ln_b'] = ln_params(next(keys), d_model)
        lyr['w1'], lyr['b1'] = linear(next(keys), d_ff, d_model)
        lyr['w2'], lyr['b2'] = linear(next(keys), d_model, d_ff)
        layers.append(lyr)

    final_g, final_b = ln_params(next(keys), d_model)
    w_head, b_head = linear(next(keys), 1, d_model)
    return {'layers': layers, 'final_ln_g': final_g, 'final_ln_b': final_b,
            'w_head': w_head, 'b_head': b_head,
            'pe': _positional_encoding(max_len, d_model)}


def prepare_params(raw, *, heads, compute_dtype):
    """Kernel-layout params: weights [in, out] in compute_dtype, Q/K/V packed head-major
    as (3H, D, dph), 1/sqrt(d_head) folded into W_q / b_q (one-time prep)."""
    d_model = raw['layers'][0]['wq'].shape[0]
    dph = d_model // heads
    scale = 1.0 / math.sqrt(dph)
    layers = []
    for lyr in raw['layers']:
        wqkv = jnp.concatenate([lyr['wq'].T * scale, lyr['wk'].T, lyr['wv'].T], axis=1)
        wqkv3 = wqkv.reshape(d_model, 3 * heads, dph).transpose(1, 0, 2)   # (3H, D, dph)
        bqkv = jnp.concatenate([lyr['bq'] * scale, lyr['bk'], lyr['bv']])
        bqkv3 = bqkv.reshape(3 * heads, 1, dph)                            # (3H, 1, dph)
        layers.append({
            'ln_g': lyr['ln_g'][None, :], 'ln_b': lyr['ln_b'][None, :],
            'wqkv': wqkv3.astype(compute_dtype), 'bqkv': bqkv3.astype(jnp.float32),
            'wo': lyr['wo'].T.astype(compute_dtype),
            'bo': lyr['bo'][None, :].astype(jnp.float32),
            'ffn_ln_g': lyr['ffn_ln_g'][None, :], 'ffn_ln_b': lyr['ffn_ln_b'][None, :],
            'w1': lyr['w1'].T.astype(compute_dtype),
            'b1': lyr['b1'][None, :].astype(jnp.float32),
            'w2': lyr['w2'].T.astype(compute_dtype),
            'b2': lyr['b2'][None, :].astype(jnp.float32),
        })
    return {'layers': layers,
            'ln_g': raw['final_ln_g'][None, :], 'ln_b': raw['final_ln_b'][None, :],
            'w_head': raw['w_head'].astype(jnp.float32),           # (1, D) row vector
            'b_head': raw['b_head'][None, :].astype(jnp.float32),  # (1, 1)
            'pe': raw['pe']}


# ---------------------------------------------------------------------------
# pure-JAX f32 reference mirroring the PyTorch forward (eval mode)
# ---------------------------------------------------------------------------
def reference_forward(raw, top_vecs, mask, *, heads, num_layers):
    B, S, D = top_vecs.shape
    dph = D // heads
    mask_f = mask.astype(jnp.float32)

    def lin(t, w, b):
        return t @ w.T + b

    x = top_vecs * mask_f[:, :, None] + raw['pe'][:, :S]
    neg = jnp.where(mask_f > 0, 0.0, NEG_INF_MASK)[:, None, None, :]
    for i in range(num_layers):
        lyr = raw['layers'][i]
        residual = x
        xn = _layer_norm(x, lyr['ln_g'], lyr['ln_b']) if i != 0 else x
        Q = lin(xn, lyr['wq'], lyr['bq'])
        K = lin(xn, lyr['wk'], lyr['bk'])
        V = lin(xn, lyr['wv'], lyr['bv'])

        def split(t):
            return t.reshape(B, S, heads, dph).transpose(0, 2, 1, 3)

        Qh, Kh, Vh = split(Q) / math.sqrt(dph), split(K), split(V)
        scores = jnp.einsum('bhqd,bhkd->bhqk', Qh, Kh) + neg
        attn = jax.nn.softmax(scores, axis=-1)
        ctx = jnp.einsum('bhqk,bhkd->bhqd', attn, Vh)
        ctx = ctx.transpose(0, 2, 1, 3).reshape(B, S, D)
        attn_out = lin(ctx, lyr['wo'], lyr['bo']) + residual
        inter = _gelu(lin(_layer_norm(attn_out, lyr['ffn_ln_g'], lyr['ffn_ln_b']),
                          lyr['w1'], lyr['b1']))
        x = lin(inter, lyr['w2'], lyr['b2']) + attn_out
    xn = _layer_norm(x, raw['final_ln_g'], raw['final_ln_b'])
    logits = xn @ raw['w_head'].T + raw['b_head']
    return jax.nn.sigmoid(logits)[..., 0] * mask_f


if __name__ == "__main__":
    # Lane-dense small shapes that still exercise multi-tile online softmax:
    # batch=2, seq=256, d_model=128, heads=4 (d_head=32), d_ff=256, 2 layers.
    B, S, D, HEADS, D_FF, LAYERS = 2, 256, 128, 4, 256, 2

    root = jax.random.PRNGKey(0)
    k_params, k_vecs = jax.random.split(root)
    raw = init_raw_params(k_params, d_model=D, d_ff=D_FF, num_layers=LAYERS, max_len=S)
    top_vecs = jax.random.normal(k_vecs, (B, S, D), jnp.float32)
    lengths = jnp.array([S, 200], dtype=jnp.int32)               # batch 1 has padding
    mask = (jnp.arange(S)[None, :] < lengths[:, None]).astype(jnp.float32)

    ref = reference_forward(raw, top_vecs, mask, heads=HEADS, num_layers=LAYERS)

    # f32 compute path with exact reciprocal (tight check) and the bf16 production path.
    for compute_dtype, approx, tol in ((jnp.float32, False, 2e-2),
                                       (jnp.bfloat16, True, 7e-2)):
        prep = prepare_params(raw, heads=HEADS, compute_dtype=compute_dtype)
        fwd = jax.jit(functools.partial(
            ext_transformer_encoder_forward, num_layers=LAYERS, head_count=HEADS,
            block_s=64, block_q=64, block_k=128, compute_dtype=compute_dtype,
            approx_recip=approx))
        out = jax.block_until_ready(fwd(prep, top_vecs, mask))
        assert out.shape == (B, S)
        max_err = float(jnp.max(jnp.abs(out - ref)))
        assert jnp.allclose(out, ref, atol=tol, rtol=tol), (
            f"mismatch ({compute_dtype.__name__}): max |err| = {max_err}")

    print("KERNEL_OK")
</pallas_src>

<mosaic_0001>
module attributes {stable_mosaic.version = 11 : i64} {
  func.func @_embed_qkv_kernel(%arg0: i32, %arg1: i32, %arg2: i32, %arg3: memref<1x64x128xf32, #tpu.memory_space<vmem>>, %arg4: memref<1x64x1xf32, #tpu.memory_space<vmem>>, %arg5: memref<1x64x128xf32, #tpu.memory_space<vmem>>, %arg6: memref<1x128x32xf32, #tpu.memory_space<vmem>>, %arg7: memref<1x1x32xf32, #tpu.memory_space<vmem>>, %arg8: memref<1x64x128xf32, #tpu.memory_space<vmem>>, %arg9: memref<1x1x64x32xf32, #tpu.memory_space<vmem>>, %arg10: memref<64x128xf32, #tpu.memory_space<vmem>>) attributes {dimension_semantics = [#tpu.dimension_semantics<parallel>, #tpu.dimension_semantics<parallel>, #tpu.dimension_semantics<arbitrary>], iteration_bounds = array<i64: 2, 4, 12>, scalar_prefetch = 0 : i64, scratch_operands = 1 : i64, tpu.core_type = #tpu.core_type<tc>, window_params = [{transform_indices = @transform_0, window_bounds = array<i64: 1, 64, 128>}, {transform_indices = @transform_1, window_bounds = array<i64: 1, 64, 1>}, {transform_indices = @transform_2, window_bounds = array<i64: 1, 64, 128>}, {transform_indices = @transform_3, window_bounds = array<i64: 1, 128, 32>}, {transform_indices = @transform_4, window_bounds = array<i64: 1, 1, 32>}, {transform_indices = @transform_5, window_bounds = array<i64: 1, 64, 128>}, {transform_indices = @transform_6, window_bounds = array<i64: 1, 1, 64, 32>}]} {
    %c0_i32 = arith.constant 0 : i32
    %0 = arith.cmpi eq, %arg2, %c0_i32 : i32
    %1 = arith.extui %0 : i1 to i32
    %c0_i32_0 = arith.constant 0 : i32
    %2 = arith.cmpi ne, %1, %c0_i32_0 : i32
    scf.if %2 {
      %c0_12 = arith.constant 0 : index
      %c0_13 = arith.constant 0 : index
      %c0_14 = arith.constant 0 : index
      %14 = vector.load %arg3[%c0_12, %c0_13, %c0_14] : memref<1x64x128xf32, #tpu.memory_space<vmem>>, vector<1x64x128xf32>
      %15 = vector.shape_cast %14 : vector<1x64x128xf32> to vector<64x128xf32>
      %c0_15 = arith.constant 0 : index
      %c0_16 = arith.constant 0 : index
      %c0_17 = arith.constant 0 : index
      %16 = vector.load %arg4[%c0_15, %c0_16, %c0_17] : memref<1x64x1xf32, #tpu.memory_space<vmem>>, vector<1x64x1xf32>
      %17 = vector.shape_cast %16 : vector<1x64x1xf32> to vector<64x1xf32>
      %18 = vector.broadcast %17 : vector<64x1xf32> to vector<64x128xf32>
      %19 = arith.mulf %15, %18 : vector<64x128xf32>
      %c0_18 = arith.constant 0 : index
      %c0_19 = arith.constant 0 : index
      %c0_20 = arith.constant 0 : index
      %20 = vector.load %arg5[%c0_18, %c0_19, %c0_20] : memref<1x64x128xf32, #tpu.memory_space<vmem>>, vector<1x64x128xf32>
      %21 = vector.shape_cast %20 : vector<1x64x128xf32> to vector<64x128xf32>
      %22 = arith.addf %19, %21 : vector<64x128xf32>
      %c0_21 = arith.constant 0 : index
      %c0_22 = arith.constant 0 : index
      %c0_23 = arith.constant 0 : index
      %23 = vector.load %arg8[%c0_21, %c0_22, %c0_23] : memref<1x64x128xf32, #tpu.memory_space<vmem>>, vector<1x64x128xf32>
      %24 = vector.shape_cast %23 : vector<1x64x128xf32> to vector<64x128xf32>
      %25 = vector.shape_cast %22 : vector<64x128xf32> to vector<1x64x128xf32>
      tpu.vector_store %arg8[%c0_21, %c0_22, %c0_23], %25 {strides = array<i32>} : memref<1x64x128xf32, #tpu.memory_space<vmem>>, vector<1x64x128xf32>,
      %c0_24 = arith.constant 0 : index
      %c0_25 = arith.constant 0 : index
      %26 = vector.load %arg10[%c0_24, %c0_25] : memref<64x128xf32, #tpu.memory_space<vmem>>, vector<64x128xf32>
      tpu.vector_store %arg10[%c0_24, %c0_25], %22 {strides = array<i32>} : memref<64x128xf32, #tpu.memory_space<vmem>>, vector<64x128xf32>,
    } else {
    }
    %c0 = arith.constant 0 : index
    %c0_1 = arith.constant 0 : index
    %3 = vector.load %arg10[%c0, %c0_1] : memref<64x128xf32, #tpu.memory_space<vmem>>, vector<64x128xf32>
    %c0_2 = arith.constant 0 : index
    %c0_3 = arith.constant 0 : index
    %c0_4 = arith.constant 0 : index
    %4 = vector.load %arg6[%c0_2, %c0_3, %c0_4] : memref<1x128x32xf32, #tpu.memory_space<vmem>>, vector<1x128x32xf32>
    %5 = vector.shape_cast %4 : vector<1x128x32xf32> to vector<128x32xf32>
    %cst = arith.constant dense<0.000000e+00> : vector<64x32xf32>
    %6 = tpu.matmul %3, %5, %cst {dimension_numbers = #tpu.dot_dimension_numbers<[1], [0], [0], [1], [0, 0, 1, 1], [], []>} : vector<64x128xf32>, vector<128x32xf32>, vector<64x32xf32> -> vector<64x32xf32>
    %c0_5 = arith.constant 0 : index
    %c0_6 = arith.constant 0 : index
    %c0_7 = arith.constant 0 : index
    %7 = vector.load %arg7[%c0_5, %c0_6, %c0_7] : memref<1x1x32xf32, #tpu.memory_space<vmem>>, vector<1x1x32xf32>
    %8 = vector.shape_cast %7 : vector<1x1x32xf32> to vector<1x32xf32>
    %9 = vector.broadcast %8 : vector<1x32xf32> to vector<64x32xf32>
    %10 = arith.addf %6, %9 : vector<64x32xf32>
    %c0_8 = arith.constant 0 : index
    %c0_9 = arith.constant 0 : index
    %c0_10 = arith.constant 0 : index
    %c0_11 = arith.constant 0 : index
    %11 = vector.load %arg9[%c0_8, %c0_9, %c0_10, %c0_11] : memref<1x1x64x32xf32, #tpu.memory_space<vmem>>, vector<1x1x64x32xf32>
    %12 = vector.shape_cast %11 : vector<1x1x64x32xf32> to vector<64x32xf32>
    %13 = vector.shape_cast %10 : vector<64x32xf32> to vector<1x1x64x32xf32>
    tpu.vector_store %arg9[%c0_8, %c0_9, %c0_10, %c0_11], %13 {strides = array<i32>} : memref<1x1x64x32xf32, #tpu.memory_space<vmem>>, vector<1x1x64x32xf32>,
    return
  }
  func.func @transform_0(%arg0: i32, %arg1: i32, %arg2: i32) -> (i32, i32, i32) {
    %c0_i32 = arith.constant 0 : i32
    %c0_i32_0 = arith.constant 0 : i32
    return %arg0, %arg1, %c0_i32 : i32, i32, i32
  }
  func.func @transform_1(%arg0: i32, %arg1: i32, %arg2: i32) -> (i32, i32, i32) {
    %c0_i32 = arith.constant 0 : i32
    %c0_i32_0 = arith.constant 0 : i32
    return %arg0, %arg1, %c0_i32 : i32, i32, i32
  }
  func.func @transform_2(%arg0: i32, %arg1: i32, %arg2: i32) -> (i32, i32, i32) {
    %c0_i32 = arith.constant 0 : i32
    %c0_i32_0 = arith.constant 0 : i32
    %c0_i32_1 = arith.constant 0 : i32
    return %c0_i32, %arg1, %c0_i32_0 : i32, i32, i32
  }
  func.func @transform_3(%arg0: i32, %arg1: i32, %arg2: i32) -> (i32, i32, i32) {
    %c0_i32 = arith.constant 0 : i32
    %c0_i32_0 = arith.constant 0 : i32
    %c0_i32_1 = arith.constant 0 : i32
    return %arg2, %c0_i32, %c0_i32_0 : i32, i32, i32
  }
  func.func @transform_4(%arg0: i32, %arg1: i32, %arg2: i32) -> (i32, i32, i32) {
    %c0_i32 = arith.constant 0 : i32
    %c0_i32_0 = arith.constant 0 : i32
    %c0_i32_1 = arith.constant 0 : i32
    return %arg2, %c0_i32, %c0_i32_0 : i32, i32, i32
  }
  func.func @transform_5(%arg0: i32, %arg1: i32, %arg2: i32) -> (i32, i32, i32) {
    %c0_i32 = arith.constant 0 : i32
    %c0_i32_0 = arith.constant 0 : i32
    return %arg0, %arg1, %c0_i32 : i32, i32, i32
  }
  func.func @transform_6(%arg0: i32, %arg1: i32, %arg2: i32) -> (i32, i32, i32, i32) {
    %c0_i32 = arith.constant 0 : i32
    %c0_i32_0 = arith.constant 0 : i32
    return %arg0, %arg2, %arg1, %c0_i32 : i32, i32, i32, i32
  }
}

module attributes {stable_mosaic.version = 11 : i64} {
  func.func @_flash_attn_kernel(%arg0: i32, %arg1: i32, %arg2: i32, %arg3: memref<1x4x64x32xf32, #tpu.memory_space<vmem>>, %arg4: memref<1x4x128x32xf32, #tpu.memory_space<vmem>>, %arg5: memref<1x4x128x32xf32, #tpu.memory_space<vmem>>, %arg6: memref<1x1x128xf32, #tpu.memory_space<vmem>>, %arg7: memref<1x64x128xf32, #tpu.memory_space<vmem>>, %arg8: memref<128x128xf32, #tpu.memory_space<vmem>>, %arg9: memref<1x128xf32, #tpu.memory_space<vmem>>, %arg10: memref<1x64x128xf32, #tpu.memory_space<vmem>>, %arg11: memref<4x64x1xf32, #tpu.memory_space<vmem>>, %arg12: memref<4x64x1xf32, #tpu.memory_space<vmem>>, %arg13: memref<64x128xf32, #tpu.memory_space<vmem>>) attributes {dimension_semantics = [#tpu.dimension_semantics<parallel>, #tpu.dimension_semantics<parallel>, #tpu.dimension_semantics<arbitrary>], iteration_bounds = array<i64: 2, 4, 2>, scalar_prefetch = 0 : i64, scratch_operands = 3 : i64, tpu.core_type = #tpu.core_type<tc>, window_params = [{transform_indices = @transform_0, window_bounds = array<i64: 1, 4, 64, 32>}, {transform_indices = @transform_1, window_bounds = array<i64: 1, 4, 128, 32>}, {transform_indices = @transform_2, window_bounds = array<i64: 1, 4, 128, 32>}, {transform_indices = @transform_3, window_bounds = array<i64: 1, 1, 128>}, {transform_indices = @transform_4, window_bounds = array<i64: 1, 64, 128>}, {pipeline_mode = #tpu.pipeline_mode<synchronous>, transform_indices = @transform_5, window_bounds = array<i64: 128, 128>}, {pipeline_mode = #tpu.pipeline_mode<synchronous>, transform_indices = @transform_6, window_bounds = array<i64: 1, 128>}, {transform_indices = @transform_7, window_bounds = array<i64: 1, 64, 128>}]} {
    %c0_i32 = arith.constant 0 : i32
    %0 = arith.cmpi eq, %arg2, %c0_i32 : i32
    %1 = arith.extui %0 : i1 to i32
    %c0_i32_0 = arith.constant 0 : i32
    %2 = arith.cmpi ne, %1, %c0_i32_0 : i32
    scf.if %2 {
      %cst_125 = arith.constant 0xFF800000 : f32
      %156 = vector.broadcast %cst_125 : f32 to vector<4x64x1xf32>
      %c0_126 = arith.constant 0 : index
      %c0_127 = arith.constant 0 : index
      %c0_128 = arith.constant 0 : index
      %157 = vector.load %arg11[%c0_126, %c0_127, %c0_128] : memref<4x64x1xf32, #tpu.memory_space<vmem>>, vector<4x64x1xf32>
      tpu.vector_store %arg11[%c0_126, %c0_127, %c0_128], %156 {strides = array<i32>} : memref<4x64x1xf32, #tpu.memory_space<vmem>>, vector<4x64x1xf32>,
      %cst_129 = arith.constant 0.000000e+00 : f32
      %158 = vector.broadcast %cst_129 : f32 to vector<4x64x1xf32>
      %c0_130 = arith.constant 0 : index
      %c0_131 = arith.constant 0 : index
      %c0_132 = arith.constant 0 : index
      %159 = vector.load %arg12[%c0_130, %c0_131, %c0_132] : memref<4x64x1xf32, #tpu.memory_space<vmem>>, vector<4x64x1xf32>
      tpu.vector_store %arg12[%c0_130, %c0_131, %c0_132], %158 {strides = array<i32>} : memref<4x64x1xf32, #tpu.memory_space<vmem>>, vector<4x64x1xf32>,
      %cst_133 = arith.constant 0.000000e+00 : f32
      %160 = vector.broadcast %cst_133 : f32 to vector<64x128xf32>
      %c0_134 = arith.constant 0 : index
      %c0_135 = arith.constant 0 : index
      %161 = vector.load %arg13[%c0_134, %c0_135] : memref<64x128xf32, #tpu.memory_space<vmem>>, vector<64x128xf32>
      tpu.vector_store %arg13[%c0_134, %c0_135], %160 {strides = array<i32>} : memref<64x128xf32, #tpu.memory_space<vmem>>, vector<64x128xf32>,
    } else {
    }
    %c0 = arith.constant 0 : index
    %c0_1 = arith.constant 0 : index
    %c0_2 = arith.constant 0 : index
    %3 = vector.load %arg6[%c0, %c0_1, %c0_2] : memref<1x1x128xf32, #tpu.memory_space<vmem>>, vector<1x1x128xf32>
    %4 = vector.shape_cast %3 : vector<1x1x128xf32> to vector<1x128xf32>
    %c0_3 = arith.constant 0 : index
    %c0_4 = arith.constant 0 : index
    %c0_5 = arith.constant 0 : index
    %c0_6 = arith.constant 0 : index
    %5 = vector.load %arg3[%c0_3, %c0_4, %c0_5, %c0_6] : memref<1x4x64x32xf32, #tpu.memory_space<vmem>>, vector<1x1x64x32xf32>
    %6 = vector.shape_cast %5 : vector<1x1x64x32xf32> to vector<64x32xf32>
    %c0_7 = arith.constant 0 : index
    %c0_8 = arith.constant 0 : index
    %c0_9 = arith.constant 0 : index
    %c0_10 = arith.constant 0 : index
    %7 = vector.load %arg4[%c0_7, %c0_8, %c0_9, %c0_10] : memref<1x4x128x32xf32, #tpu.memory_space<vmem>>, vector<1x1x128x32xf32>
    %8 = vector.shape_cast %7 : vector<1x1x128x32xf32> to vector<128x32xf32>
    %c0_11 = arith.constant 0 : index
    %c0_12 = arith.constant 0 : index
    %c0_13 = arith.constant 0 : index
    %c0_14 = arith.constant 0 : index
    %9 = vector.load %arg5[%c0_11, %c0_12, %c0_13, %c0_14] : memref<1x4x128x32xf32, #tpu.memory_space<vmem>>, vector<1x1x128x32xf32>
    %10 = vector.shape_cast %9 : vector<1x1x128x32xf32> to vector<128x32xf32>
    %cst = arith.constant dense<0.000000e+00> : vector<64x128xf32>
    %11 = tpu.matmul %6, %8, %cst {dimension_numbers = #tpu.dot_dimension_numbers<[1], [1], [0], [0], [0, 0, 1, 0], [], []>} : vector<64x32xf32>, vector<128x32xf32>, vector<64x128xf32> -> vector<64x128xf32>
    %12 = vector.broadcast %4 : vector<1x128xf32> to vector<64x128xf32>
    %13 = arith.addf %11, %12 : vector<64x128xf32>
    %c0_15 = arith.constant 0 : index
    %c0_16 = arith.constant 0 : index
    %c0_17 = arith.constant 0 : index
    %14 = vector.load %arg11[%c0_15, %c0_16, %c0_17] : memref<4x64x1xf32, #tpu.memory_space<vmem>>, vector<1x64x1xf32>
    %15 = vector.shape_cast %14 : vector<1x64x1xf32> to vector<64x1xf32>
    %cst_18 = arith.constant dense<0xFF800000> : vector<64xf32>
    %16 = vector.multi_reduction <maximumf>, %13, %cst_18 [1] : vector<64x128xf32> to vector<64xf32>
    %17 = vector.shape_cast %16 : vector<64xf32> to vector<64x1xf32>
    %18 = arith.maximumf %15, %17 : vector<64x1xf32>
    %19 = arith.subf %15, %18 : vector<64x1xf32>
    %20 = math.exp %19 : vector<64x1xf32>
    %21 = vector.broadcast %18 : vector<64x1xf32> to vector<64x128xf32>
    %22 = arith.subf %13, %21 : vector<64x128xf32>
    %23 = math.exp %22 : vector<64x128xf32>
    %c0_19 = arith.constant 0 : index
    %c0_20 = arith.constant 0 : index
    %c0_21 = arith.constant 0 : index
    %24 = vector.load %arg12[%c0_19, %c0_20, %c0_21] : memref<4x64x1xf32, #tpu.memory_space<vmem>>, vector<1x64x1xf32>
    %25 = vector.shape_cast %24 : vector<1x64x1xf32> to vector<64x1xf32>
    %26 = arith.mulf %20, %25 : vector<64x1xf32>
    %cst_22 = arith.constant dense<0.000000e+00> : vector<64xf32>
    %27 = vector.multi_reduction <add>, %23, %cst_22 [1] : vector<64x128xf32> to vector<64xf32>
    %28 = vector.shape_cast %27 : vector<64xf32> to vector<64x1xf32>
    %29 = arith.addf %26, %28 : vector<64x1xf32>
    %c0_23 = arith.constant 0 : index
    %c0_24 = arith.constant 0 : index
    %c0_25 = arith.constant 0 : index
    %30 = vector.load %arg12[%c0_23, %c0_24, %c0_25] : memref<4x64x1xf32, #tpu.memory_space<vmem>>, vector<1x64x1xf32>
    %31 = vector.shape_cast %30 : vector<1x64x1xf32> to vector<64x1xf32>
    %32 = vector.shape_cast %29 : vector<64x1xf32> to vector<1x64x1xf32>
    tpu.vector_store %arg12[%c0_23, %c0_24, %c0_25], %32 {strides = array<i32>} : memref<4x64x1xf32, #tpu.memory_space<vmem>>, vector<1x64x1xf32>,
    %c0_26 = arith.constant 0 : index
    %c0_27 = arith.constant 0 : index
    %33 = vector.load %arg13[%c0_26, %c0_27] : memref<64x128xf32, #tpu.memory_space<vmem>>, vector<64x32xf32>
    %34 = vector.broadcast %20 : vector<64x1xf32> to vector<64x32xf32>
    %35 = arith.mulf %34, %33 : vector<64x32xf32>
    %cst_28 = arith.constant dense<0.000000e+00> : vector<64x32xf32>
    %36 = tpu.matmul %23, %10, %cst_28 {dimension_numbers = #tpu.dot_dimension_numbers<[1], [0], [0], [1], [0, 0, 1, 1], [], []>} : vector<64x128xf32>, vector<128x32xf32>, vector<64x32xf32> -> vector<64x32xf32>
    %37 = arith.addf %35, %36 : vector<64x32xf32>
    %c0_29 = arith.constant 0 : index
    %c0_30 = arith.constant 0 : index
    %38 = vector.load %arg13[%c0_29, %c0_30] : memref<64x128xf32, #tpu.memory_space<vmem>>, vector<64x32xf32>
    tpu.vector_store %arg13[%c0_29, %c0_30], %37 {strides = array<i32>} : memref<64x128xf32, #tpu.memory_space<vmem>>, vector<64x32xf32>,
    %c0_31 = arith.constant 0 : index
    %c0_32 = arith.constant 0 : index
    %c0_33 = arith.constant 0 : index
    %39 = vector.load %arg11[%c0_31, %c0_32, %c0_33] : memref<4x64x1xf32, #tpu.memory_space<vmem>>, vector<1x64x1xf32>
    %40 = vector.shape_cast %39 : vector<1x64x1xf32> to vector<64x1xf32>
    %41 = vector.shape_cast %18 : vector<64x1xf32> to vector<1x64x1xf32>
    tpu.vector_store %arg11[%c0_31, %c0_32, %c0_33], %41 {strides = array<i32>} : memref<4x64x1xf32, #tpu.memory_space<vmem>>, vector<1x64x1xf32>,
    %c0_34 = arith.constant 0 : index
    %c1 = arith.constant 1 : index
    %c0_35 = arith.constant 0 : index
    %c0_36 = arith.constant 0 : index
    %42 = vector.load %arg3[%c0_34, %c1, %c0_35, %c0_36] : memref<1x4x64x32xf32, #tpu.memory_space<vmem>>, vector<1x1x64x32xf32>
    %43 = vector.shape_cast %42 : vector<1x1x64x32xf32> to vector<64x32xf32>
    %c0_37 = arith.constant 0 : index
    %c1_38 = arith.constant 1 : index
    %c0_39 = arith.constant 0 : index
    %c0_40 = arith.constant 0 : index
    %44 = vector.load %arg4[%c0_37, %c1_38, %c0_39, %c0_40] : memref<1x4x128x32xf32, #tpu.memory_space<vmem>>, vector<1x1x128x32xf32>
    %45 = vector.shape_cast %44 : vector<1x1x128x32xf32> to vector<128x32xf32>
    %c0_41 = arith.constant 0 : index
    %c1_42 = arith.constant 1 : index
    %c0_43 = arith.constant 0 : index
    %c0_44 = arith.constant 0 : index
    %46 = vector.load %arg5[%c0_41, %c1_42, %c0_43, %c0_44] : memref<1x4x128x32xf32, #tpu.memory_space<vmem>>, vector<1x1x128x32xf32>
    %47 = vector.shape_cast %46 : vector<1x1x128x32xf32> to vector<128x32xf32>
    %cst_45 = arith.constant dense<0.000000e+00> : vector<64x128xf32>
    %48 = tpu.matmul %43, %45, %cst_45 {dimension_numbers = #tpu.dot_dimension_numbers<[1], [1], [0], [0], [0, 0, 1, 0], [], []>} : vector<64x32xf32>, vector<128x32xf32>, vector<64x128xf32> -> vector<64x128xf32>
    %49 = vector.broadcast %4 : vector<1x128xf32> to vector<64x128xf32>
    %50 = arith.addf %48, %49 : vector<64x128xf32>
    %c1_46 = arith.constant 1 : index
    %c0_47 = arith.constant 0 : index
    %c0_48 = arith.constant 0 : index
    %51 = vector.load %arg11[%c1_46, %c0_47, %c0_48] : memref<4x64x1xf32, #tpu.memory_space<vmem>>, vector<1x64x1xf32>
    %52 = vector.shape_cast %51 : vector<1x64x1xf32> to vector<64x1xf32>
    %cst_49 = arith.constant dense<0xFF800000> : vector<64xf32>
    %53 = vector.multi_reduction <maximumf>, %50, %cst_49 [1] : vector<64x128xf32> to vector<64xf32>
    %54 = vector.shape_cast %53 : vector<64xf32> to vector<64x1xf32>
    %55 = arith.maximumf %52, %54 : vector<64x1xf32>
    %56 = arith.subf %52, %55 : vector<64x1xf32>
    %57 = math.exp %56 : vector<64x1xf32>
    %58 = vector.broadcast %55 : vector<64x1xf32> to vector<64x128xf32>
    %59 = arith.subf %50, %58 : vector<64x128xf32>
    %60 = math.exp %59 : vector<64x128xf32>
    %c1_50 = arith.constant 1 : index
    %c0_51 = arith.constant 0 : index
    %c0_52 = arith.constant 0 : index
    %61 = vector.load %arg12[%c1_50, %c0_51, %c0_52] : memref<4x64x1xf32, #tpu.memory_space<vmem>>, vector<1x64x1xf32>
    %62 = vector.shape_cast %61 : vector<1x64x1xf32> to vector<64x1xf32>
    %63 = arith.mulf %57, %62 : vector<64x1xf32>
    %cst_53 = arith.constant dense<0.000000e+00> : vector<64xf32>
    %64 = vector.multi_reduction <add>, %60, %cst_53 [1] : vector<64x128xf32> to vector<64xf32>
    %65 = vector.shape_cast %64 : vector<64xf32> to vector<64x1xf32>
    %66 = arith.addf %63, %65 : vector<64x1xf32>
    %c1_54 = arith.constant 1 : index
    %c0_55 = arith.constant 0 : index
    %c0_56 = arith.constant 0 : index
    %67 = vector.load %arg12[%c1_54, %c0_55, %c0_56] : memref<4x64x1xf32, #tpu.memory_space<vmem>>, vector<1x64x1xf32>
    %68 = vector.shape_cast %67 : vector<1x64x1xf32> to vector<64x1xf32>
    %69 = vector.shape_cast %66 : vector<64x1xf32> to vector<1x64x1xf32>
    tpu.vector_store %arg12[%c1_54, %c0_55, %c0_56], %69 {strides = array<i32>} : memref<4x64x1xf32, #tpu.memory_space<vmem>>, vector<1x64x1xf32>,
    %c0_57 = arith.constant 0 : index
    %c32 = arith.constant 32 : index
    %70 = vector.load %arg13[%c0_57, %c32] : memref<64x128xf32, #tpu.memory_space<vmem>>, vector<64x32xf32>
    %71 = vector.broadcast %57 : vector<64x1xf32> to vector<64x32xf32>
    %72 = arith.mulf %71, %70 : vector<64x32xf32>
    %cst_58 = arith.constant dense<0.000000e+00> : vector<64x32xf32>
    %73 = tpu.matmul %60, %47, %cst_58 {dimension_numbers = #tpu.dot_dimension_numbers<[1], [0], [0], [1], [0, 0, 1, 1], [], []>} : vector<64x128xf32>, vector<128x32xf32>, vector<64x32xf32> -> vector<64x32xf32>
    %74 = arith.addf %72, %73 : vector<64x32xf32>
    %c0_59 = arith.constant 0 : index
    %c32_60 = arith.constant 32 : index
    %75 = vector.load %arg13[%c0_59, %c32_60] : memref<64x128xf32, #tpu.memory_space<vmem>>, vector<64x32xf32>
    tpu.vector_store %arg13[%c0_59, %c32_60], %74 {strides = array<i32>} : memref<64x128xf32, #tpu.memory_space<vmem>>, vector<64x32xf32>,
    %c1_61 = arith.constant 1 : index
    %c0_62 = arith.constant 0 : index
    %c0_63 = arith.constant 0 : index
    %76 = vector.load %arg11[%c1_61, %c0_62, %c0_63] : memref<4x64x1xf32, #tpu.memory_space<vmem>>, vector<1x64x1xf32>
    %77 = vector.shape_cast %76 : vector<1x64x1xf32> to vector<64x1xf32>
    %78 = vector.shape_cast %55 : vector<64x1xf32> to vector<1x64x1xf32>
    tpu.vector_store %arg11[%c1_61, %c0_62, %c0_63], %78 {strides = array<i32>} : memref<4x64x1xf32, #tpu.memory_space<vmem>>, vector<1x64x1xf32>,
    %c0_64 = arith.constant 0 : index
    %c2 = arith.constant 2 : index
    %c0_65 = arith.constant 0 : index
    %c0_66 = arith.constant 0 : index
    %79 = vector.load %arg3[%c0_64, %c2, %c0_65, %c0_66] : memref<1x4x64x32xf32, #tpu.memory_space<vmem>>, vector<1x1x64x32xf32>
    %80 = vector.shape_cast %79 : vector<1x1x64x32xf32> to vector<64x32xf32>
    %c0_67 = arith.constant 0 : index
    %c2_68 = arith.constant 2 : index
    %c0_69 = arith.constant 0 : index
    %c0_70 = arith.constant 0 : index
    %81 = vector.load %arg4[%c0_67, %c2_68, %c0_69, %c0_70] : memref<1x4x128x32xf32, #tpu.memory_space<vmem>>, vector<1x1x128x32xf32>
    %82 = vector.shape_cast %81 : vector<1x1x128x32xf32> to vector<128x32xf32>
    %c0_71 = arith.constant 0 : index
    %c2_72 = arith.constant 2 : index
    %c0_73 = arith.constant 0 : index
    %c0_74 = arith.constant 0 : index
    %83 = vector.load %arg5[%c0_71, %c2_72, %c0_73, %c0_74] : memref<1x4x128x32xf32, #tpu.memory_space<vmem>>, vector<1x1x128x32xf32>
    %84 = vector.shape_cast %83 : vector<1x1x128x32xf32> to vector<128x32xf32>
    %cst_75 = arith.constant dense<0.000000e+00> : vector<64x128xf32>
    %85 = tpu.matmul %80, %82, %cst_75 {dimension_numbers = #tpu.dot_dimension_numbers<[1], [1], [0], [0], [0, 0, 1, 0], [], []>} : vector<64x32xf32>, vector<128x32xf32>, vector<64x128xf32> -> vector<64x128xf32>
    %86 = vector.broadcast %4 : vector<1x128xf32> to vector<64x128xf32>
    %87 = arith.addf %85, %86 : vector<64x128xf32>
    %c2_76 = arith.constant 2 : index
    %c0_77 = arith.constant 0 : index
    %c0_78 = arith.constant 0 : index
    %88 = vector.load %arg11[%c2_76, %c0_77, %c0_78] : memref<4x64x1xf32, #tpu.memory_space<vmem>>, vector<1x64x1xf32>
    %89 = vector.shape_cast %88 : vector<1x64x1xf32> to vector<64x1xf32>
    %cst_79 = arith.constant dense<0xFF800000> : vector<64xf32>
    %90 = vector.multi_reduction <maximumf>, %87, %cst_79 [1] : vector<64x128xf32> to vector<64xf32>
    %91 = vector.shape_cast %90 : vector<64xf32> to vector<64x1xf32>
    %92 = arith.maximumf %89, %91 : vector<64x1xf32>
    %93 = arith.subf %89, %92 : vector<64x1xf32>
    %94 = math.exp %93 : vector<64x1xf32>
    %95 = vector.broadcast %92 : vector<64x1xf32> to vector<64x128xf32>
    %96 = arith.subf %87, %95 : vector<64x128xf32>
    %97 = math.exp %96 : vector<64x128xf32>
    %c2_80 = arith.constant 2 : index
    %c0_81 = arith.constant 0 : index
    %c0_82 = arith.constant 0 : index
    %98 = vector.load %arg12[%c2_80, %c0_81, %c0_82] : memref<4x64x1xf32, #tpu.memory_space<vmem>>, vector<1x64x1xf32>
    %99 = vector.shape_cast %98 : vector<1x64x1xf32> to vector<64x1xf32>
    %100 = arith.mulf %94, %99 : vector<64x1xf32>
    %cst_83 = arith.constant dense<0.000000e+00> : vector<64xf32>
    %101 = vector.multi_reduction <add>, %97, %cst_83 [1] : vector<64x128xf32> to vector<64xf32>
    %102 = vector.shape_cast %101 : vector<64xf32> to vector<64x1xf32>
    %103 = arith.addf %100, %102 : vector<64x1xf32>
    %c2_84 = arith.constant 2 : index
    %c0_85 = arith.constant 0 : index
    %c0_86 = arith.constant 0 : index
    %104 = vector.load %arg12[%c2_84, %c0_85, %c0_86] : memref<4x64x1xf32, #tpu.memory_space<vmem>>, vector<1x64x1xf32>
    %105 = vector.shape_cast %104 : vector<1x64x1xf32> to vector<64x1xf32>
    %106 = vector.shape_cast %103 : vector<64x1xf32> to vector<1x64x1xf32>
    tpu.vector_store %arg12[%c2_84, %c0_85, %c0_86], %106 {strides = array<i32>} : memref<4x64x1xf32, #tpu.memory_space<vmem>>, vector<1x64x1xf32>,
    %c0_87 = arith.constant 0 : index
    %c64 = arith.constant 64 : index
    %107 = vector.load %arg13[%c0_87, %c64] : memref<64x128xf32, #tpu.memory_space<vmem>>, vector<64x32xf32>
    %108 = vector.broadcast %94 : vector<64x1xf32> to vector<64x32xf32>
    %109 = arith.mulf %108, %107 : vector<64x32xf32>
    %cst_88 = arith.constant dense<0.000000e+00> : vector<64x32xf32>
    %110 = tpu.matmul %97, %84, %cst_88 {dimension_numbers = #tpu.dot_dimension_numbers<[1], [0], [0], [1], [0, 0, 1, 1], [], []>} : vector<64x128xf32>, vector<128x32xf32>, vector<64x32xf32> -> vector<64x32xf32>
    %111 = arith.addf %109, %110 : vector<64x32xf32>
    %c0_89 = arith.constant 0 : index
    %c64_90 = arith.constant 64 : index
    %112 = vector.load %arg13[%c0_89, %c64_90] : memref<64x128xf32, #tpu.memory_space<vmem>>, vector<64x32xf32>
    tpu.vector_store %arg13[%c0_89, %c64_90], %111 {strides = array<i32>} : memref<64x128xf32, #tpu.memory_space<vmem>>, vector<64x32xf32>,
    %c2_91 = arith.constant 2 : index
    %c0_92 = arith.constant 0 : index
    %c0_93 = arith.constant 0 : index
    %113 = vector.load %arg11[%c2_91, %c0_92, %c0_93] : memref<4x64x1xf32, #tpu.memory_space<vmem>>, vector<1x64x1xf32>
    %114 = vector.shape_cast %113 : vector<1x64x1xf32> to vector<64x1xf32>
    %115 = vector.shape_cast %92 : vector<64x1xf32> to vector<1x64x1xf32>
    tpu.vector_store %arg11[%c2_91, %c0_92, %c0_93], %115 {strides = array<i32>} : memref<4x64x1xf32, #tpu.memory_space<vmem>>, vector<1x64x1xf32>,
    %c0_94 = arith.constant 0 : index
    %c3 = arith.constant 3 : index
    %c0_95 = arith.constant 0 : index
    %c0_96 = arith.constant 0 : index
    %116 = vector.load %arg3[%c0_94, %c3, %c0_95, %c0_96] : memref<1x4x64x32xf32, #tpu.memory_space<vmem>>, vector<1x1x64x32xf32>
    %117 = vector.shape_cast %116 : vector<1x1x64x32xf32> to vector<64x32xf32>
    %c0_97 = arith.constant 0 : index
    %c3_98 = arith.constant 3 : index
    %c0_99 = arith.constant 0 : index
    %c0_100 = arith.constant 0 : index
    %118 = vector.load %arg4[%c0_97, %c3_98, %c0_99, %c0_100] : memref<1x4x128x32xf32, #tpu.memory_space<vmem>>, vector<1x1x128x32xf32>
    %119 = vector.shape_cast %118 : vector<1x1x128x32xf32> to vector<128x32xf32>
    %c0_101 = arith.constant 0 : index
    %c3_102 = arith.constant 3 : index
    %c0_103 = arith.constant 0 : index
    %c0_104 = arith.constant 0 : index
    %120 = vector.load %arg5[%c0_101, %c3_102, %c0_103, %c0_104] : memref<1x4x128x32xf32, #tpu.memory_space<vmem>>, vector<1x1x128x32xf32>
    %121 = vector.shape_cast %120 : vector<1x1x128x32xf32> to vector<128x32xf32>
    %cst_105 = arith.constant dense<0.000000e+00> : vector<64x128xf32>
    %122 = tpu.matmul %117, %119, %cst_105 {dimension_numbers = #tpu.dot_dimension_numbers<[1], [1], [0], [0], [0, 0, 1, 0], [], []>} : vector<64x32xf32>, vector<128x32xf32>, vector<64x128xf32> -> vector<64x128xf32>
    %123 = vector.broadcast %4 : vector<1x128xf32> to vector<64x128xf32>
    %124 = arith.addf %122, %123 : vector<64x128xf32>
    %c3_106 = arith.constant 3 : index
    %c0_107 = arith.constant 0 : index
    %c0_108 = arith.constant 0 : index
    %125 = vector.load %arg11[%c3_106, %c0_107, %c0_108] : memref<4x64x1xf32, #tpu.memory_space<vmem>>, vector<1x64x1xf32>
    %126 = vector.shape_cast %125 : vector<1x64x1xf32> to vector<64x1xf32>
    %cst_109 = arith.constant dense<0xFF800000> : vector<64xf32>
    %127 = vector.multi_reduction <maximumf>, %124, %cst_109 [1] : vector<64x128xf32> to vector<64xf32>
    %128 = vector.shape_cast %127 : vector<64xf32> to vector<64x1xf32>
    %129 = arith.maximumf %126, %128 : vector<64x1xf32>
    %130 = arith.subf %126, %129 : vector<64x1xf32>
    %131 = math.exp %130 : vector<64x1xf32>
    %132 = vector.broadcast %129 : vector<64x1xf32> to vector<64x128xf32>
    %133 = arith.subf %124, %132 : vector<64x128xf32>
    %134 = math.exp %133 : vector<64x128xf32>
    %c3_110 = arith.constant 3 : index
    %c0_111 = arith.constant 0 : index
    %c0_112 = arith.constant 0 : index
    %135 = vector.load %arg12[%c3_110, %c0_111, %c0_112] : memref<4x64x1xf32, #tpu.memory_space<vmem>>, vector<1x64x1xf32>
    %136 = vector.shape_cast %135 : vector<1x64x1xf32> to vector<64x1xf32>
    %137 = arith.mulf %131, %136 : vector<64x1xf32>
    %cst_113 = arith.constant dense<0.000000e+00> : vector<64xf32>
    %138 = vector.multi_reduction <add>, %134, %cst_113 [1] : vector<64x128xf32> to vector<64xf32>
    %139 = vector.shape_cast %138 : vector<64xf32> to vector<64x1xf32>
    %140 = arith.addf %137, %139 : vector<64x1xf32>
    %c3_114 = arith.constant 3 : index
    %c0_115 = arith.constant 0 : index
    %c0_116 = arith.constant 0 : index
    %141 = vector.load %arg12[%c3_114, %c0_115, %c0_116] : memref<4x64x1xf32, #tpu.memory_space<vmem>>, vector<1x64x1xf32>
    %142 = vector.shape_cast %141 : vector<1x64x1xf32> to vector<64x1xf32>
    %143 = vector.shape_cast %140 : vector<64x1xf32> to vector<1x64x1xf32>
    tpu.vector_store %arg12[%c3_114, %c0_115, %c0_116], %143 {strides = array<i32>} : memref<4x64x1xf32, #tpu.memory_space<vmem>>, vector<1x64x1xf32>,
    %c0_117 = arith.constant 0 : index
    %c96 = arith.constant 96 : index
    %144 = vector.load %arg13[%c0_117, %c96] : memref<64x128xf32, #tpu.memory_space<vmem>>, vector<64x32xf32>
    %145 = vector.broadcast %131 : vector<64x1xf32> to vector<64x32xf32>
    %146 = arith.mulf %145, %144 : vector<64x32xf32>
    %cst_118 = arith.constant dense<0.000000e+00> : vector<64x32xf32>
    %147 = tpu.matmul %134, %121, %cst_118 {dimension_numbers = #tpu.dot_dimension_numbers<[1], [0], [0], [1], [0, 0, 1, 1], [], []>} : vector<64x128xf32>, vector<128x32xf32>, vector<64x32xf32> -> vector<64x32xf32>
    %148 = arith.addf %146, %147 : vector<64x32xf32>
    %c0_119 = arith.constant 0 : index
    %c96_120 = arith.constant 96 : index
    %149 = vector.load %arg13[%c0_119, %c96_120] : memref<64x128xf32, #tpu.memory_space<vmem>>, vector<64x32xf32>
    tpu.vector_store %arg13[%c0_119, %c96_120], %148 {strides = array<i32>} : memref<64x128xf32, #tpu.memory_space<vmem>>, vector<64x32xf32>,
    %c3_121 = arith.constant 3 : index
    %c0_122 = arith.constant 0 : index
    %c0_123 = arith.constant 0 : index
    %150 = vector.load %arg11[%c3_121, %c0_122, %c0_123] : memref<4x64x1xf32, #tpu.memory_space<vmem>>, vector<1x64x1xf32>
    %151 = vector.shape_cast %150 : vector<1x64x1xf32> to vector<64x1xf32>
    %152 = vector.shape_cast %129 : vector<64x1xf32> to vector<1x64x1xf32>
    tpu.vector_store %arg11[%c3_121, %c0_122, %c0_123], %152 {strides = array<i32>} : memref<4x64x1xf32, #tpu.memory_space<vmem>>, vector<1x64x1xf32>,
    %c1_i32 = arith.constant 1 : i32
    %153 = arith.cmpi eq, %arg2, %c1_i32 : i32
    %154 = arith.extui %153 : i1 to i32
    %c0_i32_124 = arith.constant 0 : i32
    %155 = arith.cmpi ne, %154, %c0_i32_124 : i32
    scf.if %155 {
      %c0_125 = arith.constant 0 : index
      %c0_126 = arith.constant 0 : index
      %156 = vector.load %arg13[%c0_125, %c0_126] : memref<64x128xf32, #tpu.memory_space<vmem>>, vector<64x32xf32>
      %c0_127 = arith.constant 0 : index
      %c0_128 = arith.constant 0 : index
      %c0_129 = arith.constant 0 : index
      %157 = vector.load %arg12[%c0_127, %c0_128, %c0_129] : memref<4x64x1xf32, #tpu.memory_space<vmem>>, vector<1x64x1xf32>
      %158 = vector.shape_cast %157 : vector<1x64x1xf32> to vector<64x1xf32>
      %159 = tpu.reciprocal %158 : vector<64x1xf32> -> vector<64x1xf32>
      %160 = vector.broadcast %159 : vector<64x1xf32> to vector<64x32xf32>
      %161 = arith.mulf %156, %160 : vector<64x32xf32>
      %c0_130 = arith.constant 0 : index
      %c0_131 = arith.constant 0 : index
      %162 = vector.load %arg13[%c0_130, %c0_131] : memref<64x128xf32, #tpu.memory_space<vmem>>, vector<64x32xf32>
      tpu.vector_store %arg13[%c0_130, %c0_131], %161 {strides = array<i32>} : memref<64x128xf32, #tpu.memory_space<vmem>>, vector<64x32xf32>,
      %c0_132 = arith.constant 0 : index
      %c32_133 = arith.constant 32 : index
      %163 = vector.load %arg13[%c0_132, %c32_133] : memref<64x128xf32, #tpu.memory_space<vmem>>, vector<64x32xf32>
      %c1_134 = arith.constant 1 : index
      %c0_135 = arith.constant 0 : index
      %c0_136 = arith.constant 0 : index
      %164 = vector.load %arg12[%c1_134, %c0_135, %c0_136] : memref<4x64x1xf32, #tpu.memory_space<vmem>>, vector<1x64x1xf32>
      %165 = vector.shape_cast %164 : vector<1x64x1xf32> to vector<64x1xf32>
      %166 = tpu.reciprocal %165 : vector<64x1xf32> -> vector<64x1xf32>
      %167 = vector.broadcast %166 : vector<64x1xf32> to vector<64x32xf32>
      %168 = arith.mulf %163, %167 : vector<64x32xf32>
      %c0_137 = arith.constant 0 : index
      %c32_138 = arith.constant 32 : index
      %169 = vector.load %arg13[%c0_137, %c32_138] : memref<64x128xf32, #tpu.memory_space<vmem>>, vector<64x32xf32>
      tpu.vector_store %arg13[%c0_137, %c32_138], %168 {strides = array<i32>} : memref<64x128xf32, #tpu.memory_space<vmem>>, vector<64x32xf32>,
      %c0_139 = arith.constant 0 : index
      %c64_140 = arith.constant 64 : index
      %170 = vector.load %arg13[%c0_139, %c64_140] : memref<64x128xf32, #tpu.memory_space<vmem>>, vector<64x32xf32>
      %c2_141 = arith.constant 2 : index
      %c0_142 = arith.constant 0 : index
      %c0_143 = arith.constant 0 : index
      %171 = vector.load %arg12[%c2_141, %c0_142, %c0_143] : memref<4x64x1xf32, #tpu.memory_space<vmem>>, vector<1x64x1xf32>
      %172 = vector.shape_cast %171 : vector<1x64x1xf32> to vector<64x1xf32>
      %173 = tpu.reciprocal %172 : vector<64x1xf32> -> vector<64x1xf32>
      %174 = vector.broadcast %173 : vector<64x1xf32> to vector<64x32xf32>
      %175 = arith.mulf %170, %174 : vector<64x32xf32>
      %c0_144 = arith.constant 0 : index
      %c64_145 = arith.constant 64 : index
      %176 = vector.load %arg13[%c0_144, %c64_145] : memref<64x128xf32, #tpu.memory_space<vmem>>, vector<64x32xf32>
      tpu.vector_store %arg13[%c0_144, %c64_145], %175 {strides = array<i32>} : memref<64x128xf32, #tpu.memory_space<vmem>>, vector<64x32xf32>,
      %c0_146 = arith.constant 0 : index
      %c96_147 = arith.constant 96 : index
      %177 = vector.load %arg13[%c0_146, %c96_147] : memref<64x128xf32, #tpu.memory_space<vmem>>, vector<64x32xf32>
      %c3_148 = arith.constant 3 : index
      %c0_149 = arith.constant 0 : index
      %c0_150 = arith.constant 0 : index
      %178 = vector.load %arg12[%c3_148, %c0_149, %c0_150] : memref<4x64x1xf32, #tpu.memory_space<vmem>>, vector<1x64x1xf32>
      %179 = vector.shape_cast %178 : vector<1x64x1xf32> to vector<64x1xf32>
      %180 = tpu.reciprocal %179 : vector<64x1xf32> -> vector<64x1xf32>
      %181 = vector.broadcast %180 : vector<64x1xf32> to vector<64x32xf32>
      %182 = arith.mulf %177, %181 : vector<64x32xf32>
      %c0_151 = arith.constant 0 : index
      %c96_152 = arith.constant 96 : index
      %183 = vector.load %arg13[%c0_151, %c96_152] : memref<64x128xf32, #tpu.memory_space<vmem>>, vector<64x32xf32>
      tpu.vector_store %arg13[%c0_151, %c96_152], %182 {strides = array<i32>} : memref<64x128xf32, #tpu.memory_space<vmem>>, vector<64x32xf32>,
      %c0_153 = arith.constant 0 : index
      %c0_154 = arith.constant 0 : index
      %184 = vector.load %arg13[%c0_153, %c0_154] : memref<64x128xf32, #tpu.memory_space<vmem>>, vector<64x128xf32>
      %c0_155 = arith.constant 0 : index
      %c0_156 = arith.constant 0 : index
      %185 = vector.load %arg8[%c0_155, %c0_156] : memref<128x128xf32, #tpu.memory_space<vmem>>, vector<128x128xf32>
      %cst_157 = arith.constant dense<0.000000e+00> : vector<64x128xf32>
      %186 = tpu.matmul %184, %185, %cst_157 {dimension_numbers = #tpu.dot_dimension_numbers<[1], [0], [0], [1], [0, 0, 1, 1], [], []>} : vector<64x128xf32>, vector<128x128xf32>, vector<64x128xf32> -> vector<64x128xf32>
      %c0_158 = arith.constant 0 : index
      %c0_159 = arith.constant 0 : index
      %187 = vector.load %arg9[%c0_158, %c0_159] : memref<1x128xf32, #tpu.memory_space<vmem>>, vector<1x128xf32>
      %188 = vector.broadcast %187 : vector<1x128xf32> to vector<64x128xf32>
      %189 = arith.addf %186, %188 : vector<64x128xf32>
      %c0_160 = arith.constant 0 : index
      %c0_161 = arith.constant 0 : index
      %c0_162 = arith.constant 0 : index
      %190 = vector.load %arg7[%c0_160, %c0_161, %c0_162] : memref<1x64x128xf32, #tpu.memory_space<vmem>>, vector<1x64x128xf32>
      %191 = vector.shape_cast %190 : vector<1x64x128xf32> to vector<64x128xf32>
      %192 = arith.addf %189, %191 : vector<64x128xf32>
      %c0_163 = arith.constant 0 : index
      %c0_164 = arith.constant 0 : index
      %c0_165 = arith.constant 0 : index
      %193 = vector.load %arg10[%c0_163, %c0_164, %c0_165] : memref<1x64x128xf32, #tpu.memory_space<vmem>>, vector<1x64x128xf32>
      %194 = vector.shape_cast %193 : vector<1x64x128xf32> to vector<64x128xf32>
      %195 = vector.shape_cast %192 : vector<64x128xf32> to vector<1x64x128xf32>
      tpu.vector_store %arg10[%c0_163, %c0_164, %c0_165], %195 {strides = array<i32>} : memref<1x64x128xf32, #tpu.memory_space<vmem>>, vector<1x64x128xf32>,
    } else {
    }
    return
  }
  func.func @transform_0(%arg0: i32, %arg1: i32, %arg2: i32) -> (i32, i32, i32, i32) {
    %c0_i32 = arith.constant 0 : i32
    %c0_i32_0 = arith.constant 0 : i32
    %c0_i32_1 = arith.constant 0 : i32
    return %arg0, %c0_i32, %arg1, %c0_i32_0 : i32, i32, i32, i32
  }
  func.func @transform_1(%arg0: i32, %arg1: i32, %arg2: i32) -> (i32, i32, i32, i32) {
    %c1_i32 = arith.constant 1 : i32
    %c0_i32 = arith.constant 0 : i32
    %c0_i32_0 = arith.constant 0 : i32
    return %arg0, %c1_i32, %arg2, %c0_i32 : i32, i32, i32, i32
  }
  func.func @transform_2(%arg0: i32, %arg1: i32, %arg2: i32) -> (i32, i32, i32, i32) {
    %c2_i32 = arith.constant 2 : i32
    %c0_i32 = arith.constant 0 : i32
    %c0_i32_0 = arith.constant 0 : i32
    return %arg0, %c2_i32, %arg2, %c0_i32 : i32, i32, i32, i32
  }
  func.func @transform_3(%arg0: i32, %arg1: i32, %arg2: i32) -> (i32, i32, i32) {
    %c0_i32 = arith.constant 0 : i32
    %c0_i32_0 = arith.constant 0 : i32
    return %arg0, %c0_i32, %arg2 : i32, i32, i32
  }
  func.func @transform_4(%arg0: i32, %arg1: i32, %arg2: i32) -> (i32, i32, i32) {
    %c0_i32 = arith.constant 0 : i32
    %c0_i32_0 = arith.constant 0 : i32
    return %arg0, %arg1, %c0_i32 : i32, i32, i32
  }
  func.func @transform_5(%arg0: i32, %arg1: i32, %arg2: i32) -> (i32, i32) {
    %c0_i32 = arith.constant 0 : i32
    %c0_i32_0 = arith.constant 0 : i32
    %c0_i32_1 = arith.constant 0 : i32
    return %c0_i32, %c0_i32_0 : i32, i32
  }
  func.func @transform_6(%arg0: i32, %arg1: i32, %arg2: i32) -> (i32, i32) {
    %c0_i32 = arith.constant 0 : i32
    %c0_i32_0 = arith.constant 0 : i32
    %c0_i32_1 = arith.constant 0 : i32
    return %c0_i32, %c0_i32_0 : i32, i32
  }
  func.func @transform_7(%arg0: i32, %arg1: i32, %arg2: i32) -> (i32, i32, i32) {
    %c0_i32 = arith.constant 0 : i32
    %c0_i32_0 = arith.constant 0 : i32
    return %arg0, %arg1, %c0_i32 : i32, i32, i32
  }
}

module attributes {stable_mosaic.version = 11 : i64} {
  func.func @_qkv_proj_kernel(%arg0: i32, %arg1: i32, %arg2: i32, %arg3: memref<1x64x128xf32, #tpu.memory_space<vmem>>, %arg4: memref<1x128xf32, #tpu.memory_space<vmem>>, %arg5: memref<1x128xf32, #tpu.memory_space<vmem>>, %arg6: memref<1x128x32xf32, #tpu.memory_space<vmem>>, %arg7: memref<1x1x32xf32, #tpu.memory_space<vmem>>, %arg8: memref<1x1x64x32xf32, #tpu.memory_space<vmem>>, %arg9: memref<64x128xf32, #tpu.memory_space<vmem>>) attributes {dimension_semantics = [#tpu.dimension_semantics<parallel>, #tpu.dimension_semantics<parallel>, #tpu.dimension_semantics<arbitrary>], iteration_bounds = array<i64: 2, 4, 12>, scalar_prefetch = 0 : i64, scratch_operands = 1 : i64, tpu.core_type = #tpu.core_type<tc>, window_params = [{transform_indices = @transform_0, window_bounds = array<i64: 1, 64, 128>}, {pipeline_mode = #tpu.pipeline_mode<synchronous>, transform_indices = @transform_1, window_bounds = array<i64: 1, 128>}, {pipeline_mode = #tpu.pipeline_mode<synchronous>, transform_indices = @transform_2, window_bounds = array<i64: 1, 128>}, {transform_indices = @transform_3, window_bounds = array<i64: 1, 128, 32>}, {transform_indices = @transform_4, window_bounds = array<i64: 1, 1, 32>}, {transform_indices = @transform_5, window_bounds = array<i64: 1, 1, 64, 32>}]} {
    %c0_i32 = arith.constant 0 : i32
    %0 = arith.cmpi eq, %arg2, %c0_i32 : i32
    %1 = arith.extui %0 : i1 to i32
    %c0_i32_0 = arith.constant 0 : i32
    %2 = arith.cmpi ne, %1, %c0_i32_0 : i32
    scf.if %2 {
      %c0_12 = arith.constant 0 : index
      %c0_13 = arith.constant 0 : index
      %c0_14 = arith.constant 0 : index
      %14 = vector.load %arg3[%c0_12, %c0_13, %c0_14] : memref<1x64x128xf32, #tpu.memory_space<vmem>>, vector<1x64x128xf32>
      %15 = vector.shape_cast %14 : vector<1x64x128xf32> to vector<64x128xf32>
      %c0_15 = arith.constant 0 : index
      %c0_16 = arith.constant 0 : index
      %16 = vector.load %arg4[%c0_15, %c0_16] : memref<1x128xf32, #tpu.memory_space<vmem>>, vector<1x128xf32>
      %c0_17 = arith.constant 0 : index
      %c0_18 = arith.constant 0 : index
      %17 = vector.load %arg5[%c0_17, %c0_18] : memref<1x128xf32, #tpu.memory_space<vmem>>, vector<1x128xf32>
      %cst_19 = arith.constant dense<0.000000e+00> : vector<64xf32>
      %18 = vector.multi_reduction <add>, %15, %cst_19 [1] : vector<64x128xf32> to vector<64xf32>
      %19 = vector.shape_cast %18 : vector<64xf32> to vector<64x1xf32>
      %cst_20 = arith.constant 1.280000e+02 : f32
      %20 = vector.broadcast %cst_20 : f32 to vector<64x1xf32>
      %21 = arith.divf %19, %20 : vector<64x1xf32>
      %22 = vector.broadcast %21 : vector<64x1xf32> to vector<64x128xf32>
      %23 = arith.subf %15, %22 : vector<64x128xf32>
      %24 = arith.mulf %23, %23 : vector<64x128xf32>
      %cst_21 = arith.constant dense<0.000000e+00> : vector<64xf32>
      %25 = vector.multi_reduction <add>, %24, %cst_21 [1] : vector<64x128xf32> to vector<64xf32>
      %26 = vector.shape_cast %25 : vector<64xf32> to vector<64x1xf32>
      %cst_22 = arith.constant 1.280000e+02 : f32
      %27 = vector.broadcast %cst_22 : f32 to vector<64x1xf32>
      %28 = arith.divf %26, %27 : vector<64x1xf32>
      %cst_23 = arith.constant 9.99999997E-7 : f32
      %29 = vector.broadcast %cst_23 : f32 to vector<64x1xf32>
      %30 = arith.addf %28, %29 : vector<64x1xf32>
      %31 = math.rsqrt %30 : vector<64x1xf32>
      %32 = vector.broadcast %31 : vector<64x1xf32> to vector<64x128xf32>
      %33 = arith.mulf %23, %32 : vector<64x128xf32>
      %34 = vector.broadcast %16 : vector<1x128xf32> to vector<64x128xf32>
      %35 = arith.mulf %33, %34 : vector<64x128xf32>
      %36 = vector.broadcast %17 : vector<1x128xf32> to vector<64x128xf32>
      %37 = arith.addf %35, %36 : vector<64x128xf32>
      %c0_24 = arith.constant 0 : index
      %c0_25 = arith.constant 0 : index
      %38 = vector.load %arg9[%c0_24, %c0_25] : memref<64x128xf32, #tpu.memory_space<vmem>>, vector<64x128xf32>
      tpu.vector_store %arg9[%c0_24, %c0_25], %37 {strides = array<i32>} : memref<64x128xf32, #tpu.memory_space<vmem>>, vector<64x128xf32>,
    } else {
    }
    %c0 = arith.constant 0 : index
    %c0_1 = arith.constant 0 : index
    %3 = vector.load %arg9[%c0, %c0_1] : memref<64x128xf32, #tpu.memory_space<vmem>>, vector<64x128xf32>
    %c0_2 = arith.constant 0 : index
    %c0_3 = arith.constant 0 : index
    %c0_4 = arith.constant 0 : index
    %4 = vector.load %arg6[%c0_2, %c0_3, %c0_4] : memref<1x128x32xf32, #tpu.memory_space<vmem>>, vector<1x128x32xf32>
    %5 = vector.shape_cast %4 : vector<1x128x32xf32> to vector<128x32xf32>
    %cst = arith.constant dense<0.000000e+00> : vector<64x32xf32>
    %6 = tpu.matmul %3, %5, %cst {dimension_numbers = #tpu.dot_dimension_numbers<[1], [0], [0], [1], [0, 0, 1, 1], [], []>} : vector<64x128xf32>, vector<128x32xf32>, vector<64x32xf32> -> vector<64x32xf32>
    %c0_5 = arith.constant 0 : index
    %c0_6 = arith.constant 0 : index
    %c0_7 = arith.constant 0 : index
    %7 = vector.load %arg7[%c0_5, %c0_6, %c0_7] : memref<1x1x32xf32, #tpu.memory_space<vmem>>, vector<1x1x32xf32>
    %8 = vector.shape_cast %7 : vector<1x1x32xf32> to vector<1x32xf32>
    %9 = vector.broadcast %8 : vector<1x32xf32> to vector<64x32xf32>
    %10 = arith.addf %6, %9 : vector<64x32xf32>
    %c0_8 = arith.constant 0 : index
    %c0_9 = arith.constant 0 : index
    %c0_10 = arith.constant 0 : index
    %c0_11 = arith.constant 0 : index
    %11 = vector.load %arg8[%c0_8, %c0_9, %c0_10, %c0_11] : memref<1x1x64x32xf32, #tpu.memory_space<vmem>>, vector<1x1x64x32xf32>
    %12 = vector.shape_cast %11 : vector<1x1x64x32xf32> to vector<64x32xf32>
    %13 = vector.shape_cast %10 : vector<64x32xf32> to vector<1x1x64x32xf32>
    tpu.vector_store %arg8[%c0_8, %c0_9, %c0_10, %c0_11], %13 {strides = array<i32>} : memref<1x1x64x32xf32, #tpu.memory_space<vmem>>, vector<1x1x64x32xf32>,
    return
  }
  func.func @transform_0(%arg0: i32, %arg1: i32, %arg2: i32) -> (i32, i32, i32) {
    %c0_i32 = arith.constant 0 : i32
    %c0_i32_0 = arith.constant 0 : i32
    return %arg0, %arg1, %c0_i32 : i32, i32, i32
  }
  func.func @transform_1(%arg0: i32, %arg1: i32, %arg2: i32) -> (i32, i32) {
    %c0_i32 = arith.constant 0 : i32
    %c0_i32_0 = arith.constant 0 : i32
    %c0_i32_1 = arith.constant 0 : i32
    return %c0_i32, %c0_i32_0 : i32, i32
  }
  func.func @transform_2(%arg0: i32, %arg1: i32, %arg2: i32) -> (i32, i32) {
    %c0_i32 = arith.constant 0 : i32
    %c0_i32_0 = arith.constant 0 : i32
    %c0_i32_1 = arith.constant 0 : i32
    return %c0_i32, %c0_i32_0 : i32, i32
  }
  func.func @transform_3(%arg0: i32, %arg1: i32, %arg2: i32) -> (i32, i32, i32) {
    %c0_i32 = arith.constant 0 : i32
    %c0_i32_0 = arith.constant 0 : i32
    %c0_i32_1 = arith.constant 0 : i32
    return %arg2, %c0_i32, %c0_i32_0 : i32, i32, i32
  }
  func.func @transform_4(%arg0: i32, %arg1: i32, %arg2: i32) -> (i32, i32, i32) {
    %c0_i32 = arith.constant 0 : i32
    %c0_i32_0 = arith.constant 0 : i32
    %c0_i32_1 = arith.constant 0 : i32
    return %arg2, %c0_i32, %c0_i32_0 : i32, i32, i32
  }
  func.func @transform_5(%arg0: i32, %arg1: i32, %arg2: i32) -> (i32, i32, i32, i32) {
    %c0_i32 = arith.constant 0 : i32
    %c0_i32_0 = arith.constant 0 : i32
    return %arg0, %arg2, %arg1, %c0_i32 : i32, i32, i32, i32
  }
}

module attributes {stable_mosaic.version = 11 : i64} {
  func.func @_ffn_kernel(%arg0: i32, %arg1: i32, %arg2: memref<1x64x128xf32, #tpu.memory_space<vmem>>, %arg3: memref<1x128xf32, #tpu.memory_space<vmem>>, %arg4: memref<1x128xf32, #tpu.memory_space<vmem>>, %arg5: memref<128x256xf32, #tpu.memory_space<vmem>>, %arg6: memref<1x256xf32, #tpu.memory_space<vmem>>, %arg7: memref<256x128xf32, #tpu.memory_space<vmem>>, %arg8: memref<1x128xf32, #tpu.memory_space<vmem>>, %arg9: memref<1x64x128xf32, #tpu.memory_space<vmem>>) attributes {dimension_semantics = [#tpu.dimension_semantics<parallel>, #tpu.dimension_semantics<parallel>], iteration_bounds = array<i64: 2, 4>, scalar_prefetch = 0 : i64, scratch_operands = 0 : i64, tpu.core_type = #tpu.core_type<tc>, window_params = [{transform_indices = @transform_0, window_bounds = array<i64: 1, 64, 128>}, {pipeline_mode = #tpu.pipeline_mode<synchronous>, transform_indices = @transform_1, window_bounds = array<i64: 1, 128>}, {pipeline_mode = #tpu.pipeline_mode<synchronous>, transform_indices = @transform_2, window_bounds = array<i64: 1, 128>}, {pipeline_mode = #tpu.pipeline_mode<synchronous>, transform_indices = @transform_3, window_bounds = array<i64: 128, 256>}, {pipeline_mode = #tpu.pipeline_mode<synchronous>, transform_indices = @transform_4, window_bounds = array<i64: 1, 256>}, {pipeline_mode = #tpu.pipeline_mode<synchronous>, transform_indices = @transform_5, window_bounds = array<i64: 256, 128>}, {pipeline_mode = #tpu.pipeline_mode<synchronous>, transform_indices = @transform_6, window_bounds = array<i64: 1, 128>}, {transform_indices = @transform_7, window_bounds = array<i64: 1, 64, 128>}]} {
    %c0 = arith.constant 0 : index
    %c0_0 = arith.constant 0 : index
    %c0_1 = arith.constant 0 : index
    %0 = vector.load %arg2[%c0, %c0_0, %c0_1] : memref<1x64x128xf32, #tpu.memory_space<vmem>>, vector<1x64x128xf32>
    %1 = vector.shape_cast %0 : vector<1x64x128xf32> to vector<64x128xf32>
    %c0_2 = arith.constant 0 : index
    %c0_3 = arith.constant 0 : index
    %2 = vector.load %arg3[%c0_2, %c0_3] : memref<1x128xf32, #tpu.memory_space<vmem>>, vector<1x128xf32>
    %c0_4 = arith.constant 0 : index
    %c0_5 = arith.constant 0 : index
    %3 = vector.load %arg4[%c0_4, %c0_5] : memref<1x128xf32, #tpu.memory_space<vmem>>, vector<1x128xf32>
    %cst = arith.constant dense<0.000000e+00> : vector<64xf32>
    %4 = vector.multi_reduction <add>, %1, %cst [1] : vector<64x128xf32> to vector<64xf32>
    %5 = vector.shape_cast %4 : vector<64xf32> to vector<64x1xf32>
    %cst_6 = arith.constant 1.280000e+02 : f32
    %6 = vector.broadcast %cst_6 : f32 to vector<64x1xf32>
    %7 = arith.divf %5, %6 : vector<64x1xf32>
    %8 = vector.broadcast %7 : vector<64x1xf32> to vector<64x128xf32>
    %9 = arith.subf %1, %8 : vector<64x128xf32>
    %10 = arith.mulf %9, %9 : vector<64x128xf32>
    %cst_7 = arith.constant dense<0.000000e+00> : vector<64xf32>
    %11 = vector.multi_reduction <add>, %10, %cst_7 [1] : vector<64x128xf32> to vector<64xf32>
    %12 = vector.shape_cast %11 : vector<64xf32> to vector<64x1xf32>
    %cst_8 = arith.constant 1.280000e+02 : f32
    %13 = vector.broadcast %cst_8 : f32 to vector<64x1xf32>
    %14 = arith.divf %12, %13 : vector<64x1xf32>
    %cst_9 = arith.constant 9.99999997E-7 : f32
    %15 = vector.broadcast %cst_9 : f32 to vector<64x1xf32>
    %16 = arith.addf %14, %15 : vector<64x1xf32>
    %17 = math.rsqrt %16 : vector<64x1xf32>
    %18 = vector.broadcast %17 : vector<64x1xf32> to vector<64x128xf32>
    %19 = arith.mulf %9, %18 : vector<64x128xf32>
    %20 = vector.broadcast %2 : vector<1x128xf32> to vector<64x128xf32>
    %21 = arith.mulf %19, %20 : vector<64x128xf32>
    %22 = vector.broadcast %3 : vector<1x128xf32> to vector<64x128xf32>
    %23 = arith.addf %21, %22 : vector<64x128xf32>
    %c0_10 = arith.constant 0 : index
    %c0_11 = arith.constant 0 : index
    %24 = vector.load %arg5[%c0_10, %c0_11] : memref<128x256xf32, #tpu.memory_space<vmem>>, vector<128x256xf32>
    %cst_12 = arith.constant dense<0.000000e+00> : vector<64x256xf32>
    %25 = tpu.matmul %23, %24, %cst_12 {dimension_numbers = #tpu.dot_dimension_numbers<[1], [0], [0], [1], [0, 0, 1, 1], [], []>} : vector<64x128xf32>, vector<128x256xf32>, vector<64x256xf32> -> vector<64x256xf32>
    %c0_13 = arith.constant 0 : index
    %c0_14 = arith.constant 0 : index
    %26 = vector.load %arg6[%c0_13, %c0_14] : memref<1x256xf32, #tpu.memory_space<vmem>>, vector<1x256xf32>
    %27 = vector.broadcast %26 : vector<1x256xf32> to vector<64x256xf32>
    %28 = arith.addf %25, %27 : vector<64x256xf32>
    %cst_15 = arith.constant 5.000000e-01 : f32
    %29 = vector.broadcast %cst_15 : f32 to vector<64x256xf32>
    %30 = arith.mulf %29, %28 : vector<64x256xf32>
    %cst_16 = arith.constant 4.471500e-02 : f32
    %31 = vector.broadcast %cst_16 : f32 to vector<64x256xf32>
    %32 = arith.mulf %31, %28 : vector<64x256xf32>
    %33 = arith.mulf %32, %28 : vector<64x256xf32>
    %34 = arith.mulf %33, %28 : vector<64x256xf32>
    %35 = arith.addf %28, %34 : vector<64x256xf32>
    %cst_17 = arith.constant 0.797884583 : f32
    %36 = vector.broadcast %cst_17 : f32 to vector<64x256xf32>
    %37 = arith.mulf %36, %35 : vector<64x256xf32>
    %38 = math.tanh %37 : vector<64x256xf32>
    %cst_18 = arith.constant 1.000000e+00 : f32
    %39 = vector.broadcast %cst_18 : f32 to vector<64x256xf32>
    %40 = arith.addf %39, %38 : vector<64x256xf32>
    %41 = arith.mulf %30, %40 : vector<64x256xf32>
    %c0_19 = arith.constant 0 : index
    %c0_20 = arith.constant 0 : index
    %42 = vector.load %arg7[%c0_19, %c0_20] : memref<256x128xf32, #tpu.memory_space<vmem>>, vector<256x128xf32>
    %cst_21 = arith.constant dense<0.000000e+00> : vector<64x128xf32>
    %43 = tpu.matmul %41, %42, %cst_21 {dimension_numbers = #tpu.dot_dimension_numbers<[1], [0], [0], [1], [0, 0, 1, 1], [], []>} : vector<64x256xf32>, vector<256x128xf32>, vector<64x128xf32> -> vector<64x128xf32>
    %c0_22 = arith.constant 0 : index
    %c0_23 = arith.constant 0 : index
    %44 = vector.load %arg8[%c0_22, %c0_23] : memref<1x128xf32, #tpu.memory_space<vmem>>, vector<1x128xf32>
    %45 = vector.broadcast %44 : vector<1x128xf32> to vector<64x128xf32>
    %46 = arith.addf %43, %45 : vector<64x128xf32>
    %47 = arith.addf %46, %1 : vector<64x128xf32>
    %c0_24 = arith.constant 0 : index
    %c0_25 = arith.constant 0 : index
    %c0_26 = arith.constant 0 : index
    %48 = vector.load %arg9[%c0_24, %c0_25, %c0_26] : memref<1x64x128xf32, #tpu.memory_space<vmem>>, vector<1x64x128xf32>
    %49 = vector.shape_cast %48 : vector<1x64x128xf32> to vector<64x128xf32>
    %50 = vector.shape_cast %47 : vector<64x128xf32> to vector<1x64x128xf32>
    tpu.vector_store %arg9[%c0_24, %c0_25, %c0_26], %50 {strides = array<i32>} : memref<1x64x128xf32, #tpu.memory_space<vmem>>, vector<1x64x128xf32>,
    return
  }
  func.func @transform_0(%arg0: i32, %arg1: i32) -> (i32, i32, i32) {
    %c0_i32 = arith.constant 0 : i32
    %c0_i32_0 = arith.constant 0 : i32
    return %arg0, %arg1, %c0_i32 : i32, i32, i32
  }
  func.func @transform_1(%arg0: i32, %arg1: i32) -> (i32, i32) {
    %c0_i32 = arith.constant 0 : i32
    %c0_i32_0 = arith.constant 0 : i32
    %c0_i32_1 = arith.constant 0 : i32
    return %c0_i32, %c0_i32_0 : i32, i32
  }
  func.func @transform_2(%arg0: i32, %arg1: i32) -> (i32, i32) {
    %c0_i32 = arith.constant 0 : i32
    %c0_i32_0 = arith.constant 0 : i32
    %c0_i32_1 = arith.constant 0 : i32
    return %c0_i32, %c0_i32_0 : i32, i32
  }
  func.func @transform_3(%arg0: i32, %arg1: i32) -> (i32, i32) {
    %c0_i32 = arith.constant 0 : i32
    %c0_i32_0 = arith.constant 0 : i32
    %c0_i32_1 = arith.constant 0 : i32
    return %c0_i32, %c0_i32_0 : i32, i32
  }
  func.func @transform_4(%arg0: i32, %arg1: i32) -> (i32, i32) {
    %c0_i32 = arith.constant 0 : i32
    %c0_i32_0 = arith.constant 0 : i32
    %c0_i32_1 = arith.constant 0 : i32
    return %c0_i32, %c0_i32_0 : i32, i32
  }
  func.func @transform_5(%arg0: i32, %arg1: i32) -> (i32, i32) {
    %c0_i32 = arith.constant 0 : i32
    %c0_i32_0 = arith.constant 0 : i32
    %c0_i32_1 = arith.constant 0 : i32
    return %c0_i32, %c0_i32_0 : i32, i32
  }
  func.func @transform_6(%arg0: i32, %arg1: i32) -> (i32, i32) {
    %c0_i32 = arith.constant 0 : i32
    %c0_i32_0 = arith.constant 0 : i32
    %c0_i32_1 = arith.constant 0 : i32
    return %c0_i32, %c0_i32_0 : i32, i32
  }
  func.func @transform_7(%arg0: i32, %arg1: i32) -> (i32, i32, i32) {
    %c0_i32 = arith.constant 0 : i32
    %c0_i32_0 = arith.constant 0 : i32
    return %arg0, %arg1, %c0_i32 : i32, i32, i32
  }
}

module attributes {stable_mosaic.version = 11 : i64} {
  func.func @_head_kernel(%arg0: i32, %arg1: i32, %arg2: memref<1x64x128xf32, #tpu.memory_space<vmem>>, %arg3: memref<1x128xf32, #tpu.memory_space<vmem>>, %arg4: memref<1x128xf32, #tpu.memory_space<vmem>>, %arg5: memref<1x128xf32, #tpu.memory_space<vmem>>, %arg6: memref<1x1xf32, #tpu.memory_space<vmem>>, %arg7: memref<1x64x1xf32, #tpu.memory_space<vmem>>, %arg8: memref<1x64x1xf32, #tpu.memory_space<vmem>>) attributes {dimension_semantics = [#tpu.dimension_semantics<parallel>, #tpu.dimension_semantics<parallel>], iteration_bounds = array<i64: 2, 4>, scalar_prefetch = 0 : i64, scratch_operands = 0 : i64, tpu.core_type = #tpu.core_type<tc>, window_params = [{transform_indices = @transform_0, window_bounds = array<i64: 1, 64, 128>}, {pipeline_mode = #tpu.pipeline_mode<synchronous>, transform_indices = @transform_1, window_bounds = array<i64: 1, 128>}, {pipeline_mode = #tpu.pipeline_mode<synchronous>, transform_indices = @transform_2, window_bounds = array<i64: 1, 128>}, {pipeline_mode = #tpu.pipeline_mode<synchronous>, transform_indices = @transform_3, window_bounds = array<i64: 1, 128>}, {pipeline_mode = #tpu.pipeline_mode<synchronous>, transform_indices = @transform_4, window_bounds = array<i64: 1, 1>}, {transform_indices = @transform_5, window_bounds = array<i64: 1, 64, 1>}, {transform_indices = @transform_6, window_bounds = array<i64: 1, 64, 1>}]} {
    %c0 = arith.constant 0 : index
    %c0_0 = arith.constant 0 : index
    %c0_1 = arith.constant 0 : index
    %0 = vector.load %arg2[%c0, %c0_0, %c0_1] : memref<1x64x128xf32, #tpu.memory_space<vmem>>, vector<1x64x128xf32>
    %1 = vector.shape_cast %0 : vector<1x64x128xf32> to vector<64x128xf32>
    %c0_2 = arith.constant 0 : index
    %c0_3 = arith.constant 0 : index
    %2 = vector.load %arg3[%c0_2, %c0_3] : memref<1x128xf32, #tpu.memory_space<vmem>>, vector<1x128xf32>
    %c0_4 = arith.constant 0 : index
    %c0_5 = arith.constant 0 : index
    %3 = vector.load %arg4[%c0_4, %c0_5] : memref<1x128xf32, #tpu.memory_space<vmem>>, vector<1x128xf32>
    %cst = arith.constant dense<0.000000e+00> : vector<64xf32>
    %4 = vector.multi_reduction <add>, %1, %cst [1] : vector<64x128xf32> to vector<64xf32>
    %5 = vector.shape_cast %4 : vector<64xf32> to vector<64x1xf32>
    %cst_6 = arith.constant 1.280000e+02 : f32
    %6 = vector.broadcast %cst_6 : f32 to vector<64x1xf32>
    %7 = arith.divf %5, %6 : vector<64x1xf32>
    %8 = vector.broadcast %7 : vector<64x1xf32> to vector<64x128xf32>
    %9 = arith.subf %1, %8 : vector<64x128xf32>
    %10 = arith.mulf %9, %9 : vector<64x128xf32>
    %cst_7 = arith.constant dense<0.000000e+00> : vector<64xf32>
    %11 = vector.multi_reduction <add>, %10, %cst_7 [1] : vector<64x128xf32> to vector<64xf32>
    %12 = vector.shape_cast %11 : vector<64xf32> to vector<64x1xf32>
    %cst_8 = arith.constant 1.280000e+02 : f32
    %13 = vector.broadcast %cst_8 : f32 to vector<64x1xf32>
    %14 = arith.divf %12, %13 : vector<64x1xf32>
    %cst_9 = arith.constant 9.99999997E-7 : f32
    %15 = vector.broadcast %cst_9 : f32 to vector<64x1xf32>
    %16 = arith.addf %14, %15 : vector<64x1xf32>
    %17 = math.rsqrt %16 : vector<64x1xf32>
    %18 = vector.broadcast %17 : vector<64x1xf32> to vector<64x128xf32>
    %19 = arith.mulf %9, %18 : vector<64x128xf32>
    %20 = vector.broadcast %2 : vector<1x128xf32> to vector<64x128xf32>
    %21 = arith.mulf %19, %20 : vector<64x128xf32>
    %22 = vector.broadcast %3 : vector<1x128xf32> to vector<64x128xf32>
    %23 = arith.addf %21, %22 : vector<64x128xf32>
    %c0_10 = arith.constant 0 : index
    %c0_11 = arith.constant 0 : index
    %24 = vector.load %arg5[%c0_10, %c0_11] : memref<1x128xf32, #tpu.memory_space<vmem>>, vector<1x128xf32>
    %25 = vector.broadcast %24 : vector<1x128xf32> to vector<64x128xf32>
    %26 = arith.mulf %23, %25 : vector<64x128xf32>
    %cst_12 = arith.constant dense<0.000000e+00> : vector<64xf32>
    %27 = vector.multi_reduction <add>, %26, %cst_12 [1] : vector<64x128xf32> to vector<64xf32>
    %28 = vector.shape_cast %27 : vector<64xf32> to vector<64x1xf32>
    %c0_13 = arith.constant 0 : index
    %c0_14 = arith.constant 0 : index
    %29 = vector.load %arg6[%c0_13, %c0_14] : memref<1x1xf32, #tpu.memory_space<vmem>>, vector<1x1xf32>
    %30 = vector.broadcast %29 : vector<1x1xf32> to vector<64x1xf32>
    %31 = arith.addf %28, %30 : vector<64x1xf32>
    %cst_15 = arith.constant 0.000000e+00 : f32
    %32 = vector.broadcast %cst_15 : f32 to vector<64x1xf32>
    %33 = arith.subf %32, %31 : vector<64x1xf32>
    %34 = math.exp %33 : vector<64x1xf32>
    %cst_16 = arith.constant 1.000000e+00 : f32
    %35 = vector.broadcast %cst_16 : f32 to vector<64x1xf32>
    %36 = arith.addf %35, %34 : vector<64x1xf32>
    %cst_17 = arith.constant 1.000000e+00 : f32
    %37 = vector.broadcast %cst_17 : f32 to vector<64x1xf32>
    %38 = arith.divf %37, %36 : vector<64x1xf32>
    %c0_18 = arith.constant 0 : index
    %c0_19 = arith.constant 0 : index
    %c0_20 = arith.constant 0 : index
    %39 = vector.load %arg7[%c0_18, %c0_19, %c0_20] : memref<1x64x1xf32, #tpu.memory_space<vmem>>, vector<1x64x1xf32>
    %40 = vector.shape_cast %39 : vector<1x64x1xf32> to vector<64x1xf32>
    %41 = arith.mulf %38, %40 : vector<64x1xf32>
    %c0_21 = arith.constant 0 : index
    %c0_22 = arith.constant 0 : index
    %c0_23 = arith.constant 0 : index
    %42 = vector.load %arg8[%c0_21, %c0_22, %c0_23] : memref<1x64x1xf32, #tpu.memory_space<vmem>>, vector<1x64x1xf32>
    %43 = vector.shape_cast %42 : vector<1x64x1xf32> to vector<64x1xf32>
    %44 = vector.shape_cast %41 : vector<64x1xf32> to vector<1x64x1xf32>
    tpu.vector_store %arg8[%c0_21, %c0_22, %c0_23], %44 {strides = array<i32>} : memref<1x64x1xf32, #tpu.memory_space<vmem>>, vector<1x64x1xf32>,
    return
  }
  func.func @transform_0(%arg0: i32, %arg1: i32) -> (i32, i32, i32) {
    %c0_i32 = arith.constant 0 : i32
    %c0_i32_0 = arith.constant 0 : i32
    return %arg0, %arg1, %c0_i32 : i32, i32, i32
  }
  func.func @transform_1(%arg0: i32, %arg1: i32) -> (i32, i32) {
    %c0_i32 = arith.constant 0 : i32
    %c0_i32_0 = arith.constant 0 : i32
    %c0_i32_1 = arith.constant 0 : i32
    return %c0_i32, %c0_i32_0 : i32, i32
  }
  func.func @transform_2(%arg0: i32, %arg1: i32) -> (i32, i32) {
    %c0_i32 = arith.constant 0 : i32
    %c0_i32_0 = arith.constant 0 : i32
    %c0_i32_1 = arith.constant 0 : i32
    return %c0_i32, %c0_i32_0 : i32, i32
  }
  func.func @transform_3(%arg0: i32, %arg1: i32) -> (i32, i32) {
    %c0_i32 = arith.constant 0 : i32
    %c0_i32_0 = arith.constant 0 : i32
    %c0_i32_1 = arith.constant 0 : i32
    return %c0_i32, %c0_i32_0 : i32, i32
  }
  func.func @transform_4(%arg0: i32, %arg1: i32) -> (i32, i32) {
    %c0_i32 = arith.constant 0 : i32
    %c0_i32_0 = arith.constant 0 : i32
    %c0_i32_1 = arith.constant 0 : i32
    return %c0_i32, %c0_i32_0 : i32, i32
  }
  func.func @transform_5(%arg0: i32, %arg1: i32) -> (i32, i32, i32) {
    %c0_i32 = arith.constant 0 : i32
    %c0_i32_0 = arith.constant 0 : i32
    return %arg0, %arg1, %c0_i32 : i32, i32, i32
  }
  func.func @transform_6(%arg0: i32, %arg1: i32) -> (i32, i32, i32) {
    %c0_i32 = arith.constant 0 : i32
    %c0_i32_0 = arith.constant 0 : i32
    return %arg0, %arg1, %c0_i32 : i32, i32, i32
  }
}

</mosaic_0001>

<llo_original>
// kernel: ext_transformer_encoder_forward.7
$region0: #{ext_transformer_encoder_forward.7}
  #allocation0 [shape = 'u32[]', space=smem, size = 0x4, offset = 0x4, fixed_abs, tag = 'smem constant byte address 0x4 - core index']
  #allocation1 [shape = 'u32[72,128]{1,0:T(1,128)}', space=vmem, size = 0x9000, scoped, tag = 'internal scratch']
  #allocation2 [shape = 'f32[64,128]{1,0:T(8,128)}', space=vmem, size = 0x8000, scoped, tag = 'scratch operand']
  %s0 = inlined_call_operand.hbm [shape: f32[2,256,128], index: 0, kind: input, shape index: {}]
  %s1 = inlined_call_operand.vmem [shape: f32[2,256,1], index: 1, kind: input, shape index: {}]
  %s2 = inlined_call_operand.hbm [shape: f32[1,256,128], index: 2, kind: input, shape index: {}]
  %s3 = inlined_call_operand.vmem [shape: f32[12,128,32], index: 3, kind: input, shape index: {}]
  %s4 = inlined_call_operand.hbm [shape: f32[12,1,32], index: 4, kind: input, shape index: {}]
  %s5 = inlined_call_operand.vmem [shape: f32[2,256,128], index: 5, kind: output, shape index: {0}]
  %s6 = inlined_call_operand.vmem [shape: f32[2,12,256,32], index: 6, kind: output, shape index: {1}]
  %7 = xla_tuple %s5, %s6
  %s8 = sld [smem:[#allocation0]]
  $region77: #{ext_transformer_encoder_forward.7} parent=0
    _
  %s10 = ssub.s32 1, %s8
  %s11 = scalar_select 0, %s10, %s8
  $region1: #{ext_transformer_encoder_forward.7} parent=0
    #allocation3 [shape = 'u8[65536]{0}', space=vmem, size = 0x10000, scoped, tag = 'input window, operand 0']
    #allocation4 [shape = 's32[2]{0}', space=sflag, size = 0x8, scoped, tag = 'scoped memory for ext_transformer_encoder_forward.7']
    #allocation5 [shape = 'u8[65536]{0}', space=vmem, size = 0x10000, scoped, tag = 'input window, operand 2']
    #allocation6 [shape = 's32[2]{0}', space=sflag, size = 0x8, scoped, tag = 'scoped memory for ext_transformer_encoder_forward.7']
    #allocation7 [shape = 'u8[1024]{0}', space=vmem, size = 0x400, scoped, tag = 'input window, operand 4']
    %12 = vsyncpa [#allocation4], 0
    %s13 = scalar_lea.sflag [#allocation4], 1
    %14 = vsyncpa %s13, 0
    %15 = vsyncpa [#allocation6], 0
    %s16 = scalar_lea.sflag [#allocation6], 1
    %17 = vsyncpa %s16, 0
    loop: start=0, step=1, limit=98
    $region2: #{ext_transformer_encoder_forward.7} parent=1 // loop_pre_header
      _
    $region3: #{ext_transformer_encoder_forward.7} parent=1 // loop_header
      %s19 = sphi 0, %s23
      %p20 = scmp.ge.s32.totalorder %s19, 98
      %s26 = sphi 0, %s45
      %s27 = sphi 0, %s41
      %s28 = sphi 0, %s37
      %s29 = sphi 0, %s26
      %s30 = sphi 0, %s27
      %s31 = sphi 0, %s28
      %s32 = sphi 0, %s29
      %s33 = sphi 0, %s30
      %s34 = sphi 0, %s31
      %s50 = sphi 0, %s52
      %s53 = sphi 0, %s50
      %s54 = sphi 0, %s53
      %s70 = sphi 0, %s54
      %s78 = sphi 0, %s80
      %s81 = sphi 0, %s78
      %s82 = sphi 0, %s81
      %s98 = sphi 0, %s82
      %s104 = sphi 0, %s106
      %s107 = sphi 0, %s104
      %s108 = sphi 0, %s107
      %s124 = sphi 0, %s108
      %s130 = sphi 0, %s132
      %s133 = sphi 0, %s130
      %s134 = sphi 0, %s133
      %s150 = sphi 0, %s134
      %s156 = sphi 0, %s158
      %s159 = sphi 0, %s156
      %s160 = sphi 0, %s159
      %s176 = sphi 0, %s160
      %s184 = sphi 0, %s186
      %s187 = sphi 0, %s184
      %s188 = sphi 0, %s187
      %s204 = sphi 0, %s188
      %s214 = sphi 0, %s216
      %s217 = sphi 0, %s214
      %s218 = sphi 0, %s217
      %s234 = sphi 0, %s218
    $region4: #{ext_transformer_encoder_forward.7} parent=1 // loop_header_branch
      %22 = sbr.rel (%p20) target = $region8
    $region5: #{ext_transformer_encoder_forward.7} parent=1 // loop_body
      %s24 = ssub.s32 %s19, 1
      %s25 = ssub.s32 %s19, 2
      %s35 = sadd.s32 1, %s28
      %p36 = scmp.ge.s32.totalorder %s35, 12
      %s37 = scalar_select %p36, 0, %s35
      %s38 = sadd.s32 1, %s27
      %s39 = scalar_select %p36, %s38, %s27
      %p40 = scmp.ge.s32.totalorder %s39, 4
      %s41 = scalar_select %p40, 0, %s39
      %s42 = sadd.s32 1, %s26
      %s43 = scalar_select %p40, %s42, %s26
      %p44 = scmp.ge.s32.totalorder %s43, 2
      %s45 = scalar_select %p44, 0, %s43
      %s46 = ssub.s32 %s26, %s45
      %s47 = ssub.s32 %s27, %s41
      %s48 = sor.u32 %s46, %s47
      %p49 = scmp.eq.s32.totalorder %s48, 0
      %s51 = sadd.s32 %s50, 1
      %s52 = scalar_select %p49, %s50, %s51
      %p55 = pneg %p49
      %p56 = scmp.eq.s32.totalorder %s19, 95
      %p57 = por %p55, %p56
      %p58 = scmp.ne.s32.totalorder %s50, %s53
      %p59 = scmp.eq.s32.totalorder %s19, 0
      %p60 = por %p58, %p59
      %p61 = scmp.ne.s32.totalorder %s50, %s53
      %p62 = scmp.eq.s32.totalorder %s24, 95
      %p63 = por %p61, %p62
      %p64 = scmp.ne.s32.totalorder %s53, %s54
      %p65 = scmp.eq.s32.totalorder %s24, 0
      %p66 = por %p64, %p65
      %p67 = scmp.ne.s32.totalorder %s53, %s54
      %p68 = scmp.eq.s32.totalorder %s25, 95
      %p69 = por %p67, %p68
      %p71 = scmp.ne.s32.totalorder %s54, %s70
      %p72 = scmp.eq.s32.totalorder %s25, 0
      %p73 = por %p71, %p72
      %s74 = ssub.s32 %s26, %s45
      %s75 = ssub.s32 %s27, %s41
      %s76 = sor.u32 %s74, %s75
      %p77 = scmp.eq.s32.totalorder %s76, 0
      %s79 = sadd.s32 %s78, 1
      %s80 = scalar_select %p77, %s78, %s79
      %p83 = pneg %p77
      %p84 = scmp.eq.s32.totalorder %s19, 95
      %p85 = por %p83, %p84
      %p86 = scmp.ne.s32.totalorder %s78, %s81
      %p87 = scmp.eq.s32.totalorder %s19, 0
      %p88 = por %p86, %p87
      %p89 = scmp.ne.s32.totalorder %s78, %s81
      %p90 = scmp.eq.s32.totalorder %s24, 95
      %p91 = por %p89, %p90
      %p92 = scmp.ne.s32.totalorder %s81, %s82
      %p93 = scmp.eq.s32.totalorder %s24, 0
      %p94 = por %p92, %p93
      %p95 = scmp.ne.s32.totalorder %s81, %s82
      %p96 = scmp.eq.s32.totalorder %s25, 95
      %p97 = por %p95, %p96
      %p99 = scmp.ne.s32.totalorder %s82, %s98
      %p100 = scmp.eq.s32.totalorder %s25, 0
      %p101 = por %p99, %p100
      %s102 = ssub.s32 %s27, %s41
      %p103 = scmp.eq.s32.totalorder %s102, 0
      %s105 = sadd.s32 %s104, 1
      %s106 = scalar_select %p103, %s104, %s105
      %p109 = pneg %p103
      %p110 = scmp.eq.s32.totalorder %s19, 95
      %p111 = por %p109, %p110
      %p112 = scmp.ne.s32.totalorder %s104, %s107
      %p113 = scmp.eq.s32.totalorder %s19, 0
      %p114 = por %p112, %p113
      %p115 = scmp.ne.s32.totalorder %s104, %s107
      %p116 = scmp.eq.s32.totalorder %s24, 95
      %p117 = por %p115, %p116
      %p118 = scmp.ne.s32.totalorder %s107, %s108
      %p119 = scmp.eq.s32.totalorder %s24, 0
      %p120 = por %p118, %p119
      %p121 = scmp.ne.s32.totalorder %s107, %s108
      %p122 = scmp.eq.s32.totalorder %s25, 95
      %p123 = por %p121, %p122
      %p125 = scmp.ne.s32.totalorder %s108, %s124
      %p126 = scmp.eq.s32.totalorder %s25, 0
      %p127 = por %p125, %p126
      %s128 = ssub.s32 %s28, %s37
      %p129 = scmp.eq.s32.totalorder %s128, 0
      %s131 = sadd.s32 %s130, 1
      %s132 = scalar_select %p129, %s130, %s131
      %p135 = pneg %p129
      %p136 = scmp.eq.s32.totalorder %s19, 95
      %p137 = por %p135, %p136
      %p138 = scmp.ne.s32.totalorder %s130, %s133
      %p139 = scmp.eq.s32.totalorder %s19, 0
      %p140 = por %p138, %p139
      %p141 = scmp.ne.s32.totalorder %s130, %s133
      %p142 = scmp.eq.s32.totalorder %s24, 95
      %p143 = por %p141, %p142
      %p144 = scmp.ne.s32.totalorder %s133, %s134
      %p145 = scmp.eq.s32.totalorder %s24, 0
      %p146 = por %p144, %p145
      %p147 = scmp.ne.s32.totalorder %s133, %s134
      %p148 = scmp.eq.s32.totalorder %s25, 95
      %p149 = por %p147, %p148
      %p151 = scmp.ne.s32.totalorder %s134, %s150
      %p152 = scmp.eq.s32.totalorder %s25, 0
      %p153 = por %p151, %p152
      %s154 = ssub.s32 %s28, %s37
      %p155 = scmp.eq.s32.totalorder %s154, 0
      %s157 = sadd.s32 %s156, 1
      %s158 = scalar_select %p155, %s156, %s157
      %p161 = pneg %p155
      %p162 = scmp.eq.s32.totalorder %s19, 95
      %p163 = por %p161, %p162
      %p164 = scmp.ne.s32.totalorder %s156, %s159
      %p165 = scmp.eq.s32.totalorder %s19, 0
      %p166 = por %p164, %p165
      %p167 = scmp.ne.s32.totalorder %s156, %s159
      %p168 = scmp.eq.s32.totalorder %s24, 95
      %p169 = por %p167, %p168
      %p170 = scmp.ne.s32.totalorder %s159, %s160
      %p171 = scmp.eq.s32.totalorder %s24, 0
      %p172 = por %p170, %p171
      %p173 = scmp.ne.s32.totalorder %s159, %s160
      %p174 = scmp.eq.s32.totalorder %s25, 95
      %p175 = por %p173, %p174
      %p177 = scmp.ne.s32.totalorder %s160, %s176
      %p178 = scmp.eq.s32.totalorder %s25, 0
      %p179 = por %p177, %p178
      %s180 = ssub.s32 %s26, %s45
      %s181 = ssub.s32 %s27, %s41
      %s182 = sor.u32 %s180, %s181
      %p183 = scmp.eq.s32.totalorder %s182, 0
      %s185 = sadd.s32 %s184, 1
      %s186 = scalar_select %p183, %s184, %s185
      %p189 = pneg %p183
      %p190 = scmp.eq.s32.totalorder %s19, 95
      %p191 = por %p189, %p190
      %p192 = scmp.ne.s32.totalorder %s184, %s187
      %p193 = scmp.eq.s32.totalorder %s19, 0
      %p194 = por %p192, %p193
      %p195 = scmp.ne.s32.totalorder %s184, %s187
      %p196 = scmp.eq.s32.totalorder %s24, 95
      %p197 = por %p195, %p196
      %p198 = scmp.ne.s32.totalorder %s187, %s188
      %p199 = scmp.eq.s32.totalorder %s24, 0
      %p200 = por %p198, %p199
      %p201 = scmp.ne.s32.totalorder %s187, %s188
      %p202 = scmp.eq.s32.totalorder %s25, 95
      %p203 = por %p201, %p202
      %p205 = scmp.ne.s32.totalorder %s188, %s204
      %p206 = scmp.eq.s32.totalorder %s25, 0
      %p207 = por %p205, %p206
      %s208 = ssub.s32 %s26, %s45
      %s209 = ssub.s32 %s28, %s37
      %s210 = sor.u32 %s208, %s209
      %s211 = ssub.s32 %s27, %s41
      %s212 = sor.u32 %s210, %s211
      %p213 = scmp.eq.s32.totalorder %s212, 0
      %s215 = sadd.s32 %s214, 1
      %s216 = scalar_select %p213, %s214, %s215
      %p219 = pneg %p213
      %p220 = scmp.eq.s32.totalorder %s19, 95
      %p221 = por %p219, %p220
      %p222 = scmp.ne.s32.totalorder %s214, %s217
      %p223 = scmp.eq.s32.totalorder %s19, 0
      %p224 = por %p222, %p223
      %p225 = scmp.ne.s32.totalorder %s214, %s217
      %p226 = scmp.eq.s32.totalorder %s24, 95
      %p227 = por %p225, %p226
      %p228 = scmp.ne.s32.totalorder %s217, %s218
      %p229 = scmp.eq.s32.totalorder %s24, 0
      %p230 = por %p228, %p229
      %p231 = scmp.ne.s32.totalorder %s217, %s218
      %p232 = scmp.eq.s32.totalorder %s25, 95
      %p233 = por %p231, %p232
      %p235 = scmp.ne.s32.totalorder %s218, %s234
      %p236 = scmp.eq.s32.totalorder %s25, 0
      %p237 = por %p235, %p236
      %p238 = scmp.le.s32.totalorder 1, %s19
      %p239 = scmp.lt.s32.totalorder %s19, 97
      %p240 = pnand %p238, %p239
      %p241 = pneg %p240
      // Predicated region
      $region9: #{ext_transformer_encoder_forward.7} parent=5 // pred_check
        _
      $region10: #{ext_transformer_encoder_forward.7} parent=5 // pred_check_branch
        %243 = sbr.rel (%p240) target = $region12
      $region11: #{ext_transformer_encoder_forward.7} parent=5 // pred_region
        %s244 = ssub.s32 %s19, 1
      $region12: #{ext_transformer_encoder_forward.7} parent=5 // pred_fallthru
        _
      %p245 = scmp.lt.s32.totalorder %s19, 96
      // Predicated region
      $region13: #{ext_transformer_encoder_forward.7} parent=5 // pred_check
        %p246 = pneg %p245
      $region14: #{ext_transformer_encoder_forward.7} parent=5 // pred_check_branch
        %248 = sbr.rel (%p246) target = $region16
      $region15: #{ext_transformer_encoder_forward.7} parent=5 // pred_region
        // Predicated region
        $region17: #{ext_transformer_encoder_forward.7} parent=15 // pred_check
          %p249 = pneg %p60
        $region18: #{ext_transformer_encoder_forward.7} parent=15 // pred_check_branch
          %251 = sbr.rel (%p249) target = $region20
        $region19: #{ext_transformer_encoder_forward.7} parent=15 // pred_region
          %s252 = sand.u32 %s50, 1
          %s253 = scalar_lea.sflag [#allocation4], %s252
          %s254 = sand.u32 %s50, 1
          %s255 = smul.addr %s254, 64
          %s256 = scalar_lea.vmem [#allocation3], %s255
          %s257 = smul.u32 8, %s27
          %259 = vsyncadd %s253, 0
          %s260 = smul.addr %s26, 32
          %s261 = sadd.s32 %s257, %s260
          %s262 = smul.addr %s261, 8
          %s263 = scalar_lea.hbm %s0, %s262
          %s264 = sshll.u32 %s263, 4
          %s265 = int_to_ptr.hbm [resolvable:$true] %s264
          %s266 = sshll.u32 %s256, 4
          %s267 = int_to_ptr.vmem [resolvable:$true] %s266
          %272 = dma.hbm_to_vmem [thread:$0]  %s265, 1024, %s267, %s253, 128, 128, 8
        $region20: #{ext_transformer_encoder_forward.7} parent=15 // pred_fallthru
          _
        // Predicated region
        $region21: #{ext_transformer_encoder_forward.7} parent=15 // pred_check
          %p273 = pneg %p88
        $region22: #{ext_transformer_encoder_forward.7} parent=15 // pred_check_branch
          %275 = sbr.rel (%p273) target = $region24
        $region23: #{ext_transformer_encoder_forward.7} parent=15 // pred_region
          %s276 = smul.u32 8, %s27
          %p277 = scmp.lt.s32.totalorder %s26, 1
          %s278 = scalar_select %p277, %s26, 1
          %p279 = scmp.lt.s32.totalorder %s276, 31
          %s280 = scalar_select %p279, %s276, 31
          %s281 = smul.addr %s278, 32
          %s282 = sadd.s32 %s280, %s281
          %s283 = smul.addr %s282, 8
          %s284 = scalar_lea.vmem %s1, %s283
          %s285 = smul.u32 8, %s27
        $region24: #{ext_transformer_encoder_forward.7} parent=15 // pred_fallthru
          _
        // Predicated region
        $region25: #{ext_transformer_encoder_forward.7} parent=15 // pred_check
          %p286 = pneg %p114
        $region26: #{ext_transformer_encoder_forward.7} parent=15 // pred_check_branch
          %288 = sbr.rel (%p286) target = $region28
        $region27: #{ext_transformer_encoder_forward.7} parent=15 // pred_region
          %s289 = sand.u32 %s19, 1
          %s290 = scalar_lea.sflag [#allocation6], %s289
          %s291 = sand.u32 %s104, 1
          %s292 = smul.addr %s291, 64
          %s293 = scalar_lea.vmem [#allocation5], %s292
          %s294 = smul.u32 8, %s27
          %296 = vsyncadd %s290, 0
          %s297 = smul.addr %s294, 8
          %s298 = scalar_lea.hbm %s2, %s297
          %s299 = sshll.u32 %s298, 4
          %s300 = int_to_ptr.hbm [resolvable:$true] %s299
          %s301 = sshll.u32 %s293, 4
          %s302 = int_to_ptr.vmem [resolvable:$true] %s301
          %307 = dma.hbm_to_vmem [thread:$0]  %s300, 1024, %s302, %s290, 128, 128, 8
        $region28: #{ext_transformer_encoder_forward.7} parent=15 // pred_fallthru
          _
        // Predicated region
        $region29: #{ext_transformer_encoder_forward.7} parent=15 // pred_check
          %p308 = pneg %p140
        $region30: #{ext_transformer_encoder_forward.7} parent=15 // pred_check_branch
          %310 = sbr.rel (%p308) target = $region32
        $region31: #{ext_transformer_encoder_forward.7} parent=15 // pred_region
          %p311 = scmp.lt.s32.totalorder %s28, 11
          %s312 = scalar_select %p311, %s28, 11
          %s313 = smul.addr %s312, 16
          %s314 = smul.addr %s313, 8
          %s315 = scalar_lea.vmem %s3, %s314
        $region32: #{ext_transformer_encoder_forward.7} parent=15 // pred_fallthru
          _
        // Predicated region
        $region33: #{ext_transformer_encoder_forward.7} parent=15 // pred_check
          %p316 = pneg %p166
        $region34: #{ext_transformer_encoder_forward.7} parent=15 // pred_check_branch
          %318 = sbr.rel (%p316) target = $region36
        $region35: #{ext_transformer_encoder_forward.7} parent=15 // pred_region
          %s319 = sand.u32 %s19, 1
          %s320 = scalar_lea.sflag [#allocation6], %s319
          %s321 = sand.u32 %s156, 1
          %s322 = scalar_lea.vmem [#allocation7], %s321
          %324 = vsyncadd %s320, 0
          %s325 = scalar_lea.hbm %s4, %s28
          %s327 = sshll.u32 %s325, 4
          %s328 = int_to_ptr.hbm [resolvable:$true] %s327
          %s329 = sshll.u32 %s322, 4
          %s330 = int_to_ptr.vmem [resolvable:$true] %s329
          %332 = dma.hbm_to_vmem [thread:$0]  %s328, 16, %s330, %s320
        $region36: #{ext_transformer_encoder_forward.7} parent=15 // pred_fallthru
          _
      $region16: #{ext_transformer_encoder_forward.7} parent=5 // pred_fallthru
        _
      %p333 = scmp.le.s32.totalorder 1, %s19
      %p334 = scmp.lt.s32.totalorder %s19, 97
      %p335 = pnand %p333, %p334
      %p336 = pneg %p335
      // Predicated region
      $region37: #{ext_transformer_encoder_forward.7} parent=5 // pred_check
        _
      $region38: #{ext_transformer_encoder_forward.7} parent=5 // pred_check_branch
        %338 = sbr.rel (%p335) target = $region40
      $region39: #{ext_transformer_encoder_forward.7} parent=5 // pred_region
        %s339 = ssub.s32 %s19, 1
        %s340 = sand.u32 %s53, 1
        %s341 = scalar_lea.sflag [#allocation4], %s340
        %s342 = sand.u32 %s53, 1
        %s343 = smul.addr %s342, 64
        %s344 = scalar_lea.vmem [#allocation3], %s343
        // Predicated region
        $region41: #{ext_transformer_encoder_forward.7} parent=39 // pred_check
          %p345 = pneg %p66
        $region42: #{ext_transformer_encoder_forward.7} parent=39 // pred_check_branch
          %347 = sbr.rel (%p345) target = $region44
        $region43: #{ext_transformer_encoder_forward.7} parent=39 // pred_region
          %349 = dma.done %s341, 1024
        $region44: #{ext_transformer_encoder_forward.7} parent=39 // pred_fallthru
          _
        %s350 = sand.u32 %s24, 1
        %s351 = scalar_lea.sflag [#allocation6], %s350
        %s352 = sand.u32 %s107, 1
        %s353 = smul.addr %s352, 64
        %s354 = scalar_lea.vmem [#allocation5], %s353
        // Predicated region
        $region45: #{ext_transformer_encoder_forward.7} parent=39 // pred_check
          %p355 = pneg %p120
        $region46: #{ext_transformer_encoder_forward.7} parent=39 // pred_check_branch
          %357 = sbr.rel (%p355) target = $region48
        $region47: #{ext_transformer_encoder_forward.7} parent=39 // pred_region
          %359 = dma.done %s351, 1024
        $region48: #{ext_transformer_encoder_forward.7} parent=39 // pred_fallthru
          _
        %s360 = sand.u32 %s24, 1
        %s361 = scalar_lea.sflag [#allocation6], %s360
        %s362 = sand.u32 %s159, 1
        %s363 = scalar_lea.vmem [#allocation7], %s362
        // Predicated region
        $region49: #{ext_transformer_encoder_forward.7} parent=39 // pred_check
          %p364 = pneg %p172
        $region50: #{ext_transformer_encoder_forward.7} parent=39 // pred_check_branch
          %366 = sbr.rel (%p364) target = $region52
        $region51: #{ext_transformer_encoder_forward.7} parent=39 // pred_region
          %368 = dma.done %s361, 16
        $region52: #{ext_transformer_encoder_forward.7} parent=39 // pred_fallthru
          _
        %s369 = sand.u32 %s53, 1
        %s370 = scalar_lea.sflag [#allocation4], %s369
        %s371 = sand.u32 %s53, 1
        %s372 = smul.addr %s371, 64
        %s373 = scalar_lea.vmem [#allocation3], %s372
        %p374 = pneg %p66
        %p375 = pneg %p63
        %s376 = smul.u32 8, %s30
        %p377 = scmp.lt.s32.totalorder %s29, 1
        %s378 = scalar_select %p377, %s29, 1
        %p379 = scmp.lt.s32.totalorder %s376, 31
        %s380 = scalar_select %p379, %s376, 31
        %s381 = smul.addr %s378, 32
        %s382 = sadd.s32 %s380, %s381
        %s383 = smul.addr %s382, 8
        %s384 = scalar_lea.vmem %s1, %s383
        %p385 = pneg %p94
        %p386 = pneg %p91
        %s387 = sand.u32 %s24, 1
        %s388 = scalar_lea.sflag [#allocation6], %s387
        %s389 = sand.u32 %s107, 1
        %s390 = smul.addr %s389, 64
        %s391 = scalar_lea.vmem [#allocation5], %s390
        %p392 = pneg %p120
        %p393 = pneg %p117
        %p394 = scmp.lt.s32.totalorder %s31, 11
        %s395 = scalar_select %p394, %s31, 11
        %s396 = smul.addr %s395, 16
        %s397 = smul.addr %s396, 8
        %s398 = scalar_lea.vmem %s3, %s397
        %p399 = pneg %p146
        %p400 = pneg %p143
        %s401 = sand.u32 %s24, 1
        %s402 = scalar_lea.sflag [#allocation6], %s401
        %s403 = sand.u32 %s159, 1
        %s404 = scalar_lea.vmem [#allocation7], %s403
        %p405 = pneg %p172
        %p406 = pneg %p169
        %p407 = pneg %p200
        %p408 = pneg %p197
        %s409 = smul.u32 8, %s30
        %p410 = scmp.lt.s32.totalorder %s29, 1
        %s411 = scalar_select %p410, %s29, 1
        %p412 = scmp.lt.s32.totalorder %s409, 31
        %s413 = scalar_select %p412, %s409, 31
        %s414 = smul.addr %s411, 32
        %s415 = sadd.s32 %s413, %s414
        %s416 = smul.addr %s415, 8
        %s417 = scalar_lea.vmem %s5, %s416
        %p418 = pneg %p230
        %p419 = pneg %p227
        %s420 = smul.u32 8, %s30
        %p421 = scmp.lt.s32.totalorder %s29, 1
        %s422 = scalar_select %p421, %s29, 1
        %p423 = scmp.lt.s32.totalorder %s31, 11
        %s424 = scalar_select %p423, %s31, 11
        %p425 = scmp.lt.s32.totalorder %s420, 31
        %s426 = scalar_select %p425, %s420, 31
        %s427 = smul.addr %s424, 32
        %s428 = sadd.s32 %s426, %s427
        %s429 = smul.addr %s422, 384
        %s430 = sadd.s32 %s428, %s429
        %s431 = smul.addr %s430, 8
        %s432 = scalar_lea.vmem %s6, %s431
        %s433 = smul.u32 8, %s30
        %s434 = smul.u32 8, %s30
        %p435 = scmp.lt.s32.totalorder %s29, 1
        %s436 = scalar_select %p435, %s29, 1
        %p437 = scmp.lt.s32.totalorder %s434, 31
        %s438 = scalar_select %p437, %s434, 31
        %s439 = smul.addr %s436, 32
        %s440 = sadd.s32 %s438, %s439
        %s441 = smul.addr %s440, 8
        %s442 = scalar_lea.vmem %s1, %s441
        %s443 = smul.u32 8, %s30
        %s444 = smul.u32 8, %s30
        %p445 = scmp.lt.s32.totalorder %s31, 11
        %s446 = scalar_select %p445, %s31, 11
        %s447 = smul.addr %s446, 16
        %s448 = smul.addr %s447, 8
        %s449 = scalar_lea.vmem %s3, %s448
        %s450 = smul.u32 8, %s30
        %p451 = scmp.lt.s32.totalorder %s29, 1
        %s452 = scalar_select %p451, %s29, 1
        %p453 = scmp.lt.s32.totalorder %s450, 31
        %s454 = scalar_select %p453, %s450, 31
        %s455 = smul.addr %s452, 32
        %s456 = sadd.s32 %s454, %s455
        %s457 = smul.addr %s456, 8
        %s458 = scalar_lea.vmem %s5, %s457
        %s459 = smul.u32 8, %s30
        %s460 = smul.u32 8, %s30
        %p461 = scmp.lt.s32.totalorder %s29, 1
        %s462 = scalar_select %p461, %s29, 1
        %p463 = scmp.lt.s32.totalorder %s31, 11
        %s464 = scalar_select %p463, %s31, 11
        %p465 = scmp.lt.s32.totalorder %s460, 31
        %s466 = scalar_select %p465, %s460, 31
        %s467 = smul.addr %s464, 32
        %s468 = sadd.s32 %s466, %s467
        %s469 = smul.addr %s462, 384
        %s470 = sadd.s32 %s468, %s469
        %s471 = smul.addr %s470, 8
        %s472 = scalar_lea.vmem %s6, %s471
        %s473 = smul.u32 8, %s30
        %p474 = scmp.eq.s32.totalorder %s31, 0
        // Predicated region
        $region53: #{ext_transformer_encoder_forward.7} parent=39 // pred_check
          %p475 = pneg %p474
        $region54: #{ext_transformer_encoder_forward.7} parent=39 // pred_check_branch
          %477 = sbr.rel (%p475) target = $region56
        $region55: #{ext_transformer_encoder_forward.7} parent=39 // pred_region
          %v478 = vld [vmem:[%s344] sm:$0xff]
          %v479 = vld [vmem:[%s344 + $0x8] sm:$0xff]
          %v480 = vld [vmem:[%s344 + $0x10] sm:$0xff]
          %v481 = vld [vmem:[%s344 + $0x18] sm:$0xff]
          %v482 = vld [vmem:[%s344 + $0x20] sm:$0xff]
          %v483 = vld [vmem:[%s344 + $0x28] sm:$0xff]
          %v484 = vld [vmem:[%s344 + $0x30] sm:$0xff]
          %v485 = vld [vmem:[%s344 + $0x38] sm:$0xff]
          %v486 = vld [vmem:[%s442] sm:$0xff]
          %v487 = vld [vmem:[%s442 + $0x8] sm:$0xff]
          %v488 = vld [vmem:[%s442 + $0x10] sm:$0xff]
          %v489 = vld [vmem:[%s442 + $0x18] sm:$0xff]
          %v490 = vld [vmem:[%s442 + $0x20] sm:$0xff]
          %v491 = vld [vmem:[%s442 + $0x28] sm:$0xff]
          %v492 = vld [vmem:[%s442 + $0x30] sm:$0xff]
          %v493 = vld [vmem:[%s442 + $0x38] sm:$0xff]
          %495 = vset.pattern.permute.xlu0 0
          %496 = vperm.xlu0 %495, %v486
          %v497 = vpop.permute.xlu0 %496
          %500 = vset.pattern.permute.xlu0 0
          %501 = vperm.xlu0 %500, %v487
          %v502 = vpop.permute.xlu0 %501
          %505 = vset.pattern.permute.xlu0 0
          %506 = vperm.xlu0 %505, %v488
          %v507 = vpop.permute.xlu0 %506
          %510 = vset.pattern.permute.xlu0 0
          %511 = vperm.xlu0 %510, %v489
          %v512 = vpop.permute.xlu0 %511
          %515 = vset.pattern.permute.xlu0 0
          %516 = vperm.xlu0 %515, %v490
          %v517 = vpop.permute.xlu0 %516
          %520 = vset.pattern.permute.xlu0 0
          %521 = vperm.xlu0 %520, %v491
          %v522 = vpop.permute.xlu0 %521
          %525 = vset.pattern.permute.xlu0 0
          %526 = vperm.xlu0 %525, %v492
          %v527 = vpop.permute.xlu0 %526
          %530 = vset.pattern.permute.xlu0 0
          %531 = vperm.xlu0 %530, %v493
          %v532 = vpop.permute.xlu0 %531
          %v534 = vmul.f32 %v478, %v497
          %v535 = vmul.f32 %v479, %v502
          %v536 = vmul.f32 %v480, %v507
          %v537 = vmul.f32 %v481, %v512
          %v538 = vmul.f32 %v482, %v517
          %v539 = vmul.f32 %v483, %v522
          %v540 = vmul.f32 %v484, %v527
          %v541 = vmul.f32 %v485, %v532
          %v542 = vld [vmem:[%s354] sm:$0xff]
          %v543 = vld [vmem:[%s354 + $0x8] sm:$0xff]
          %v544 = vld [vmem:[%s354 + $0x10] sm:$0xff]
          %v545 = vld [vmem:[%s354 + $0x18] sm:$0xff]
          %v546 = vld [vmem:[%s354 + $0x20] sm:$0xff]
          %v547 = vld [vmem:[%s354 + $0x28] sm:$0xff]
          %v548 = vld [vmem:[%s354 + $0x30] sm:$0xff]
          %v549 = vld [vmem:[%s354 + $0x38] sm:$0xff]
          %v550 = vadd.f32 %v534, %v542
          %v551 = vadd.f32 %v535, %v543
          %v552 = vadd.f32 %v536, %v544
          %v553 = vadd.f32 %v537, %v545
          %v554 = vadd.f32 %v538, %v546
          %v555 = vadd.f32 %v539, %v547
          %v556 = vadd.f32 %v540, %v548
          %v557 = vadd.f32 %v541, %v549
          %558 = vst [vmem:[%s458] sm:$0xff] %v550
          %559 = vst [vmem:[%s458 + $0x8] sm:$0xff] %v551
          %560 = vst [vmem:[%s458 + $0x10] sm:$0xff] %v552
          %561 = vst [vmem:[%s458 + $0x18] sm:$0xff] %v553
          %562 = vst [vmem:[%s458 + $0x20] sm:$0xff] %v554
          %563 = vst [vmem:[%s458 + $0x28] sm:$0xff] %v555
          %564 = vst [vmem:[%s458 + $0x30] sm:$0xff] %v556
          %565 = vst [vmem:[%s458 + $0x38] sm:$0xff] %v557
          %566 = vst [vmem:[#allocation2] sm:$0xff] %v550
          %567 = vst [vmem:[#allocation2 + $0x8] sm:$0xff] %v551
          %568 = vst [vmem:[#allocation2 + $0x10] sm:$0xff] %v552
          %569 = vst [vmem:[#allocation2 + $0x18] sm:$0xff] %v553
          %570 = vst [vmem:[#allocation2 + $0x20] sm:$0xff] %v554
          %571 = vst [vmem:[#allocation2 + $0x28] sm:$0xff] %v555
          %572 = vst [vmem:[#allocation2 + $0x30] sm:$0xff] %v556
          %573 = vst [vmem:[#allocation2 + $0x38] sm:$0xff] %v557
        $region56: #{ext_transformer_encoder_forward.7} parent=39 // pred_fallthru
          _
        %v574 = vld [vmem:[#allocation2] sm:$0xff]
        %v575 = vld [vmem:[#allocation2 + $0x8] sm:$0xff]
        %v576 = vld [vmem:[#allocation2 + $0x10] sm:$0xff]
        %v577 = vld [vmem:[#allocation2 + $0x18] sm:$0xff]
        %v578 = vld [vmem:[#allocation2 + $0x20] sm:$0xff]
        %v579 = vld [vmem:[#allocation2 + $0x28] sm:$0xff]
        %v580 = vld [vmem:[#allocation2 + $0x30] sm:$0xff]
        %v581 = vld [vmem:[#allocation2 + $0x38] sm:$0xff]
        %v582 = vld [vmem:[%s449] sm:$0xff]
        %v583 = vld [vmem:[%s449 + $0x8] sm:$0xff]
        %v584 = vld [vmem:[%s449 + $0x10] sm:$0xff]
        %v585 = vld [vmem:[%s449 + $0x18] sm:$0xff]
        %v586 = vld [vmem:[%s449 + $0x20] sm:$0xff]
        %v587 = vld [vmem:[%s449 + $0x28] sm:$0xff]
        %v588 = vld [vmem:[%s449 + $0x30] sm:$0xff]
        %v589 = vld [vmem:[%s449 + $0x38] sm:$0xff]
        %v590 = vld [vmem:[%s449 + $0x40] sm:$0xff]
        %v591 = vld [vmem:[%s449 + $0x48] sm:$0xff]
        %v592 = vld [vmem:[%s449 + $0x50] sm:$0xff]
        %v593 = vld [vmem:[%s449 + $0x58] sm:$0xff]
        %v594 = vld [vmem:[%s449 + $0x60] sm:$0xff]
        %v595 = vld [vmem:[%s449 + $0x68] sm:$0xff]
        %v596 = vld [vmem:[%s449 + $0x70] sm:$0xff]
        %v597 = vld [vmem:[%s449 + $0x78] sm:$0xff]
        %v598 = vld [vmem:[%s363] sm:$0x1]
        %v600 = vperm.slane %v598, 0
        %602 = vmatpush.msra.mxu0 %v597
        %603 = vmatpush.msra.mxu0 %v596
        %604 = vmatpush.msra.mxu0 %v595
        %605 = vmatpush.msra.mxu0 %v594
        %606 = vmatpush.msra.mxu0 %v593
        %607 = vmatpush.msra.mxu0 %v592
        %608 = vmatpush.msra.mxu0 %v591
        %609 = vmatpush.msra.mxu0 %v590
        %610 = vmatpush.msra.mxu0 %v589
        %611 = vmatpush.msra.mxu0 %v588
        %612 = vmatpush.msra.mxu0 %v587
        %613 = vmatpush.msra.mxu0 %v586
        %614 = vmatpush.msra.mxu0 %v585
        %615 = vmatpush.msra.mxu0 %v584
        %616 = vmatpush.msra.mxu0 %v583
        %617 = vmatpush.msra.mxu0 %v582
        %618 = vmatmul.f32.gmra.mxu0 %v574
        %v619 = vpop.f32.mrf.mxu0
        %v620 = vadd.f32 %v600, %v619
        %621 = vmatmul.f32.gmra.mxu0 %v575
        %v622 = vpop.f32.mrf.mxu0
        %v623 = vadd.f32 %v600, %v622
        %624 = vmatmul.f32.gmra.mxu0 %v576
        %v625 = vpop.f32.mrf.mxu0
        %v626 = vadd.f32 %v600, %v625
        %627 = vmatmul.f32.gmra.mxu0 %v577
        %v628 = vpop.f32.mrf.mxu0
        %v629 = vadd.f32 %v600, %v628
        %630 = vmatmul.f32.gmra.mxu0 %v578
        %v631 = vpop.f32.mrf.mxu0
        %v632 = vadd.f32 %v600, %v631
        %633 = vmatmul.f32.gmra.mxu0 %v579
        %v634 = vpop.f32.mrf.mxu0
        %v635 = vadd.f32 %v600, %v634
        %636 = vmatmul.f32.gmra.mxu0 %v580
        %v637 = vpop.f32.mrf.mxu0
        %v638 = vadd.f32 %v600, %v637
        %639 = vmatmul.f32.gmra.mxu0 %v581
        %v640 = vpop.f32.mrf.mxu0
        %v641 = vadd.f32 %v600, %v640
        %642 = vdwg.mxu0
        %vm643 = vcmask 261120
        %644 = vst.msk [vmem:[%s472] sm:$0xff] %vm643, %v620
        %645 = vst.msk [vmem:[%s472 + $0x8] sm:$0xff] %vm643, %v623
        %646 = vst.msk [vmem:[%s472 + $0x10] sm:$0xff] %vm643, %v626
        %647 = vst.msk [vmem:[%s472 + $0x18] sm:$0xff] %vm643, %v629
        %648 = vst.msk [vmem:[%s472 + $0x20] sm:$0xff] %vm643, %v632
        %649 = vst.msk [vmem:[%s472 + $0x28] sm:$0xff] %vm643, %v635
        %650 = vst.msk [vmem:[%s472 + $0x30] sm:$0xff] %vm643, %v638
        %651 = vst.msk [vmem:[%s472 + $0x38] sm:$0xff] %vm643, %v641
        %s652 = smul.u32 8, %s30
        %p653 = scmp.lt.s32.totalorder %s29, 1
        %s654 = scalar_select %p653, %s29, 1
        %p655 = scmp.lt.s32.totalorder %s652, 31
        %s656 = scalar_select %p655, %s652, 31
        %s657 = smul.addr %s654, 32
        %s658 = sadd.s32 %s656, %s657
        %s659 = smul.addr %s658, 8
        %s660 = scalar_lea.vmem %s5, %s659
        %s661 = smul.u32 8, %s30
        %p662 = scmp.lt.s32.totalorder %s29, 1
        %s663 = scalar_select %p662, %s29, 1
        %p664 = scmp.lt.s32.totalorder %s31, 11
        %s665 = scalar_select %p664, %s31, 11
        %p666 = scmp.lt.s32.totalorder %s661, 31
        %s667 = scalar_select %p666, %s661, 31
        %s668 = smul.addr %s665, 32
        %s669 = sadd.s32 %s667, %s668
        %s670 = smul.addr %s663, 384
        %s671 = sadd.s32 %s669, %s670
        %s672 = smul.addr %s671, 8
        %s673 = scalar_lea.vmem %s6, %s672
        // Predicated region
        $region57: #{ext_transformer_encoder_forward.7} parent=39 // pred_check
          %p674 = pneg %p197
        $region58: #{ext_transformer_encoder_forward.7} parent=39 // pred_check_branch
          %676 = sbr.rel (%p674) target = $region60
        $region59: #{ext_transformer_encoder_forward.7} parent=39 // pred_region
          %s677 = smul.u32 8, %s30
        $region60: #{ext_transformer_encoder_forward.7} parent=39 // pred_fallthru
          _
        // Predicated region
        $region61: #{ext_transformer_encoder_forward.7} parent=39 // pred_check
          %p678 = pneg %p227
        $region62: #{ext_transformer_encoder_forward.7} parent=39 // pred_check_branch
          %680 = sbr.rel (%p678) target = $region64
        $region63: #{ext_transformer_encoder_forward.7} parent=39 // pred_region
          %s681 = smul.u32 8, %s30
        $region64: #{ext_transformer_encoder_forward.7} parent=39 // pred_fallthru
          _
      $region40: #{ext_transformer_encoder_forward.7} parent=5 // pred_fallthru
        _
      %p682 = scmp.le.s32.totalorder 2, %s19
      // Predicated region
      $region65: #{ext_transformer_encoder_forward.7} parent=5 // pred_check
        %p683 = pneg %p682
      $region66: #{ext_transformer_encoder_forward.7} parent=5 // pred_check_branch
        %685 = sbr.rel (%p683) target = $region68
      $region67: #{ext_transformer_encoder_forward.7} parent=5 // pred_region
        %s686 = ssub.s32 %s19, 2
        // Predicated region
        $region69: #{ext_transformer_encoder_forward.7} parent=67 // pred_check
          %p687 = pneg %p203
        $region70: #{ext_transformer_encoder_forward.7} parent=67 // pred_check_branch
          %689 = sbr.rel (%p687) target = $region72
        $region71: #{ext_transformer_encoder_forward.7} parent=67 // pred_region
          %s690 = smul.u32 8, %s33
          %p691 = scmp.lt.s32.totalorder %s32, 1
          %s692 = scalar_select %p691, %s32, 1
          %p693 = scmp.lt.s32.totalorder %s690, 31
          %s694 = scalar_select %p693, %s690, 31
          %s695 = smul.addr %s692, 32
          %s696 = sadd.s32 %s694, %s695
          %s697 = smul.addr %s696, 8
          %s698 = scalar_lea.vmem %s5, %s697
        $region72: #{ext_transformer_encoder_forward.7} parent=67 // pred_fallthru
          _
        // Predicated region
        $region73: #{ext_transformer_encoder_forward.7} parent=67 // pred_check
          %p699 = pneg %p233
        $region74: #{ext_transformer_encoder_forward.7} parent=67 // pred_check_branch
          %701 = sbr.rel (%p699) target = $region76
        $region75: #{ext_transformer_encoder_forward.7} parent=67 // pred_region
          %s702 = smul.u32 8, %s33
          %p703 = scmp.lt.s32.totalorder %s32, 1
          %s704 = scalar_select %p703, %s32, 1
          %p705 = scmp.lt.s32.totalorder %s34, 11
          %s706 = scalar_select %p705, %s34, 11
          %p707 = scmp.lt.s32.totalorder %s702, 31
          %s708 = scalar_select %p707, %s702, 31
          %s709 = smul.addr %s706, 32
          %s710 = sadd.s32 %s708, %s709
          %s711 = smul.addr %s704, 384
          %s712 = sadd.s32 %s710, %s711
          %s713 = smul.addr %s712, 8
          %s714 = scalar_lea.vmem %s6, %s713
        $region76: #{ext_transformer_encoder_forward.7} parent=67 // pred_fallthru
          _
      $region68: #{ext_transformer_encoder_forward.7} parent=5 // pred_fallthru
        _
    $region6: #{ext_transformer_encoder_forward.7} parent=1 // loop_footer
      %s23 = sadd.s32 1, %s19
    $region7: #{ext_transformer_encoder_forward.7} parent=1 // loop_footer_branch
      %18 = sbr.rel target = $region3
    $region8: #{ext_transformer_encoder_forward.7} parent=1 // loop_exit
      _
    %715 = vsyncpa [#allocation4], 1
    %s716 = scalar_lea.sflag [#allocation4], 1
    %717 = vsyncpa %s716, 1
    %718 = vsyncpa [#allocation6], 1
    %s719 = scalar_lea.sflag [#allocation6], 1
    %720 = vsyncpa %s719, 1

// kernel: ext_transformer_encoder_forward.10
$region0: #{ext_transformer_encoder_forward.10}
  #allocation0 [shape = 'u32[]', space=smem, size = 0x4, offset = 0x4, fixed_abs, tag = 'smem constant byte address 0x4 - core index']
  #allocation1 [shape = 'u32[72,128]{1,0:T(1,128)}', space=vmem, size = 0x9000, scoped, tag = 'internal scratch']
  #allocation2 [shape = 'f32[64,128]{1,0:T(8,128)}', space=vmem, size = 0x8000, scoped, tag = 'scratch operand']
  %s0 = inlined_call_operand.vmem [shape: f32[2,256,128], index: 0, kind: input, shape index: {}]
  %s1 = inlined_call_operand.hbm [shape: f32[1,128], index: 1, kind: input, shape index: {}]
  %s2 = inlined_call_operand.hbm [shape: f32[1,128], index: 2, kind: input, shape index: {}]
  %s3 = inlined_call_operand.vmem [shape: f32[12,128,32], index: 3, kind: input, shape index: {}]
  %s4 = inlined_call_operand.hbm [shape: f32[12,1,32], index: 4, kind: input, shape index: {}]
  %s5 = inlined_call_operand.vmem [shape: f32[2,12,256,32], index: 5, kind: output, shape index: {}]
  %s6 = sld [smem:[#allocation0]]
  $region69: #{ext_transformer_encoder_forward.10} parent=0
    _
  %s8 = ssub.s32 1, %s6
  %s9 = scalar_select 0, %s8, %s6
  $region1: #{ext_transformer_encoder_forward.10} parent=0
    #allocation3 [shape = 'u8[512]{0}', space=vmem, size = 0x400, scoped, tag = 'input window, operand 1, single buffered']
    #allocation4 [shape = 's32[2]{0}', space=sflag, size = 0x8, scoped, tag = 'scoped memory for ext_transformer_encoder_forward.10']
    #allocation5 [shape = 'u8[512]{0}', space=vmem, size = 0x400, scoped, tag = 'input window, operand 2, single buffered']
    #allocation6 [shape = 's32[1]{0}', space=sflag, size = 0x4, scoped, tag = 'scoped memory for ext_transformer_encoder_forward.10']
    #allocation7 [shape = 'u8[1024]{0}', space=vmem, size = 0x400, scoped, tag = 'input window, operand 4']
    %10 = vsyncpa [#allocation4], 0
    %11 = vsyncpa [#allocation6], 0
    loop: start=0, step=1, limit=98
    $region2: #{ext_transformer_encoder_forward.10} parent=1 // loop_pre_header
      _
    $region3: #{ext_transformer_encoder_forward.10} parent=1 // loop_header
      %s13 = sphi 0, %s17
      %p14 = scmp.ge.s32.totalorder %s13, 98
      %s20 = sphi 0, %s39
      %s21 = sphi 0, %s35
      %s22 = sphi 0, %s31
      %s23 = sphi 0, %s20
      %s24 = sphi 0, %s21
      %s25 = sphi 0, %s22
      %s26 = sphi 0, %s23
      %s27 = sphi 0, %s24
      %s28 = sphi 0, %s25
      %s44 = sphi 0, %s46
      %s47 = sphi 0, %s44
      %s48 = sphi 0, %s47
      %s64 = sphi 0, %s48
      %s68 = sphi 0, %s68
      %s70 = sphi 0, %s68
      %s71 = sphi 0, %s70
      %s85 = sphi 0, %s71
      %s89 = sphi 0, %s89
      %s91 = sphi 0, %s89
      %s92 = sphi 0, %s91
      %s106 = sphi 0, %s92
      %s112 = sphi 0, %s114
      %s115 = sphi 0, %s112
      %s116 = sphi 0, %s115
      %s132 = sphi 0, %s116
      %s138 = sphi 0, %s140
      %s141 = sphi 0, %s138
      %s142 = sphi 0, %s141
      %s158 = sphi 0, %s142
      %s168 = sphi 0, %s170
      %s171 = sphi 0, %s168
      %s172 = sphi 0, %s171
      %s188 = sphi 0, %s172
    $region4: #{ext_transformer_encoder_forward.10} parent=1 // loop_header_branch
      %16 = sbr.rel (%p14) target = $region8
    $region5: #{ext_transformer_encoder_forward.10} parent=1 // loop_body
      %s18 = ssub.s32 %s13, 1
      %s19 = ssub.s32 %s13, 2
      %s29 = sadd.s32 1, %s22
      %p30 = scmp.ge.s32.totalorder %s29, 12
      %s31 = scalar_select %p30, 0, %s29
      %s32 = sadd.s32 1, %s21
      %s33 = scalar_select %p30, %s32, %s21
      %p34 = scmp.ge.s32.totalorder %s33, 4
      %s35 = scalar_select %p34, 0, %s33
      %s36 = sadd.s32 1, %s20
      %s37 = scalar_select %p34, %s36, %s20
      %p38 = scmp.ge.s32.totalorder %s37, 2
      %s39 = scalar_select %p38, 0, %s37
      %s40 = ssub.s32 %s20, %s39
      %s41 = ssub.s32 %s21, %s35
      %s42 = sor.u32 %s40, %s41
      %p43 = scmp.eq.s32.totalorder %s42, 0
      %s45 = sadd.s32 %s44, 1
      %s46 = scalar_select %p43, %s44, %s45
      %p49 = pneg %p43
      %p50 = scmp.eq.s32.totalorder %s13, 95
      %p51 = por %p49, %p50
      %p52 = scmp.ne.s32.totalorder %s44, %s47
      %p53 = scmp.eq.s32.totalorder %s13, 0
      %p54 = por %p52, %p53
      %p55 = scmp.ne.s32.totalorder %s44, %s47
      %p56 = scmp.eq.s32.totalorder %s18, 95
      %p57 = por %p55, %p56
      %p58 = scmp.ne.s32.totalorder %s47, %s48
      %p59 = scmp.eq.s32.totalorder %s18, 0
      %p60 = por %p58, %p59
      %p61 = scmp.ne.s32.totalorder %s47, %s48
      %p62 = scmp.eq.s32.totalorder %s19, 95
      %p63 = por %p61, %p62
      %p65 = scmp.ne.s32.totalorder %s48, %s64
      %p66 = scmp.eq.s32.totalorder %s19, 0
      %p67 = por %p65, %p66
      %s69 = sadd.s32 %s68, 1
      %p72 = scmp.eq.s32.totalorder %s13, 95
      %p73 = scmp.ne.s32.totalorder %s68, %s70
      %p74 = scmp.eq.s32.totalorder %s13, 0
      %p75 = por %p73, %p74
      %p76 = scmp.ne.s32.totalorder %s68, %s70
      %p77 = scmp.eq.s32.totalorder %s18, 95
      %p78 = por %p76, %p77
      %p79 = scmp.ne.s32.totalorder %s70, %s71
      %p80 = scmp.eq.s32.totalorder %s18, 0
      %p81 = por %p79, %p80
      %p82 = scmp.ne.s32.totalorder %s70, %s71
      %p83 = scmp.eq.s32.totalorder %s19, 95
      %p84 = por %p82, %p83
      %p86 = scmp.ne.s32.totalorder %s71, %s85
      %p87 = scmp.eq.s32.totalorder %s19, 0
      %p88 = por %p86, %p87
      %s90 = sadd.s32 %s89, 1
      %p93 = scmp.eq.s32.totalorder %s13, 95
      %p94 = scmp.ne.s32.totalorder %s89, %s91
      %p95 = scmp.eq.s32.totalorder %s13, 0
      %p96 = por %p94, %p95
      %p97 = scmp.ne.s32.totalorder %s89, %s91
      %p98 = scmp.eq.s32.totalorder %s18, 95
      %p99 = por %p97, %p98
      %p100 = scmp.ne.s32.totalorder %s91, %s92
      %p101 = scmp.eq.s32.totalorder %s18, 0
      %p102 = por %p100, %p101
      %p103 = scmp.ne.s32.totalorder %s91, %s92
      %p104 = scmp.eq.s32.totalorder %s19, 95
      %p105 = por %p103, %p104
      %p107 = scmp.ne.s32.totalorder %s92, %s106
      %p108 = scmp.eq.s32.totalorder %s19, 0
      %p109 = por %p107, %p108
      %s110 = ssub.s32 %s22, %s31
      %p111 = scmp.eq.s32.totalorder %s110, 0
      %s113 = sadd.s32 %s112, 1
      %s114 = scalar_select %p111, %s112, %s113
      %p117 = pneg %p111
      %p118 = scmp.eq.s32.totalorder %s13, 95
      %p119 = por %p117, %p118
      %p120 = scmp.ne.s32.totalorder %s112, %s115
      %p121 = scmp.eq.s32.totalorder %s13, 0
      %p122 = por %p120, %p121
      %p123 = scmp.ne.s32.totalorder %s112, %s115
      %p124 = scmp.eq.s32.totalorder %s18, 95
      %p125 = por %p123, %p124
      %p126 = scmp.ne.s32.totalorder %s115, %s116
      %p127 = scmp.eq.s32.totalorder %s18, 0
      %p128 = por %p126, %p127
      %p129 = scmp.ne.s32.totalorder %s115, %s116
      %p130 = scmp.eq.s32.totalorder %s19, 95
      %p131 = por %p129, %p130
      %p133 = scmp.ne.s32.totalorder %s116, %s132
      %p134 = scmp.eq.s32.totalorder %s19, 0
      %p135 = por %p133, %p134
      %s136 = ssub.s32 %s22, %s31
      %p137 = scmp.eq.s32.totalorder %s136, 0
      %s139 = sadd.s32 %s138, 1
      %s140 = scalar_select %p137, %s138, %s139
      %p143 = pneg %p137
      %p144 = scmp.eq.s32.totalorder %s13, 95
      %p145 = por %p143, %p144
      %p146 = scmp.ne.s32.totalorder %s138, %s141
      %p147 = scmp.eq.s32.totalorder %s13, 0
      %p148 = por %p146, %p147
      %p149 = scmp.ne.s32.totalorder %s138, %s141
      %p150 = scmp.eq.s32.totalorder %s18, 95
      %p151 = por %p149, %p150
      %p152 = scmp.ne.s32.totalorder %s141, %s142
      %p153 = scmp.eq.s32.totalorder %s18, 0
      %p154 = por %p152, %p153
      %p155 = scmp.ne.s32.totalorder %s141, %s142
      %p156 = scmp.eq.s32.totalorder %s19, 95
      %p157 = por %p155, %p156
      %p159 = scmp.ne.s32.totalorder %s142, %s158
      %p160 = scmp.eq.s32.totalorder %s19, 0
      %p161 = por %p159, %p160
      %s162 = ssub.s32 %s20, %s39
      %s163 = ssub.s32 %s22, %s31
      %s164 = sor.u32 %s162, %s163
      %s165 = ssub.s32 %s21, %s35
      %s166 = sor.u32 %s164, %s165
      %p167 = scmp.eq.s32.totalorder %s166, 0
      %s169 = sadd.s32 %s168, 1
      %s170 = scalar_select %p167, %s168, %s169
      %p173 = pneg %p167
      %p174 = scmp.eq.s32.totalorder %s13, 95
      %p175 = por %p173, %p174
      %p176 = scmp.ne.s32.totalorder %s168, %s171
      %p177 = scmp.eq.s32.totalorder %s13, 0
      %p178 = por %p176, %p177
      %p179 = scmp.ne.s32.totalorder %s168, %s171
      %p180 = scmp.eq.s32.totalorder %s18, 95
      %p181 = por %p179, %p180
      %p182 = scmp.ne.s32.totalorder %s171, %s172
      %p183 = scmp.eq.s32.totalorder %s18, 0
      %p184 = por %p182, %p183
      %p185 = scmp.ne.s32.totalorder %s171, %s172
      %p186 = scmp.eq.s32.totalorder %s19, 95
      %p187 = por %p185, %p186
      %p189 = scmp.ne.s32.totalorder %s172, %s188
      %p190 = scmp.eq.s32.totalorder %s19, 0
      %p191 = por %p189, %p190
      %p192 = scmp.le.s32.totalorder 1, %s13
      %p193 = scmp.lt.s32.totalorder %s13, 97
      %p194 = pnand %p192, %p193
      %p195 = pneg %p194
      // Predicated region
      $region9: #{ext_transformer_encoder_forward.10} parent=5 // pred_check
        _
      $region10: #{ext_transformer_encoder_forward.10} parent=5 // pred_check_branch
        %197 = sbr.rel (%p194) target = $region12
      $region11: #{ext_transformer_encoder_forward.10} parent=5 // pred_region
        %s198 = ssub.s32 %s13, 1
        // Predicated region
        $region13: #{ext_transformer_encoder_forward.10} parent=11 // pred_check
          %p199 = pneg %p81
        $region14: #{ext_transformer_encoder_forward.10} parent=11 // pred_check_branch
          %201 = sbr.rel (%p199) target = $region16
        $region15: #{ext_transformer_encoder_forward.10} parent=11 // pred_region
          %203 = vsyncadd [#allocation4], 0
          %s205 = sshll.u32 %s1, 4
          %s206 = int_to_ptr.hbm [resolvable:$true] %s205
          %s207 = sshll.u32 [#allocation3], 4
          %s208 = int_to_ptr.vmem [resolvable:$true] %s207
          %210 = dma.hbm_to_vmem [thread:$0]  %s206, 16, %s208, [#allocation4]
        $region16: #{ext_transformer_encoder_forward.10} parent=11 // pred_fallthru
          _
        // Predicated region
        $region17: #{ext_transformer_encoder_forward.10} parent=11 // pred_check
          %p211 = pneg %p102
        $region18: #{ext_transformer_encoder_forward.10} parent=11 // pred_check_branch
          %213 = sbr.rel (%p211) target = $region20
        $region19: #{ext_transformer_encoder_forward.10} parent=11 // pred_region
          %215 = vsyncadd [#allocation6], 0
          %s217 = sshll.u32 %s2, 4
          %s218 = int_to_ptr.hbm [resolvable:$true] %s217
          %s219 = sshll.u32 [#allocation5], 4
          %s220 = int_to_ptr.vmem [resolvable:$true] %s219
          %222 = dma.hbm_to_vmem [thread:$0]  %s218, 16, %s220, [#allocation6]
        $region20: #{ext_transformer_encoder_forward.10} parent=11 // pred_fallthru
          _
      $region12: #{ext_transformer_encoder_forward.10} parent=5 // pred_fallthru
        _
      %p223 = scmp.lt.s32.totalorder %s13, 96
      // Predicated region
      $region21: #{ext_transformer_encoder_forward.10} parent=5 // pred_check
        %p224 = pneg %p223
      $region22: #{ext_transformer_encoder_forward.10} parent=5 // pred_check_branch
        %226 = sbr.rel (%p224) target = $region24
      $region23: #{ext_transformer_encoder_forward.10} parent=5 // pred_region
        // Predicated region
        $region25: #{ext_transformer_encoder_forward.10} parent=23 // pred_check
          %p227 = pneg %p54
        $region26: #{ext_transformer_encoder_forward.10} parent=23 // pred_check_branch
          %229 = sbr.rel (%p227) target = $region28
        $region27: #{ext_transformer_encoder_forward.10} parent=23 // pred_region
          %s230 = smul.u32 8, %s21
          %p231 = scmp.lt.s32.totalorder %s20, 1
          %s232 = scalar_select %p231, %s20, 1
          %p233 = scmp.lt.s32.totalorder %s230, 31
          %s234 = scalar_select %p233, %s230, 31
          %s235 = smul.addr %s232, 32
          %s236 = sadd.s32 %s234, %s235
          %s237 = smul.addr %s236, 8
          %s238 = scalar_lea.vmem %s0, %s237
          %s239 = smul.u32 8, %s21
        $region28: #{ext_transformer_encoder_forward.10} parent=23 // pred_fallthru
          _
        // Predicated region
        $region29: #{ext_transformer_encoder_forward.10} parent=23 // pred_check
          %p240 = pneg %p122
        $region30: #{ext_transformer_encoder_forward.10} parent=23 // pred_check_branch
          %242 = sbr.rel (%p240) target = $region32
        $region31: #{ext_transformer_encoder_forward.10} parent=23 // pred_region
          %p243 = scmp.lt.s32.totalorder %s22, 11
          %s244 = scalar_select %p243, %s22, 11
          %s245 = smul.addr %s244, 16
          %s246 = smul.addr %s245, 8
          %s247 = scalar_lea.vmem %s3, %s246
        $region32: #{ext_transformer_encoder_forward.10} parent=23 // pred_fallthru
          _
        // Predicated region
        $region33: #{ext_transformer_encoder_forward.10} parent=23 // pred_check
          %p248 = pneg %p148
        $region34: #{ext_transformer_encoder_forward.10} parent=23 // pred_check_branch
          %250 = sbr.rel (%p248) target = $region36
        $region35: #{ext_transformer_encoder_forward.10} parent=23 // pred_region
          %s251 = sand.u32 %s13, 1
          %s252 = scalar_lea.sflag [#allocation4], %s251
          %s253 = sand.u32 %s138, 1
          %s254 = scalar_lea.vmem [#allocation7], %s253
          %256 = vsyncadd %s252, 0
          %s257 = scalar_lea.hbm %s4, %s22
          %s259 = sshll.u32 %s257, 4
          %s260 = int_to_ptr.hbm [resolvable:$true] %s259
          %s261 = sshll.u32 %s254, 4
          %s262 = int_to_ptr.vmem [resolvable:$true] %s261
          %264 = dma.hbm_to_vmem [thread:$0]  %s260, 16, %s262, %s252
        $region36: #{ext_transformer_encoder_forward.10} parent=23 // pred_fallthru
          _
      $region24: #{ext_transformer_encoder_forward.10} parent=5 // pred_fallthru
        _
      %p265 = scmp.le.s32.totalorder 1, %s13
      %p266 = scmp.lt.s32.totalorder %s13, 97
      %p267 = pnand %p265, %p266
      %p268 = pneg %p267
      // Predicated region
      $region37: #{ext_transformer_encoder_forward.10} parent=5 // pred_check
        _
      $region38: #{ext_transformer_encoder_forward.10} parent=5 // pred_check_branch
        %270 = sbr.rel (%p267) target = $region40
      $region39: #{ext_transformer_encoder_forward.10} parent=5 // pred_region
        %s271 = ssub.s32 %s13, 1
        // Predicated region
        $region41: #{ext_transformer_encoder_forward.10} parent=39 // pred_check
          %p272 = pneg %p81
        $region42: #{ext_transformer_encoder_forward.10} parent=39 // pred_check_branch
          %274 = sbr.rel (%p272) target = $region44
        $region43: #{ext_transformer_encoder_forward.10} parent=39 // pred_region
          %276 = dma.done [#allocation4], 16
        $region44: #{ext_transformer_encoder_forward.10} parent=39 // pred_fallthru
          _
        // Predicated region
        $region45: #{ext_transformer_encoder_forward.10} parent=39 // pred_check
          %p277 = pneg %p102
        $region46: #{ext_transformer_encoder_forward.10} parent=39 // pred_check_branch
          %279 = sbr.rel (%p277) target = $region48
        $region47: #{ext_transformer_encoder_forward.10} parent=39 // pred_region
          %281 = dma.done [#allocation6], 16
        $region48: #{ext_transformer_encoder_forward.10} parent=39 // pred_fallthru
          _
        %s282 = sand.u32 %s18, 1
        %s283 = scalar_lea.sflag [#allocation4], %s282
        %s284 = sand.u32 %s141, 1
        %s285 = scalar_lea.vmem [#allocation7], %s284
        // Predicated region
        $region49: #{ext_transformer_encoder_forward.10} parent=39 // pred_check
          %p286 = pneg %p154
        $region50: #{ext_transformer_encoder_forward.10} parent=39 // pred_check_branch
          %288 = sbr.rel (%p286) target = $region52
        $region51: #{ext_transformer_encoder_forward.10} parent=39 // pred_region
          %290 = dma.done %s283, 16
        $region52: #{ext_transformer_encoder_forward.10} parent=39 // pred_fallthru
          _
        %s291 = smul.u32 8, %s24
        %p292 = scmp.lt.s32.totalorder %s23, 1
        %s293 = scalar_select %p292, %s23, 1
        %p294 = scmp.lt.s32.totalorder %s291, 31
        %s295 = scalar_select %p294, %s291, 31
        %s296 = smul.addr %s293, 32
        %s297 = sadd.s32 %s295, %s296
        %s298 = smul.addr %s297, 8
        %s299 = scalar_lea.vmem %s0, %s298
        %p300 = pneg %p60
        %p301 = pneg %p57
        %p302 = pneg %p81
        %p303 = pneg %p78
        %p304 = pneg %p102
        %p305 = pneg %p99
        %p306 = scmp.lt.s32.totalorder %s25, 11
        %s307 = scalar_select %p306, %s25, 11
        %s308 = smul.addr %s307, 16
        %s309 = smul.addr %s308, 8
        %s310 = scalar_lea.vmem %s3, %s309
        %p311 = pneg %p128
        %p312 = pneg %p125
        %s313 = sand.u32 %s18, 1
        %s314 = scalar_lea.sflag [#allocation4], %s313
        %s315 = sand.u32 %s141, 1
        %s316 = scalar_lea.vmem [#allocation7], %s315
        %p317 = pneg %p154
        %p318 = pneg %p151
        %p319 = pneg %p184
        %p320 = pneg %p181
        %s321 = smul.u32 8, %s24
        %p322 = scmp.lt.s32.totalorder %s23, 1
        %s323 = scalar_select %p322, %s23, 1
        %p324 = scmp.lt.s32.totalorder %s25, 11
        %s325 = scalar_select %p324, %s25, 11
        %p326 = scmp.lt.s32.totalorder %s321, 31
        %s327 = scalar_select %p326, %s321, 31
        %s328 = smul.addr %s325, 32
        %s329 = sadd.s32 %s327, %s328
        %s330 = smul.addr %s323, 384
        %s331 = sadd.s32 %s329, %s330
        %s332 = smul.addr %s331, 8
        %s333 = scalar_lea.vmem %s5, %s332
        %s334 = smul.u32 8, %s24
        %p335 = scmp.lt.s32.totalorder %s23, 1
        %s336 = scalar_select %p335, %s23, 1
        %p337 = scmp.lt.s32.totalorder %s334, 31
        %s338 = scalar_select %p337, %s334, 31
        %s339 = smul.addr %s336, 32
        %s340 = sadd.s32 %s338, %s339
        %s341 = smul.addr %s340, 8
        %s342 = scalar_lea.vmem %s0, %s341
        %s343 = smul.u32 8, %s24
        %p344 = scmp.lt.s32.totalorder %s25, 11
        %s345 = scalar_select %p344, %s25, 11
        %s346 = smul.addr %s345, 16
        %s347 = smul.addr %s346, 8
        %s348 = scalar_lea.vmem %s3, %s347
        %s349 = smul.u32 8, %s24
        %p350 = scmp.lt.s32.totalorder %s23, 1
        %s351 = scalar_select %p350, %s23, 1
        %p352 = scmp.lt.s32.totalorder %s25, 11
        %s353 = scalar_select %p352, %s25, 11
        %p354 = scmp.lt.s32.totalorder %s349, 31
        %s355 = scalar_select %p354, %s349, 31
        %s356 = smul.addr %s353, 32
        %s357 = sadd.s32 %s355, %s356
        %s358 = smul.addr %s351, 384
        %s359 = sadd.s32 %s357, %s358
        %s360 = smul.addr %s359, 8
        %s361 = scalar_lea.vmem %s5, %s360
        %s362 = smul.u32 8, %s24
        %p363 = scmp.eq.s32.totalorder %s25, 0
        // Predicated region
        $region53: #{ext_transformer_encoder_forward.10} parent=39 // pred_check
          %p364 = pneg %p363
        $region54: #{ext_transformer_encoder_forward.10} parent=39 // pred_check_branch
          %366 = sbr.rel (%p364) target = $region56
        $region55: #{ext_transformer_encoder_forward.10} parent=39 // pred_region
          %v367 = vld [vmem:[%s342] sm:$0xff]
          %v368 = vld [vmem:[%s342 + $0x8] sm:$0xff]
          %v369 = vld [vmem:[%s342 + $0x10] sm:$0xff]
          %v370 = vld [vmem:[%s342 + $0x18] sm:$0xff]
          %v371 = vld [vmem:[%s342 + $0x20] sm:$0xff]
          %v372 = vld [vmem:[%s342 + $0x28] sm:$0xff]
          %v373 = vld [vmem:[%s342 + $0x30] sm:$0xff]
          %v374 = vld [vmem:[%s342 + $0x38] sm:$0xff]
          %v375 = vld [vmem:[#allocation3] sm:$0x1]
          %v376 = vld [vmem:[#allocation5] sm:$0x1]
          %377 = vadd.xlane.f32.xlu0 %v367
          %v378 = vpop.xlane.xlu0 %377
          %379 = vadd.xlane.f32.xlu0 %v368
          %v380 = vpop.xlane.xlu0 %379
          %381 = vadd.xlane.f32.xlu0 %v369
          %v382 = vpop.xlane.xlu0 %381
          %383 = vadd.xlane.f32.xlu0 %v370
          %v384 = vpop.xlane.xlu0 %383
          %385 = vadd.xlane.f32.xlu0 %v371
          %v386 = vpop.xlane.xlu0 %385
          %387 = vadd.xlane.f32.xlu0 %v372
          %v388 = vpop.xlane.xlu0 %387
          %389 = vadd.xlane.f32.xlu0 %v373
          %v390 = vpop.xlane.xlu0 %389
          %391 = vadd.xlane.f32.xlu0 %v374
          %v392 = vpop.xlane.xlu0 %391
          %v393 = vrcp.pop 128.0
          %v394 = vmul.f32 128.0, %v393
          %v395 = vsub.f32 1.0, %v394
          %v396 = vmul.f32 %v393, %v395
          %v397 = vadd.f32 %v393, %v396
          %vm398 = vweird.f32 %v393
          %v399 = vsel %vm398, %v393, %v397
          %v400 = vmul.f32 %v378, %v399
          %v401 = vmul.f32 %v380, %v399
          %v402 = vmul.f32 %v382, %v399
          %v403 = vmul.f32 %v384, %v399
          %v404 = vmul.f32 %v386, %v399
          %v405 = vmul.f32 %v388, %v399
          %v406 = vmul.f32 %v390, %v399
          %v407 = vmul.f32 %v392, %v399
          %v408 = vsub.f32 %v367, %v400
          %v409 = vsub.f32 %v368, %v401
          %v410 = vsub.f32 %v369, %v402
          %v411 = vsub.f32 %v370, %v403
          %v412 = vsub.f32 %v371, %v404
          %v413 = vsub.f32 %v372, %v405
          %v414 = vsub.f32 %v373, %v406
          %v415 = vsub.f32 %v374, %v407
          %v416 = vmul.f32 %v408, %v408
          %v417 = vmul.f32 %v409, %v409
          %v418 = vmul.f32 %v410, %v410
          %v419 = vmul.f32 %v411, %v411
          %v420 = vmul.f32 %v412, %v412
          %v421 = vmul.f32 %v413, %v413
          %v422 = vmul.f32 %v414, %v414
          %v423 = vmul.f32 %v415, %v415
          %424 = vadd.xlane.f32.xlu0 %v416
          %v425 = vpop.xlane.xlu0 %424
          %426 = vadd.xlane.f32.xlu0 %v417
          %v427 = vpop.xlane.xlu0 %426
          %428 = vadd.xlane.f32.xlu0 %v418
          %v429 = vpop.xlane.xlu0 %428
          %430 = vadd.xlane.f32.xlu0 %v419
          %v431 = vpop.xlane.xlu0 %430
          %432 = vadd.xlane.f32.xlu0 %v420
          %v433 = vpop.xlane.xlu0 %432
          %434 = vadd.xlane.f32.xlu0 %v421
          %v435 = vpop.xlane.xlu0 %434
          %436 = vadd.xlane.f32.xlu0 %v422
          %v437 = vpop.xlane.xlu0 %436
          %438 = vadd.xlane.f32.xlu0 %v423
          %v439 = vpop.xlane.xlu0 %438
          %v440 = vmul.f32 %v425, %v399
          %v441 = vmul.f32 %v427, %v399
          %v442 = vmul.f32 %v429, %v399
          %v443 = vmul.f32 %v431, %v399
          %v444 = vmul.f32 %v433, %v399
          %v445 = vmul.f32 %v435, %v399
          %v446 = vmul.f32 %v437, %v399
          %v447 = vmul.f32 %v439, %v399
          %v448 = vadd.f32 %v440, 1e-06
          %v449 = vadd.f32 %v441, 1e-06
          %v450 = vadd.f32 %v442, 1e-06
          %v451 = vadd.f32 %v443, 1e-06
          %v452 = vadd.f32 %v444, 1e-06
          %v453 = vadd.f32 %v445, 1e-06
          %v454 = vadd.f32 %v446, 1e-06
          %v455 = vadd.f32 %v447, 1e-06
          %v456 = vrsqrt.pop %v448
          %v457 = vmul.f32 %v456, %v448
          %v458 = vmul.f32 %v457, %v456
          %v459 = vmul.f32 0.5, %v458
          %v460 = vsub.f32 1.5, %v459
          %v461 = vmul.f32 %v456, %v460
          %vm462 = vweird.f32 %v448
          %vm463 = vweird.f32 %v456
          %vm464 = vmor %vm462, %vm463
          %v465 = vsel %vm464, %v456, %v461
          %v466 = vrsqrt.pop %v449
          %v467 = vmul.f32 %v466, %v449
          %v468 = vmul.f32 %v467, %v466
          %v469 = vmul.f32 0.5, %v468
          %v470 = vsub.f32 1.5, %v469
          %v471 = vmul.f32 %v466, %v470
          %vm472 = vweird.f32 %v449
          %vm473 = vweird.f32 %v466
          %vm474 = vmor %vm472, %vm473
          %v475 = vsel %vm474, %v466, %v471
          %v476 = vrsqrt.pop %v450
          %v477 = vmul.f32 %v476, %v450
          %v478 = vmul.f32 %v477, %v476
          %v479 = vmul.f32 0.5, %v478
          %v480 = vsub.f32 1.5, %v479
          %v481 = vmul.f32 %v476, %v480
          %vm482 = vweird.f32 %v450
          %vm483 = vweird.f32 %v476
          %vm484 = vmor %vm482, %vm483
          %v485 = vsel %vm484, %v476, %v481
          %v486 = vrsqrt.pop %v451
          %v487 = vmul.f32 %v486, %v451
          %v488 = vmul.f32 %v487, %v486
          %v489 = vmul.f32 0.5, %v488
          %v490 = vsub.f32 1.5, %v489
          %v491 = vmul.f32 %v486, %v490
          %vm492 = vweird.f32 %v451
          %vm493 = vweird.f32 %v486
          %vm494 = vmor %vm492, %vm493
          %v495 = vsel %vm494, %v486, %v491
          %v496 = vrsqrt.pop %v452
          %v497 = vmul.f32 %v496, %v452
          %v498 = vmul.f32 %v497, %v496
          %v499 = vmul.f32 0.5, %v498
          %v500 = vsub.f32 1.5, %v499
          %v501 = vmul.f32 %v496, %v500
          %vm502 = vweird.f32 %v452
          %vm503 = vweird.f32 %v496
          %vm504 = vmor %vm502, %vm503
          %v505 = vsel %vm504, %v496, %v501
          %v506 = vrsqrt.pop %v453
          %v507 = vmul.f32 %v506, %v453
          %v508 = vmul.f32 %v507, %v506
          %v509 = vmul.f32 0.5, %v508
          %v510 = vsub.f32 1.5, %v509
          %v511 = vmul.f32 %v506, %v510
          %vm512 = vweird.f32 %v453
          %vm513 = vweird.f32 %v506
          %vm514 = vmor %vm512, %vm513
          %v515 = vsel %vm514, %v506, %v511
          %v516 = vrsqrt.pop %v454
          %v517 = vmul.f32 %v516, %v454
          %v518 = vmul.f32 %v517, %v516
          %v519 = vmul.f32 0.5, %v518
          %v520 = vsub.f32 1.5, %v519
          %v521 = vmul.f32 %v516, %v520
          %vm522 = vweird.f32 %v454
          %vm523 = vweird.f32 %v516
          %vm524 = vmor %vm522, %vm523
          %v525 = vsel %vm524, %v516, %v521
          %v526 = vrsqrt.pop %v455
          %v527 = vmul.f32 %v526, %v455
          %v528 = vmul.f32 %v527, %v526
          %v529 = vmul.f32 0.5, %v528
          %v530 = vsub.f32 1.5, %v529
          %v531 = vmul.f32 %v526, %v530
          %vm532 = vweird.f32 %v455
          %vm533 = vweird.f32 %v526
          %vm534 = vmor %vm532, %vm533
          %v535 = vsel %vm534, %v526, %v531
          %v536 = vmul.f32 %v408, %v465
          %v537 = vmul.f32 %v409, %v475
          %v538 = vmul.f32 %v410, %v485
          %v539 = vmul.f32 %v411, %v495
          %v540 = vmul.f32 %v412, %v505
          %v541 = vmul.f32 %v413, %v515
          %v542 = vmul.f32 %v414, %v525
          %v543 = vmul.f32 %v415, %v535
          %v545 = vperm.slane %v375, 0
          %v547 = vmul.f32 %v536, %v545
          %v548 = vmul.f32 %v537, %v545
          %v549 = vmul.f32 %v538, %v545
          %v550 = vmul.f32 %v539, %v545
          %v551 = vmul.f32 %v540, %v545
          %v552 = vmul.f32 %v541, %v545
          %v553 = vmul.f32 %v542, %v545
          %v554 = vmul.f32 %v543, %v545
          %v556 = vperm.slane %v376, 0
          %v558 = vadd.f32 %v547, %v556
          %v559 = vadd.f32 %v548, %v556
          %v560 = vadd.f32 %v549, %v556
          %v561 = vadd.f32 %v550, %v556
          %v562 = vadd.f32 %v551, %v556
          %v563 = vadd.f32 %v552, %v556
          %v564 = vadd.f32 %v553, %v556
          %v565 = vadd.f32 %v554, %v556
          %566 = vst [vmem:[#allocation2] sm:$0xff] %v558
          %567 = vst [vmem:[#allocation2 + $0x8] sm:$0xff] %v559
          %568 = vst [vmem:[#allocation2 + $0x10] sm:$0xff] %v560
          %569 = vst [vmem:[#allocation2 + $0x18] sm:$0xff] %v561
          %570 = vst [vmem:[#allocation2 + $0x20] sm:$0xff] %v562
          %571 = vst [vmem:[#allocation2 + $0x28] sm:$0xff] %v563
          %572 = vst [vmem:[#allocation2 + $0x30] sm:$0xff] %v564
          %573 = vst [vmem:[#allocation2 + $0x38] sm:$0xff] %v565
        $region56: #{ext_transformer_encoder_forward.10} parent=39 // pred_fallthru
          _
        %v574 = vld [vmem:[#allocation2] sm:$0xff]
        %v575 = vld [vmem:[#allocation2 + $0x8] sm:$0xff]
        %v576 = vld [vmem:[#allocation2 + $0x10] sm:$0xff]
        %v577 = vld [vmem:[#allocation2 + $0x18] sm:$0xff]
        %v578 = vld [vmem:[#allocation2 + $0x20] sm:$0xff]
        %v579 = vld [vmem:[#allocation2 + $0x28] sm:$0xff]
        %v580 = vld [vmem:[#allocation2 + $0x30] sm:$0xff]
        %v581 = vld [vmem:[#allocation2 + $0x38] sm:$0xff]
        %v582 = vld [vmem:[%s348] sm:$0xff]
        %v583 = vld [vmem:[%s348 + $0x8] sm:$0xff]
        %v584 = vld [vmem:[%s348 + $0x10] sm:$0xff]
        %v585 = vld [vmem:[%s348 + $0x18] sm:$0xff]
        %v586 = vld [vmem:[%s348 + $0x20] sm:$0xff]
        %v587 = vld [vmem:[%s348 + $0x28] sm:$0xff]
        %v588 = vld [vmem:[%s348 + $0x30] sm:$0xff]
        %v589 = vld [vmem:[%s348 + $0x38] sm:$0xff]
        %v590 = vld [vmem:[%s348 + $0x40] sm:$0xff]
        %v591 = vld [vmem:[%s348 + $0x48] sm:$0xff]
        %v592 = vld [vmem:[%s348 + $0x50] sm:$0xff]
        %v593 = vld [vmem:[%s348 + $0x58] sm:$0xff]
        %v594 = vld [vmem:[%s348 + $0x60] sm:$0xff]
        %v595 = vld [vmem:[%s348 + $0x68] sm:$0xff]
        %v596 = vld [vmem:[%s348 + $0x70] sm:$0xff]
        %v597 = vld [vmem:[%s348 + $0x78] sm:$0xff]
        %v598 = vld [vmem:[%s285] sm:$0x1]
        %v600 = vperm.slane %v598, 0
        %602 = vmatpush.msra.mxu0 %v597
        %603 = vmatpush.msra.mxu0 %v596
        %604 = vmatpush.msra.mxu0 %v595
        %605 = vmatpush.msra.mxu0 %v594
        %606 = vmatpush.msra.mxu0 %v593
        %607 = vmatpush.msra.mxu0 %v592
        %608 = vmatpush.msra.mxu0 %v591
        %609 = vmatpush.msra.mxu0 %v590
        %610 = vmatpush.msra.mxu0 %v589
        %611 = vmatpush.msra.mxu0 %v588
        %612 = vmatpush.msra.mxu0 %v587
        %613 = vmatpush.msra.mxu0 %v586
        %614 = vmatpush.msra.mxu0 %v585
        %615 = vmatpush.msra.mxu0 %v584
        %616 = vmatpush.msra.mxu0 %v583
        %617 = vmatpush.msra.mxu0 %v582
        %618 = vmatmul.f32.gmra.mxu0 %v574
        %v619 = vpop.f32.mrf.mxu0
        %v620 = vadd.f32 %v600, %v619
        %621 = vmatmul.f32.gmra.mxu0 %v575
        %v622 = vpop.f32.mrf.mxu0
        %v623 = vadd.f32 %v600, %v622
        %624 = vmatmul.f32.gmra.mxu0 %v576
        %v625 = vpop.f32.mrf.mxu0
        %v626 = vadd.f32 %v600, %v625
        %627 = vmatmul.f32.gmra.mxu0 %v577
        %v628 = vpop.f32.mrf.mxu0
        %v629 = vadd.f32 %v600, %v628
        %630 = vmatmul.f32.gmra.mxu0 %v578
        %v631 = vpop.f32.mrf.mxu0
        %v632 = vadd.f32 %v600, %v631
        %633 = vmatmul.f32.gmra.mxu0 %v579
        %v634 = vpop.f32.mrf.mxu0
        %v635 = vadd.f32 %v600, %v634
        %636 = vmatmul.f32.gmra.mxu0 %v580
        %v637 = vpop.f32.mrf.mxu0
        %v638 = vadd.f32 %v600, %v637
        %639 = vmatmul.f32.gmra.mxu0 %v581
        %v640 = vpop.f32.mrf.mxu0
        %v641 = vadd.f32 %v600, %v640
        %642 = vdwg.mxu0
        %vm643 = vcmask 261120
        %644 = vst.msk [vmem:[%s361] sm:$0xff] %vm643, %v620
        %645 = vst.msk [vmem:[%s361 + $0x8] sm:$0xff] %vm643, %v623
        %646 = vst.msk [vmem:[%s361 + $0x10] sm:$0xff] %vm643, %v626
        %647 = vst.msk [vmem:[%s361 + $0x18] sm:$0xff] %vm643, %v629
        %648 = vst.msk [vmem:[%s361 + $0x20] sm:$0xff] %vm643, %v632
        %649 = vst.msk [vmem:[%s361 + $0x28] sm:$0xff] %vm643, %v635
        %650 = vst.msk [vmem:[%s361 + $0x30] sm:$0xff] %vm643, %v638
        %651 = vst.msk [vmem:[%s361 + $0x38] sm:$0xff] %vm643, %v641
        %s652 = smul.u32 8, %s24
        %p653 = scmp.lt.s32.totalorder %s23, 1
        %s654 = scalar_select %p653, %s23, 1
        %p655 = scmp.lt.s32.totalorder %s25, 11
        %s656 = scalar_select %p655, %s25, 11
        %p657 = scmp.lt.s32.totalorder %s652, 31
        %s658 = scalar_select %p657, %s652, 31
        %s659 = smul.addr %s656, 32
        %s660 = sadd.s32 %s658, %s659
        %s661 = smul.addr %s654, 384
        %s662 = sadd.s32 %s660, %s661
        %s663 = smul.addr %s662, 8
        %s664 = scalar_lea.vmem %s5, %s663
        // Predicated region
        $region57: #{ext_transformer_encoder_forward.10} parent=39 // pred_check
          %p665 = pneg %p181
        $region58: #{ext_transformer_encoder_forward.10} parent=39 // pred_check_branch
          %667 = sbr.rel (%p665) target = $region60
        $region59: #{ext_transformer_encoder_forward.10} parent=39 // pred_region
          %s668 = smul.u32 8, %s24
        $region60: #{ext_transformer_encoder_forward.10} parent=39 // pred_fallthru
          _
      $region40: #{ext_transformer_encoder_forward.10} parent=5 // pred_fallthru
        _
      %p669 = scmp.le.s32.totalorder 2, %s13
      // Predicated region
      $region61: #{ext_transformer_encoder_forward.10} parent=5 // pred_check
        %p670 = pneg %p669
      $region62: #{ext_transformer_encoder_forward.10} parent=5 // pred_check_branch
        %672 = sbr.rel (%p670) target = $region64
      $region63: #{ext_transformer_encoder_forward.10} parent=5 // pred_region
        %s673 = ssub.s32 %s13, 2
        // Predicated region
        $region65: #{ext_transformer_encoder_forward.10} parent=63 // pred_check
          %p674 = pneg %p187
        $region66: #{ext_transformer_encoder_forward.10} parent=63 // pred_check_branch
          %676 = sbr.rel (%p674) target = $region68
        $region67: #{ext_transformer_encoder_forward.10} parent=63 // pred_region
          %s677 = smul.u32 8, %s27
          %p678 = scmp.lt.s32.totalorder %s26, 1
          %s679 = scalar_select %p678, %s26, 1
          %p680 = scmp.lt.s32.totalorder %s28, 11
          %s681 = scalar_select %p680, %s28, 11
          %p682 = scmp.lt.s32.totalorder %s677, 31
          %s683 = scalar_select %p682, %s677, 31
          %s684 = smul.addr %s681, 32
          %s685 = sadd.s32 %s683, %s684
          %s686 = smul.addr %s679, 384
          %s687 = sadd.s32 %s685, %s686
          %s688 = smul.addr %s687, 8
          %s689 = scalar_lea.vmem %s5, %s688
        $region68: #{ext_transformer_encoder_forward.10} parent=63 // pred_fallthru
          _
      $region64: #{ext_transformer_encoder_forward.10} parent=5 // pred_fallthru
        _
    $region6: #{ext_transformer_encoder_forward.10} parent=1 // loop_footer
      %s17 = sadd.s32 1, %s13
    $region7: #{ext_transformer_encoder_forward.10} parent=1 // loop_footer_branch
      %12 = sbr.rel target = $region3
    $region8: #{ext_transformer_encoder_forward.10} parent=1 // loop_exit
      _
    %690 = vsyncpa [#allocation4], 1
    %s691 = scalar_lea.sflag [#allocation4], 1
    %692 = vsyncpa %s691, 1
    %693 = vsyncpa [#allocation6], 1

// kernel: ext_transformer_encoder_forward.9
$region0: #{ext_transformer_encoder_forward.9}
  #allocation0 [shape = 'u32[]', space=smem, size = 0x4, offset = 0x4, fixed_abs, tag = 'smem constant byte address 0x4 - core index']
  #allocation1 [shape = 'u32[72,128]{1,0:T(1,128)}', space=vmem, size = 0x9000, scoped, tag = 'internal scratch']
  %s0 = inlined_call_operand.vmem [shape: f32[2,256,128], index: 0, kind: input, shape index: {}]
  %s1 = inlined_call_operand.hbm [shape: f32[1,128], index: 1, kind: input, shape index: {}]
  %s2 = inlined_call_operand.hbm [shape: f32[1,128], index: 2, kind: input, shape index: {}]
  %s3 = inlined_call_operand.hbm [shape: f32[128,256], index: 3, kind: input, shape index: {}]
  %s4 = inlined_call_operand.hbm [shape: f32[1,256], index: 4, kind: input, shape index: {}]
  %s5 = inlined_call_operand.hbm [shape: f32[256,128], index: 5, kind: input, shape index: {}]
  %s6 = inlined_call_operand.hbm [shape: f32[1,128], index: 6, kind: input, shape index: {}]
  %s7 = inlined_call_operand.vmem [shape: f32[2,256,128], index: 7, kind: output, shape index: {}]
  %s8 = sld [smem:[#allocation0]]
  $region85: #{ext_transformer_encoder_forward.9} parent=0
    _
  %s10 = ssub.s32 1, %s8
  %s11 = scalar_select 0, %s10, %s8
  $region1: #{ext_transformer_encoder_forward.9} parent=0
    #allocation2 [shape = 'u8[512]{0}', space=vmem, size = 0x400, scoped, tag = 'input window, operand 1, single buffered']
    #allocation3 [shape = 's32[2]{0}', space=sflag, size = 0x8, scoped, tag = 'scoped memory for ext_transformer_encoder_forward.9']
    #allocation4 [shape = 'u8[512]{0}', space=vmem, size = 0x400, scoped, tag = 'input window, operand 2, single buffered']
    #allocation5 [shape = 's32[1]{0}', space=sflag, size = 0x4, scoped, tag = 'scoped memory for ext_transformer_encoder_forward.9']
    #allocation6 [shape = 'u8[131072]{0}', space=vmem, size = 0x20000, scoped, tag = 'input window, operand 3, single buffered']
    #allocation7 [shape = 'u8[1024]{0}', space=vmem, size = 0x400, scoped, tag = 'input window, operand 4, single buffered']
    #allocation8 [shape = 's32[1]{0}', space=sflag, size = 0x4, scoped, tag = 'scoped memory for ext_transformer_encoder_forward.9']
    #allocation9 [shape = 'u8[131072]{0}', space=vmem, size = 0x20000, scoped, tag = 'input window, operand 5, single buffered']
    #allocation10 [shape = 'u8[512]{0}', space=vmem, size = 0x400, scoped, tag = 'input window, operand 6, single buffered']
    #allocation11 [shape = 's32[1]{0}', space=sflag, size = 0x4, scoped, tag = 'scoped memory for ext_transformer_encoder_forward.9']
    %12 = vsyncpa [#allocation3], 0
    %13 = vsyncpa [#allocation5], 0
    %14 = vsyncpa [#allocation8], 0
    %15 = vsyncpa [#allocation11], 0
    loop: start=0, step=1, limit=10
    $region2: #{ext_transformer_encoder_forward.9} parent=1 // loop_pre_header
      _
    $region3: #{ext_transformer_encoder_forward.9} parent=1 // loop_header
      %s17 = sphi 0, %s21
      %p18 = scmp.ge.s32.totalorder %s17, 10
      %s24 = sphi 0, %s36
      %s25 = sphi 0, %s32
      %s26 = sphi 0, %s24
      %s27 = sphi 0, %s25
      %s28 = sphi 0, %s26
      %s29 = sphi 0, %s27
      %s41 = sphi 0, %s43
      %s44 = sphi 0, %s41
      %s45 = sphi 0, %s44
      %s61 = sphi 0, %s45
      %s65 = sphi 0, %s65
      %s67 = sphi 0, %s65
      %s68 = sphi 0, %s67
      %s82 = sphi 0, %s68
      %s86 = sphi 0, %s86
      %s88 = sphi 0, %s86
      %s89 = sphi 0, %s88
      %s103 = sphi 0, %s89
      %s107 = sphi 0, %s107
      %s109 = sphi 0, %s107
      %s110 = sphi 0, %s109
      %s124 = sphi 0, %s110
      %s128 = sphi 0, %s128
      %s130 = sphi 0, %s128
      %s131 = sphi 0, %s130
      %s145 = sphi 0, %s131
      %s149 = sphi 0, %s149
      %s151 = sphi 0, %s149
      %s152 = sphi 0, %s151
      %s166 = sphi 0, %s152
      %s170 = sphi 0, %s170
      %s172 = sphi 0, %s170
      %s173 = sphi 0, %s172
      %s187 = sphi 0, %s173
      %s195 = sphi 0, %s197
      %s198 = sphi 0, %s195
      %s199 = sphi 0, %s198
      %s215 = sphi 0, %s199
    $region4: #{ext_transformer_encoder_forward.9} parent=1 // loop_header_branch
      %20 = sbr.rel (%p18) target = $region8
    $region5: #{ext_transformer_encoder_forward.9} parent=1 // loop_body
      %s22 = ssub.s32 %s17, 1
      %s23 = ssub.s32 %s17, 2
      %s30 = sadd.s32 1, %s25
      %p31 = scmp.ge.s32.totalorder %s30, 4
      %s32 = scalar_select %p31, 0, %s30
      %s33 = sadd.s32 1, %s24
      %s34 = scalar_select %p31, %s33, %s24
      %p35 = scmp.ge.s32.totalorder %s34, 2
      %s36 = scalar_select %p35, 0, %s34
      %s37 = ssub.s32 %s24, %s36
      %s38 = ssub.s32 %s25, %s32
      %s39 = sor.u32 %s37, %s38
      %p40 = scmp.eq.s32.totalorder %s39, 0
      %s42 = sadd.s32 %s41, 1
      %s43 = scalar_select %p40, %s41, %s42
      %p46 = pneg %p40
      %p47 = scmp.eq.s32.totalorder %s17, 7
      %p48 = por %p46, %p47
      %p49 = scmp.ne.s32.totalorder %s41, %s44
      %p50 = scmp.eq.s32.totalorder %s17, 0
      %p51 = por %p49, %p50
      %p52 = scmp.ne.s32.totalorder %s41, %s44
      %p53 = scmp.eq.s32.totalorder %s22, 7
      %p54 = por %p52, %p53
      %p55 = scmp.ne.s32.totalorder %s44, %s45
      %p56 = scmp.eq.s32.totalorder %s22, 0
      %p57 = por %p55, %p56
      %p58 = scmp.ne.s32.totalorder %s44, %s45
      %p59 = scmp.eq.s32.totalorder %s23, 7
      %p60 = por %p58, %p59
      %p62 = scmp.ne.s32.totalorder %s45, %s61
      %p63 = scmp.eq.s32.totalorder %s23, 0
      %p64 = por %p62, %p63
      %s66 = sadd.s32 %s65, 1
      %p69 = scmp.eq.s32.totalorder %s17, 7
      %p70 = scmp.ne.s32.totalorder %s65, %s67
      %p71 = scmp.eq.s32.totalorder %s17, 0
      %p72 = por %p70, %p71
      %p73 = scmp.ne.s32.totalorder %s65, %s67
      %p74 = scmp.eq.s32.totalorder %s22, 7
      %p75 = por %p73, %p74
      %p76 = scmp.ne.s32.totalorder %s67, %s68
      %p77 = scmp.eq.s32.totalorder %s22, 0
      %p78 = por %p76, %p77
      %p79 = scmp.ne.s32.totalorder %s67, %s68
      %p80 = scmp.eq.s32.totalorder %s23, 7
      %p81 = por %p79, %p80
      %p83 = scmp.ne.s32.totalorder %s68, %s82
      %p84 = scmp.eq.s32.totalorder %s23, 0
      %p85 = por %p83, %p84
      %s87 = sadd.s32 %s86, 1
      %p90 = scmp.eq.s32.totalorder %s17, 7
      %p91 = scmp.ne.s32.totalorder %s86, %s88
      %p92 = scmp.eq.s32.totalorder %s17, 0
      %p93 = por %p91, %p92
      %p94 = scmp.ne.s32.totalorder %s86, %s88
      %p95 = scmp.eq.s32.totalorder %s22, 7
      %p96 = por %p94, %p95
      %p97 = scmp.ne.s32.totalorder %s88, %s89
      %p98 = scmp.eq.s32.totalorder %s22, 0
      %p99 = por %p97, %p98
      %p100 = scmp.ne.s32.totalorder %s88, %s89
      %p101 = scmp.eq.s32.totalorder %s23, 7
      %p102 = por %p100, %p101
      %p104 = scmp.ne.s32.totalorder %s89, %s103
      %p105 = scmp.eq.s32.totalorder %s23, 0
      %p106 = por %p104, %p105
      %s108 = sadd.s32 %s107, 1
      %p111 = scmp.eq.s32.totalorder %s17, 7
      %p112 = scmp.ne.s32.totalorder %s107, %s109
      %p113 = scmp.eq.s32.totalorder %s17, 0
      %p114 = por %p112, %p113
      %p115 = scmp.ne.s32.totalorder %s107, %s109
      %p116 = scmp.eq.s32.totalorder %s22, 7
      %p117 = por %p115, %p116
      %p118 = scmp.ne.s32.totalorder %s109, %s110
      %p119 = scmp.eq.s32.totalorder %s22, 0
      %p120 = por %p118, %p119
      %p121 = scmp.ne.s32.totalorder %s109, %s110
      %p122 = scmp.eq.s32.totalorder %s23, 7
      %p123 = por %p121, %p122
      %p125 = scmp.ne.s32.totalorder %s110, %s124
      %p126 = scmp.eq.s32.totalorder %s23, 0
      %p127 = por %p125, %p126
      %s129 = sadd.s32 %s128, 1
      %p132 = scmp.eq.s32.totalorder %s17, 7
      %p133 = scmp.ne.s32.totalorder %s128, %s130
      %p134 = scmp.eq.s32.totalorder %s17, 0
      %p135 = por %p133, %p134
      %p136 = scmp.ne.s32.totalorder %s128, %s130
      %p137 = scmp.eq.s32.totalorder %s22, 7
      %p138 = por %p136, %p137
      %p139 = scmp.ne.s32.totalorder %s130, %s131
      %p140 = scmp.eq.s32.totalorder %s22, 0
      %p141 = por %p139, %p140
      %p142 = scmp.ne.s32.totalorder %s130, %s131
      %p143 = scmp.eq.s32.totalorder %s23, 7
      %p144 = por %p142, %p143
      %p146 = scmp.ne.s32.totalorder %s131, %s145
      %p147 = scmp.eq.s32.totalorder %s23, 0
      %p148 = por %p146, %p147
      %s150 = sadd.s32 %s149, 1
      %p153 = scmp.eq.s32.totalorder %s17, 7
      %p154 = scmp.ne.s32.totalorder %s149, %s151
      %p155 = scmp.eq.s32.totalorder %s17, 0
      %p156 = por %p154, %p155
      %p157 = scmp.ne.s32.totalorder %s149, %s151
      %p158 = scmp.eq.s32.totalorder %s22, 7
      %p159 = por %p157, %p158
      %p160 = scmp.ne.s32.totalorder %s151, %s152
      %p161 = scmp.eq.s32.totalorder %s22, 0
      %p162 = por %p160, %p161
      %p163 = scmp.ne.s32.totalorder %s151, %s152
      %p164 = scmp.eq.s32.totalorder %s23, 7
      %p165 = por %p163, %p164
      %p167 = scmp.ne.s32.totalorder %s152, %s166
      %p168 = scmp.eq.s32.totalorder %s23, 0
      %p169 = por %p167, %p168
      %s171 = sadd.s32 %s170, 1
      %p174 = scmp.eq.s32.totalorder %s17, 7
      %p175 = scmp.ne.s32.totalorder %s170, %s172
      %p176 = scmp.eq.s32.totalorder %s17, 0
      %p177 = por %p175, %p176
      %p178 = scmp.ne.s32.totalorder %s170, %s172
      %p179 = scmp.eq.s32.totalorder %s22, 7
      %p180 = por %p178, %p179
      %p181 = scmp.ne.s32.totalorder %s172, %s173
      %p182 = scmp.eq.s32.totalorder %s22, 0
      %p183 = por %p181, %p182
      %p184 = scmp.ne.s32.totalorder %s172, %s173
      %p185 = scmp.eq.s32.totalorder %s23, 7
      %p186 = por %p184, %p185
      %p188 = scmp.ne.s32.totalorder %s173, %s187
      %p189 = scmp.eq.s32.totalorder %s23, 0
      %p190 = por %p188, %p189
      %s191 = ssub.s32 %s24, %s36
      %s192 = ssub.s32 %s25, %s32
      %s193 = sor.u32 %s191, %s192
      %p194 = scmp.eq.s32.totalorder %s193, 0
      %s196 = sadd.s32 %s195, 1
      %s197 = scalar_select %p194, %s195, %s196
      %p200 = pneg %p194
      %p201 = scmp.eq.s32.totalorder %s17, 7
      %p202 = por %p200, %p201
      %p203 = scmp.ne.s32.totalorder %s195, %s198
      %p204 = scmp.eq.s32.totalorder %s17, 0
      %p205 = por %p203, %p204
      %p206 = scmp.ne.s32.totalorder %s195, %s198
      %p207 = scmp.eq.s32.totalorder %s22, 7
      %p208 = por %p206, %p207
      %p209 = scmp.ne.s32.totalorder %s198, %s199
      %p210 = scmp.eq.s32.totalorder %s22, 0
      %p211 = por %p209, %p210
      %p212 = scmp.ne.s32.totalorder %s198, %s199
      %p213 = scmp.eq.s32.totalorder %s23, 7
      %p214 = por %p212, %p213
      %p216 = scmp.ne.s32.totalorder %s199, %s215
      %p217 = scmp.eq.s32.totalorder %s23, 0
      %p218 = por %p216, %p217
      %p219 = scmp.le.s32.totalorder 1, %s17
      %p220 = scmp.lt.s32.totalorder %s17, 9
      %p221 = pnand %p219, %p220
      %p222 = pneg %p221
      // Predicated region
      $region9: #{ext_transformer_encoder_forward.9} parent=5 // pred_check
        _
      $region10: #{ext_transformer_encoder_forward.9} parent=5 // pred_check_branch
        %224 = sbr.rel (%p221) target = $region12
      $region11: #{ext_transformer_encoder_forward.9} parent=5 // pred_region
        %s225 = ssub.s32 %s17, 1
        // Predicated region
        $region13: #{ext_transformer_encoder_forward.9} parent=11 // pred_check
          %p226 = pneg %p78
        $region14: #{ext_transformer_encoder_forward.9} parent=11 // pred_check_branch
          %228 = sbr.rel (%p226) target = $region16
        $region15: #{ext_transformer_encoder_forward.9} parent=11 // pred_region
          %230 = vsyncadd [#allocation3], 0
          %s232 = sshll.u32 %s1, 4
          %s233 = int_to_ptr.hbm [resolvable:$true] %s232
          %s234 = sshll.u32 [#allocation2], 4
          %s235 = int_to_ptr.vmem [resolvable:$true] %s234
          %237 = dma.hbm_to_vmem [thread:$0]  %s233, 16, %s235, [#allocation3]
        $region16: #{ext_transformer_encoder_forward.9} parent=11 // pred_fallthru
          _
        // Predicated region
        $region17: #{ext_transformer_encoder_forward.9} parent=11 // pred_check
          %p238 = pneg %p99
        $region18: #{ext_transformer_encoder_forward.9} parent=11 // pred_check_branch
          %240 = sbr.rel (%p238) target = $region20
        $region19: #{ext_transformer_encoder_forward.9} parent=11 // pred_region
          %242 = vsyncadd [#allocation5], 0
          %s244 = sshll.u32 %s2, 4
          %s245 = int_to_ptr.hbm [resolvable:$true] %s244
          %s246 = sshll.u32 [#allocation4], 4
          %s247 = int_to_ptr.vmem [resolvable:$true] %s246
          %249 = dma.hbm_to_vmem [thread:$0]  %s245, 16, %s247, [#allocation5]
        $region20: #{ext_transformer_encoder_forward.9} parent=11 // pred_fallthru
          _
        // Predicated region
        $region21: #{ext_transformer_encoder_forward.9} parent=11 // pred_check
          %p250 = pneg %p120
        $region22: #{ext_transformer_encoder_forward.9} parent=11 // pred_check_branch
          %252 = sbr.rel (%p250) target = $region24
        $region23: #{ext_transformer_encoder_forward.9} parent=11 // pred_region
          %254 = vsyncadd [#allocation5], 0
          %s255 = sshll.u32 %s3, 4
          %s256 = int_to_ptr.hbm [resolvable:$true] %s255
          %s257 = sshll.u32 [#allocation6], 4
          %s258 = int_to_ptr.vmem [resolvable:$true] %s257
          %263 = dma.hbm_to_vmem [thread:$0]  %s256, 4096, %s258, [#allocation5], 256, 256, 16
        $region24: #{ext_transformer_encoder_forward.9} parent=11 // pred_fallthru
          _
        // Predicated region
        $region25: #{ext_transformer_encoder_forward.9} parent=11 // pred_check
          %p264 = pneg %p141
        $region26: #{ext_transformer_encoder_forward.9} parent=11 // pred_check_branch
          %266 = sbr.rel (%p264) target = $region28
        $region27: #{ext_transformer_encoder_forward.9} parent=11 // pred_region
          %268 = vsyncadd [#allocation8], 0
          %s270 = sshll.u32 %s4, 4
          %s271 = int_to_ptr.hbm [resolvable:$true] %s270
          %s272 = sshll.u32 [#allocation7], 4
          %s273 = int_to_ptr.vmem [resolvable:$true] %s272
          %275 = dma.hbm_to_vmem [thread:$0]  %s271, 32, %s273, [#allocation8]
        $region28: #{ext_transformer_encoder_forward.9} parent=11 // pred_fallthru
          _
        // Predicated region
        $region29: #{ext_transformer_encoder_forward.9} parent=11 // pred_check
          %p276 = pneg %p162
        $region30: #{ext_transformer_encoder_forward.9} parent=11 // pred_check_branch
          %278 = sbr.rel (%p276) target = $region32
        $region31: #{ext_transformer_encoder_forward.9} parent=11 // pred_region
          %280 = vsyncadd [#allocation8], 0
          %s281 = sshll.u32 %s5, 4
          %s282 = int_to_ptr.hbm [resolvable:$true] %s281
          %s283 = sshll.u32 [#allocation9], 4
          %s284 = int_to_ptr.vmem [resolvable:$true] %s283
          %289 = dma.hbm_to_vmem [thread:$0]  %s282, 4096, %s284, [#allocation8], 128, 128, 8
        $region32: #{ext_transformer_encoder_forward.9} parent=11 // pred_fallthru
          _
        // Predicated region
        $region33: #{ext_transformer_encoder_forward.9} parent=11 // pred_check
          %p290 = pneg %p183
        $region34: #{ext_transformer_encoder_forward.9} parent=11 // pred_check_branch
          %292 = sbr.rel (%p290) target = $region36
        $region35: #{ext_transformer_encoder_forward.9} parent=11 // pred_region
          %294 = vsyncadd [#allocation11], 0
          %s296 = sshll.u32 %s6, 4
          %s297 = int_to_ptr.hbm [resolvable:$true] %s296
          %s298 = sshll.u32 [#allocation10], 4
          %s299 = int_to_ptr.vmem [resolvable:$true] %s298
          %301 = dma.hbm_to_vmem [thread:$0]  %s297, 16, %s299, [#allocation11]
        $region36: #{ext_transformer_encoder_forward.9} parent=11 // pred_fallthru
          _
      $region12: #{ext_transformer_encoder_forward.9} parent=5 // pred_fallthru
        _
      %p302 = scmp.lt.s32.totalorder %s17, 8
      // Predicated region
      $region37: #{ext_transformer_encoder_forward.9} parent=5 // pred_check
        %p303 = pneg %p302
      $region38: #{ext_transformer_encoder_forward.9} parent=5 // pred_check_branch
        %305 = sbr.rel (%p303) target = $region40
      $region39: #{ext_transformer_encoder_forward.9} parent=5 // pred_region
        // Predicated region
        $region41: #{ext_transformer_encoder_forward.9} parent=39 // pred_check
          %p306 = pneg %p51
        $region42: #{ext_transformer_encoder_forward.9} parent=39 // pred_check_branch
          %308 = sbr.rel (%p306) target = $region44
        $region43: #{ext_transformer_encoder_forward.9} parent=39 // pred_region
          %s309 = smul.u32 8, %s25
          %p310 = scmp.lt.s32.totalorder %s24, 1
          %s311 = scalar_select %p310, %s24, 1
          %p312 = scmp.lt.s32.totalorder %s309, 31
          %s313 = scalar_select %p312, %s309, 31
          %s314 = smul.addr %s311, 32
          %s315 = sadd.s32 %s313, %s314
          %s316 = smul.addr %s315, 8
          %s317 = scalar_lea.vmem %s0, %s316
          %s318 = smul.u32 8, %s25
        $region44: #{ext_transformer_encoder_forward.9} parent=39 // pred_fallthru
          _
      $region40: #{ext_transformer_encoder_forward.9} parent=5 // pred_fallthru
        _
      %p319 = scmp.le.s32.totalorder 1, %s17
      %p320 = scmp.lt.s32.totalorder %s17, 9
      %p321 = pnand %p319, %p320
      %p322 = pneg %p321
      // Predicated region
      $region45: #{ext_transformer_encoder_forward.9} parent=5 // pred_check
        _
      $region46: #{ext_transformer_encoder_forward.9} parent=5 // pred_check_branch
        %324 = sbr.rel (%p321) target = $region48
      $region47: #{ext_transformer_encoder_forward.9} parent=5 // pred_region
        %s325 = ssub.s32 %s17, 1
        // Predicated region
        $region49: #{ext_transformer_encoder_forward.9} parent=47 // pred_check
          %p326 = pneg %p78
        $region50: #{ext_transformer_encoder_forward.9} parent=47 // pred_check_branch
          %328 = sbr.rel (%p326) target = $region52
        $region51: #{ext_transformer_encoder_forward.9} parent=47 // pred_region
          %330 = dma.done [#allocation3], 16
        $region52: #{ext_transformer_encoder_forward.9} parent=47 // pred_fallthru
          _
        // Predicated region
        $region53: #{ext_transformer_encoder_forward.9} parent=47 // pred_check
          %p331 = pneg %p99
        $region54: #{ext_transformer_encoder_forward.9} parent=47 // pred_check_branch
          %333 = sbr.rel (%p331) target = $region56
        $region55: #{ext_transformer_encoder_forward.9} parent=47 // pred_region
          %335 = dma.done [#allocation5], 16
        $region56: #{ext_transformer_encoder_forward.9} parent=47 // pred_fallthru
          _
        // Predicated region
        $region57: #{ext_transformer_encoder_forward.9} parent=47 // pred_check
          %p336 = pneg %p120
        $region58: #{ext_transformer_encoder_forward.9} parent=47 // pred_check_branch
          %338 = sbr.rel (%p336) target = $region60
        $region59: #{ext_transformer_encoder_forward.9} parent=47 // pred_region
          %340 = dma.done [#allocation5], 4096
        $region60: #{ext_transformer_encoder_forward.9} parent=47 // pred_fallthru
          _
        // Predicated region
        $region61: #{ext_transformer_encoder_forward.9} parent=47 // pred_check
          %p341 = pneg %p141
        $region62: #{ext_transformer_encoder_forward.9} parent=47 // pred_check_branch
          %343 = sbr.rel (%p341) target = $region64
        $region63: #{ext_transformer_encoder_forward.9} parent=47 // pred_region
          %345 = dma.done [#allocation8], 32
        $region64: #{ext_transformer_encoder_forward.9} parent=47 // pred_fallthru
          _
        // Predicated region
        $region65: #{ext_transformer_encoder_forward.9} parent=47 // pred_check
          %p346 = pneg %p162
        $region66: #{ext_transformer_encoder_forward.9} parent=47 // pred_check_branch
          %348 = sbr.rel (%p346) target = $region68
        $region67: #{ext_transformer_encoder_forward.9} parent=47 // pred_region
          %350 = dma.done [#allocation8], 4096
        $region68: #{ext_transformer_encoder_forward.9} parent=47 // pred_fallthru
          _
        // Predicated region
        $region69: #{ext_transformer_encoder_forward.9} parent=47 // pred_check
          %p351 = pneg %p183
        $region70: #{ext_transformer_encoder_forward.9} parent=47 // pred_check_branch
          %353 = sbr.rel (%p351) target = $region72
        $region71: #{ext_transformer_encoder_forward.9} parent=47 // pred_region
          %355 = dma.done [#allocation11], 16
        $region72: #{ext_transformer_encoder_forward.9} parent=47 // pred_fallthru
          _
        %s356 = smul.u32 8, %s27
        %p357 = scmp.lt.s32.totalorder %s26, 1
        %s358 = scalar_select %p357, %s26, 1
        %p359 = scmp.lt.s32.totalorder %s356, 31
        %s360 = scalar_select %p359, %s356, 31
        %s361 = smul.addr %s358, 32
        %s362 = sadd.s32 %s360, %s361
        %s363 = smul.addr %s362, 8
        %s364 = scalar_lea.vmem %s0, %s363
        %p365 = pneg %p57
        %p366 = pneg %p54
        %p367 = pneg %p78
        %p368 = pneg %p75
        %p369 = pneg %p99
        %p370 = pneg %p96
        %p371 = pneg %p120
        %p372 = pneg %p117
        %p373 = pneg %p141
        %p374 = pneg %p138
        %p375 = pneg %p162
        %p376 = pneg %p159
        %p377 = pneg %p183
        %p378 = pneg %p180
        %p379 = pneg %p211
        %p380 = pneg %p208
        %s381 = smul.u32 8, %s27
        %p382 = scmp.lt.s32.totalorder %s26, 1
        %s383 = scalar_select %p382, %s26, 1
        %p384 = scmp.lt.s32.totalorder %s381, 31
        %s385 = scalar_select %p384, %s381, 31
        %s386 = smul.addr %s383, 32
        %s387 = sadd.s32 %s385, %s386
        %s388 = smul.addr %s387, 8
        %s389 = scalar_lea.vmem %s7, %s388
        %s390 = smul.u32 8, %s27
        %p391 = scmp.lt.s32.totalorder %s26, 1
        %s392 = scalar_select %p391, %s26, 1
        %p393 = scmp.lt.s32.totalorder %s390, 31
        %s394 = scalar_select %p393, %s390, 31
        %s395 = smul.addr %s392, 32
        %s396 = sadd.s32 %s394, %s395
        %s397 = smul.addr %s396, 8
        %s398 = scalar_lea.vmem %s0, %s397
        %s399 = smul.u32 8, %s27
        %s400 = smul.u32 8, %s27
        %p401 = scmp.lt.s32.totalorder %s26, 1
        %s402 = scalar_select %p401, %s26, 1
        %p403 = scmp.lt.s32.totalorder %s400, 31
        %s404 = scalar_select %p403, %s400, 31
        %s405 = smul.addr %s402, 32
        %s406 = sadd.s32 %s404, %s405
        %s407 = smul.addr %s406, 8
        %s408 = scalar_lea.vmem %s7, %s407
        %s409 = smul.u32 8, %s27
        %v410 = vld [vmem:[%s398] sm:$0xff]
        %v411 = vld [vmem:[%s398 + $0x8] sm:$0xff]
        %v412 = vld [vmem:[%s398 + $0x10] sm:$0xff]
        %v413 = vld [vmem:[%s398 + $0x18] sm:$0xff]
        %v414 = vld [vmem:[%s398 + $0x20] sm:$0xff]
        %v415 = vld [vmem:[%s398 + $0x28] sm:$0xff]
        %v416 = vld [vmem:[%s398 + $0x30] sm:$0xff]
        %v417 = vld [vmem:[%s398 + $0x38] sm:$0xff]
        %v418 = vld [vmem:[#allocation2] sm:$0x1]
        %v419 = vld [vmem:[#allocation4] sm:$0x1]
        %420 = vadd.xlane.f32.xlu0 %v410
        %v421 = vpop.xlane.xlu0 %420
        %422 = vadd.xlane.f32.xlu0 %v411
        %v423 = vpop.xlane.xlu0 %422
        %424 = vadd.xlane.f32.xlu0 %v412
        %v425 = vpop.xlane.xlu0 %424
        %426 = vadd.xlane.f32.xlu0 %v413
        %v427 = vpop.xlane.xlu0 %426
        %428 = vadd.xlane.f32.xlu0 %v414
        %v429 = vpop.xlane.xlu0 %428
        %430 = vadd.xlane.f32.xlu0 %v415
        %v431 = vpop.xlane.xlu0 %430
        %432 = vadd.xlane.f32.xlu0 %v416
        %v433 = vpop.xlane.xlu0 %432
        %434 = vadd.xlane.f32.xlu0 %v417
        %v435 = vpop.xlane.xlu0 %434
        %v436 = vrcp.pop 128.0
        %v437 = vmul.f32 128.0, %v436
        %v438 = vsub.f32 1.0, %v437
        %v439 = vmul.f32 %v436, %v438
        %v440 = vadd.f32 %v436, %v439
        %vm441 = vweird.f32 %v436
        %v442 = vsel %vm441, %v436, %v440
        %v443 = vmul.f32 %v421, %v442
        %v444 = vmul.f32 %v423, %v442
        %v445 = vmul.f32 %v425, %v442
        %v446 = vmul.f32 %v427, %v442
        %v447 = vmul.f32 %v429, %v442
        %v448 = vmul.f32 %v431, %v442
        %v449 = vmul.f32 %v433, %v442
        %v450 = vmul.f32 %v435, %v442
        %v451 = vsub.f32 %v410, %v443
        %v452 = vsub.f32 %v411, %v444
        %v453 = vsub.f32 %v412, %v445
        %v454 = vsub.f32 %v413, %v446
        %v455 = vsub.f32 %v414, %v447
        %v456 = vsub.f32 %v415, %v448
        %v457 = vsub.f32 %v416, %v449
        %v458 = vsub.f32 %v417, %v450
        %v459 = vmul.f32 %v451, %v451
        %v460 = vmul.f32 %v452, %v452
        %v461 = vmul.f32 %v453, %v453
        %v462 = vmul.f32 %v454, %v454
        %v463 = vmul.f32 %v455, %v455
        %v464 = vmul.f32 %v456, %v456
        %v465 = vmul.f32 %v457, %v457
        %v466 = vmul.f32 %v458, %v458
        %467 = vadd.xlane.f32.xlu0 %v459
        %v468 = vpop.xlane.xlu0 %467
        %469 = vadd.xlane.f32.xlu0 %v460
        %v470 = vpop.xlane.xlu0 %469
        %471 = vadd.xlane.f32.xlu0 %v461
        %v472 = vpop.xlane.xlu0 %471
        %473 = vadd.xlane.f32.xlu0 %v462
        %v474 = vpop.xlane.xlu0 %473
        %475 = vadd.xlane.f32.xlu0 %v463
        %v476 = vpop.xlane.xlu0 %475
        %477 = vadd.xlane.f32.xlu0 %v464
        %v478 = vpop.xlane.xlu0 %477
        %479 = vadd.xlane.f32.xlu0 %v465
        %v480 = vpop.xlane.xlu0 %479
        %481 = vadd.xlane.f32.xlu0 %v466
        %v482 = vpop.xlane.xlu0 %481
        %v483 = vmul.f32 %v468, %v442
        %v484 = vmul.f32 %v470, %v442
        %v485 = vmul.f32 %v472, %v442
        %v486 = vmul.f32 %v474, %v442
        %v487 = vmul.f32 %v476, %v442
        %v488 = vmul.f32 %v478, %v442
        %v489 = vmul.f32 %v480, %v442
        %v490 = vmul.f32 %v482, %v442
        %v491 = vadd.f32 %v483, 1e-06
        %v492 = vadd.f32 %v484, 1e-06
        %v493 = vadd.f32 %v485, 1e-06
        %v494 = vadd.f32 %v486, 1e-06
        %v495 = vadd.f32 %v487, 1e-06
        %v496 = vadd.f32 %v488, 1e-06
        %v497 = vadd.f32 %v489, 1e-06
        %v498 = vadd.f32 %v490, 1e-06
        %v499 = vrsqrt.pop %v491
        %v500 = vmul.f32 %v499, %v491
        %v501 = vmul.f32 %v500, %v499
        %v502 = vmul.f32 0.5, %v501
        %v503 = vsub.f32 1.5, %v502
        %v504 = vmul.f32 %v499, %v503
        %vm505 = vweird.f32 %v491
        %vm506 = vweird.f32 %v499
        %vm507 = vmor %vm505, %vm506
        %v508 = vsel %vm507, %v499, %v504
        %v509 = vrsqrt.pop %v492
        %v510 = vmul.f32 %v509, %v492
        %v511 = vmul.f32 %v510, %v509
        %v512 = vmul.f32 0.5, %v511
        %v513 = vsub.f32 1.5, %v512
        %v514 = vmul.f32 %v509, %v513
        %vm515 = vweird.f32 %v492
        %vm516 = vweird.f32 %v509
        %vm517 = vmor %vm515, %vm516
        %v518 = vsel %vm517, %v509, %v514
        %v519 = vrsqrt.pop %v493
        %v520 = vmul.f32 %v519, %v493
        %v521 = vmul.f32 %v520, %v519
        %v522 = vmul.f32 0.5, %v521
        %v523 = vsub.f32 1.5, %v522
        %v524 = vmul.f32 %v519, %v523
        %vm525 = vweird.f32 %v493
        %vm526 = vweird.f32 %v519
        %vm527 = vmor %vm525, %vm526
        %v528 = vsel %vm527, %v519, %v524
        %v529 = vrsqrt.pop %v494
        %v530 = vmul.f32 %v529, %v494
        %v531 = vmul.f32 %v530, %v529
        %v532 = vmul.f32 0.5, %v531
        %v533 = vsub.f32 1.5, %v532
        %v534 = vmul.f32 %v529, %v533
        %vm535 = vweird.f32 %v494
        %vm536 = vweird.f32 %v529
        %vm537 = vmor %vm535, %vm536
        %v538 = vsel %vm537, %v529, %v534
        %v539 = vrsqrt.pop %v495
        %v540 = vmul.f32 %v539, %v495
        %v541 = vmul.f32 %v540, %v539
        %v542 = vmul.f32 0.5, %v541
        %v543 = vsub.f32 1.5, %v542
        %v544 = vmul.f32 %v539, %v543
        %vm545 = vweird.f32 %v495
        %vm546 = vweird.f32 %v539
        %vm547 = vmor %vm545, %vm546
        %v548 = vsel %vm547, %v539, %v544
        %v549 = vrsqrt.pop %v496
        %v550 = vmul.f32 %v549, %v496
        %v551 = vmul.f32 %v550, %v549
        %v552 = vmul.f32 0.5, %v551
        %v553 = vsub.f32 1.5, %v552
        %v554 = vmul.f32 %v549, %v553
        %vm555 = vweird.f32 %v496
        %vm556 = vweird.f32 %v549
        %vm557 = vmor %vm555, %vm556
        %v558 = vsel %vm557, %v549, %v554
        %v559 = vrsqrt.pop %v497
        %v560 = vmul.f32 %v559, %v497
        %v561 = vmul.f32 %v560, %v559
        %v562 = vmul.f32 0.5, %v561
        %v563 = vsub.f32 1.5, %v562
        %v564 = vmul.f32 %v559, %v563
        %vm565 = vweird.f32 %v497
        %vm566 = vweird.f32 %v559
        %vm567 = vmor %vm565, %vm566
        %v568 = vsel %vm567, %v559, %v564
        %v569 = vrsqrt.pop %v498
        %v570 = vmul.f32 %v569, %v498
        %v571 = vmul.f32 %v570, %v569
        %v572 = vmul.f32 0.5, %v571
        %v573 = vsub.f32 1.5, %v572
        %v574 = vmul.f32 %v569, %v573
        %vm575 = vweird.f32 %v498
        %vm576 = vweird.f32 %v569
        %vm577 = vmor %vm575, %vm576
        %v578 = vsel %vm577, %v569, %v574
        %v579 = vmul.f32 %v451, %v508
        %v580 = vmul.f32 %v452, %v518
        %v581 = vmul.f32 %v453, %v528
        %v582 = vmul.f32 %v454, %v538
        %v583 = vmul.f32 %v455, %v548
        %v584 = vmul.f32 %v456, %v558
        %v585 = vmul.f32 %v457, %v568
        %v586 = vmul.f32 %v458, %v578
        %v588 = vperm.slane %v418, 0
        %v590 = vmul.f32 %v579, %v588
        %v591 = vmul.f32 %v580, %v588
        %v592 = vmul.f32 %v581, %v588
        %v593 = vmul.f32 %v582, %v588
        %v594 = vmul.f32 %v583, %v588
        %v595 = vmul.f32 %v584, %v588
        %v596 = vmul.f32 %v585, %v588
        %v597 = vmul.f32 %v586, %v588
        %v599 = vperm.slane %v419, 0
        %v601 = vadd.f32 %v590, %v599
        %v602 = vadd.f32 %v591, %v599
        %v603 = vadd.f32 %v592, %v599
        %v604 = vadd.f32 %v593, %v599
        %v605 = vadd.f32 %v594, %v599
        %v606 = vadd.f32 %v595, %v599
        %v607 = vadd.f32 %v596, %v599
        %v608 = vadd.f32 %v597, %v599
        %v609 = vld [vmem:[#allocation6] sm:$0xff]
        %v610 = vld [vmem:[#allocation6 + $0x8] sm:$0xff]
        %v611 = vld [vmem:[#allocation6 + $0x10] sm:$0xff]
        %v612 = vld [vmem:[#allocation6 + $0x18] sm:$0xff]
        %v613 = vld [vmem:[#allocation6 + $0x20] sm:$0xff]
        %v614 = vld [vmem:[#allocation6 + $0x28] sm:$0xff]
        %v615 = vld [vmem:[#allocation6 + $0x30] sm:$0xff]
        %v616 = vld [vmem:[#allocation6 + $0x38] sm:$0xff]
        %v617 = vld [vmem:[#allocation6 + $0x40] sm:$0xff]
        %v618 = vld [vmem:[#allocation6 + $0x48] sm:$0xff]
        %v619 = vld [vmem:[#allocation6 + $0x50] sm:$0xff]
        %v620 = vld [vmem:[#allocation6 + $0x58] sm:$0xff]
        %v621 = vld [vmem:[#allocation6 + $0x60] sm:$0xff]
        %v622 = vld [vmem:[#allocation6 + $0x68] sm:$0xff]
        %v623 = vld [vmem:[#allocation6 + $0x70] sm:$0xff]
        %v624 = vld [vmem:[#allocation6 + $0x78] sm:$0xff]
        %v625 = vld [vmem:[#allocation6 + $0x80] sm:$0xff]
        %v626 = vld [vmem:[#allocation6 + $0x88] sm:$0xff]
        %v627 = vld [vmem:[#allocation6 + $0x90] sm:$0xff]
        %v628 = vld [vmem:[#allocation6 + $0x98] sm:$0xff]
        %v629 = vld [vmem:[#allocation6 + $0xa0] sm:$0xff]
        %v630 = vld [vmem:[#allocation6 + $0xa8] sm:$0xff]
        %v631 = vld [vmem:[#allocation6 + $0xb0] sm:$0xff]
        %v632 = vld [vmem:[#allocation6 + $0xb8] sm:$0xff]
        %v633 = vld [vmem:[#allocation6 + $0xc0] sm:$0xff]
        %v634 = vld [vmem:[#allocation6 + $0xc8] sm:$0xff]
        %v635 = vld [vmem:[#allocation6 + $0xd0] sm:$0xff]
        %v636 = vld [vmem:[#allocation6 + $0xd8] sm:$0xff]
        %v637 = vld [vmem:[#allocation6 + $0xe0] sm:$0xff]
        %v638 = vld [vmem:[#allocation6 + $0xe8] sm:$0xff]
        %v639 = vld [vmem:[#allocation6 + $0xf0] sm:$0xff]
        %v640 = vld [vmem:[#allocation6 + $0xf8] sm:$0xff]
        %v641 = vld [vmem:[#allocation7] sm:$0x3]
        %v643 = vperm.slane %v641, 0
        %v644 = vperm.slane %v641, 1
        %647 = vmatpush.msra.mxu0 %v639
        %648 = vmatpush.msra.mxu0 %v637
        %649 = vmatpush.msra.mxu0 %v635
        %650 = vmatpush.msra.mxu0 %v633
        %651 = vmatpush.msra.mxu0 %v631
        %652 = vmatpush.msra.mxu0 %v629
        %653 = vmatpush.msra.mxu0 %v627
        %654 = vmatpush.msra.mxu0 %v625
        %655 = vmatpush.msra.mxu0 %v623
        %656 = vmatpush.msra.mxu0 %v621
        %657 = vmatpush.msra.mxu0 %v619
        %658 = vmatpush.msra.mxu0 %v617
        %659 = vmatpush.msra.mxu0 %v615
        %660 = vmatpush.msra.mxu0 %v613
        %661 = vmatpush.msra.mxu0 %v611
        %662 = vmatpush.msra.mxu0 %v609
        %663 = vmatmul.f32.gmra.mxu0 %v601
        %v664 = vpop.f32.mrf.mxu0
        %v665 = vadd.f32 %v643, %v664
        %666 = vmatmul.f32.gmra.mxu0 %v602
        %v667 = vpop.f32.mrf.mxu0
        %v668 = vadd.f32 %v643, %v667
        %669 = vmatmul.f32.gmra.mxu0 %v603
        %v670 = vpop.f32.mrf.mxu0
        %v671 = vadd.f32 %v643, %v670
        %672 = vmatmul.f32.gmra.mxu0 %v604
        %v673 = vpop.f32.mrf.mxu0
        %v674 = vadd.f32 %v643, %v673
        %675 = vmatmul.f32.gmra.mxu0 %v605
        %v676 = vpop.f32.mrf.mxu0
        %v677 = vadd.f32 %v643, %v676
        %678 = vmatmul.f32.gmra.mxu0 %v606
        %v679 = vpop.f32.mrf.mxu0
        %v680 = vadd.f32 %v643, %v679
        %681 = vmatmul.f32.gmra.mxu0 %v607
        %v682 = vpop.f32.mrf.mxu0
        %v683 = vadd.f32 %v643, %v682
        %684 = vmatmul.f32.gmra.mxu0 %v608
        %v685 = vpop.f32.mrf.mxu0
        %v686 = vadd.f32 %v643, %v685
        %687 = vdwg.mxu0
        %688 = vmatpush.msra.mxu0 %v640
        %689 = vmatpush.msra.mxu0 %v638
        %690 = vmatpush.msra.mxu0 %v636
        %691 = vmatpush.msra.mxu0 %v634
        %692 = vmatpush.msra.mxu0 %v632
        %693 = vmatpush.msra.mxu0 %v630
        %694 = vmatpush.msra.mxu0 %v628
        %695 = vmatpush.msra.mxu0 %v626
        %696 = vmatpush.msra.mxu0 %v624
        %697 = vmatpush.msra.mxu0 %v622
        %698 = vmatpush.msra.mxu0 %v620
        %699 = vmatpush.msra.mxu0 %v618
        %700 = vmatpush.msra.mxu0 %v616
        %701 = vmatpush.msra.mxu0 %v614
        %702 = vmatpush.msra.mxu0 %v612
        %703 = vmatpush.msra.mxu0 %v610
        %704 = vmatmul.f32.gmra.mxu0 %v601
        %v705 = vpop.f32.mrf.mxu0
        %v706 = vadd.f32 %v644, %v705
        %707 = vmatmul.f32.gmra.mxu0 %v602
        %v708 = vpop.f32.mrf.mxu0
        %v709 = vadd.f32 %v644, %v708
        %710 = vmatmul.f32.gmra.mxu0 %v603
        %v711 = vpop.f32.mrf.mxu0
        %v712 = vadd.f32 %v644, %v711
        %713 = vmatmul.f32.gmra.mxu0 %v604
        %v714 = vpop.f32.mrf.mxu0
        %v715 = vadd.f32 %v644, %v714
        %716 = vmatmul.f32.gmra.mxu0 %v605
        %v717 = vpop.f32.mrf.mxu0
        %v718 = vadd.f32 %v644, %v717
        %719 = vmatmul.f32.gmra.mxu0 %v606
        %v720 = vpop.f32.mrf.mxu0
        %v721 = vadd.f32 %v644, %v720
        %722 = vmatmul.f32.gmra.mxu0 %v607
        %v723 = vpop.f32.mrf.mxu0
        %v724 = vadd.f32 %v644, %v723
        %725 = vmatmul.f32.gmra.mxu0 %v608
        %v726 = vpop.f32.mrf.mxu0
        %v727 = vadd.f32 %v644, %v726
        %728 = vdwg.mxu0
        %v729 = vmul.f32 %v665, 0.5
        %v730 = vmul.f32 %v706, 0.5
        %v731 = vmul.f32 %v668, 0.5
        %v732 = vmul.f32 %v709, 0.5
        %v733 = vmul.f32 %v671, 0.5
        %v734 = vmul.f32 %v712, 0.5
        %v735 = vmul.f32 %v674, 0.5
        %v736 = vmul.f32 %v715, 0.5
        %v737 = vmul.f32 %v677, 0.5
        %v738 = vmul.f32 %v718, 0.5
        %v739 = vmul.f32 %v680, 0.5
        %v740 = vmul.f32 %v721, 0.5
        %v741 = vmul.f32 %v683, 0.5
        %v742 = vmul.f32 %v724, 0.5
        %v743 = vmul.f32 %v686, 0.5
        %v744 = vmul.f32 %v727, 0.5
        %v745 = vmul.f32 %v665, 0.044715
        %v746 = vmul.f32 %v706, 0.044715
        %v747 = vmul.f32 %v668, 0.044715
        %v748 = vmul.f32 %v709, 0.044715
        %v749 = vmul.f32 %v671, 0.044715
        %v750 = vmul.f32 %v712, 0.044715
        %v751 = vmul.f32 %v674, 0.044715
        %v752 = vmul.f32 %v715, 0.044715
        %v753 = vmul.f32 %v677, 0.044715
        %v754 = vmul.f32 %v718, 0.044715
        %v755 = vmul.f32 %v680, 0.044715
        %v756 = vmul.f32 %v721, 0.044715
        %v757 = vmul.f32 %v683, 0.044715
        %v758 = vmul.f32 %v724, 0.044715
        %v759 = vmul.f32 %v686, 0.044715
        %v760 = vmul.f32 %v727, 0.044715
        %v761 = vmul.f32 %v745, %v665
        %v762 = vmul.f32 %v746, %v706
        %v763 = vmul.f32 %v747, %v668
        %v764 = vmul.f32 %v748, %v709
        %v765 = vmul.f32 %v749, %v671
        %v766 = vmul.f32 %v750, %v712
        %v767 = vmul.f32 %v751, %v674
        %v768 = vmul.f32 %v752, %v715
        %v769 = vmul.f32 %v753, %v677
        %v770 = vmul.f32 %v754, %v718
        %v771 = vmul.f32 %v755, %v680
        %v772 = vmul.f32 %v756, %v721
        %v773 = vmul.f32 %v757, %v683
        %v774 = vmul.f32 %v758, %v724
        %v775 = vmul.f32 %v759, %v686
        %v776 = vmul.f32 %v760, %v727
        %v777 = vmul.f32 %v761, %v665
        %v778 = vmul.f32 %v762, %v706
        %v779 = vmul.f32 %v763, %v668
        %v780 = vmul.f32 %v764, %v709
        %v781 = vmul.f32 %v765, %v671
        %v782 = vmul.f32 %v766, %v712
        %v783 = vmul.f32 %v767, %v674
        %v784 = vmul.f32 %v768, %v715
        %v785 = vmul.f32 %v769, %v677
        %v786 = vmul.f32 %v770, %v718
        %v787 = vmul.f32 %v771, %v680
        %v788 = vmul.f32 %v772, %v721
        %v789 = vmul.f32 %v773, %v683
        %v790 = vmul.f32 %v774, %v724
        %v791 = vmul.f32 %v775, %v686
        %v792 = vmul.f32 %v776, %v727
        %v793 = vadd.f32 %v665, %v777
        %v794 = vadd.f32 %v706, %v778
        %v795 = vadd.f32 %v668, %v779
        %v796 = vadd.f32 %v709, %v780
        %v797 = vadd.f32 %v671, %v781
        %v798 = vadd.f32 %v712, %v782
        %v799 = vadd.f32 %v674, %v783
        %v800 = vadd.f32 %v715, %v784
        %v801 = vadd.f32 %v677, %v785
        %v802 = vadd.f32 %v718, %v786
        %v803 = vadd.f32 %v680, %v787
        %v804 = vadd.f32 %v721, %v788
        %v805 = vadd.f32 %v683, %v789
        %v806 = vadd.f32 %v724, %v790
        %v807 = vadd.f32 %v686, %v791
        %v808 = vadd.f32 %v727, %v792
        %v809 = vmul.f32 %v793, 0.7978846
        %v810 = vmul.f32 %v794, 0.7978846
        %v811 = vmul.f32 %v795, 0.7978846
        %v812 = vmul.f32 %v796, 0.7978846
        %v813 = vmul.f32 %v797, 0.7978846
        %v814 = vmul.f32 %v798, 0.7978846
        %v815 = vmul.f32 %v799, 0.7978846
        %v816 = vmul.f32 %v800, 0.7978846
        %v817 = vmul.f32 %v801, 0.7978846
        %v818 = vmul.f32 %v802, 0.7978846
        %v819 = vmul.f32 %v803, 0.7978846
        %v820 = vmul.f32 %v804, 0.7978846
        %v821 = vmul.f32 %v805, 0.7978846
        %v822 = vmul.f32 %v806, 0.7978846
        %v823 = vmul.f32 %v807, 0.7978846
        %v824 = vmul.f32 %v808, 0.7978846
        %v825 = vtanh.pop %v809
        %v826 = vtanh.pop %v810
        %v827 = vtanh.pop %v811
        %v828 = vtanh.pop %v812
        %v829 = vtanh.pop %v813
        %v830 = vtanh.pop %v814
        %v831 = vtanh.pop %v815
        %v832 = vtanh.pop %v816
        %v833 = vtanh.pop %v817
        %v834 = vtanh.pop %v818
        %v835 = vtanh.pop %v819
        %v836 = vtanh.pop %v820
        %v837 = vtanh.pop %v821
        %v838 = vtanh.pop %v822
        %v839 = vtanh.pop %v823
        %v840 = vtanh.pop %v824
        %v841 = vadd.f32 %v825, 1.0
        %v842 = vadd.f32 %v826, 1.0
        %v843 = vadd.f32 %v827, 1.0
        %v844 = vadd.f32 %v828, 1.0
        %v845 = vadd.f32 %v829, 1.0
        %v846 = vadd.f32 %v830, 1.0
        %v847 = vadd.f32 %v831, 1.0
        %v848 = vadd.f32 %v832, 1.0
        %v849 = vadd.f32 %v833, 1.0
        %v850 = vadd.f32 %v834, 1.0
        %v851 = vadd.f32 %v835, 1.0
        %v852 = vadd.f32 %v836, 1.0
        %v853 = vadd.f32 %v837, 1.0
        %v854 = vadd.f32 %v838, 1.0
        %v855 = vadd.f32 %v839, 1.0
        %v856 = vadd.f32 %v840, 1.0
        %v857 = vmul.f32 %v729, %v841
        %v858 = vmul.f32 %v730, %v842
        %v859 = vmul.f32 %v731, %v843
        %v860 = vmul.f32 %v732, %v844
        %v861 = vmul.f32 %v733, %v845
        %v862 = vmul.f32 %v734, %v846
        %v863 = vmul.f32 %v735, %v847
        %v864 = vmul.f32 %v736, %v848
        %v865 = vmul.f32 %v737, %v849
        %v866 = vmul.f32 %v738, %v850
        %v867 = vmul.f32 %v739, %v851
        %v868 = vmul.f32 %v740, %v852
        %v869 = vmul.f32 %v741, %v853
        %v870 = vmul.f32 %v742, %v854
        %v871 = vmul.f32 %v743, %v855
        %v872 = vmul.f32 %v744, %v856
        %v873 = vld [vmem:[#allocation9] sm:$0xff]
        %v874 = vld [vmem:[#allocation9 + $0x8] sm:$0xff]
        %v875 = vld [vmem:[#allocation9 + $0x10] sm:$0xff]
        %v876 = vld [vmem:[#allocation9 + $0x18] sm:$0xff]
        %v877 = vld [vmem:[#allocation9 + $0x20] sm:$0xff]
        %v878 = vld [vmem:[#allocation9 + $0x28] sm:$0xff]
        %v879 = vld [vmem:[#allocation9 + $0x30] sm:$0xff]
        %v880 = vld [vmem:[#allocation9 + $0x38] sm:$0xff]
        %v881 = vld [vmem:[#allocation9 + $0x40] sm:$0xff]
        %v882 = vld [vmem:[#allocation9 + $0x48] sm:$0xff]
        %v883 = vld [vmem:[#allocation9 + $0x50] sm:$0xff]
        %v884 = vld [vmem:[#allocation9 + $0x58] sm:$0xff]
        %v885 = vld [vmem:[#allocation9 + $0x60] sm:$0xff]
        %v886 = vld [vmem:[#allocation9 + $0x68] sm:$0xff]
        %v887 = vld [vmem:[#allocation9 + $0x70] sm:$0xff]
        %v888 = vld [vmem:[#allocation9 + $0x78] sm:$0xff]
        %v889 = vld [vmem:[#allocation9 + $0x80] sm:$0xff]
        %v890 = vld [vmem:[#allocation9 + $0x88] sm:$0xff]
        %v891 = vld [vmem:[#allocation9 + $0x90] sm:$0xff]
        %v892 = vld [vmem:[#allocation9 + $0x98] sm:$0xff]
        %v893 = vld [vmem:[#allocation9 + $0xa0] sm:$0xff]
        %v894 = vld [vmem:[#allocation9 + $0xa8] sm:$0xff]
        %v895 = vld [vmem:[#allocation9 + $0xb0] sm:$0xff]
        %v896 = vld [vmem:[#allocation9 + $0xb8] sm:$0xff]
        %v897 = vld [vmem:[#allocation9 + $0xc0] sm:$0xff]
        %v898 = vld [vmem:[#allocation9 + $0xc8] sm:$0xff]
        %v899 = vld [vmem:[#allocation9 + $0xd0] sm:$0xff]
        %v900 = vld [vmem:[#allocation9 + $0xd8] sm:$0xff]
        %v901 = vld [vmem:[#allocation9 + $0xe0] sm:$0xff]
        %v902 = vld [vmem:[#allocation9 + $0xe8] sm:$0xff]
        %v903 = vld [vmem:[#allocation9 + $0xf0] sm:$0xff]
        %v904 = vld [vmem:[#allocation9 + $0xf8] sm:$0xff]
        %v905 = vld [vmem:[#allocation10] sm:$0x1]
        %v907 = vperm.slane %v905, 0
        %909 = vmatpush.msra.mxu0 %v888
        %910 = vmatpush.msra.mxu0 %v887
        %911 = vmatpush.msra.mxu0 %v886
        %912 = vmatpush.msra.mxu0 %v885
        %913 = vmatpush.msra.mxu0 %v884
        %914 = vmatpush.msra.mxu0 %v883
        %915 = vmatpush.msra.mxu0 %v882
        %916 = vmatpush.msra.mxu0 %v881
        %917 = vmatpush.msra.mxu0 %v880
        %918 = vmatpush.msra.mxu0 %v879
        %919 = vmatpush.msra.mxu0 %v878
        %920 = vmatpush.msra.mxu0 %v877
        %921 = vmatpush.msra.mxu0 %v876
        %922 = vmatpush.msra.mxu0 %v875
        %923 = vmatpush.msra.mxu0 %v874
        %924 = vmatpush.msra.mxu0 %v873
        %925 = vmatmul.f32.gmra.mxu0 %v857
        %v926 = vpop.f32.mrf.mxu0
        %v927 = vadd.f32 %v907, %v926
        %928 = vmatmul.f32.gmra.mxu0 %v859
        %v929 = vpop.f32.mrf.mxu0
        %v930 = vadd.f32 %v907, %v929
        %931 = vmatmul.f32.gmra.mxu0 %v861
        %v932 = vpop.f32.mrf.mxu0
        %v933 = vadd.f32 %v907, %v932
        %934 = vmatmul.f32.gmra.mxu0 %v863
        %v935 = vpop.f32.mrf.mxu0
        %v936 = vadd.f32 %v907, %v935
        %937 = vmatmul.f32.gmra.mxu0 %v865
        %v938 = vpop.f32.mrf.mxu0
        %v939 = vadd.f32 %v907, %v938
        %940 = vmatmul.f32.gmra.mxu0 %v867
        %v941 = vpop.f32.mrf.mxu0
        %v942 = vadd.f32 %v907, %v941
        %943 = vmatmul.f32.gmra.mxu0 %v869
        %v944 = vpop.f32.mrf.mxu0
        %v945 = vadd.f32 %v907, %v944
        %946 = vmatmul.f32.gmra.mxu0 %v871
        %v947 = vpop.f32.mrf.mxu0
        %v948 = vadd.f32 %v907, %v947
        %949 = vdwg.mxu0
        %950 = vmatpush.msra.mxu0 %v904
        %951 = vmatpush.msra.mxu0 %v903
        %952 = vmatpush.msra.mxu0 %v902
        %953 = vmatpush.msra.mxu0 %v901
        %954 = vmatpush.msra.mxu0 %v900
        %955 = vmatpush.msra.mxu0 %v899
        %956 = vmatpush.msra.mxu0 %v898
        %957 = vmatpush.msra.mxu0 %v897
        %958 = vmatpush.msra.mxu0 %v896
        %959 = vmatpush.msra.mxu0 %v895
        %960 = vmatpush.msra.mxu0 %v894
        %961 = vmatpush.msra.mxu0 %v893
        %962 = vmatpush.msra.mxu0 %v892
        %963 = vmatpush.msra.mxu0 %v891
        %964 = vmatpush.msra.mxu0 %v890
        %965 = vmatpush.msra.mxu0 %v889
        %966 = vmatmul.f32.gmra.mxu0 %v858
        %v967 = vpop.f32.mrf.mxu0
        %v968 = vadd.f32 %v927, %v967
        %969 = vmatmul.f32.gmra.mxu0 %v860
        %v970 = vpop.f32.mrf.mxu0
        %v971 = vadd.f32 %v930, %v970
        %972 = vmatmul.f32.gmra.mxu0 %v862
        %v973 = vpop.f32.mrf.mxu0
        %v974 = vadd.f32 %v933, %v973
        %975 = vmatmul.f32.gmra.mxu0 %v864
        %v976 = vpop.f32.mrf.mxu0
        %v977 = vadd.f32 %v936, %v976
        %978 = vmatmul.f32.gmra.mxu0 %v866
        %v979 = vpop.f32.mrf.mxu0
        %v980 = vadd.f32 %v939, %v979
        %981 = vmatmul.f32.gmra.mxu0 %v868
        %v982 = vpop.f32.mrf.mxu0
        %v983 = vadd.f32 %v942, %v982
        %984 = vmatmul.f32.gmra.mxu0 %v870
        %v985 = vpop.f32.mrf.mxu0
        %v986 = vadd.f32 %v945, %v985
        %987 = vmatmul.f32.gmra.mxu0 %v872
        %v988 = vpop.f32.mrf.mxu0
        %v989 = vadd.f32 %v948, %v988
        %990 = vdwg.mxu0
        %v991 = vadd.f32 %v968, %v410
        %v992 = vadd.f32 %v971, %v411
        %v993 = vadd.f32 %v974, %v412
        %v994 = vadd.f32 %v977, %v413
        %v995 = vadd.f32 %v980, %v414
        %v996 = vadd.f32 %v983, %v415
        %v997 = vadd.f32 %v986, %v416
        %v998 = vadd.f32 %v989, %v417
        %999 = vst [vmem:[%s408] sm:$0xff] %v991
        %1000 = vst [vmem:[%s408 + $0x8] sm:$0xff] %v992
        %1001 = vst [vmem:[%s408 + $0x10] sm:$0xff] %v993
        %1002 = vst [vmem:[%s408 + $0x18] sm:$0xff] %v994
        %1003 = vst [vmem:[%s408 + $0x20] sm:$0xff] %v995
        %1004 = vst [vmem:[%s408 + $0x28] sm:$0xff] %v996
        %1005 = vst [vmem:[%s408 + $0x30] sm:$0xff] %v997
        %1006 = vst [vmem:[%s408 + $0x38] sm:$0xff] %v998
        %s1007 = smul.u32 8, %s27
        %p1008 = scmp.lt.s32.totalorder %s26, 1
        %s1009 = scalar_select %p1008, %s26, 1
        %p1010 = scmp.lt.s32.totalorder %s1007, 31
        %s1011 = scalar_select %p1010, %s1007, 31
        %s1012 = smul.addr %s1009, 32
        %s1013 = sadd.s32 %s1011, %s1012
        %s1014 = smul.addr %s1013, 8
        %s1015 = scalar_lea.vmem %s7, %s1014
        // Predicated region
        $region73: #{ext_transformer_encoder_forward.9} parent=47 // pred_check
          %p1016 = pneg %p208
        $region74: #{ext_transformer_encoder_forward.9} parent=47 // pred_check_branch
          %1018 = sbr.rel (%p1016) target = $region76
        $region75: #{ext_transformer_encoder_forward.9} parent=47 // pred_region
          %s1019 = smul.u32 8, %s27
        $region76: #{ext_transformer_encoder_forward.9} parent=47 // pred_fallthru
          _
      $region48: #{ext_transformer_encoder_forward.9} parent=5 // pred_fallthru
        _
      %p1020 = scmp.le.s32.totalorder 2, %s17
      // Predicated region
      $region77: #{ext_transformer_encoder_forward.9} parent=5 // pred_check
        %p1021 = pneg %p1020
      $region78: #{ext_transformer_encoder_forward.9} parent=5 // pred_check_branch
        %1023 = sbr.rel (%p1021) target = $region80
      $region79: #{ext_transformer_encoder_forward.9} parent=5 // pred_region
        %s1024 = ssub.s32 %s17, 2
        // Predicated region
        $region81: #{ext_transformer_encoder_forward.9} parent=79 // pred_check
          %p1025 = pneg %p214
        $region82: #{ext_transformer_encoder_forward.9} parent=79 // pred_check_branch
          %1027 = sbr.rel (%p1025) target = $region84
        $region83: #{ext_transformer_encoder_forward.9} parent=79 // pred_region
          %s1028 = smul.u32 8, %s29
          %p1029 = scmp.lt.s32.totalorder %s28, 1
          %s1030 = scalar_select %p1029, %s28, 1
          %p1031 = scmp.lt.s32.totalorder %s1028, 31
          %s1032 = scalar_select %p1031, %s1028, 31
          %s1033 = smul.addr %s1030, 32
          %s1034 = sadd.s32 %s1032, %s1033
          %s1035 = smul.addr %s1034, 8
          %s1036 = scalar_lea.vmem %s7, %s1035
        $region84: #{ext_transformer_encoder_forward.9} parent=79 // pred_fallthru
          _
      $region80: #{ext_transformer_encoder_forward.9} parent=5 // pred_fallthru
        _
    $region6: #{ext_transformer_encoder_forward.9} parent=1 // loop_footer
      %s21 = sadd.s32 1, %s17
    $region7: #{ext_transformer_encoder_forward.9} parent=1 // loop_footer_branch
      %16 = sbr.rel target = $region3
    $region8: #{ext_transformer_encoder_forward.9} parent=1 // loop_exit
      _
    %1037 = vsyncpa [#allocation3], 1
    %s1038 = scalar_lea.sflag [#allocation3], 1
    %1039 = vsyncpa %s1038, 1
    %1040 = vsyncpa [#allocation5], 1
    %1041 = vsyncpa [#allocation8], 1
    %1042 = vsyncpa [#allocation11], 1

// kernel: ext_transformer_encoder_forward.13
$region0: #{ext_transformer_encoder_forward.13}
  #allocation0 [shape = 'u32[]', space=smem, size = 0x4, offset = 0x4, fixed_abs, tag = 'smem constant byte address 0x4 - core index']
  #allocation1 [shape = 'u32[72,128]{1,0:T(1,128)}', space=vmem, size = 0x9000, scoped, tag = 'internal scratch']
  #allocation2 [shape = 'f32[1,1]{1,0:T(1,128)S(1)}', space=vmem, size = 0x200, scoped, tag = 'scoped memory for ext_transformer_encoder_forward.13']
  %s0 = inlined_call_operand.vmem [shape: f32[2,256,128], index: 0, kind: input, shape index: {}]
  %s1 = inlined_call_operand.hbm [shape: f32[1,128], index: 1, kind: input, shape index: {}]
  %s2 = inlined_call_operand.hbm [shape: f32[1,128], index: 2, kind: input, shape index: {}]
  %s3 = inlined_call_operand.hbm [shape: f32[1,128], index: 3, kind: input, shape index: {}]
  %s4 = inlined_call_operand.<no memory space> [shape: f32[1,1], index: 4, kind: input, shape index: {}]
  %s5 = inlined_call_operand.vmem [shape: f32[2,256,1], index: 5, kind: input, shape index: {}]
  %s6 = inlined_call_operand.vmem [shape: f32[2,256,1], index: 6, kind: output, shape index: {}]
  %s7 = sld [smem:[#allocation0]]
  $region69: #{ext_transformer_encoder_forward.13} parent=0
    _
  %s9 = ssub.s32 1, %s7
  %s10 = scalar_select 0, %s9, %s7
  %v11 = vstv %s4
  %12 = vst [vmem:[#allocation2] sm:$0x1] %v11
  $region1: #{ext_transformer_encoder_forward.13} parent=0
    #allocation3 [shape = 'u8[512]{0}', space=vmem, size = 0x400, scoped, tag = 'input window, operand 1, single buffered']
    #allocation4 [shape = 's32[2]{0}', space=sflag, size = 0x8, scoped, tag = 'scoped memory for ext_transformer_encoder_forward.13']
    #allocation5 [shape = 'u8[512]{0}', space=vmem, size = 0x400, scoped, tag = 'input window, operand 2, single buffered']
    #allocation6 [shape = 's32[1]{0}', space=sflag, size = 0x4, scoped, tag = 'scoped memory for ext_transformer_encoder_forward.13']
    #allocation7 [shape = 'u8[512]{0}', space=vmem, size = 0x400, scoped, tag = 'input window, operand 3, single buffered']
    %13 = vsyncpa [#allocation4], 0
    %14 = vsyncpa [#allocation6], 0
    loop: start=0, step=1, limit=10
    $region2: #{ext_transformer_encoder_forward.13} parent=1 // loop_pre_header
      _
    $region3: #{ext_transformer_encoder_forward.13} parent=1 // loop_header
      %s16 = sphi 0, %s20
      %p17 = scmp.ge.s32.totalorder %s16, 10
      %s23 = sphi 0, %s35
      %s24 = sphi 0, %s31
      %s25 = sphi 0, %s23
      %s26 = sphi 0, %s24
      %s27 = sphi 0, %s25
      %s28 = sphi 0, %s26
      %s40 = sphi 0, %s42
      %s43 = sphi 0, %s40
      %s44 = sphi 0, %s43
      %s60 = sphi 0, %s44
      %s64 = sphi 0, %s64
      %s66 = sphi 0, %s64
      %s67 = sphi 0, %s66
      %s81 = sphi 0, %s67
      %s85 = sphi 0, %s85
      %s87 = sphi 0, %s85
      %s88 = sphi 0, %s87
      %s102 = sphi 0, %s88
      %s106 = sphi 0, %s106
      %s108 = sphi 0, %s106
      %s109 = sphi 0, %s108
      %s123 = sphi 0, %s109
      %s127 = sphi 0, %s127
      %s129 = sphi 0, %s127
      %s130 = sphi 0, %s129
      %s144 = sphi 0, %s130
      %s152 = sphi 0, %s154
      %s155 = sphi 0, %s152
      %s156 = sphi 0, %s155
      %s172 = sphi 0, %s156
      %s180 = sphi 0, %s182
      %s183 = sphi 0, %s180
      %s184 = sphi 0, %s183
      %s200 = sphi 0, %s184
    $region4: #{ext_transformer_encoder_forward.13} parent=1 // loop_header_branch
      %19 = sbr.rel (%p17) target = $region8
    $region5: #{ext_transformer_encoder_forward.13} parent=1 // loop_body
      %s21 = ssub.s32 %s16, 1
      %s22 = ssub.s32 %s16, 2
      %s29 = sadd.s32 1, %s24
      %p30 = scmp.ge.s32.totalorder %s29, 4
      %s31 = scalar_select %p30, 0, %s29
      %s32 = sadd.s32 1, %s23
      %s33 = scalar_select %p30, %s32, %s23
      %p34 = scmp.ge.s32.totalorder %s33, 2
      %s35 = scalar_select %p34, 0, %s33
      %s36 = ssub.s32 %s23, %s35
      %s37 = ssub.s32 %s24, %s31
      %s38 = sor.u32 %s36, %s37
      %p39 = scmp.eq.s32.totalorder %s38, 0
      %s41 = sadd.s32 %s40, 1
      %s42 = scalar_select %p39, %s40, %s41
      %p45 = pneg %p39
      %p46 = scmp.eq.s32.totalorder %s16, 7
      %p47 = por %p45, %p46
      %p48 = scmp.ne.s32.totalorder %s40, %s43
      %p49 = scmp.eq.s32.totalorder %s16, 0
      %p50 = por %p48, %p49
      %p51 = scmp.ne.s32.totalorder %s40, %s43
      %p52 = scmp.eq.s32.totalorder %s21, 7
      %p53 = por %p51, %p52
      %p54 = scmp.ne.s32.totalorder %s43, %s44
      %p55 = scmp.eq.s32.totalorder %s21, 0
      %p56 = por %p54, %p55
      %p57 = scmp.ne.s32.totalorder %s43, %s44
      %p58 = scmp.eq.s32.totalorder %s22, 7
      %p59 = por %p57, %p58
      %p61 = scmp.ne.s32.totalorder %s44, %s60
      %p62 = scmp.eq.s32.totalorder %s22, 0
      %p63 = por %p61, %p62
      %s65 = sadd.s32 %s64, 1
      %p68 = scmp.eq.s32.totalorder %s16, 7
      %p69 = scmp.ne.s32.totalorder %s64, %s66
      %p70 = scmp.eq.s32.totalorder %s16, 0
      %p71 = por %p69, %p70
      %p72 = scmp.ne.s32.totalorder %s64, %s66
      %p73 = scmp.eq.s32.totalorder %s21, 7
      %p74 = por %p72, %p73
      %p75 = scmp.ne.s32.totalorder %s66, %s67
      %p76 = scmp.eq.s32.totalorder %s21, 0
      %p77 = por %p75, %p76
      %p78 = scmp.ne.s32.totalorder %s66, %s67
      %p79 = scmp.eq.s32.totalorder %s22, 7
      %p80 = por %p78, %p79
      %p82 = scmp.ne.s32.totalorder %s67, %s81
      %p83 = scmp.eq.s32.totalorder %s22, 0
      %p84 = por %p82, %p83
      %s86 = sadd.s32 %s85, 1
      %p89 = scmp.eq.s32.totalorder %s16, 7
      %p90 = scmp.ne.s32.totalorder %s85, %s87
      %p91 = scmp.eq.s32.totalorder %s16, 0
      %p92 = por %p90, %p91
      %p93 = scmp.ne.s32.totalorder %s85, %s87
      %p94 = scmp.eq.s32.totalorder %s21, 7
      %p95 = por %p93, %p94
      %p96 = scmp.ne.s32.totalorder %s87, %s88
      %p97 = scmp.eq.s32.totalorder %s21, 0
      %p98 = por %p96, %p97
      %p99 = scmp.ne.s32.totalorder %s87, %s88
      %p100 = scmp.eq.s32.totalorder %s22, 7
      %p101 = por %p99, %p100
      %p103 = scmp.ne.s32.totalorder %s88, %s102
      %p104 = scmp.eq.s32.totalorder %s22, 0
      %p105 = por %p103, %p104
      %s107 = sadd.s32 %s106, 1
      %p110 = scmp.eq.s32.totalorder %s16, 7
      %p111 = scmp.ne.s32.totalorder %s106, %s108
      %p112 = scmp.eq.s32.totalorder %s16, 0
      %p113 = por %p111, %p112
      %p114 = scmp.ne.s32.totalorder %s106, %s108
      %p115 = scmp.eq.s32.totalorder %s21, 7
      %p116 = por %p114, %p115
      %p117 = scmp.ne.s32.totalorder %s108, %s109
      %p118 = scmp.eq.s32.totalorder %s21, 0
      %p119 = por %p117, %p118
      %p120 = scmp.ne.s32.totalorder %s108, %s109
      %p121 = scmp.eq.s32.totalorder %s22, 7
      %p122 = por %p120, %p121
      %p124 = scmp.ne.s32.totalorder %s109, %s123
      %p125 = scmp.eq.s32.totalorder %s22, 0
      %p126 = por %p124, %p125
      %s128 = sadd.s32 %s127, 1
      %p131 = scmp.eq.s32.totalorder %s16, 7
      %p132 = scmp.ne.s32.totalorder %s127, %s129
      %p133 = scmp.eq.s32.totalorder %s16, 0
      %p134 = por %p132, %p133
      %p135 = scmp.ne.s32.totalorder %s127, %s129
      %p136 = scmp.eq.s32.totalorder %s21, 7
      %p137 = por %p135, %p136
      %p138 = scmp.ne.s32.totalorder %s129, %s130
      %p139 = scmp.eq.s32.totalorder %s21, 0
      %p140 = por %p138, %p139
      %p141 = scmp.ne.s32.totalorder %s129, %s130
      %p142 = scmp.eq.s32.totalorder %s22, 7
      %p143 = por %p141, %p142
      %p145 = scmp.ne.s32.totalorder %s130, %s144
      %p146 = scmp.eq.s32.totalorder %s22, 0
      %p147 = por %p145, %p146
      %s148 = ssub.s32 %s23, %s35
      %s149 = ssub.s32 %s24, %s31
      %s150 = sor.u32 %s148, %s149
      %p151 = scmp.eq.s32.totalorder %s150, 0
      %s153 = sadd.s32 %s152, 1
      %s154 = scalar_select %p151, %s152, %s153
      %p157 = pneg %p151
      %p158 = scmp.eq.s32.totalorder %s16, 7
      %p159 = por %p157, %p158
      %p160 = scmp.ne.s32.totalorder %s152, %s155
      %p161 = scmp.eq.s32.totalorder %s16, 0
      %p162 = por %p160, %p161
      %p163 = scmp.ne.s32.totalorder %s152, %s155
      %p164 = scmp.eq.s32.totalorder %s21, 7
      %p165 = por %p163, %p164
      %p166 = scmp.ne.s32.totalorder %s155, %s156
      %p167 = scmp.eq.s32.totalorder %s21, 0
      %p168 = por %p166, %p167
      %p169 = scmp.ne.s32.totalorder %s155, %s156
      %p170 = scmp.eq.s32.totalorder %s22, 7
      %p171 = por %p169, %p170
      %p173 = scmp.ne.s32.totalorder %s156, %s172
      %p174 = scmp.eq.s32.totalorder %s22, 0
      %p175 = por %p173, %p174
      %s176 = ssub.s32 %s23, %s35
      %s177 = ssub.s32 %s24, %s31
      %s178 = sor.u32 %s176, %s177
      %p179 = scmp.eq.s32.totalorder %s178, 0
      %s181 = sadd.s32 %s180, 1
      %s182 = scalar_select %p179, %s180, %s181
      %p185 = pneg %p179
      %p186 = scmp.eq.s32.totalorder %s16, 7
      %p187 = por %p185, %p186
      %p188 = scmp.ne.s32.totalorder %s180, %s183
      %p189 = scmp.eq.s32.totalorder %s16, 0
      %p190 = por %p188, %p189
      %p191 = scmp.ne.s32.totalorder %s180, %s183
      %p192 = scmp.eq.s32.totalorder %s21, 7
      %p193 = por %p191, %p192
      %p194 = scmp.ne.s32.totalorder %s183, %s184
      %p195 = scmp.eq.s32.totalorder %s21, 0
      %p196 = por %p194, %p195
      %p197 = scmp.ne.s32.totalorder %s183, %s184
      %p198 = scmp.eq.s32.totalorder %s22, 7
      %p199 = por %p197, %p198
      %p201 = scmp.ne.s32.totalorder %s184, %s200
      %p202 = scmp.eq.s32.totalorder %s22, 0
      %p203 = por %p201, %p202
      %p204 = scmp.le.s32.totalorder 1, %s16
      %p205 = scmp.lt.s32.totalorder %s16, 9
      %p206 = pnand %p204, %p205
      %p207 = pneg %p206
      // Predicated region
      $region9: #{ext_transformer_encoder_forward.13} parent=5 // pred_check
        _
      $region10: #{ext_transformer_encoder_forward.13} parent=5 // pred_check_branch
        %209 = sbr.rel (%p206) target = $region12
      $region11: #{ext_transformer_encoder_forward.13} parent=5 // pred_region
        %s210 = ssub.s32 %s16, 1
        // Predicated region
        $region13: #{ext_transformer_encoder_forward.13} parent=11 // pred_check
          %p211 = pneg %p77
        $region14: #{ext_transformer_encoder_forward.13} parent=11 // pred_check_branch
          %213 = sbr.rel (%p211) target = $region16
        $region15: #{ext_transformer_encoder_forward.13} parent=11 // pred_region
          %215 = vsyncadd [#allocation4], 0
          %s217 = sshll.u32 %s1, 4
          %s218 = int_to_ptr.hbm [resolvable:$true] %s217
          %s219 = sshll.u32 [#allocation3], 4
          %s220 = int_to_ptr.vmem [resolvable:$true] %s219
          %222 = dma.hbm_to_vmem [thread:$0]  %s218, 16, %s220, [#allocation4]
        $region16: #{ext_transformer_encoder_forward.13} parent=11 // pred_fallthru
          _
        // Predicated region
        $region17: #{ext_transformer_encoder_forward.13} parent=11 // pred_check
          %p223 = pneg %p98
        $region18: #{ext_transformer_encoder_forward.13} parent=11 // pred_check_branch
          %225 = sbr.rel (%p223) target = $region20
        $region19: #{ext_transformer_encoder_forward.13} parent=11 // pred_region
          %227 = vsyncadd [#allocation6], 0
          %s229 = sshll.u32 %s2, 4
          %s230 = int_to_ptr.hbm [resolvable:$true] %s229
          %s231 = sshll.u32 [#allocation5], 4
          %s232 = int_to_ptr.vmem [resolvable:$true] %s231
          %234 = dma.hbm_to_vmem [thread:$0]  %s230, 16, %s232, [#allocation6]
        $region20: #{ext_transformer_encoder_forward.13} parent=11 // pred_fallthru
          _
        // Predicated region
        $region21: #{ext_transformer_encoder_forward.13} parent=11 // pred_check
          %p235 = pneg %p119
        $region22: #{ext_transformer_encoder_forward.13} parent=11 // pred_check_branch
          %237 = sbr.rel (%p235) target = $region24
        $region23: #{ext_transformer_encoder_forward.13} parent=11 // pred_region
          %239 = vsyncadd [#allocation6], 0
          %s241 = sshll.u32 %s3, 4
          %s242 = int_to_ptr.hbm [resolvable:$true] %s241
          %s243 = sshll.u32 [#allocation7], 4
          %s244 = int_to_ptr.vmem [resolvable:$true] %s243
          %246 = dma.hbm_to_vmem [thread:$0]  %s242, 16, %s244, [#allocation6]
        $region24: #{ext_transformer_encoder_forward.13} parent=11 // pred_fallthru
          _
        // Predicated region
        $region25: #{ext_transformer_encoder_forward.13} parent=11 // pred_check
          %p247 = pneg %p140
        $region26: #{ext_transformer_encoder_forward.13} parent=11 // pred_check_branch
          %249 = sbr.rel (%p247) target = $region28
        $region27: #{ext_transformer_encoder_forward.13} parent=11 // pred_region
          _
        $region28: #{ext_transformer_encoder_forward.13} parent=11 // pred_fallthru
          _
      $region12: #{ext_transformer_encoder_forward.13} parent=5 // pred_fallthru
        _
      %p250 = scmp.lt.s32.totalorder %s16, 8
      // Predicated region
      $region29: #{ext_transformer_encoder_forward.13} parent=5 // pred_check
        %p251 = pneg %p250
      $region30: #{ext_transformer_encoder_forward.13} parent=5 // pred_check_branch
        %253 = sbr.rel (%p251) target = $region32
      $region31: #{ext_transformer_encoder_forward.13} parent=5 // pred_region
        // Predicated region
        $region33: #{ext_transformer_encoder_forward.13} parent=31 // pred_check
          %p254 = pneg %p50
        $region34: #{ext_transformer_encoder_forward.13} parent=31 // pred_check_branch
          %256 = sbr.rel (%p254) target = $region36
        $region35: #{ext_transformer_encoder_forward.13} parent=31 // pred_region
          %s257 = smul.u32 8, %s24
          %p258 = scmp.lt.s32.totalorder %s23, 1
          %s259 = scalar_select %p258, %s23, 1
          %p260 = scmp.lt.s32.totalorder %s257, 31
          %s261 = scalar_select %p260, %s257, 31
          %s262 = smul.addr %s259, 32
          %s263 = sadd.s32 %s261, %s262
          %s264 = smul.addr %s263, 8
          %s265 = scalar_lea.vmem %s0, %s264
          %s266 = smul.u32 8, %s24
        $region36: #{ext_transformer_encoder_forward.13} parent=31 // pred_fallthru
          _
        // Predicated region
        $region37: #{ext_transformer_encoder_forward.13} parent=31 // pred_check
          %p267 = pneg %p162
        $region38: #{ext_transformer_encoder_forward.13} parent=31 // pred_check_branch
          %269 = sbr.rel (%p267) target = $region40
        $region39: #{ext_transformer_encoder_forward.13} parent=31 // pred_region
          %s270 = smul.u32 8, %s24
          %p271 = scmp.lt.s32.totalorder %s23, 1
          %s272 = scalar_select %p271, %s23, 1
          %p273 = scmp.lt.s32.totalorder %s270, 31
          %s274 = scalar_select %p273, %s270, 31
          %s275 = smul.addr %s272, 32
          %s276 = sadd.s32 %s274, %s275
          %s277 = smul.addr %s276, 8
          %s278 = scalar_lea.vmem %s5, %s277
          %s279 = smul.u32 8, %s24
        $region40: #{ext_transformer_encoder_forward.13} parent=31 // pred_fallthru
          _
      $region32: #{ext_transformer_encoder_forward.13} parent=5 // pred_fallthru
        _
      %p280 = scmp.le.s32.totalorder 1, %s16
      %p281 = scmp.lt.s32.totalorder %s16, 9
      %p282 = pnand %p280, %p281
      %p283 = pneg %p282
      // Predicated region
      $region41: #{ext_transformer_encoder_forward.13} parent=5 // pred_check
        _
      $region42: #{ext_transformer_encoder_forward.13} parent=5 // pred_check_branch
        %285 = sbr.rel (%p282) target = $region44
      $region43: #{ext_transformer_encoder_forward.13} parent=5 // pred_region
        %s286 = ssub.s32 %s16, 1
        // Predicated region
        $region45: #{ext_transformer_encoder_forward.13} parent=43 // pred_check
          %p287 = pneg %p77
        $region46: #{ext_transformer_encoder_forward.13} parent=43 // pred_check_branch
          %289 = sbr.rel (%p287) target = $region48
        $region47: #{ext_transformer_encoder_forward.13} parent=43 // pred_region
          %291 = dma.done [#allocation4], 16
        $region48: #{ext_transformer_encoder_forward.13} parent=43 // pred_fallthru
          _
        // Predicated region
        $region49: #{ext_transformer_encoder_forward.13} parent=43 // pred_check
          %p292 = pneg %p98
        $region50: #{ext_transformer_encoder_forward.13} parent=43 // pred_check_branch
          %294 = sbr.rel (%p292) target = $region52
        $region51: #{ext_transformer_encoder_forward.13} parent=43 // pred_region
          %296 = dma.done [#allocation6], 16
        $region52: #{ext_transformer_encoder_forward.13} parent=43 // pred_fallthru
          _
        // Predicated region
        $region53: #{ext_transformer_encoder_forward.13} parent=43 // pred_check
          %p297 = pneg %p119
        $region54: #{ext_transformer_encoder_forward.13} parent=43 // pred_check_branch
          %299 = sbr.rel (%p297) target = $region56
        $region55: #{ext_transformer_encoder_forward.13} parent=43 // pred_region
          %301 = dma.done [#allocation6], 16
        $region56: #{ext_transformer_encoder_forward.13} parent=43 // pred_fallthru
          _
        %s302 = smul.u32 8, %s26
        %p303 = scmp.lt.s32.totalorder %s25, 1
        %s304 = scalar_select %p303, %s25, 1
        %p305 = scmp.lt.s32.totalorder %s302, 31
        %s306 = scalar_select %p305, %s302, 31
        %s307 = smul.addr %s304, 32
        %s308 = sadd.s32 %s306, %s307
        %s309 = smul.addr %s308, 8
        %s310 = scalar_lea.vmem %s0, %s309
        %p311 = pneg %p56
        %p312 = pneg %p53
        %p313 = pneg %p77
        %p314 = pneg %p74
        %p315 = pneg %p98
        %p316 = pneg %p95
        %p317 = pneg %p119
        %p318 = pneg %p116
        %p319 = pneg %p140
        %p320 = pneg %p137
        %s321 = smul.u32 8, %s26
        %p322 = scmp.lt.s32.totalorder %s25, 1
        %s323 = scalar_select %p322, %s25, 1
        %p324 = scmp.lt.s32.totalorder %s321, 31
        %s325 = scalar_select %p324, %s321, 31
        %s326 = smul.addr %s323, 32
        %s327 = sadd.s32 %s325, %s326
        %s328 = smul.addr %s327, 8
        %s329 = scalar_lea.vmem %s5, %s328
        %p330 = pneg %p168
        %p331 = pneg %p165
        %p332 = pneg %p196
        %p333 = pneg %p193
        %s334 = smul.u32 8, %s26
        %p335 = scmp.lt.s32.totalorder %s25, 1
        %s336 = scalar_select %p335, %s25, 1
        %p337 = scmp.lt.s32.totalorder %s334, 31
        %s338 = scalar_select %p337, %s334, 31
        %s339 = smul.addr %s336, 32
        %s340 = sadd.s32 %s338, %s339
        %s341 = smul.addr %s340, 8
        %s342 = scalar_lea.vmem %s6, %s341
        %s343 = smul.u32 8, %s26
        %p344 = scmp.lt.s32.totalorder %s25, 1
        %s345 = scalar_select %p344, %s25, 1
        %p346 = scmp.lt.s32.totalorder %s343, 31
        %s347 = scalar_select %p346, %s343, 31
        %s348 = smul.addr %s345, 32
        %s349 = sadd.s32 %s347, %s348
        %s350 = smul.addr %s349, 8
        %s351 = scalar_lea.vmem %s0, %s350
        %s352 = smul.u32 8, %s26
        %s353 = smul.u32 8, %s26
        %p354 = scmp.lt.s32.totalorder %s25, 1
        %s355 = scalar_select %p354, %s25, 1
        %p356 = scmp.lt.s32.totalorder %s353, 31
        %s357 = scalar_select %p356, %s353, 31
        %s358 = smul.addr %s355, 32
        %s359 = sadd.s32 %s357, %s358
        %s360 = smul.addr %s359, 8
        %s361 = scalar_lea.vmem %s5, %s360
        %s362 = smul.u32 8, %s26
        %s363 = smul.u32 8, %s26
        %p364 = scmp.lt.s32.totalorder %s25, 1
        %s365 = scalar_select %p364, %s25, 1
        %p366 = scmp.lt.s32.totalorder %s363, 31
        %s367 = scalar_select %p366, %s363, 31
        %s368 = smul.addr %s365, 32
        %s369 = sadd.s32 %s367, %s368
        %s370 = smul.addr %s369, 8
        %s371 = scalar_lea.vmem %s6, %s370
        %s372 = smul.u32 8, %s26
        %v373 = vld [vmem:[%s351] sm:$0xff]
        %v374 = vld [vmem:[%s351 + $0x8] sm:$0xff]
        %v375 = vld [vmem:[%s351 + $0x10] sm:$0xff]
        %v376 = vld [vmem:[%s351 + $0x18] sm:$0xff]
        %v377 = vld [vmem:[%s351 + $0x20] sm:$0xff]
        %v378 = vld [vmem:[%s351 + $0x28] sm:$0xff]
        %v379 = vld [vmem:[%s351 + $0x30] sm:$0xff]
        %v380 = vld [vmem:[%s351 + $0x38] sm:$0xff]
        %v381 = vld [vmem:[#allocation3] sm:$0x1]
        %v382 = vld [vmem:[#allocation5] sm:$0x1]
        %383 = vadd.xlane.f32.xlu0 %v373
        %v384 = vpop.xlane.xlu0 %383
        %385 = vadd.xlane.f32.xlu0 %v374
        %v386 = vpop.xlane.xlu0 %385
        %387 = vadd.xlane.f32.xlu0 %v375
        %v388 = vpop.xlane.xlu0 %387
        %389 = vadd.xlane.f32.xlu0 %v376
        %v390 = vpop.xlane.xlu0 %389
        %391 = vadd.xlane.f32.xlu0 %v377
        %v392 = vpop.xlane.xlu0 %391
        %393 = vadd.xlane.f32.xlu0 %v378
        %v394 = vpop.xlane.xlu0 %393
        %395 = vadd.xlane.f32.xlu0 %v379
        %v396 = vpop.xlane.xlu0 %395
        %397 = vadd.xlane.f32.xlu0 %v380
        %v398 = vpop.xlane.xlu0 %397
        %v399 = vrcp.pop 128.0
        %v400 = vmul.f32 128.0, %v399
        %v401 = vsub.f32 1.0, %v400
        %v402 = vmul.f32 %v399, %v401
        %v403 = vadd.f32 %v399, %v402
        %vm404 = vweird.f32 %v399
        %v405 = vsel %vm404, %v399, %v403
        %v406 = vmul.f32 %v384, %v405
        %v407 = vmul.f32 %v386, %v405
        %v408 = vmul.f32 %v388, %v405
        %v409 = vmul.f32 %v390, %v405
        %v410 = vmul.f32 %v392, %v405
        %v411 = vmul.f32 %v394, %v405
        %v412 = vmul.f32 %v396, %v405
        %v413 = vmul.f32 %v398, %v405
        %v414 = vsub.f32 %v373, %v406
        %v415 = vsub.f32 %v374, %v407
        %v416 = vsub.f32 %v375, %v408
        %v417 = vsub.f32 %v376, %v409
        %v418 = vsub.f32 %v377, %v410
        %v419 = vsub.f32 %v378, %v411
        %v420 = vsub.f32 %v379, %v412
        %v421 = vsub.f32 %v380, %v413
        %v422 = vmul.f32 %v414, %v414
        %v423 = vmul.f32 %v415, %v415
        %v424 = vmul.f32 %v416, %v416
        %v425 = vmul.f32 %v417, %v417
        %v426 = vmul.f32 %v418, %v418
        %v427 = vmul.f32 %v419, %v419
        %v428 = vmul.f32 %v420, %v420
        %v429 = vmul.f32 %v421, %v421
        %430 = vadd.xlane.f32.xlu0 %v422
        %v431 = vpop.xlane.xlu0 %430
        %432 = vadd.xlane.f32.xlu0 %v423
        %v433 = vpop.xlane.xlu0 %432
        %434 = vadd.xlane.f32.xlu0 %v424
        %v435 = vpop.xlane.xlu0 %434
        %436 = vadd.xlane.f32.xlu0 %v425
        %v437 = vpop.xlane.xlu0 %436
        %438 = vadd.xlane.f32.xlu0 %v426
        %v439 = vpop.xlane.xlu0 %438
        %440 = vadd.xlane.f32.xlu0 %v427
        %v441 = vpop.xlane.xlu0 %440
        %442 = vadd.xlane.f32.xlu0 %v428
        %v443 = vpop.xlane.xlu0 %442
        %444 = vadd.xlane.f32.xlu0 %v429
        %v445 = vpop.xlane.xlu0 %444
        %v446 = vmul.f32 %v431, %v405
        %v447 = vmul.f32 %v433, %v405
        %v448 = vmul.f32 %v435, %v405
        %v449 = vmul.f32 %v437, %v405
        %v450 = vmul.f32 %v439, %v405
        %v451 = vmul.f32 %v441, %v405
        %v452 = vmul.f32 %v443, %v405
        %v453 = vmul.f32 %v445, %v405
        %v454 = vadd.f32 %v446, 1e-06
        %v455 = vadd.f32 %v447, 1e-06
        %v456 = vadd.f32 %v448, 1e-06
        %v457 = vadd.f32 %v449, 1e-06
        %v458 = vadd.f32 %v450, 1e-06
        %v459 = vadd.f32 %v451, 1e-06
        %v460 = vadd.f32 %v452, 1e-06
        %v461 = vadd.f32 %v453, 1e-06
        %v462 = vrsqrt.pop %v454
        %v463 = vmul.f32 %v462, %v454
        %v464 = vmul.f32 %v463, %v462
        %v465 = vmul.f32 0.5, %v464
        %v466 = vsub.f32 1.5, %v465
        %v467 = vmul.f32 %v462, %v466
        %vm468 = vweird.f32 %v454
        %vm469 = vweird.f32 %v462
        %vm470 = vmor %vm468, %vm469
        %v471 = vsel %vm470, %v462, %v467
        %v472 = vrsqrt.pop %v455
        %v473 = vmul.f32 %v472, %v455
        %v474 = vmul.f32 %v473, %v472
        %v475 = vmul.f32 0.5, %v474
        %v476 = vsub.f32 1.5, %v475
        %v477 = vmul.f32 %v472, %v476
        %vm478 = vweird.f32 %v455
        %vm479 = vweird.f32 %v472
        %vm480 = vmor %vm478, %vm479
        %v481 = vsel %vm480, %v472, %v477
        %v482 = vrsqrt.pop %v456
        %v483 = vmul.f32 %v482, %v456
        %v484 = vmul.f32 %v483, %v482
        %v485 = vmul.f32 0.5, %v484
        %v486 = vsub.f32 1.5, %v485
        %v487 = vmul.f32 %v482, %v486
        %vm488 = vweird.f32 %v456
        %vm489 = vweird.f32 %v482
        %vm490 = vmor %vm488, %vm489
        %v491 = vsel %vm490, %v482, %v487
        %v492 = vrsqrt.pop %v457
        %v493 = vmul.f32 %v492, %v457
        %v494 = vmul.f32 %v493, %v492
        %v495 = vmul.f32 0.5, %v494
        %v496 = vsub.f32 1.5, %v495
        %v497 = vmul.f32 %v492, %v496
        %vm498 = vweird.f32 %v457
        %vm499 = vweird.f32 %v492
        %vm500 = vmor %vm498, %vm499
        %v501 = vsel %vm500, %v492, %v497
        %v502 = vrsqrt.pop %v458
        %v503 = vmul.f32 %v502, %v458
        %v504 = vmul.f32 %v503, %v502
        %v505 = vmul.f32 0.5, %v504
        %v506 = vsub.f32 1.5, %v505
        %v507 = vmul.f32 %v502, %v506
        %vm508 = vweird.f32 %v458
        %vm509 = vweird.f32 %v502
        %vm510 = vmor %vm508, %vm509
        %v511 = vsel %vm510, %v502, %v507
        %v512 = vrsqrt.pop %v459
        %v513 = vmul.f32 %v512, %v459
        %v514 = vmul.f32 %v513, %v512
        %v515 = vmul.f32 0.5, %v514
        %v516 = vsub.f32 1.5, %v515
        %v517 = vmul.f32 %v512, %v516
        %vm518 = vweird.f32 %v459
        %vm519 = vweird.f32 %v512
        %vm520 = vmor %vm518, %vm519
        %v521 = vsel %vm520, %v512, %v517
        %v522 = vrsqrt.pop %v460
        %v523 = vmul.f32 %v522, %v460
        %v524 = vmul.f32 %v523, %v522
        %v525 = vmul.f32 0.5, %v524
        %v526 = vsub.f32 1.5, %v525
        %v527 = vmul.f32 %v522, %v526
        %vm528 = vweird.f32 %v460
        %vm529 = vweird.f32 %v522
        %vm530 = vmor %vm528, %vm529
        %v531 = vsel %vm530, %v522, %v527
        %v532 = vrsqrt.pop %v461
        %v533 = vmul.f32 %v532, %v461
        %v534 = vmul.f32 %v533, %v532
        %v535 = vmul.f32 0.5, %v534
        %v536 = vsub.f32 1.5, %v535
        %v537 = vmul.f32 %v532, %v536
        %vm538 = vweird.f32 %v461
        %vm539 = vweird.f32 %v532
        %vm540 = vmor %vm538, %vm539
        %v541 = vsel %vm540, %v532, %v537
        %v542 = vmul.f32 %v414, %v471
        %v543 = vmul.f32 %v415, %v481
        %v544 = vmul.f32 %v416, %v491
        %v545 = vmul.f32 %v417, %v501
        %v546 = vmul.f32 %v418, %v511
        %v547 = vmul.f32 %v419, %v521
        %v548 = vmul.f32 %v420, %v531
        %v549 = vmul.f32 %v421, %v541
        %v551 = vperm.slane %v381, 0
        %v553 = vmul.f32 %v542, %v551
        %v554 = vmul.f32 %v543, %v551
        %v555 = vmul.f32 %v544, %v551
        %v556 = vmul.f32 %v545, %v551
        %v557 = vmul.f32 %v546, %v551
        %v558 = vmul.f32 %v547, %v551
        %v559 = vmul.f32 %v548, %v551
        %v560 = vmul.f32 %v549, %v551
        %v562 = vperm.slane %v382, 0
        %v564 = vadd.f32 %v553, %v562
        %v565 = vadd.f32 %v554, %v562
        %v566 = vadd.f32 %v555, %v562
        %v567 = vadd.f32 %v556, %v562
        %v568 = vadd.f32 %v557, %v562
        %v569 = vadd.f32 %v558, %v562
        %v570 = vadd.f32 %v559, %v562
        %v571 = vadd.f32 %v560, %v562
        %v572 = vld [vmem:[#allocation7] sm:$0x1]
        %v574 = vperm.slane %v572, 0
        %v576 = vmul.f32 %v564, %v574
        %v577 = vmul.f32 %v565, %v574
        %v578 = vmul.f32 %v566, %v574
        %v579 = vmul.f32 %v567, %v574
        %v580 = vmul.f32 %v568, %v574
        %v581 = vmul.f32 %v569, %v574
        %v582 = vmul.f32 %v570, %v574
        %v583 = vmul.f32 %v571, %v574
        %584 = vadd.xlane.f32.xlu0 %v576
        %v585 = vpop.xlane.xlu0 %584
        %586 = vadd.xlane.f32.xlu0 %v577
        %v587 = vpop.xlane.xlu0 %586
        %588 = vadd.xlane.f32.xlu0 %v578
        %v589 = vpop.xlane.xlu0 %588
        %590 = vadd.xlane.f32.xlu0 %v579
        %v591 = vpop.xlane.xlu0 %590
        %592 = vadd.xlane.f32.xlu0 %v580
        %v593 = vpop.xlane.xlu0 %592
        %594 = vadd.xlane.f32.xlu0 %v581
        %v595 = vpop.xlane.xlu0 %594
        %596 = vadd.xlane.f32.xlu0 %v582
        %v597 = vpop.xlane.xlu0 %596
        %598 = vadd.xlane.f32.xlu0 %v583
        %v599 = vpop.xlane.xlu0 %598
        %v600 = vld [vmem:[#allocation2] sm:$0x1]
        %v602 = vperm.slane %v600, 0
        %v604 = vadd.f32 %v585, %v602
        %v605 = vadd.f32 %v587, %v602
        %v606 = vadd.f32 %v589, %v602
        %v607 = vadd.f32 %v591, %v602
        %v608 = vadd.f32 %v593, %v602
        %v609 = vadd.f32 %v595, %v602
        %v610 = vadd.f32 %v597, %v602
        %v611 = vadd.f32 %v599, %v602
        %v612 = vsub.f32 0.0, %v604
        %v613 = vsub.f32 0.0, %v605
        %v614 = vsub.f32 0.0, %v606
        %v615 = vsub.f32 0.0, %v607
        %v616 = vsub.f32 0.0, %v608
        %v617 = vsub.f32 0.0, %v609
        %v618 = vsub.f32 0.0, %v610
        %v619 = vsub.f32 0.0, %v611
        %v620 = vmul.f32 %v612, 1.442695
        %v621 = vpow.pop %v620
        %v622 = vmul.f32 %v613, 1.442695
        %v623 = vpow.pop %v622
        %v624 = vmul.f32 %v614, 1.442695
        %v625 = vpow.pop %v624
        %v626 = vmul.f32 %v615, 1.442695
        %v627 = vpow.pop %v626
        %v628 = vmul.f32 %v616, 1.442695
        %v629 = vpow.pop %v628
        %v630 = vmul.f32 %v617, 1.442695
        %v631 = vpow.pop %v630
        %v632 = vmul.f32 %v618, 1.442695
        %v633 = vpow.pop %v632
        %v634 = vmul.f32 %v619, 1.442695
        %v635 = vpow.pop %v634
        %v636 = vadd.f32 %v621, 1.0
        %v637 = vadd.f32 %v623, 1.0
        %v638 = vadd.f32 %v625, 1.0
        %v639 = vadd.f32 %v627, 1.0
        %v640 = vadd.f32 %v629, 1.0
        %v641 = vadd.f32 %v631, 1.0
        %v642 = vadd.f32 %v633, 1.0
        %v643 = vadd.f32 %v635, 1.0
        %v644 = vrcp.pop %v636
        %v645 = vmul.f32 %v636, %v644
        %v646 = vsub.f32 1.0, %v645
        %v647 = vmul.f32 %v644, %v646
        %v648 = vadd.f32 %v644, %v647
        %vm649 = vweird.f32 %v636
        %vm650 = vweird.f32 %v644
        %vm651 = vmor %vm649, %vm650
        %v652 = vsel %vm651, %v644, %v648
        %v653 = vand.u32 2147483647, %v636
        %vm654 = vcmp.eq.f32.partialorder %v653, 8.507059e+37
        %v655 = vand.u32 %v636, 2147483648
        %v656 = vor.u32 1.1754944e-38, %v655
        %v657 = vsel %vm654, %v656, %v652
        %v658 = vmul.f32 1.0, %v657
        %v659 = vrcp.pop %v637
        %v660 = vmul.f32 %v637, %v659
        %v661 = vsub.f32 1.0, %v660
        %v662 = vmul.f32 %v659, %v661
        %v663 = vadd.f32 %v659, %v662
        %vm664 = vweird.f32 %v637
        %vm665 = vweird.f32 %v659
        %vm666 = vmor %vm664, %vm665
        %v667 = vsel %vm666, %v659, %v663
        %v668 = vand.u32 2147483647, %v637
        %vm669 = vcmp.eq.f32.partialorder %v668, 8.507059e+37
        %v670 = vand.u32 %v637, 2147483648
        %v671 = vor.u32 1.1754944e-38, %v670
        %v672 = vsel %vm669, %v671, %v667
        %v673 = vmul.f32 1.0, %v672
        %v674 = vrcp.pop %v638
        %v675 = vmul.f32 %v638, %v674
        %v676 = vsub.f32 1.0, %v675
        %v677 = vmul.f32 %v674, %v676
        %v678 = vadd.f32 %v674, %v677
        %vm679 = vweird.f32 %v638
        %vm680 = vweird.f32 %v674
        %vm681 = vmor %vm679, %vm680
        %v682 = vsel %vm681, %v674, %v678
        %v683 = vand.u32 2147483647, %v638
        %vm684 = vcmp.eq.f32.partialorder %v683, 8.507059e+37
        %v685 = vand.u32 %v638, 2147483648
        %v686 = vor.u32 1.1754944e-38, %v685
        %v687 = vsel %vm684, %v686, %v682
        %v688 = vmul.f32 1.0, %v687
        %v689 = vrcp.pop %v639
        %v690 = vmul.f32 %v639, %v689
        %v691 = vsub.f32 1.0, %v690
        %v692 = vmul.f32 %v689, %v691
        %v693 = vadd.f32 %v689, %v692
        %vm694 = vweird.f32 %v639
        %vm695 = vweird.f32 %v689
        %vm696 = vmor %vm694, %vm695
        %v697 = vsel %vm696, %v689, %v693
        %v698 = vand.u32 2147483647, %v639
        %vm699 = vcmp.eq.f32.partialorder %v698, 8.507059e+37
        %v700 = vand.u32 %v639, 2147483648
        %v701 = vor.u32 1.1754944e-38, %v700
        %v702 = vsel %vm699, %v701, %v697
        %v703 = vmul.f32 1.0, %v702
        %v704 = vrcp.pop %v640
        %v705 = vmul.f32 %v640, %v704
        %v706 = vsub.f32 1.0, %v705
        %v707 = vmul.f32 %v704, %v706
        %v708 = vadd.f32 %v704, %v707
        %vm709 = vweird.f32 %v640
        %vm710 = vweird.f32 %v704
        %vm711 = vmor %vm709, %vm710
        %v712 = vsel %vm711, %v704, %v708
        %v713 = vand.u32 2147483647, %v640
        %vm714 = vcmp.eq.f32.partialorder %v713, 8.507059e+37
        %v715 = vand.u32 %v640, 2147483648
        %v716 = vor.u32 1.1754944e-38, %v715
        %v717 = vsel %vm714, %v716, %v712
        %v718 = vmul.f32 1.0, %v717
        %v719 = vrcp.pop %v641
        %v720 = vmul.f32 %v641, %v719
        %v721 = vsub.f32 1.0, %v720
        %v722 = vmul.f32 %v719, %v721
        %v723 = vadd.f32 %v719, %v722
        %vm724 = vweird.f32 %v641
        %vm725 = vweird.f32 %v719
        %vm726 = vmor %vm724, %vm725
        %v727 = vsel %vm726, %v719, %v723
        %v728 = vand.u32 2147483647, %v641
        %vm729 = vcmp.eq.f32.partialorder %v728, 8.507059e+37
        %v730 = vand.u32 %v641, 2147483648
        %v731 = vor.u32 1.1754944e-38, %v730
        %v732 = vsel %vm729, %v731, %v727
        %v733 = vmul.f32 1.0, %v732
        %v734 = vrcp.pop %v642
        %v735 = vmul.f32 %v642, %v734
        %v736 = vsub.f32 1.0, %v735
        %v737 = vmul.f32 %v734, %v736
        %v738 = vadd.f32 %v734, %v737
        %vm739 = vweird.f32 %v642
        %vm740 = vweird.f32 %v734
        %vm741 = vmor %vm739, %vm740
        %v742 = vsel %vm741, %v734, %v738
        %v743 = vand.u32 2147483647, %v642
        %vm744 = vcmp.eq.f32.partialorder %v743, 8.507059e+37
        %v745 = vand.u32 %v642, 2147483648
        %v746 = vor.u32 1.1754944e-38, %v745
        %v747 = vsel %vm744, %v746, %v742
        %v748 = vmul.f32 1.0, %v747
        %v749 = vrcp.pop %v643
        %v750 = vmul.f32 %v643, %v749
        %v751 = vsub.f32 1.0, %v750
        %v752 = vmul.f32 %v749, %v751
        %v753 = vadd.f32 %v749, %v752
        %vm754 = vweird.f32 %v643
        %vm755 = vweird.f32 %v749
        %vm756 = vmor %vm754, %vm755
        %v757 = vsel %vm756, %v749, %v753
        %v758 = vand.u32 2147483647, %v643
        %vm759 = vcmp.eq.f32.partialorder %v758, 8.507059e+37
        %v760 = vand.u32 %v643, 2147483648
        %v761 = vor.u32 1.1754944e-38, %v760
        %v762 = vsel %vm759, %v761, %v757
        %v763 = vmul.f32 1.0, %v762
        %v764 = vld [vmem:[%s361] sm:$0xff]
        %v765 = vld [vmem:[%s361 + $0x8] sm:$0xff]
        %v766 = vld [vmem:[%s361 + $0x10] sm:$0xff]
        %v767 = vld [vmem:[%s361 + $0x18] sm:$0xff]
        %v768 = vld [vmem:[%s361 + $0x20] sm:$0xff]
        %v769 = vld [vmem:[%s361 + $0x28] sm:$0xff]
        %v770 = vld [vmem:[%s361 + $0x30] sm:$0xff]
        %v771 = vld [vmem:[%s361 + $0x38] sm:$0xff]
        %v772 = vmul.f32 %v658, %v764
        %v773 = vmul.f32 %v673, %v765
        %v774 = vmul.f32 %v688, %v766
        %v775 = vmul.f32 %v703, %v767
        %v776 = vmul.f32 %v718, %v768
        %v777 = vmul.f32 %v733, %v769
        %v778 = vmul.f32 %v748, %v770
        %v779 = vmul.f32 %v763, %v771
        %vm780 = vcmask 7168
        %781 = vst.msk [vmem:[%s371] sm:$0xff] %vm780, %v772
        %782 = vst.msk [vmem:[%s371 + $0x8] sm:$0xff] %vm780, %v773
        %783 = vst.msk [vmem:[%s371 + $0x10] sm:$0xff] %vm780, %v774
        %784 = vst.msk [vmem:[%s371 + $0x18] sm:$0xff] %vm780, %v775
        %785 = vst.msk [vmem:[%s371 + $0x20] sm:$0xff] %vm780, %v776
        %786 = vst.msk [vmem:[%s371 + $0x28] sm:$0xff] %vm780, %v777
        %787 = vst.msk [vmem:[%s371 + $0x30] sm:$0xff] %vm780, %v778
        %788 = vst.msk [vmem:[%s371 + $0x38] sm:$0xff] %vm780, %v779
        %s789 = smul.u32 8, %s26
        %p790 = scmp.lt.s32.totalorder %s25, 1
        %s791 = scalar_select %p790, %s25, 1
        %p792 = scmp.lt.s32.totalorder %s789, 31
        %s793 = scalar_select %p792, %s789, 31
        %s794 = smul.addr %s791, 32
        %s795 = sadd.s32 %s793, %s794
        %s796 = smul.addr %s795, 8
        %s797 = scalar_lea.vmem %s6, %s796
        // Predicated region
        $region57: #{ext_transformer_encoder_forward.13} parent=43 // pred_check
          %p798 = pneg %p193
        $region58: #{ext_transformer_encoder_forward.13} parent=43 // pred_check_branch
          %800 = sbr.rel (%p798) target = $region60
        $region59: #{ext_transformer_encoder_forward.13} parent=43 // pred_region
          %s801 = smul.u32 8, %s26
        $region60: #{ext_transformer_encoder_forward.13} parent=43 // pred_fallthru
          _
      $region44: #{ext_transformer_encoder_forward.13} parent=5 // pred_fallthru
        _
      %p802 = scmp.le.s32.totalorder 2, %s16
      // Predicated region
      $region61: #{ext_transformer_encoder_forward.13} parent=5 // pred_check
        %p803 = pneg %p802
      $region62: #{ext_transformer_encoder_forward.13} parent=5 // pred_check_branch
        %805 = sbr.rel (%p803) target = $region64
      $region63: #{ext_transformer_encoder_forward.13} parent=5 // pred_region
        %s806 = ssub.s32 %s16, 2
        // Predicated region
        $region65: #{ext_transformer_encoder_forward.13} parent=63 // pred_check
          %p807 = pneg %p199
        $region66: #{ext_transformer_encoder_forward.13} parent=63 // pred_check_branch
          %809 = sbr.rel (%p807) target = $region68
        $region67: #{ext_transformer_encoder_forward.13} parent=63 // pred_region
          %s810 = smul.u32 8, %s28
          %p811 = scmp.lt.s32.totalorder %s27, 1
          %s812 = scalar_select %p811, %s27, 1
          %p813 = scmp.lt.s32.totalorder %s810, 31
          %s814 = scalar_select %p813, %s810, 31
          %s815 = smul.addr %s812, 32
          %s816 = sadd.s32 %s814, %s815
          %s817 = smul.addr %s816, 8
          %s818 = scalar_lea.vmem %s6, %s817
        $region68: #{ext_transformer_encoder_forward.13} parent=63 // pred_fallthru
          _
      $region64: #{ext_transformer_encoder_forward.13} parent=5 // pred_fallthru
        _
    $region6: #{ext_transformer_encoder_forward.13} parent=1 // loop_footer
      %s20 = sadd.s32 1, %s16
    $region7: #{ext_transformer_encoder_forward.13} parent=1 // loop_footer_branch
      %15 = sbr.rel target = $region3
    $region8: #{ext_transformer_encoder_forward.13} parent=1 // loop_exit
      _
    %819 = vsyncpa [#allocation4], 1
    %s820 = scalar_lea.sflag [#allocation4], 1
    %821 = vsyncpa %s820, 1
    %822 = vsyncpa [#allocation6], 1

// kernel: ext_transformer_encoder_forward.8
$region0: #{ext_transformer_encoder_forward.8}
  #allocation0 [shape = 'u32[]', space=smem, size = 0x4, offset = 0x4, fixed_abs, tag = 'smem constant byte address 0x4 - core index']
  #allocation1 [shape = 'u32[72,128]{1,0:T(1,128)}', space=vmem, size = 0x9000, scoped, tag = 'internal scratch']
  #allocation2 [shape = 'f32[4,64,1]{2,1,0:T(8,128)}', space=vmem, size = 0x20000, scoped, tag = 'scratch operand']
  #allocation3 [shape = 'f32[4,64,1]{2,1,0:T(8,128)}', space=vmem, size = 0x20000, scoped, tag = 'scratch operand']
  #allocation4 [shape = 'f32[64,128]{1,0:T(8,128)}', space=vmem, size = 0x8000, scoped, tag = 'scratch operand']
  %s0 = inlined_call_operand.vmem [shape: f32[2,12,256,32], index: 0, kind: input, shape index: {}, may-alias: {0,1,2}]
  %s1 = inlined_call_operand.vmem [shape: f32[2,12,256,32], index: 1, kind: input, shape index: {}, may-alias: {0,1,2}]
  %s2 = inlined_call_operand.vmem [shape: f32[2,12,256,32], index: 2, kind: input, shape index: {}, may-alias: {0,1,2}]
  %s3 = inlined_call_operand.vmem [shape: f32[2,1,256], index: 3, kind: input, shape index: {}]
  %s4 = inlined_call_operand.vmem [shape: f32[2,256,128], index: 4, kind: input, shape index: {}]
  %s5 = inlined_call_operand.hbm [shape: f32[128,128], index: 5, kind: input, shape index: {}]
  %s6 = inlined_call_operand.hbm [shape: f32[1,128], index: 6, kind: input, shape index: {}]
  %s7 = inlined_call_operand.vmem [shape: f32[2,256,128], index: 7, kind: output, shape index: {}]
  %s8 = sld [smem:[#allocation0]]
  $region191: #{ext_transformer_encoder_forward.8} parent=0
    _
  %s10 = ssub.s32 1, %s8
  %s11 = scalar_select 0, %s10, %s8
  $region1: #{ext_transformer_encoder_forward.8} parent=0
    #allocation5 [shape = 'u8[262144]{0}', space=vmem, size = 0x40000, scoped, tag = 'input window, operand 0']
    #allocation6 [shape = 'u8[524288]{0}', space=vmem, size = 0x80000, scoped, tag = 'input window, operand 1']
    #allocation7 [shape = 'u8[524288]{0}', space=vmem, size = 0x80000, scoped, tag = 'input window, operand 2']
    #allocation8 [shape = 'u8[65536]{0}', space=vmem, size = 0x10000, scoped, tag = 'input window, operand 5, single buffered']
    #allocation9 [shape = 's32[2]{0}', space=sflag, size = 0x8, scoped, tag = 'scoped memory for ext_transformer_encoder_forward.8']
    #allocation10 [shape = 'u8[512]{0}', space=vmem, size = 0x400, scoped, tag = 'input window, operand 6, single buffered']
    #allocation11 [shape = 's32[1]{0}', space=sflag, size = 0x4, scoped, tag = 'scoped memory for ext_transformer_encoder_forward.8']
    %12 = vsyncpa [#allocation9], 0
    %13 = vsyncpa [#allocation11], 0
    loop: start=0, step=1, limit=18
    $region2: #{ext_transformer_encoder_forward.8} parent=1 // loop_pre_header
      _
    $region3: #{ext_transformer_encoder_forward.8} parent=1 // loop_header
      %s15 = sphi 0, %s19
      %p16 = scmp.ge.s32.totalorder %s15, 18
      %s22 = sphi 0, %s41
      %s23 = sphi 0, %s37
      %s24 = sphi 0, %s33
      %s25 = sphi 0, %s22
      %s26 = sphi 0, %s23
      %s27 = sphi 0, %s24
      %s28 = sphi 0, %s25
      %s29 = sphi 0, %s26
      %s30 = sphi 0, %s27
      %s46 = sphi 0, %s48
      %s49 = sphi 0, %s46
      %s50 = sphi 0, %s49
      %s66 = sphi 0, %s50
      %s74 = sphi 0, %s76
      %s77 = sphi 0, %s74
      %s78 = sphi 0, %s77
      %s94 = sphi 0, %s78
      %s102 = sphi 0, %s104
      %s105 = sphi 0, %s102
      %s106 = sphi 0, %s105
      %s122 = sphi 0, %s106
      %s130 = sphi 0, %s132
      %s133 = sphi 0, %s130
      %s134 = sphi 0, %s133
      %s150 = sphi 0, %s134
      %s158 = sphi 0, %s160
      %s161 = sphi 0, %s158
      %s162 = sphi 0, %s161
      %s178 = sphi 0, %s162
      %s182 = sphi 0, %s182
      %s184 = sphi 0, %s182
      %s185 = sphi 0, %s184
      %s199 = sphi 0, %s185
      %s203 = sphi 0, %s203
      %s205 = sphi 0, %s203
      %s206 = sphi 0, %s205
      %s220 = sphi 0, %s206
      %s228 = sphi 0, %s230
      %s231 = sphi 0, %s228
      %s232 = sphi 0, %s231
      %s248 = sphi 0, %s232
    $region4: #{ext_transformer_encoder_forward.8} parent=1 // loop_header_branch
      %18 = sbr.rel (%p16) target = $region8
    $region5: #{ext_transformer_encoder_forward.8} parent=1 // loop_body
      %s20 = ssub.s32 %s15, 1
      %s21 = ssub.s32 %s15, 2
      %s31 = sadd.s32 1, %s24
      %p32 = scmp.ge.s32.totalorder %s31, 2
      %s33 = scalar_select %p32, 0, %s31
      %s34 = sadd.s32 1, %s23
      %s35 = scalar_select %p32, %s34, %s23
      %p36 = scmp.ge.s32.totalorder %s35, 4
      %s37 = scalar_select %p36, 0, %s35
      %s38 = sadd.s32 1, %s22
      %s39 = scalar_select %p36, %s38, %s22
      %p40 = scmp.ge.s32.totalorder %s39, 2
      %s41 = scalar_select %p40, 0, %s39
      %s42 = ssub.s32 %s22, %s41
      %s43 = ssub.s32 %s23, %s37
      %s44 = sor.u32 %s42, %s43
      %p45 = scmp.eq.s32.totalorder %s44, 0
      %s47 = sadd.s32 %s46, 1
      %s48 = scalar_select %p45, %s46, %s47
      %p51 = pneg %p45
      %p52 = scmp.eq.s32.totalorder %s15, 15
      %p53 = por %p51, %p52
      %p54 = scmp.ne.s32.totalorder %s46, %s49
      %p55 = scmp.eq.s32.totalorder %s15, 0
      %p56 = por %p54, %p55
      %p57 = scmp.ne.s32.totalorder %s46, %s49
      %p58 = scmp.eq.s32.totalorder %s20, 15
      %p59 = por %p57, %p58
      %p60 = scmp.ne.s32.totalorder %s49, %s50
      %p61 = scmp.eq.s32.totalorder %s20, 0
      %p62 = por %p60, %p61
      %p63 = scmp.ne.s32.totalorder %s49, %s50
      %p64 = scmp.eq.s32.totalorder %s21, 15
      %p65 = por %p63, %p64
      %p67 = scmp.ne.s32.totalorder %s50, %s66
      %p68 = scmp.eq.s32.totalorder %s21, 0
      %p69 = por %p67, %p68
      %s70 = ssub.s32 %s22, %s41
      %s71 = ssub.s32 %s24, %s33
      %s72 = sor.u32 %s70, %s71
      %p73 = scmp.eq.s32.totalorder %s72, 0
      %s75 = sadd.s32 %s74, 1
      %s76 = scalar_select %p73, %s74, %s75
      %p79 = pneg %p73
      %p80 = scmp.eq.s32.totalorder %s15, 15
      %p81 = por %p79, %p80
      %p82 = scmp.ne.s32.totalorder %s74, %s77
      %p83 = scmp.eq.s32.totalorder %s15, 0
      %p84 = por %p82, %p83
      %p85 = scmp.ne.s32.totalorder %s74, %s77
      %p86 = scmp.eq.s32.totalorder %s20, 15
      %p87 = por %p85, %p86
      %p88 = scmp.ne.s32.totalorder %s77, %s78
      %p89 = scmp.eq.s32.totalorder %s20, 0
      %p90 = por %p88, %p89
      %p91 = scmp.ne.s32.totalorder %s77, %s78
      %p92 = scmp.eq.s32.totalorder %s21, 15
      %p93 = por %p91, %p92
      %p95 = scmp.ne.s32.totalorder %s78, %s94
      %p96 = scmp.eq.s32.totalorder %s21, 0
      %p97 = por %p95, %p96
      %s98 = ssub.s32 %s22, %s41
      %s99 = ssub.s32 %s24, %s33
      %s100 = sor.u32 %s98, %s99
      %p101 = scmp.eq.s32.totalorder %s100, 0
      %s103 = sadd.s32 %s102, 1
      %s104 = scalar_select %p101, %s102, %s103
      %p107 = pneg %p101
      %p108 = scmp.eq.s32.totalorder %s15, 15
      %p109 = por %p107, %p108
      %p110 = scmp.ne.s32.totalorder %s102, %s105
      %p111 = scmp.eq.s32.totalorder %s15, 0
      %p112 = por %p110, %p111
      %p113 = scmp.ne.s32.totalorder %s102, %s105
      %p114 = scmp.eq.s32.totalorder %s20, 15
      %p115 = por %p113, %p114
      %p116 = scmp.ne.s32.totalorder %s105, %s106
      %p117 = scmp.eq.s32.totalorder %s20, 0
      %p118 = por %p116, %p117
      %p119 = scmp.ne.s32.totalorder %s105, %s106
      %p120 = scmp.eq.s32.totalorder %s21, 15
      %p121 = por %p119, %p120
      %p123 = scmp.ne.s32.totalorder %s106, %s122
      %p124 = scmp.eq.s32.totalorder %s21, 0
      %p125 = por %p123, %p124
      %s126 = ssub.s32 %s22, %s41
      %s127 = ssub.s32 %s24, %s33
      %s128 = sor.u32 %s126, %s127
      %p129 = scmp.eq.s32.totalorder %s128, 0
      %s131 = sadd.s32 %s130, 1
      %s132 = scalar_select %p129, %s130, %s131
      %p135 = pneg %p129
      %p136 = scmp.eq.s32.totalorder %s15, 15
      %p137 = por %p135, %p136
      %p138 = scmp.ne.s32.totalorder %s130, %s133
      %p139 = scmp.eq.s32.totalorder %s15, 0
      %p140 = por %p138, %p139
      %p141 = scmp.ne.s32.totalorder %s130, %s133
      %p142 = scmp.eq.s32.totalorder %s20, 15
      %p143 = por %p141, %p142
      %p144 = scmp.ne.s32.totalorder %s133, %s134
      %p145 = scmp.eq.s32.totalorder %s20, 0
      %p146 = por %p144, %p145
      %p147 = scmp.ne.s32.totalorder %s133, %s134
      %p148 = scmp.eq.s32.totalorder %s21, 15
      %p149 = por %p147, %p148
      %p151 = scmp.ne.s32.totalorder %s134, %s150
      %p152 = scmp.eq.s32.totalorder %s21, 0
      %p153 = por %p151, %p152
      %s154 = ssub.s32 %s22, %s41
      %s155 = ssub.s32 %s23, %s37
      %s156 = sor.u32 %s154, %s155
      %p157 = scmp.eq.s32.totalorder %s156, 0
      %s159 = sadd.s32 %s158, 1
      %s160 = scalar_select %p157, %s158, %s159
      %p163 = pneg %p157
      %p164 = scmp.eq.s32.totalorder %s15, 15
      %p165 = por %p163, %p164
      %p166 = scmp.ne.s32.totalorder %s158, %s161
      %p167 = scmp.eq.s32.totalorder %s15, 0
      %p168 = por %p166, %p167
      %p169 = scmp.ne.s32.totalorder %s158, %s161
      %p170 = scmp.eq.s32.totalorder %s20, 15
      %p171 = por %p169, %p170
      %p172 = scmp.ne.s32.totalorder %s161, %s162
      %p173 = scmp.eq.s32.totalorder %s20, 0
      %p174 = por %p172, %p173
      %p175 = scmp.ne.s32.totalorder %s161, %s162
      %p176 = scmp.eq.s32.totalorder %s21, 15
      %p177 = por %p175, %p176
      %p179 = scmp.ne.s32.totalorder %s162, %s178
      %p180 = scmp.eq.s32.totalorder %s21, 0
      %p181 = por %p179, %p180
      %s183 = sadd.s32 %s182, 1
      %p186 = scmp.eq.s32.totalorder %s15, 15
      %p187 = scmp.ne.s32.totalorder %s182, %s184
      %p188 = scmp.eq.s32.totalorder %s15, 0
      %p189 = por %p187, %p188
      %p190 = scmp.ne.s32.totalorder %s182, %s184
      %p191 = scmp.eq.s32.totalorder %s20, 15
      %p192 = por %p190, %p191
      %p193 = scmp.ne.s32.totalorder %s184, %s185
      %p194 = scmp.eq.s32.totalorder %s20, 0
      %p195 = por %p193, %p194
      %p196 = scmp.ne.s32.totalorder %s184, %s185
      %p197 = scmp.eq.s32.totalorder %s21, 15
      %p198 = por %p196, %p197
      %p200 = scmp.ne.s32.totalorder %s185, %s199
      %p201 = scmp.eq.s32.totalorder %s21, 0
      %p202 = por %p200, %p201
      %s204 = sadd.s32 %s203, 1
      %p207 = scmp.eq.s32.totalorder %s15, 15
      %p208 = scmp.ne.s32.totalorder %s203, %s205
      %p209 = scmp.eq.s32.totalorder %s15, 0
      %p210 = por %p208, %p209
      %p211 = scmp.ne.s32.totalorder %s203, %s205
      %p212 = scmp.eq.s32.totalorder %s20, 15
      %p213 = por %p211, %p212
      %p214 = scmp.ne.s32.totalorder %s205, %s206
      %p215 = scmp.eq.s32.totalorder %s20, 0
      %p216 = por %p214, %p215
      %p217 = scmp.ne.s32.totalorder %s205, %s206
      %p218 = scmp.eq.s32.totalorder %s21, 15
      %p219 = por %p217, %p218
      %p221 = scmp.ne.s32.totalorder %s206, %s220
      %p222 = scmp.eq.s32.totalorder %s21, 0
      %p223 = por %p221, %p222
      %s224 = ssub.s32 %s22, %s41
      %s225 = ssub.s32 %s23, %s37
      %s226 = sor.u32 %s224, %s225
      %p227 = scmp.eq.s32.totalorder %s226, 0
      %s229 = sadd.s32 %s228, 1
      %s230 = scalar_select %p227, %s228, %s229
      %p233 = pneg %p227
      %p234 = scmp.eq.s32.totalorder %s15, 15
      %p235 = por %p233, %p234
      %p236 = scmp.ne.s32.totalorder %s228, %s231
      %p237 = scmp.eq.s32.totalorder %s15, 0
      %p238 = por %p236, %p237
      %p239 = scmp.ne.s32.totalorder %s228, %s231
      %p240 = scmp.eq.s32.totalorder %s20, 15
      %p241 = por %p239, %p240
      %p242 = scmp.ne.s32.totalorder %s231, %s232
      %p243 = scmp.eq.s32.totalorder %s20, 0
      %p244 = por %p242, %p243
      %p245 = scmp.ne.s32.totalorder %s231, %s232
      %p246 = scmp.eq.s32.totalorder %s21, 15
      %p247 = por %p245, %p246
      %p249 = scmp.ne.s32.totalorder %s232, %s248
      %p250 = scmp.eq.s32.totalorder %s21, 0
      %p251 = por %p249, %p250
      %p252 = scmp.le.s32.totalorder 1, %s15
      %p253 = scmp.lt.s32.totalorder %s15, 17
      %p254 = pnand %p252, %p253
      %p255 = pneg %p254
      // Predicated region
      $region9: #{ext_transformer_encoder_forward.8} parent=5 // pred_check
        _
      $region10: #{ext_transformer_encoder_forward.8} parent=5 // pred_check_branch
        %257 = sbr.rel (%p254) target = $region12
      $region11: #{ext_transformer_encoder_forward.8} parent=5 // pred_region
        %s258 = ssub.s32 %s15, 1
        // Predicated region
        $region13: #{ext_transformer_encoder_forward.8} parent=11 // pred_check
          %p259 = pneg %p195
        $region14: #{ext_transformer_encoder_forward.8} parent=11 // pred_check_branch
          %261 = sbr.rel (%p259) target = $region16
        $region15: #{ext_transformer_encoder_forward.8} parent=11 // pred_region
          %263 = vsyncadd [#allocation9], 0
          %s264 = sshll.u32 %s5, 4
          %s265 = int_to_ptr.hbm [resolvable:$true] %s264
          %s266 = sshll.u32 [#allocation8], 4
          %s267 = int_to_ptr.vmem [resolvable:$true] %s266
          %272 = dma.hbm_to_vmem [thread:$0]  %s265, 2048, %s267, [#allocation9], 128, 128, 8
        $region16: #{ext_transformer_encoder_forward.8} parent=11 // pred_fallthru
          _
        // Predicated region
        $region17: #{ext_transformer_encoder_forward.8} parent=11 // pred_check
          %p273 = pneg %p216
        $region18: #{ext_transformer_encoder_forward.8} parent=11 // pred_check_branch
          %275 = sbr.rel (%p273) target = $region20
        $region19: #{ext_transformer_encoder_forward.8} parent=11 // pred_region
          %277 = vsyncadd [#allocation11], 0
          %s279 = sshll.u32 %s6, 4
          %s280 = int_to_ptr.hbm [resolvable:$true] %s279
          %s281 = sshll.u32 [#allocation10], 4
          %s282 = int_to_ptr.vmem [resolvable:$true] %s281
          %284 = dma.hbm_to_vmem [thread:$0]  %s280, 16, %s282, [#allocation11]
        $region20: #{ext_transformer_encoder_forward.8} parent=11 // pred_fallthru
          _
      $region12: #{ext_transformer_encoder_forward.8} parent=5 // pred_fallthru
        _
      %p285 = scmp.lt.s32.totalorder %s15, 16
      // Predicated region
      $region21: #{ext_transformer_encoder_forward.8} parent=5 // pred_check
        %p286 = pneg %p285
      $region22: #{ext_transformer_encoder_forward.8} parent=5 // pred_check_branch
        %288 = sbr.rel (%p286) target = $region24
      $region23: #{ext_transformer_encoder_forward.8} parent=5 // pred_region
        // Predicated region
        $region25: #{ext_transformer_encoder_forward.8} parent=23 // pred_check
          %p289 = pneg %p56
        $region26: #{ext_transformer_encoder_forward.8} parent=23 // pred_check_branch
          %291 = sbr.rel (%p289) target = $region28
        $region27: #{ext_transformer_encoder_forward.8} parent=23 // pred_region
          %s292 = sand.u32 %s46, 1
          %s293 = sand.u32 %s46, 1
          %s294 = smul.addr %s293, 256
          %s295 = scalar_lea.vmem [#allocation5], %s294
          %s296 = smul.u32 8, %s23
          %s297 = smul.addr %s22, 384
          %s298 = sadd.s32 %s296, %s297
          %s299 = smul.addr %s298, 8
          %s300 = scalar_lea.vmem %s0, %s299
          // Predicated region
          $region29: #{ext_transformer_encoder_forward.8} parent=27 // pred_check
            _
          $region30: #{ext_transformer_encoder_forward.8} parent=27 // pred_check_branch
            %302 = sbr.rel (0) target = $region32
          $region31: #{ext_transformer_encoder_forward.8} parent=27 // pred_region
            // Predicated region
            $region33: #{ext_transformer_encoder_forward.8} parent=31 // pred_check
              _
            $region34: #{ext_transformer_encoder_forward.8} parent=31 // pred_check_branch
              %304 = sbr.rel (0) target = $region36
            $region35: #{ext_transformer_encoder_forward.8} parent=31 // pred_region
              // Predicated region
              $region48: #{ext_transformer_encoder_forward.8} parent=35 // pred_check
                _
              $region49: #{ext_transformer_encoder_forward.8} parent=35 // pred_check_branch
                %382 = sbr.rel (0) target = $region51
              $region50: #{ext_transformer_encoder_forward.8} parent=35 // pred_region
                loop: start=0, step=1, limit=1
                $region52: #{ext_transformer_encoder_forward.8} parent=50 // loop_pre_header
                  _
                $region53: #{ext_transformer_encoder_forward.8} parent=50 // loop_header
                  %s384 = sphi 0, %s388
                  %p385 = scmp.ge.s32.totalorder %s384, 1
                  %s389 = sphi %s300, %s300
                  %s390 = sphi %s295, %s295
                $region54: #{ext_transformer_encoder_forward.8} parent=50 // loop_header_branch
                  %387 = sbr.rel (%p385) target = $region58
                $region55: #{ext_transformer_encoder_forward.8} parent=50 // loop_body
                  %v391 = vld [vmem:[%s389] sm:$0xff]
                  %392 = vst [vmem:[%s390] sm:$0xff] %v391
                  %v393 = vld [vmem:[%s389 + $0x8] sm:$0xff]
                  %394 = vst [vmem:[%s390 + $0x8] sm:$0xff] %v393
                  %v395 = vld [vmem:[%s389 + $0x10] sm:$0xff]
                  %396 = vst [vmem:[%s390 + $0x10] sm:$0xff] %v395
                  %v397 = vld [vmem:[%s389 + $0x18] sm:$0xff]
                  %398 = vst [vmem:[%s390 + $0x18] sm:$0xff] %v397
                  %v399 = vld [vmem:[%s389 + $0x20] sm:$0xff]
                  %400 = vst [vmem:[%s390 + $0x20] sm:$0xff] %v399
                  %v401 = vld [vmem:[%s389 + $0x28] sm:$0xff]
                  %402 = vst [vmem:[%s390 + $0x28] sm:$0xff] %v401
                  %v403 = vld [vmem:[%s389 + $0x30] sm:$0xff]
                  %404 = vst [vmem:[%s390 + $0x30] sm:$0xff] %v403
                  %v405 = vld [vmem:[%s389 + $0x38] sm:$0xff]
                  %406 = vst [vmem:[%s390 + $0x38] sm:$0xff] %v405
                  %v407 = vld [vmem:[%s389 + $0x100] sm:$0xff]
                  %408 = vst [vmem:[%s390 + $0x40] sm:$0xff] %v407
                  %v409 = vld [vmem:[%s389 + $0x108] sm:$0xff]
                  %410 = vst [vmem:[%s390 + $0x48] sm:$0xff] %v409
                  %v411 = vld [vmem:[%s389 + $0x110] sm:$0xff]
                  %412 = vst [vmem:[%s390 + $0x50] sm:$0xff] %v411
                  %v413 = vld [vmem:[%s389 + $0x118] sm:$0xff]
                  %414 = vst [vmem:[%s390 + $0x58] sm:$0xff] %v413
                  %v415 = vld [vmem:[%s389 + $0x120] sm:$0xff]
                  %416 = vst [vmem:[%s390 + $0x60] sm:$0xff] %v415
                  %v417 = vld [vmem:[%s389 + $0x128] sm:$0xff]
                  %418 = vst [vmem:[%s390 + $0x68] sm:$0xff] %v417
                  %v419 = vld [vmem:[%s389 + $0x130] sm:$0xff]
                  %420 = vst [vmem:[%s390 + $0x70] sm:$0xff] %v419
                  %v421 = vld [vmem:[%s389 + $0x138] sm:$0xff]
                  %422 = vst [vmem:[%s390 + $0x78] sm:$0xff] %v421
                  %v423 = vld [vmem:[%s389 + $0x200] sm:$0xff]
                  %424 = vst [vmem:[%s390 + $0x80] sm:$0xff] %v423
                  %v425 = vld [vmem:[%s389 + $0x208] sm:$0xff]
                  %426 = vst [vmem:[%s390 + $0x88] sm:$0xff] %v425
                  %v427 = vld [vmem:[%s389 + $0x210] sm:$0xff]
                  %428 = vst [vmem:[%s390 + $0x90] sm:$0xff] %v427
                  %v429 = vld [vmem:[%s389 + $0x218] sm:$0xff]
                  %430 = vst [vmem:[%s390 + $0x98] sm:$0xff] %v429
                  %v431 = vld [vmem:[%s389 + $0x220] sm:$0xff]
                  %432 = vst [vmem:[%s390 + $0xa0] sm:$0xff] %v431
                  %v433 = vld [vmem:[%s389 + $0x228] sm:$0xff]
                  %434 = vst [vmem:[%s390 + $0xa8] sm:$0xff] %v433
                  %v435 = vld [vmem:[%s389 + $0x230] sm:$0xff]
                  %436 = vst [vmem:[%s390 + $0xb0] sm:$0xff] %v435
                  %v437 = vld [vmem:[%s389 + $0x238] sm:$0xff]
                  %438 = vst [vmem:[%s390 + $0xb8] sm:$0xff] %v437
                  %v439 = vld [vmem:[%s389 + $0x300] sm:$0xff]
                  %440 = vst [vmem:[%s390 + $0xc0] sm:$0xff] %v439
                  %v441 = vld [vmem:[%s389 + $0x308] sm:$0xff]
                  %442 = vst [vmem:[%s390 + $0xc8] sm:$0xff] %v441
                  %v443 = vld [vmem:[%s389 + $0x310] sm:$0xff]
                  %444 = vst [vmem:[%s390 + $0xd0] sm:$0xff] %v443
                  %v445 = vld [vmem:[%s389 + $0x318] sm:$0xff]
                  %446 = vst [vmem:[%s390 + $0xd8] sm:$0xff] %v445
                  %v447 = vld [vmem:[%s389 + $0x320] sm:$0xff]
                  %448 = vst [vmem:[%s390 + $0xe0] sm:$0xff] %v447
                  %v449 = vld [vmem:[%s389 + $0x328] sm:$0xff]
                  %450 = vst [vmem:[%s390 + $0xe8] sm:$0xff] %v449
                  %v451 = vld [vmem:[%s389 + $0x330] sm:$0xff]
                  %452 = vst [vmem:[%s390 + $0xf0] sm:$0xff] %v451
                  %v453 = vld [vmem:[%s389 + $0x338] sm:$0xff]
                  %454 = vst [vmem:[%s390 + $0xf8] sm:$0xff] %v453
                $region56: #{ext_transformer_encoder_forward.8} parent=50 // loop_footer
                  %s388 = sadd.s32 1, %s384
                $region57: #{ext_transformer_encoder_forward.8} parent=50 // loop_footer_branch
                  %383 = sbr.rel target = $region53
                $region58: #{ext_transformer_encoder_forward.8} parent=50 // loop_exit
                  _
              $region51: #{ext_transformer_encoder_forward.8} parent=35 // pred_fallthru
                _
              // Predicated region
              $region59: #{ext_transformer_encoder_forward.8} parent=35 // pred_check
                _
              $region60: #{ext_transformer_encoder_forward.8} parent=35 // pred_check_branch
                %456 = sbr.rel target = $region62
              $region61: #{ext_transformer_encoder_forward.8} parent=35 // pred_region
                _
              $region62: #{ext_transformer_encoder_forward.8} parent=35 // pred_fallthru
                _
            $region36: #{ext_transformer_encoder_forward.8} parent=31 // pred_fallthru
              _
            // Predicated region
            $region37: #{ext_transformer_encoder_forward.8} parent=31 // pred_check
              _
            $region38: #{ext_transformer_encoder_forward.8} parent=31 // pred_check_branch
              %306 = sbr.rel target = $region40
            $region39: #{ext_transformer_encoder_forward.8} parent=31 // pred_region
              %s308 = ssub.s32 256, 1
              loop: start=0, step=1, limit=1
              $region41: #{ext_transformer_encoder_forward.8} parent=39 // loop_pre_header
                _
              $region42: #{ext_transformer_encoder_forward.8} parent=39 // loop_header
                %s310 = sphi 0, %s314
                %p311 = scmp.ge.s32.totalorder %s310, 1
                %s315 = sphi %s300, %s300
                %s316 = sphi %s295, %s295
              $region43: #{ext_transformer_encoder_forward.8} parent=39 // loop_header_branch
                %313 = sbr.rel (%p311) target = $region47
              $region44: #{ext_transformer_encoder_forward.8} parent=39 // loop_body
                %v317 = vld [vmem:[%s315] sm:%s308]
                %318 = vst [vmem:[%s316] sm:%s308] %v317
                %v319 = vld [vmem:[%s315 + $0x8] sm:%s308]
                %320 = vst [vmem:[%s316 + $0x8] sm:%s308] %v319
                %v321 = vld [vmem:[%s315 + $0x10] sm:%s308]
                %322 = vst [vmem:[%s316 + $0x10] sm:%s308] %v321
                %v323 = vld [vmem:[%s315 + $0x18] sm:%s308]
                %324 = vst [vmem:[%s316 + $0x18] sm:%s308] %v323
                %v325 = vld [vmem:[%s315 + $0x20] sm:%s308]
                %326 = vst [vmem:[%s316 + $0x20] sm:%s308] %v325
                %v327 = vld [vmem:[%s315 + $0x28] sm:%s308]
                %328 = vst [vmem:[%s316 + $0x28] sm:%s308] %v327
                %v329 = vld [vmem:[%s315 + $0x30] sm:%s308]
                %330 = vst [vmem:[%s316 + $0x30] sm:%s308] %v329
                %v331 = vld [vmem:[%s315 + $0x38] sm:%s308]
                %332 = vst [vmem:[%s316 + $0x38] sm:%s308] %v331
                %v333 = vld [vmem:[%s315 + $0x100] sm:%s308]
                %334 = vst [vmem:[%s316 + $0x40] sm:%s308] %v333
                %v335 = vld [vmem:[%s315 + $0x108] sm:%s308]
                %336 = vst [vmem:[%s316 + $0x48] sm:%s308] %v335
                %v337 = vld [vmem:[%s315 + $0x110] sm:%s308]
                %338 = vst [vmem:[%s316 + $0x50] sm:%s308] %v337
                %v339 = vld [vmem:[%s315 + $0x118] sm:%s308]
                %340 = vst [vmem:[%s316 + $0x58] sm:%s308] %v339
                %v341 = vld [vmem:[%s315 + $0x120] sm:%s308]
                %342 = vst [vmem:[%s316 + $0x60] sm:%s308] %v341
                %v343 = vld [vmem:[%s315 + $0x128] sm:%s308]
                %344 = vst [vmem:[%s316 + $0x68] sm:%s308] %v343
                %v345 = vld [vmem:[%s315 + $0x130] sm:%s308]
                %346 = vst [vmem:[%s316 + $0x70] sm:%s308] %v345
                %v347 = vld [vmem:[%s315 + $0x138] sm:%s308]
                %348 = vst [vmem:[%s316 + $0x78] sm:%s308] %v347
                %v349 = vld [vmem:[%s315 + $0x200] sm:%s308]
                %350 = vst [vmem:[%s316 + $0x80] sm:%s308] %v349
                %v351 = vld [vmem:[%s315 + $0x208] sm:%s308]
                %352 = vst [vmem:[%s316 + $0x88] sm:%s308] %v351
                %v353 = vld [vmem:[%s315 + $0x210] sm:%s308]
                %354 = vst [vmem:[%s316 + $0x90] sm:%s308] %v353
                %v355 = vld [vmem:[%s315 + $0x218] sm:%s308]
                %356 = vst [vmem:[%s316 + $0x98] sm:%s308] %v355
                %v357 = vld [vmem:[%s315 + $0x220] sm:%s308]
                %358 = vst [vmem:[%s316 + $0xa0] sm:%s308] %v357
                %v359 = vld [vmem:[%s315 + $0x228] sm:%s308]
                %360 = vst [vmem:[%s316 + $0xa8] sm:%s308] %v359
                %v361 = vld [vmem:[%s315 + $0x230] sm:%s308]
                %362 = vst [vmem:[%s316 + $0xb0] sm:%s308] %v361
                %v363 = vld [vmem:[%s315 + $0x238] sm:%s308]
                %364 = vst [vmem:[%s316 + $0xb8] sm:%s308] %v363
                %v365 = vld [vmem:[%s315 + $0x300] sm:%s308]
                %366 = vst [vmem:[%s316 + $0xc0] sm:%s308] %v365
                %v367 = vld [vmem:[%s315 + $0x308] sm:%s308]
                %368 = vst [vmem:[%s316 + $0xc8] sm:%s308] %v367
                %v369 = vld [vmem:[%s315 + $0x310] sm:%s308]
                %370 = vst [vmem:[%s316 + $0xd0] sm:%s308] %v369
                %v371 = vld [vmem:[%s315 + $0x318] sm:%s308]
                %372 = vst [vmem:[%s316 + $0xd8] sm:%s308] %v371
                %v373 = vld [vmem:[%s315 + $0x320] sm:%s308]
                %374 = vst [vmem:[%s316 + $0xe0] sm:%s308] %v373
                %v375 = vld [vmem:[%s315 + $0x328] sm:%s308]
                %376 = vst [vmem:[%s316 + $0xe8] sm:%s308] %v375
                %v377 = vld [vmem:[%s315 + $0x330] sm:%s308]
                %378 = vst [vmem:[%s316 + $0xf0] sm:%s308] %v377
                %v379 = vld [vmem:[%s315 + $0x338] sm:%s308]
                %380 = vst [vmem:[%s316 + $0xf8] sm:%s308] %v379
              $region45: #{ext_transformer_encoder_forward.8} parent=39 // loop_footer
                %s314 = sadd.s32 1, %s310
              $region46: #{ext_transformer_encoder_forward.8} parent=39 // loop_footer_branch
                %309 = sbr.rel target = $region42
              $region47: #{ext_transformer_encoder_forward.8} parent=39 // loop_exit
                _
            $region40: #{ext_transformer_encoder_forward.8} parent=31 // pred_fallthru
              _
          $region32: #{ext_transformer_encoder_forward.8} parent=27 // pred_fallthru
            _
          %457 = vnop
        $region28: #{ext_transformer_encoder_forward.8} parent=23 // pred_fallthru
          _
        // Predicated region
        $region63: #{ext_transformer_encoder_forward.8} parent=23 // pred_check
          %p458 = pneg %p84
        $region64: #{ext_transformer_encoder_forward.8} parent=23 // pred_check_branch
          %460 = sbr.rel (%p458) target = $region66
        $region65: #{ext_transformer_encoder_forward.8} parent=23 // pred_region
          %s461 = sand.u32 %s74, 1
          %s462 = sand.u32 %s74, 1
          %s463 = smul.addr %s462, 512
          %s464 = scalar_lea.vmem [#allocation6], %s463
          %s465 = smul.u32 16, %s24
          %s466 = sadd.s32 %s465, 128
          %s467 = smul.addr %s22, 384
          %s468 = sadd.s32 %s466, %s467
          %s469 = smul.addr %s468, 8
          %s470 = scalar_lea.vmem %s1, %s469
          // Predicated region
          $region67: #{ext_transformer_encoder_forward.8} parent=65 // pred_check
            _
          $region68: #{ext_transformer_encoder_forward.8} parent=65 // pred_check_branch
            %472 = sbr.rel (0) target = $region70
          $region69: #{ext_transformer_encoder_forward.8} parent=65 // pred_region
            // Predicated region
            $region71: #{ext_transformer_encoder_forward.8} parent=69 // pred_check
              _
            $region72: #{ext_transformer_encoder_forward.8} parent=69 // pred_check_branch
              %474 = sbr.rel (0) target = $region74
            $region73: #{ext_transformer_encoder_forward.8} parent=69 // pred_region
              // Predicated region
              $region86: #{ext_transformer_encoder_forward.8} parent=73 // pred_check
                _
              $region87: #{ext_transformer_encoder_forward.8} parent=73 // pred_check_branch
                %616 = sbr.rel (0) target = $region89
              $region88: #{ext_transformer_encoder_forward.8} parent=73 // pred_region
                loop: start=0, step=1, limit=1
                $region90: #{ext_transformer_encoder_forward.8} parent=88 // loop_pre_header
                  _
                $region91: #{ext_transformer_encoder_forward.8} parent=88 // loop_header
                  %s618 = sphi 0, %s622
                  %p619 = scmp.ge.s32.totalorder %s618, 1
                  %s623 = sphi %s470, %s470
                  %s624 = sphi %s464, %s464
                $region92: #{ext_transformer_encoder_forward.8} parent=88 // loop_header_branch
                  %621 = sbr.rel (%p619) target = $region96
                $region93: #{ext_transformer_encoder_forward.8} parent=88 // loop_body
                  %v625 = vld [vmem:[%s623] sm:$0xff]
                  %626 = vst [vmem:[%s624] sm:$0xff] %v625
                  %v627 = vld [vmem:[%s623 + $0x8] sm:$0xff]
                  %628 = vst [vmem:[%s624 + $0x8] sm:$0xff] %v627
                  %v629 = vld [vmem:[%s623 + $0x10] sm:$0xff]
                  %630 = vst [vmem:[%s624 + $0x10] sm:$0xff] %v629
                  %v631 = vld [vmem:[%s623 + $0x18] sm:$0xff]
                  %632 = vst [vmem:[%s624 + $0x18] sm:$0xff] %v631
                  %v633 = vld [vmem:[%s623 + $0x20] sm:$0xff]
                  %634 = vst [vmem:[%s624 + $0x20] sm:$0xff] %v633
                  %v635 = vld [vmem:[%s623 + $0x28] sm:$0xff]
                  %636 = vst [vmem:[%s624 + $0x28] sm:$0xff] %v635
                  %v637 = vld [vmem:[%s623 + $0x30] sm:$0xff]
                  %638 = vst [vmem:[%s624 + $0x30] sm:$0xff] %v637
                  %v639 = vld [vmem:[%s623 + $0x38] sm:$0xff]
                  %640 = vst [vmem:[%s624 + $0x38] sm:$0xff] %v639
                  %v641 = vld [vmem:[%s623 + $0x40] sm:$0xff]
                  %642 = vst [vmem:[%s624 + $0x40] sm:$0xff] %v641
                  %v643 = vld [vmem:[%s623 + $0x48] sm:$0xff]
                  %644 = vst [vmem:[%s624 + $0x48] sm:$0xff] %v643
                  %v645 = vld [vmem:[%s623 + $0x50] sm:$0xff]
                  %646 = vst [vmem:[%s624 + $0x50] sm:$0xff] %v645
                  %v647 = vld [vmem:[%s623 + $0x58] sm:$0xff]
                  %648 = vst [vmem:[%s624 + $0x58] sm:$0xff] %v647
                  %v649 = vld [vmem:[%s623 + $0x60] sm:$0xff]
                  %650 = vst [vmem:[%s624 + $0x60] sm:$0xff] %v649
                  %v651 = vld [vmem:[%s623 + $0x68] sm:$0xff]
                  %652 = vst [vmem:[%s624 + $0x68] sm:$0xff] %v651
                  %v653 = vld [vmem:[%s623 + $0x70] sm:$0xff]
                  %654 = vst [vmem:[%s624 + $0x70] sm:$0xff] %v653
                  %v655 = vld [vmem:[%s623 + $0x78] sm:$0xff]
                  %656 = vst [vmem:[%s624 + $0x78] sm:$0xff] %v655
                  %v657 = vld [vmem:[%s623 + $0x100] sm:$0xff]
                  %658 = vst [vmem:[%s624 + $0x80] sm:$0xff] %v657
                  %v659 = vld [vmem:[%s623 + $0x108] sm:$0xff]
                  %660 = vst [vmem:[%s624 + $0x88] sm:$0xff] %v659
                  %v661 = vld [vmem:[%s623 + $0x110] sm:$0xff]
                  %662 = vst [vmem:[%s624 + $0x90] sm:$0xff] %v661
                  %v663 = vld [vmem:[%s623 + $0x118] sm:$0xff]
                  %664 = vst [vmem:[%s624 + $0x98] sm:$0xff] %v663
                  %v665 = vld [vmem:[%s623 + $0x120] sm:$0xff]
                  %666 = vst [vmem:[%s624 + $0xa0] sm:$0xff] %v665
                  %v667 = vld [vmem:[%s623 + $0x128] sm:$0xff]
                  %668 = vst [vmem:[%s624 + $0xa8] sm:$0xff] %v667
                  %v669 = vld [vmem:[%s623 + $0x130] sm:$0xff]
                  %670 = vst [vmem:[%s624 + $0xb0] sm:$0xff] %v669
                  %v671 = vld [vmem:[%s623 + $0x138] sm:$0xff]
                  %672 = vst [vmem:[%s624 + $0xb8] sm:$0xff] %v671
                  %v673 = vld [vmem:[%s623 + $0x140] sm:$0xff]
                  %674 = vst [vmem:[%s624 + $0xc0] sm:$0xff] %v673
                  %v675 = vld [vmem:[%s623 + $0x148] sm:$0xff]
                  %676 = vst [vmem:[%s624 + $0xc8] sm:$0xff] %v675
                  %v677 = vld [vmem:[%s623 + $0x150] sm:$0xff]
                  %678 = vst [vmem:[%s624 + $0xd0] sm:$0xff] %v677
                  %v679 = vld [vmem:[%s623 + $0x158] sm:$0xff]
                  %680 = vst [vmem:[%s624 + $0xd8] sm:$0xff] %v679
                  %v681 = vld [vmem:[%s623 + $0x160] sm:$0xff]
                  %682 = vst [vmem:[%s624 + $0xe0] sm:$0xff] %v681
                  %v683 = vld [vmem:[%s623 + $0x168] sm:$0xff]
                  %684 = vst [vmem:[%s624 + $0xe8] sm:$0xff] %v683
                  %v685 = vld [vmem:[%s623 + $0x170] sm:$0xff]
                  %686 = vst [vmem:[%s624 + $0xf0] sm:$0xff] %v685
                  %v687 = vld [vmem:[%s623 + $0x178] sm:$0xff]
                  %688 = vst [vmem:[%s624 + $0xf8] sm:$0xff] %v687
                  %v689 = vld [vmem:[%s623 + $0x200] sm:$0xff]
                  %690 = vst [vmem:[%s624 + $0x100] sm:$0xff] %v689
                  %v691 = vld [vmem:[%s623 + $0x208] sm:$0xff]
                  %692 = vst [vmem:[%s624 + $0x108] sm:$0xff] %v691
                  %v693 = vld [vmem:[%s623 + $0x210] sm:$0xff]
                  %694 = vst [vmem:[%s624 + $0x110] sm:$0xff] %v693
                  %v695 = vld [vmem:[%s623 + $0x218] sm:$0xff]
                  %696 = vst [vmem:[%s624 + $0x118] sm:$0xff] %v695
                  %v697 = vld [vmem:[%s623 + $0x220] sm:$0xff]
                  %698 = vst [vmem:[%s624 + $0x120] sm:$0xff] %v697
                  %v699 = vld [vmem:[%s623 + $0x228] sm:$0xff]
                  %700 = vst [vmem:[%s624 + $0x128] sm:$0xff] %v699
                  %v701 = vld [vmem:[%s623 + $0x230] sm:$0xff]
                  %702 = vst [vmem:[%s624 + $0x130] sm:$0xff] %v701
                  %v703 = vld [vmem:[%s623 + $0x238] sm:$0xff]
                  %704 = vst [vmem:[%s624 + $0x138] sm:$0xff] %v703
                  %v705 = vld [vmem:[%s623 + $0x240] sm:$0xff]
                  %706 = vst [vmem:[%s624 + $0x140] sm:$0xff] %v705
                  %v707 = vld [vmem:[%s623 + $0x248] sm:$0xff]
                  %708 = vst [vmem:[%s624 + $0x148] sm:$0xff] %v707
                  %v709 = vld [vmem:[%s623 + $0x250] sm:$0xff]
                  %710 = vst [vmem:[%s624 + $0x150] sm:$0xff] %v709
                  %v711 = vld [vmem:[%s623 + $0x258] sm:$0xff]
                  %712 = vst [vmem:[%s624 + $0x158] sm:$0xff] %v711
                  %v713 = vld [vmem:[%s623 + $0x260] sm:$0xff]
                  %714 = vst [vmem:[%s624 + $0x160] sm:$0xff] %v713
                  %v715 = vld [vmem:[%s623 + $0x268] sm:$0xff]
                  %716 = vst [vmem:[%s624 + $0x168] sm:$0xff] %v715
                  %v717 = vld [vmem:[%s623 + $0x270] sm:$0xff]
                  %718 = vst [vmem:[%s624 + $0x170] sm:$0xff] %v717
                  %v719 = vld [vmem:[%s623 + $0x278] sm:$0xff]
                  %720 = vst [vmem:[%s624 + $0x178] sm:$0xff] %v719
                  %v721 = vld [vmem:[%s623 + $0x300] sm:$0xff]
                  %722 = vst [vmem:[%s624 + $0x180] sm:$0xff] %v721
                  %v723 = vld [vmem:[%s623 + $0x308] sm:$0xff]
                  %724 = vst [vmem:[%s624 + $0x188] sm:$0xff] %v723
                  %v725 = vld [vmem:[%s623 + $0x310] sm:$0xff]
                  %726 = vst [vmem:[%s624 + $0x190] sm:$0xff] %v725
                  %v727 = vld [vmem:[%s623 + $0x318] sm:$0xff]
                  %728 = vst [vmem:[%s624 + $0x198] sm:$0xff] %v727
                  %v729 = vld [vmem:[%s623 + $0x320] sm:$0xff]
                  %730 = vst [vmem:[%s624 + $0x1a0] sm:$0xff] %v729
                  %v731 = vld [vmem:[%s623 + $0x328] sm:$0xff]
                  %732 = vst [vmem:[%s624 + $0x1a8] sm:$0xff] %v731
                  %v733 = vld [vmem:[%s623 + $0x330] sm:$0xff]
                  %734 = vst [vmem:[%s624 + $0x1b0] sm:$0xff] %v733
                  %v735 = vld [vmem:[%s623 + $0x338] sm:$0xff]
                  %736 = vst [vmem:[%s624 + $0x1b8] sm:$0xff] %v735
                  %v737 = vld [vmem:[%s623 + $0x340] sm:$0xff]
                  %738 = vst [vmem:[%s624 + $0x1c0] sm:$0xff] %v737
                  %v739 = vld [vmem:[%s623 + $0x348] sm:$0xff]
                  %740 = vst [vmem:[%s624 + $0x1c8] sm:$0xff] %v739
                  %v741 = vld [vmem:[%s623 + $0x350] sm:$0xff]
                  %742 = vst [vmem:[%s624 + $0x1d0] sm:$0xff] %v741
                  %v743 = vld [vmem:[%s623 + $0x358] sm:$0xff]
                  %744 = vst [vmem:[%s624 + $0x1d8] sm:$0xff] %v743
                  %v745 = vld [vmem:[%s623 + $0x360] sm:$0xff]
                  %746 = vst [vmem:[%s624 + $0x1e0] sm:$0xff] %v745
                  %v747 = vld [vmem:[%s623 + $0x368] sm:$0xff]
                  %748 = vst [vmem:[%s624 + $0x1e8] sm:$0xff] %v747
                  %v749 = vld [vmem:[%s623 + $0x370] sm:$0xff]
                  %750 = vst [vmem:[%s624 + $0x1f0] sm:$0xff] %v749
                  %v751 = vld [vmem:[%s623 + $0x378] sm:$0xff]
                  %752 = vst [vmem:[%s624 + $0x1f8] sm:$0xff] %v751
                $region94: #{ext_transformer_encoder_forward.8} parent=88 // loop_footer
                  %s622 = sadd.s32 1, %s618
                $region95: #{ext_transformer_encoder_forward.8} parent=88 // loop_footer_branch
                  %617 = sbr.rel target = $region91
                $region96: #{ext_transformer_encoder_forward.8} parent=88 // loop_exit
                  _
              $region89: #{ext_transformer_encoder_forward.8} parent=73 // pred_fallthru
                _
              // Predicated region
              $region97: #{ext_transformer_encoder_forward.8} parent=73 // pred_check
                _
              $region98: #{ext_transformer_encoder_forward.8} parent=73 // pred_check_branch
                %754 = sbr.rel target = $region100
              $region99: #{ext_transformer_encoder_forward.8} parent=73 // pred_region
                _
              $region100: #{ext_transformer_encoder_forward.8} parent=73 // pred_fallthru
                _
            $region74: #{ext_transformer_encoder_forward.8} parent=69 // pred_fallthru
              _
            // Predicated region
            $region75: #{ext_transformer_encoder_forward.8} parent=69 // pred_check
              _
            $region76: #{ext_transformer_encoder_forward.8} parent=69 // pred_check_branch
              %476 = sbr.rel target = $region78
            $region77: #{ext_transformer_encoder_forward.8} parent=69 // pred_region
              %s478 = ssub.s32 256, 1
              loop: start=0, step=1, limit=1
              $region79: #{ext_transformer_encoder_forward.8} parent=77 // loop_pre_header
                _
              $region80: #{ext_transformer_encoder_forward.8} parent=77 // loop_header
                %s480 = sphi 0, %s484
                %p481 = scmp.ge.s32.totalorder %s480, 1
                %s485 = sphi %s470, %s470
                %s486 = sphi %s464, %s464
              $region81: #{ext_transformer_encoder_forward.8} parent=77 // loop_header_branch
                %483 = sbr.rel (%p481) target = $region85
              $region82: #{ext_transformer_encoder_forward.8} parent=77 // loop_body
                %v487 = vld [vmem:[%s485] sm:%s478]
                %488 = vst [vmem:[%s486] sm:%s478] %v487
                %v489 = vld [vmem:[%s485 + $0x8] sm:%s478]
                %490 = vst [vmem:[%s486 + $0x8] sm:%s478] %v489
                %v491 = vld [vmem:[%s485 + $0x10] sm:%s478]
                %492 = vst [vmem:[%s486 + $0x10] sm:%s478] %v491
                %v493 = vld [vmem:[%s485 + $0x18] sm:%s478]
                %494 = vst [vmem:[%s486 + $0x18] sm:%s478] %v493
                %v495 = vld [vmem:[%s485 + $0x20] sm:%s478]
                %496 = vst [vmem:[%s486 + $0x20] sm:%s478] %v495
                %v497 = vld [vmem:[%s485 + $0x28] sm:%s478]
                %498 = vst [vmem:[%s486 + $0x28] sm:%s478] %v497
                %v499 = vld [vmem:[%s485 + $0x30] sm:%s478]
                %500 = vst [vmem:[%s486 + $0x30] sm:%s478] %v499
                %v501 = vld [vmem:[%s485 + $0x38] sm:%s478]
                %502 = vst [vmem:[%s486 + $0x38] sm:%s478] %v501
                %v503 = vld [vmem:[%s485 + $0x40] sm:%s478]
                %504 = vst [vmem:[%s486 + $0x40] sm:%s478] %v503
                %v505 = vld [vmem:[%s485 + $0x48] sm:%s478]
                %506 = vst [vmem:[%s486 + $0x48] sm:%s478] %v505
                %v507 = vld [vmem:[%s485 + $0x50] sm:%s478]
                %508 = vst [vmem:[%s486 + $0x50] sm:%s478] %v507
                %v509 = vld [vmem:[%s485 + $0x58] sm:%s478]
                %510 = vst [vmem:[%s486 + $0x58] sm:%s478] %v509
                %v511 = vld [vmem:[%s485 + $0x60] sm:%s478]
                %512 = vst [vmem:[%s486 + $0x60] sm:%s478] %v511
                %v513 = vld [vmem:[%s485 + $0x68] sm:%s478]
                %514 = vst [vmem:[%s486 + $0x68] sm:%s478] %v513
                %v515 = vld [vmem:[%s485 + $0x70] sm:%s478]
                %516 = vst [vmem:[%s486 + $0x70] sm:%s478] %v515
                %v517 = vld [vmem:[%s485 + $0x78] sm:%s478]
                %518 = vst [vmem:[%s486 + $0x78] sm:%s478] %v517
                %v519 = vld [vmem:[%s485 + $0x100] sm:%s478]
                %520 = vst [vmem:[%s486 + $0x80] sm:%s478] %v519
                %v521 = vld [vmem:[%s485 + $0x108] sm:%s478]
                %522 = vst [vmem:[%s486 + $0x88] sm:%s478] %v521
                %v523 = vld [vmem:[%s485 + $0x110] sm:%s478]
                %524 = vst [vmem:[%s486 + $0x90] sm:%s478] %v523
                %v525 = vld [vmem:[%s485 + $0x118] sm:%s478]
                %526 = vst [vmem:[%s486 + $0x98] sm:%s478] %v525
                %v527 = vld [vmem:[%s485 + $0x120] sm:%s478]
                %528 = vst [vmem:[%s486 + $0xa0] sm:%s478] %v527
                %v529 = vld [vmem:[%s485 + $0x128] sm:%s478]
                %530 = vst [vmem:[%s486 + $0xa8] sm:%s478] %v529
                %v531 = vld [vmem:[%s485 + $0x130] sm:%s478]
                %532 = vst [vmem:[%s486 + $0xb0] sm:%s478] %v531
                %v533 = vld [vmem:[%s485 + $0x138] sm:%s478]
                %534 = vst [vmem:[%s486 + $0xb8] sm:%s478] %v533
                %v535 = vld [vmem:[%s485 + $0x140] sm:%s478]
                %536 = vst [vmem:[%s486 + $0xc0] sm:%s478] %v535
                %v537 = vld [vmem:[%s485 + $0x148] sm:%s478]
                %538 = vst [vmem:[%s486 + $0xc8] sm:%s478] %v537
                %v539 = vld [vmem:[%s485 + $0x150] sm:%s478]
                %540 = vst [vmem:[%s486 + $0xd0] sm:%s478] %v539
                %v541 = vld [vmem:[%s485 + $0x158] sm:%s478]
                %542 = vst [vmem:[%s486 + $0xd8] sm:%s478] %v541
                %v543 = vld [vmem:[%s485 + $0x160] sm:%s478]
                %544 = vst [vmem:[%s486 + $0xe0] sm:%s478] %v543
                %v545 = vld [vmem:[%s485 + $0x168] sm:%s478]
                %546 = vst [vmem:[%s486 + $0xe8] sm:%s478] %v545
                %v547 = vld [vmem:[%s485 + $0x170] sm:%s478]
                %548 = vst [vmem:[%s486 + $0xf0] sm:%s478] %v547
                %v549 = vld [vmem:[%s485 + $0x178] sm:%s478]
                %550 = vst [vmem:[%s486 + $0xf8] sm:%s478] %v549
                %v551 = vld [vmem:[%s485 + $0x200] sm:%s478]
                %552 = vst [vmem:[%s486 + $0x100] sm:%s478] %v551
                %v553 = vld [vmem:[%s485 + $0x208] sm:%s478]
                %554 = vst [vmem:[%s486 + $0x108] sm:%s478] %v553
                %v555 = vld [vmem:[%s485 + $0x210] sm:%s478]
                %556 = vst [vmem:[%s486 + $0x110] sm:%s478] %v555
                %v557 = vld [vmem:[%s485 + $0x218] sm:%s478]
                %558 = vst [vmem:[%s486 + $0x118] sm:%s478] %v557
                %v559 = vld [vmem:[%s485 + $0x220] sm:%s478]
                %560 = vst [vmem:[%s486 + $0x120] sm:%s478] %v559
                %v561 = vld [vmem:[%s485 + $0x228] sm:%s478]
                %562 = vst [vmem:[%s486 + $0x128] sm:%s478] %v561
                %v563 = vld [vmem:[%s485 + $0x230] sm:%s478]
                %564 = vst [vmem:[%s486 + $0x130] sm:%s478] %v563
                %v565 = vld [vmem:[%s485 + $0x238] sm:%s478]
                %566 = vst [vmem:[%s486 + $0x138] sm:%s478] %v565
                %v567 = vld [vmem:[%s485 + $0x240] sm:%s478]
                %568 = vst [vmem:[%s486 + $0x140] sm:%s478] %v567
                %v569 = vld [vmem:[%s485 + $0x248] sm:%s478]
                %570 = vst [vmem:[%s486 + $0x148] sm:%s478] %v569
                %v571 = vld [vmem:[%s485 + $0x250] sm:%s478]
                %572 = vst [vmem:[%s486 + $0x150] sm:%s478] %v571
                %v573 = vld [vmem:[%s485 + $0x258] sm:%s478]
                %574 = vst [vmem:[%s486 + $0x158] sm:%s478] %v573
                %v575 = vld [vmem:[%s485 + $0x260] sm:%s478]
                %576 = vst [vmem:[%s486 + $0x160] sm:%s478] %v575
                %v577 = vld [vmem:[%s485 + $0x268] sm:%s478]
                %578 = vst [vmem:[%s486 + $0x168] sm:%s478] %v577
                %v579 = vld [vmem:[%s485 + $0x270] sm:%s478]
                %580 = vst [vmem:[%s486 + $0x170] sm:%s478] %v579
                %v581 = vld [vmem:[%s485 + $0x278] sm:%s478]
                %582 = vst [vmem:[%s486 + $0x178] sm:%s478] %v581
                %v583 = vld [vmem:[%s485 + $0x300] sm:%s478]
                %584 = vst [vmem:[%s486 + $0x180] sm:%s478] %v583
                %v585 = vld [vmem:[%s485 + $0x308] sm:%s478]
                %586 = vst [vmem:[%s486 + $0x188] sm:%s478] %v585
                %v587 = vld [vmem:[%s485 + $0x310] sm:%s478]
                %588 = vst [vmem:[%s486 + $0x190] sm:%s478] %v587
                %v589 = vld [vmem:[%s485 + $0x318] sm:%s478]
                %590 = vst [vmem:[%s486 + $0x198] sm:%s478] %v589
                %v591 = vld [vmem:[%s485 + $0x320] sm:%s478]
                %592 = vst [vmem:[%s486 + $0x1a0] sm:%s478] %v591
                %v593 = vld [vmem:[%s485 + $0x328] sm:%s478]
                %594 = vst [vmem:[%s486 + $0x1a8] sm:%s478] %v593
                %v595 = vld [vmem:[%s485 + $0x330] sm:%s478]
                %596 = vst [vmem:[%s486 + $0x1b0] sm:%s478] %v595
                %v597 = vld [vmem:[%s485 + $0x338] sm:%s478]
                %598 = vst [vmem:[%s486 + $0x1b8] sm:%s478] %v597
                %v599 = vld [vmem:[%s485 + $0x340] sm:%s478]
                %600 = vst [vmem:[%s486 + $0x1c0] sm:%s478] %v599
                %v601 = vld [vmem:[%s485 + $0x348] sm:%s478]
                %602 = vst [vmem:[%s486 + $0x1c8] sm:%s478] %v601
                %v603 = vld [vmem:[%s485 + $0x350] sm:%s478]
                %604 = vst [vmem:[%s486 + $0x1d0] sm:%s478] %v603
                %v605 = vld [vmem:[%s485 + $0x358] sm:%s478]
                %606 = vst [vmem:[%s486 + $0x1d8] sm:%s478] %v605
                %v607 = vld [vmem:[%s485 + $0x360] sm:%s478]
                %608 = vst [vmem:[%s486 + $0x1e0] sm:%s478] %v607
                %v609 = vld [vmem:[%s485 + $0x368] sm:%s478]
                %610 = vst [vmem:[%s486 + $0x1e8] sm:%s478] %v609
                %v611 = vld [vmem:[%s485 + $0x370] sm:%s478]
                %612 = vst [vmem:[%s486 + $0x1f0] sm:%s478] %v611
                %v613 = vld [vmem:[%s485 + $0x378] sm:%s478]
                %614 = vst [vmem:[%s486 + $0x1f8] sm:%s478] %v613
              $region83: #{ext_transformer_encoder_forward.8} parent=77 // loop_footer
                %s484 = sadd.s32 1, %s480
              $region84: #{ext_transformer_encoder_forward.8} parent=77 // loop_footer_branch
                %479 = sbr.rel target = $region80
              $region85: #{ext_transformer_encoder_forward.8} parent=77 // loop_exit
                _
            $region78: #{ext_transformer_encoder_forward.8} parent=69 // pred_fallthru
              _
          $region70: #{ext_transformer_encoder_forward.8} parent=65 // pred_fallthru
            _
          %755 = vnop
        $region66: #{ext_transformer_encoder_forward.8} parent=23 // pred_fallthru
          _
        // Predicated region
        $region101: #{ext_transformer_encoder_forward.8} parent=23 // pred_check
          %p756 = pneg %p112
        $region102: #{ext_transformer_encoder_forward.8} parent=23 // pred_check_branch
          %758 = sbr.rel (%p756) target = $region104
        $region103: #{ext_transformer_encoder_forward.8} parent=23 // pred_region
          %s759 = sand.u32 %s102, 1
          %s760 = sand.u32 %s102, 1
          %s761 = smul.addr %s760, 512
          %s762 = scalar_lea.vmem [#allocation7], %s761
          %s763 = smul.u32 16, %s24
          %s764 = sadd.s32 %s763, 256
          %s765 = smul.addr %s22, 384
          %s766 = sadd.s32 %s764, %s765
          %s767 = smul.addr %s766, 8
          %s768 = scalar_lea.vmem %s2, %s767
          // Predicated region
          $region105: #{ext_transformer_encoder_forward.8} parent=103 // pred_check
            _
          $region106: #{ext_transformer_encoder_forward.8} parent=103 // pred_check_branch
            %770 = sbr.rel (0) target = $region108
          $region107: #{ext_transformer_encoder_forward.8} parent=103 // pred_region
            // Predicated region
            $region109: #{ext_transformer_encoder_forward.8} parent=107 // pred_check
              _
            $region110: #{ext_transformer_encoder_forward.8} parent=107 // pred_check_branch
              %772 = sbr.rel (0) target = $region112
            $region111: #{ext_transformer_encoder_forward.8} parent=107 // pred_region
              // Predicated region
              $region124: #{ext_transformer_encoder_forward.8} parent=111 // pred_check
                _
              $region125: #{ext_transformer_encoder_forward.8} parent=111 // pred_check_branch
                %914 = sbr.rel (0) target = $region127
              $region126: #{ext_transformer_encoder_forward.8} parent=111 // pred_region
                loop: start=0, step=1, limit=1
                $region128: #{ext_transformer_encoder_forward.8} parent=126 // loop_pre_header
                  _
                $region129: #{ext_transformer_encoder_forward.8} parent=126 // loop_header
                  %s916 = sphi 0, %s920
                  %p917 = scmp.ge.s32.totalorder %s916, 1
                  %s921 = sphi %s768, %s768
                  %s922 = sphi %s762, %s762
                $region130: #{ext_transformer_encoder_forward.8} parent=126 // loop_header_branch
                  %919 = sbr.rel (%p917) target = $region134
                $region131: #{ext_transformer_encoder_forward.8} parent=126 // loop_body
                  %v923 = vld [vmem:[%s921] sm:$0xff]
                  %924 = vst [vmem:[%s922] sm:$0xff] %v923
                  %v925 = vld [vmem:[%s921 + $0x8] sm:$0xff]
                  %926 = vst [vmem:[%s922 + $0x8] sm:$0xff] %v925
                  %v927 = vld [vmem:[%s921 + $0x10] sm:$0xff]
                  %928 = vst [vmem:[%s922 + $0x10] sm:$0xff] %v927
                  %v929 = vld [vmem:[%s921 + $0x18] sm:$0xff]
                  %930 = vst [vmem:[%s922 + $0x18] sm:$0xff] %v929
                  %v931 = vld [vmem:[%s921 + $0x20] sm:$0xff]
                  %932 = vst [vmem:[%s922 + $0x20] sm:$0xff] %v931
                  %v933 = vld [vmem:[%s921 + $0x28] sm:$0xff]
                  %934 = vst [vmem:[%s922 + $0x28] sm:$0xff] %v933
                  %v935 = vld [vmem:[%s921 + $0x30] sm:$0xff]
                  %936 = vst [vmem:[%s922 + $0x30] sm:$0xff] %v935
                  %v937 = vld [vmem:[%s921 + $0x38] sm:$0xff]
                  %938 = vst [vmem:[%s922 + $0x38] sm:$0xff] %v937
                  %v939 = vld [vmem:[%s921 + $0x40] sm:$0xff]
                  %940 = vst [vmem:[%s922 + $0x40] sm:$0xff] %v939
                  %v941 = vld [vmem:[%s921 + $0x48] sm:$0xff]
                  %942 = vst [vmem:[%s922 + $0x48] sm:$0xff] %v941
                  %v943 = vld [vmem:[%s921 + $0x50] sm:$0xff]
                  %944 = vst [vmem:[%s922 + $0x50] sm:$0xff] %v943
                  %v945 = vld [vmem:[%s921 + $0x58] sm:$0xff]
                  %946 = vst [vmem:[%s922 + $0x58] sm:$0xff] %v945
                  %v947 = vld [vmem:[%s921 + $0x60] sm:$0xff]
                  %948 = vst [vmem:[%s922 + $0x60] sm:$0xff] %v947
                  %v949 = vld [vmem:[%s921 + $0x68] sm:$0xff]
                  %950 = vst [vmem:[%s922 + $0x68] sm:$0xff] %v949
                  %v951 = vld [vmem:[%s921 + $0x70] sm:$0xff]
                  %952 = vst [vmem:[%s922 + $0x70] sm:$0xff] %v951
                  %v953 = vld [vmem:[%s921 + $0x78] sm:$0xff]
                  %954 = vst [vmem:[%s922 + $0x78] sm:$0xff] %v953
                  %v955 = vld [vmem:[%s921 + $0x100] sm:$0xff]
                  %956 = vst [vmem:[%s922 + $0x80] sm:$0xff] %v955
                  %v957 = vld [vmem:[%s921 + $0x108] sm:$0xff]
                  %958 = vst [vmem:[%s922 + $0x88] sm:$0xff] %v957
                  %v959 = vld [vmem:[%s921 + $0x110] sm:$0xff]
                  %960 = vst [vmem:[%s922 + $0x90] sm:$0xff] %v959
                  %v961 = vld [vmem:[%s921 + $0x118] sm:$0xff]
                  %962 = vst [vmem:[%s922 + $0x98] sm:$0xff] %v961
                  %v963 = vld [vmem:[%s921 + $0x120] sm:$0xff]
                  %964 = vst [vmem:[%s922 + $0xa0] sm:$0xff] %v963
                  %v965 = vld [vmem:[%s921 + $0x128] sm:$0xff]
                  %966 = vst [vmem:[%s922 + $0xa8] sm:$0xff] %v965
                  %v967 = vld [vmem:[%s921 + $0x130] sm:$0xff]
                  %968 = vst [vmem:[%s922 + $0xb0] sm:$0xff] %v967
                  %v969 = vld [vmem:[%s921 + $0x138] sm:$0xff]
                  %970 = vst [vmem:[%s922 + $0xb8] sm:$0xff] %v969
                  %v971 = vld [vmem:[%s921 + $0x140] sm:$0xff]
                  %972 = vst [vmem:[%s922 + $0xc0] sm:$0xff] %v971
                  %v973 = vld [vmem:[%s921 + $0x148] sm:$0xff]
                  %974 = vst [vmem:[%s922 + $0xc8] sm:$0xff] %v973
                  %v975 = vld [vmem:[%s921 + $0x150] sm:$0xff]
                  %976 = vst [vmem:[%s922 + $0xd0] sm:$0xff] %v975
                  %v977 = vld [vmem:[%s921 + $0x158] sm:$0xff]
                  %978 = vst [vmem:[%s922 + $0xd8] sm:$0xff] %v977
                  %v979 = vld [vmem:[%s921 + $0x160] sm:$0xff]
                  %980 = vst [vmem:[%s922 + $0xe0] sm:$0xff] %v979
                  %v981 = vld [vmem:[%s921 + $0x168] sm:$0xff]
                  %982 = vst [vmem:[%s922 + $0xe8] sm:$0xff] %v981
                  %v983 = vld [vmem:[%s921 + $0x170] sm:$0xff]
                  %984 = vst [vmem:[%s922 + $0xf0] sm:$0xff] %v983
                  %v985 = vld [vmem:[%s921 + $0x178] sm:$0xff]
                  %986 = vst [vmem:[%s922 + $0xf8] sm:$0xff] %v985
                  %v987 = vld [vmem:[%s921 + $0x200] sm:$0xff]
                  %988 = vst [vmem:[%s922 + $0x100] sm:$0xff] %v987
                  %v989 = vld [vmem:[%s921 + $0x208] sm:$0xff]
                  %990 = vst [vmem:[%s922 + $0x108] sm:$0xff] %v989
                  %v991 = vld [vmem:[%s921 + $0x210] sm:$0xff]
                  %992 = vst [vmem:[%s922 + $0x110] sm:$0xff] %v991
                  %v993 = vld [vmem:[%s921 + $0x218] sm:$0xff]
                  %994 = vst [vmem:[%s922 + $0x118] sm:$0xff] %v993
                  %v995 = vld [vmem:[%s921 + $0x220] sm:$0xff]
                  %996 = vst [vmem:[%s922 + $0x120] sm:$0xff] %v995
                  %v997 = vld [vmem:[%s921 + $0x228] sm:$0xff]
                  %998 = vst [vmem:[%s922 + $0x128] sm:$0xff] %v997
                  %v999 = vld [vmem:[%s921 + $0x230] sm:$0xff]
                  %1000 = vst [vmem:[%s922 + $0x130] sm:$0xff] %v999
                  %v1001 = vld [vmem:[%s921 + $0x238] sm:$0xff]
                  %1002 = vst [vmem:[%s922 + $0x138] sm:$0xff] %v1001
                  %v1003 = vld [vmem:[%s921 + $0x240] sm:$0xff]
                  %1004 = vst [vmem:[%s922 + $0x140] sm:$0xff] %v1003
                  %v1005 = vld [vmem:[%s921 + $0x248] sm:$0xff]
                  %1006 = vst [vmem:[%s922 + $0x148] sm:$0xff] %v1005
                  %v1007 = vld [vmem:[%s921 + $0x250] sm:$0xff]
                  %1008 = vst [vmem:[%s922 + $0x150] sm:$0xff] %v1007
                  %v1009 = vld [vmem:[%s921 + $0x258] sm:$0xff]
                  %1010 = vst [vmem:[%s922 + $0x158] sm:$0xff] %v1009
                  %v1011 = vld [vmem:[%s921 + $0x260] sm:$0xff]
                  %1012 = vst [vmem:[%s922 + $0x160] sm:$0xff] %v1011
                  %v1013 = vld [vmem:[%s921 + $0x268] sm:$0xff]
                  %1014 = vst [vmem:[%s922 + $0x168] sm:$0xff] %v1013
                  %v1015 = vld [vmem:[%s921 + $0x270] sm:$0xff]
                  %1016 = vst [vmem:[%s922 + $0x170] sm:$0xff] %v1015
                  %v1017 = vld [vmem:[%s921 + $0x278] sm:$0xff]
                  %1018 = vst [vmem:[%s922 + $0x178] sm:$0xff] %v1017
                  %v1019 = vld [vmem:[%s921 + $0x300] sm:$0xff]
                  %1020 = vst [vmem:[%s922 + $0x180] sm:$0xff] %v1019
                  %v1021 = vld [vmem:[%s921 + $0x308] sm:$0xff]
                  %1022 = vst [vmem:[%s922 + $0x188] sm:$0xff] %v1021
                  %v1023 = vld [vmem:[%s921 + $0x310] sm:$0xff]
                  %1024 = vst [vmem:[%s922 + $0x190] sm:$0xff] %v1023
                  %v1025 = vld [vmem:[%s921 + $0x318] sm:$0xff]
                  %1026 = vst [vmem:[%s922 + $0x198] sm:$0xff] %v1025
                  %v1027 = vld [vmem:[%s921 + $0x320] sm:$0xff]
                  %1028 = vst [vmem:[%s922 + $0x1a0] sm:$0xff] %v1027
                  %v1029 = vld [vmem:[%s921 + $0x328] sm:$0xff]
                  %1030 = vst [vmem:[%s922 + $0x1a8] sm:$0xff] %v1029
                  %v1031 = vld [vmem:[%s921 + $0x330] sm:$0xff]
                  %1032 = vst [vmem:[%s922 + $0x1b0] sm:$0xff] %v1031
                  %v1033 = vld [vmem:[%s921 + $0x338] sm:$0xff]
                  %1034 = vst [vmem:[%s922 + $0x1b8] sm:$0xff] %v1033
                  %v1035 = vld [vmem:[%s921 + $0x340] sm:$0xff]
                  %1036 = vst [vmem:[%s922 + $0x1c0] sm:$0xff] %v1035
                  %v1037 = vld [vmem:[%s921 + $0x348] sm:$0xff]
                  %1038 = vst [vmem:[%s922 + $0x1c8] sm:$0xff] %v1037
                  %v1039 = vld [vmem:[%s921 + $0x350] sm:$0xff]
                  %1040 = vst [vmem:[%s922 + $0x1d0] sm:$0xff] %v1039
                  %v1041 = vld [vmem:[%s921 + $0x358] sm:$0xff]
                  %1042 = vst [vmem:[%s922 + $0x1d8] sm:$0xff] %v1041
                  %v1043 = vld [vmem:[%s921 + $0x360] sm:$0xff]
                  %1044 = vst [vmem:[%s922 + $0x1e0] sm:$0xff] %v1043
                  %v1045 = vld [vmem:[%s921 + $0x368] sm:$0xff]
                  %1046 = vst [vmem:[%s922 + $0x1e8] sm:$0xff] %v1045
                  %v1047 = vld [vmem:[%s921 + $0x370] sm:$0xff]
                  %1048 = vst [vmem:[%s922 + $0x1f0] sm:$0xff] %v1047
                  %v1049 = vld [vmem:[%s921 + $0x378] sm:$0xff]
                  %1050 = vst [vmem:[%s922 + $0x1f8] sm:$0xff] %v1049
                $region132: #{ext_transformer_encoder_forward.8} parent=126 // loop_footer
                  %s920 = sadd.s32 1, %s916
                $region133: #{ext_transformer_encoder_forward.8} parent=126 // loop_footer_branch
                  %915 = sbr.rel target = $region129
                $region134: #{ext_transformer_encoder_forward.8} parent=126 // loop_exit
                  _
              $region127: #{ext_transformer_encoder_forward.8} parent=111 // pred_fallthru
                _
              // Predicated region
              $region135: #{ext_transformer_encoder_forward.8} parent=111 // pred_check
                _
              $region136: #{ext_transformer_encoder_forward.8} parent=111 // pred_check_branch
                %1052 = sbr.rel target = $region138
              $region137: #{ext_transformer_encoder_forward.8} parent=111 // pred_region
                _
              $region138: #{ext_transformer_encoder_forward.8} parent=111 // pred_fallthru
                _
            $region112: #{ext_transformer_encoder_forward.8} parent=107 // pred_fallthru
              _
            // Predicated region
            $region113: #{ext_transformer_encoder_forward.8} parent=107 // pred_check
              _
            $region114: #{ext_transformer_encoder_forward.8} parent=107 // pred_check_branch
              %774 = sbr.rel target = $region116
            $region115: #{ext_transformer_encoder_forward.8} parent=107 // pred_region
              %s776 = ssub.s32 256, 1
              loop: start=0, step=1, limit=1
              $region117: #{ext_transformer_encoder_forward.8} parent=115 // loop_pre_header
                _
              $region118: #{ext_transformer_encoder_forward.8} parent=115 // loop_header
                %s778 = sphi 0, %s782
                %p779 = scmp.ge.s32.totalorder %s778, 1
                %s783 = sphi %s768, %s768
                %s784 = sphi %s762, %s762
              $region119: #{ext_transformer_encoder_forward.8} parent=115 // loop_header_branch
                %781 = sbr.rel (%p779) target = $region123
              $region120: #{ext_transformer_encoder_forward.8} parent=115 // loop_body
                %v785 = vld [vmem:[%s783] sm:%s776]
                %786 = vst [vmem:[%s784] sm:%s776] %v785
                %v787 = vld [vmem:[%s783 + $0x8] sm:%s776]
                %788 = vst [vmem:[%s784 + $0x8] sm:%s776] %v787
                %v789 = vld [vmem:[%s783 + $0x10] sm:%s776]
                %790 = vst [vmem:[%s784 + $0x10] sm:%s776] %v789
                %v791 = vld [vmem:[%s783 + $0x18] sm:%s776]
                %792 = vst [vmem:[%s784 + $0x18] sm:%s776] %v791
                %v793 = vld [vmem:[%s783 + $0x20] sm:%s776]
                %794 = vst [vmem:[%s784 + $0x20] sm:%s776] %v793
                %v795 = vld [vmem:[%s783 + $0x28] sm:%s776]
                %796 = vst [vmem:[%s784 + $0x28] sm:%s776] %v795
                %v797 = vld [vmem:[%s783 + $0x30] sm:%s776]
                %798 = vst [vmem:[%s784 + $0x30] sm:%s776] %v797
                %v799 = vld [vmem:[%s783 + $0x38] sm:%s776]
                %800 = vst [vmem:[%s784 + $0x38] sm:%s776] %v799
                %v801 = vld [vmem:[%s783 + $0x40] sm:%s776]
                %802 = vst [vmem:[%s784 + $0x40] sm:%s776] %v801
                %v803 = vld [vmem:[%s783 + $0x48] sm:%s776]
                %804 = vst [vmem:[%s784 + $0x48] sm:%s776] %v803
                %v805 = vld [vmem:[%s783 + $0x50] sm:%s776]
                %806 = vst [vmem:[%s784 + $0x50] sm:%s776] %v805
                %v807 = vld [vmem:[%s783 + $0x58] sm:%s776]
                %808 = vst [vmem:[%s784 + $0x58] sm:%s776] %v807
                %v809 = vld [vmem:[%s783 + $0x60] sm:%s776]
                %810 = vst [vmem:[%s784 + $0x60] sm:%s776] %v809
                %v811 = vld [vmem:[%s783 + $0x68] sm:%s776]
                %812 = vst [vmem:[%s784 + $0x68] sm:%s776] %v811
                %v813 = vld [vmem:[%s783 + $0x70] sm:%s776]
                %814 = vst [vmem:[%s784 + $0x70] sm:%s776] %v813
                %v815 = vld [vmem:[%s783 + $0x78] sm:%s776]
                %816 = vst [vmem:[%s784 + $0x78] sm:%s776] %v815
                %v817 = vld [vmem:[%s783 + $0x100] sm:%s776]
                %818 = vst [vmem:[%s784 + $0x80] sm:%s776] %v817
                %v819 = vld [vmem:[%s783 + $0x108] sm:%s776]
                %820 = vst [vmem:[%s784 + $0x88] sm:%s776] %v819
                %v821 = vld [vmem:[%s783 + $0x110] sm:%s776]
                %822 = vst [vmem:[%s784 + $0x90] sm:%s776] %v821
                %v823 = vld [vmem:[%s783 + $0x118] sm:%s776]
                %824 = vst [vmem:[%s784 + $0x98] sm:%s776] %v823
                %v825 = vld [vmem:[%s783 + $0x120] sm:%s776]
                %826 = vst [vmem:[%s784 + $0xa0] sm:%s776] %v825
                %v827 = vld [vmem:[%s783 + $0x128] sm:%s776]
                %828 = vst [vmem:[%s784 + $0xa8] sm:%s776] %v827
                %v829 = vld [vmem:[%s783 + $0x130] sm:%s776]
                %830 = vst [vmem:[%s784 + $0xb0] sm:%s776] %v829
                %v831 = vld [vmem:[%s783 + $0x138] sm:%s776]
                %832 = vst [vmem:[%s784 + $0xb8] sm:%s776] %v831
                %v833 = vld [vmem:[%s783 + $0x140] sm:%s776]
                %834 = vst [vmem:[%s784 + $0xc0] sm:%s776] %v833
                %v835 = vld [vmem:[%s783 + $0x148] sm:%s776]
                %836 = vst [vmem:[%s784 + $0xc8] sm:%s776] %v835
                %v837 = vld [vmem:[%s783 + $0x150] sm:%s776]
                %838 = vst [vmem:[%s784 + $0xd0] sm:%s776] %v837
                %v839 = vld [vmem:[%s783 + $0x158] sm:%s776]
                %840 = vst [vmem:[%s784 + $0xd8] sm:%s776] %v839
                %v841 = vld [vmem:[%s783 + $0x160] sm:%s776]
                %842 = vst [vmem:[%s784 + $0xe0] sm:%s776] %v841
                %v843 = vld [vmem:[%s783 + $0x168] sm:%s776]
                %844 = vst [vmem:[%s784 + $0xe8] sm:%s776] %v843
                %v845 = vld [vmem:[%s783 + $0x170] sm:%s776]
                %846 = vst [vmem:[%s784 + $0xf0] sm:%s776] %v845
                %v847 = vld [vmem:[%s783 + $0x178] sm:%s776]
                %848 = vst [vmem:[%s784 + $0xf8] sm:%s776] %v847
                %v849 = vld [vmem:[%s783 + $0x200] sm:%s776]
                %850 = vst [vmem:[%s784 + $0x100] sm:%s776] %v849
                %v851 = vld [vmem:[%s783 + $0x208] sm:%s776]
                %852 = vst [vmem:[%s784 + $0x108] sm:%s776] %v851
                %v853 = vld [vmem:[%s783 + $0x210] sm:%s776]
                %854 = vst [vmem:[%s784 + $0x110] sm:%s776] %v853
                %v855 = vld [vmem:[%s783 + $0x218] sm:%s776]
                %856 = vst [vmem:[%s784 + $0x118] sm:%s776] %v855
                %v857 = vld [vmem:[%s783 + $0x220] sm:%s776]
                %858 = vst [vmem:[%s784 + $0x120] sm:%s776] %v857
                %v859 = vld [vmem:[%s783 + $0x228] sm:%s776]
                %860 = vst [vmem:[%s784 + $0x128] sm:%s776] %v859
                %v861 = vld [vmem:[%s783 + $0x230] sm:%s776]
                %862 = vst [vmem:[%s784 + $0x130] sm:%s776] %v861
                %v863 = vld [vmem:[%s783 + $0x238] sm:%s776]
                %864 = vst [vmem:[%s784 + $0x138] sm:%s776] %v863
                %v865 = vld [vmem:[%s783 + $0x240] sm:%s776]
                %866 = vst [vmem:[%s784 + $0x140] sm:%s776] %v865
                %v867 = vld [vmem:[%s783 + $0x248] sm:%s776]
                %868 = vst [vmem:[%s784 + $0x148] sm:%s776] %v867
                %v869 = vld [vmem:[%s783 + $0x250] sm:%s776]
                %870 = vst [vmem:[%s784 + $0x150] sm:%s776] %v869
                %v871 = vld [vmem:[%s783 + $0x258] sm:%s776]
                %872 = vst [vmem:[%s784 + $0x158] sm:%s776] %v871
                %v873 = vld [vmem:[%s783 + $0x260] sm:%s776]
                %874 = vst [vmem:[%s784 + $0x160] sm:%s776] %v873
                %v875 = vld [vmem:[%s783 + $0x268] sm:%s776]
                %876 = vst [vmem:[%s784 + $0x168] sm:%s776] %v875
                %v877 = vld [vmem:[%s783 + $0x270] sm:%s776]
                %878 = vst [vmem:[%s784 + $0x170] sm:%s776] %v877
                %v879 = vld [vmem:[%s783 + $0x278] sm:%s776]
                %880 = vst [vmem:[%s784 + $0x178] sm:%s776] %v879
                %v881 = vld [vmem:[%s783 + $0x300] sm:%s776]
                %882 = vst [vmem:[%s784 + $0x180] sm:%s776] %v881
                %v883 = vld [vmem:[%s783 + $0x308] sm:%s776]
                %884 = vst [vmem:[%s784 + $0x188] sm:%s776] %v883
                %v885 = vld [vmem:[%s783 + $0x310] sm:%s776]
                %886 = vst [vmem:[%s784 + $0x190] sm:%s776] %v885
                %v887 = vld [vmem:[%s783 + $0x318] sm:%s776]
                %888 = vst [vmem:[%s784 + $0x198] sm:%s776] %v887
                %v889 = vld [vmem:[%s783 + $0x320] sm:%s776]
                %890 = vst [vmem:[%s784 + $0x1a0] sm:%s776] %v889
                %v891 = vld [vmem:[%s783 + $0x328] sm:%s776]
                %892 = vst [vmem:[%s784 + $0x1a8] sm:%s776] %v891
                %v893 = vld [vmem:[%s783 + $0x330] sm:%s776]
                %894 = vst [vmem:[%s784 + $0x1b0] sm:%s776] %v893
                %v895 = vld [vmem:[%s783 + $0x338] sm:%s776]
                %896 = vst [vmem:[%s784 + $0x1b8] sm:%s776] %v895
                %v897 = vld [vmem:[%s783 + $0x340] sm:%s776]
                %898 = vst [vmem:[%s784 + $0x1c0] sm:%s776] %v897
                %v899 = vld [vmem:[%s783 + $0x348] sm:%s776]
                %900 = vst [vmem:[%s784 + $0x1c8] sm:%s776] %v899
                %v901 = vld [vmem:[%s783 + $0x350] sm:%s776]
                %902 = vst [vmem:[%s784 + $0x1d0] sm:%s776] %v901
                %v903 = vld [vmem:[%s783 + $0x358] sm:%s776]
                %904 = vst [vmem:[%s784 + $0x1d8] sm:%s776] %v903
                %v905 = vld [vmem:[%s783 + $0x360] sm:%s776]
                %906 = vst [vmem:[%s784 + $0x1e0] sm:%s776] %v905
                %v907 = vld [vmem:[%s783 + $0x368] sm:%s776]
                %908 = vst [vmem:[%s784 + $0x1e8] sm:%s776] %v907
                %v909 = vld [vmem:[%s783 + $0x370] sm:%s776]
                %910 = vst [vmem:[%s784 + $0x1f0] sm:%s776] %v909
                %v911 = vld [vmem:[%s783 + $0x378] sm:%s776]
                %912 = vst [vmem:[%s784 + $0x1f8] sm:%s776] %v911
              $region121: #{ext_transformer_encoder_forward.8} parent=115 // loop_footer
                %s782 = sadd.s32 1, %s778
              $region122: #{ext_transformer_encoder_forward.8} parent=115 // loop_footer_branch
                %777 = sbr.rel target = $region118
              $region123: #{ext_transformer_encoder_forward.8} parent=115 // loop_exit
                _
            $region116: #{ext_transformer_encoder_forward.8} parent=107 // pred_fallthru
              _
          $region108: #{ext_transformer_encoder_forward.8} parent=103 // pred_fallthru
            _
          %1053 = vnop
        $region104: #{ext_transformer_encoder_forward.8} parent=23 // pred_fallthru
          _
        // Predicated region
        $region139: #{ext_transformer_encoder_forward.8} parent=23 // pred_check
          %p1054 = pneg %p140
        $region140: #{ext_transformer_encoder_forward.8} parent=23 // pred_check_branch
          %1056 = sbr.rel (%p1054) target = $region142
        $region141: #{ext_transformer_encoder_forward.8} parent=23 // pred_region
          %p1057 = scmp.lt.s32.totalorder %s22, 1
          %s1058 = scalar_select %p1057, %s22, 1
          %p1059 = scmp.lt.s32.totalorder %s24, 1
          %s1060 = scalar_select %p1059, %s24, 1
          %s1061 = smul.addr %s1058, 2
          %s1062 = sadd.s32 %s1060, %s1061
          %s1063 = scalar_lea.vmem %s3, %s1062
        $region142: #{ext_transformer_encoder_forward.8} parent=23 // pred_fallthru
          _
        // Predicated region
        $region143: #{ext_transformer_encoder_forward.8} parent=23 // pred_check
          %p1064 = pneg %p168
        $region144: #{ext_transformer_encoder_forward.8} parent=23 // pred_check_branch
          %1066 = sbr.rel (%p1064) target = $region146
        $region145: #{ext_transformer_encoder_forward.8} parent=23 // pred_region
          %s1067 = smul.u32 8, %s23
          %p1068 = scmp.lt.s32.totalorder %s22, 1
          %s1069 = scalar_select %p1068, %s22, 1
          %p1070 = scmp.lt.s32.totalorder %s1067, 31
          %s1071 = scalar_select %p1070, %s1067, 31
          %s1072 = smul.addr %s1069, 32
          %s1073 = sadd.s32 %s1071, %s1072
          %s1074 = smul.addr %s1073, 8
          %s1075 = scalar_lea.vmem %s4, %s1074
          %s1076 = smul.u32 8, %s23
        $region146: #{ext_transformer_encoder_forward.8} parent=23 // pred_fallthru
          _
      $region24: #{ext_transformer_encoder_forward.8} parent=5 // pred_fallthru
        _
      %p1077 = scmp.le.s32.totalorder 1, %s15
      %p1078 = scmp.lt.s32.totalorder %s15, 17
      %p1079 = pnand %p1077, %p1078
      %p1080 = pneg %p1079
      // Predicated region
      $region147: #{ext_transformer_encoder_forward.8} parent=5 // pred_check
        _
      $region148: #{ext_transformer_encoder_forward.8} parent=5 // pred_check_branch
        %1082 = sbr.rel (%p1079) target = $region150
      $region149: #{ext_transformer_encoder_forward.8} parent=5 // pred_region
        %s1083 = ssub.s32 %s15, 1
        %s1084 = sand.u32 %s49, 1
        %s1085 = sand.u32 %s49, 1
        %s1086 = smul.addr %s1085, 256
        %s1087 = scalar_lea.vmem [#allocation5], %s1086
        // Predicated region
        $region151: #{ext_transformer_encoder_forward.8} parent=149 // pred_check
          %p1088 = pneg %p62
        $region152: #{ext_transformer_encoder_forward.8} parent=149 // pred_check_branch
          %1090 = sbr.rel (%p1088) target = $region154
        $region153: #{ext_transformer_encoder_forward.8} parent=149 // pred_region
          _
        $region154: #{ext_transformer_encoder_forward.8} parent=149 // pred_fallthru
          _
        %s1091 = sand.u32 %s77, 1
        %s1092 = sand.u32 %s77, 1
        %s1093 = smul.addr %s1092, 512
        %s1094 = scalar_lea.vmem [#allocation6], %s1093
        // Predicated region
        $region155: #{ext_transformer_encoder_forward.8} parent=149 // pred_check
          %p1095 = pneg %p90
        $region156: #{ext_transformer_encoder_forward.8} parent=149 // pred_check_branch
          %1097 = sbr.rel (%p1095) target = $region158
        $region157: #{ext_transformer_encoder_forward.8} parent=149 // pred_region
          _
        $region158: #{ext_transformer_encoder_forward.8} parent=149 // pred_fallthru
          _
        %s1098 = sand.u32 %s105, 1
        %s1099 = sand.u32 %s105, 1
        %s1100 = smul.addr %s1099, 512
        %s1101 = scalar_lea.vmem [#allocation7], %s1100
        // Predicated region
        $region159: #{ext_transformer_encoder_forward.8} parent=149 // pred_check
          %p1102 = pneg %p118
        $region160: #{ext_transformer_encoder_forward.8} parent=149 // pred_check_branch
          %1104 = sbr.rel (%p1102) target = $region162
        $region161: #{ext_transformer_encoder_forward.8} parent=149 // pred_region
          _
        $region162: #{ext_transformer_encoder_forward.8} parent=149 // pred_fallthru
          _
        // Predicated region
        $region163: #{ext_transformer_encoder_forward.8} parent=149 // pred_check
          %p1105 = pneg %p195
        $region164: #{ext_transformer_encoder_forward.8} parent=149 // pred_check_branch
          %1107 = sbr.rel (%p1105) target = $region166
        $region165: #{ext_transformer_encoder_forward.8} parent=149 // pred_region
          %1109 = dma.done [#allocation9], 2048
        $region166: #{ext_transformer_encoder_forward.8} parent=149 // pred_fallthru
          _
        // Predicated region
        $region167: #{ext_transformer_encoder_forward.8} parent=149 // pred_check
          %p1110 = pneg %p216
        $region168: #{ext_transformer_encoder_forward.8} parent=149 // pred_check_branch
          %1112 = sbr.rel (%p1110) target = $region170
        $region169: #{ext_transformer_encoder_forward.8} parent=149 // pred_region
          %1114 = dma.done [#allocation11], 16
        $region170: #{ext_transformer_encoder_forward.8} parent=149 // pred_fallthru
          _
        %s1115 = sand.u32 %s49, 1
        %s1116 = sand.u32 %s49, 1
        %s1117 = smul.addr %s1116, 256
        %s1118 = scalar_lea.vmem [#allocation5], %s1117
        %p1119 = pneg %p62
        %p1120 = pneg %p59
        %s1121 = sand.u32 %s77, 1
        %s1122 = sand.u32 %s77, 1
        %s1123 = smul.addr %s1122, 512
        %s1124 = scalar_lea.vmem [#allocation6], %s1123
        %p1125 = pneg %p90
        %p1126 = pneg %p87
        %s1127 = sand.u32 %s105, 1
        %s1128 = sand.u32 %s105, 1
        %s1129 = smul.addr %s1128, 512
        %s1130 = scalar_lea.vmem [#allocation7], %s1129
        %p1131 = pneg %p118
        %p1132 = pneg %p115
        %p1133 = scmp.lt.s32.totalorder %s25, 1
        %s1134 = scalar_select %p1133, %s25, 1
        %p1135 = scmp.lt.s32.totalorder %s27, 1
        %s1136 = scalar_select %p1135, %s27, 1
        %s1137 = smul.addr %s1134, 2
        %s1138 = sadd.s32 %s1136, %s1137
        %s1139 = scalar_lea.vmem %s3, %s1138
        %p1140 = pneg %p146
        %p1141 = pneg %p143
        %s1142 = smul.u32 8, %s26
        %p1143 = scmp.lt.s32.totalorder %s25, 1
        %s1144 = scalar_select %p1143, %s25, 1
        %p1145 = scmp.lt.s32.totalorder %s1142, 31
        %s1146 = scalar_select %p1145, %s1142, 31
        %s1147 = smul.addr %s1144, 32
        %s1148 = sadd.s32 %s1146, %s1147
        %s1149 = smul.addr %s1148, 8
        %s1150 = scalar_lea.vmem %s4, %s1149
        %p1151 = pneg %p174
        %p1152 = pneg %p171
        %p1153 = pneg %p195
        %p1154 = pneg %p192
        %p1155 = pneg %p216
        %p1156 = pneg %p213
        %p1157 = pneg %p244
        %p1158 = pneg %p241
        %s1159 = smul.u32 8, %s26
        %p1160 = scmp.lt.s32.totalorder %s25, 1
        %s1161 = scalar_select %p1160, %s25, 1
        %p1162 = scmp.lt.s32.totalorder %s1159, 31
        %s1163 = scalar_select %p1162, %s1159, 31
        %s1164 = smul.addr %s1161, 32
        %s1165 = sadd.s32 %s1163, %s1164
        %s1166 = smul.addr %s1165, 8
        %s1167 = scalar_lea.vmem %s7, %s1166
        %s1168 = smul.u32 8, %s26
        %s1169 = smul.u32 16, %s27
        %s1170 = smul.u32 16, %s27
        %p1171 = scmp.lt.s32.totalorder %s25, 1
        %s1172 = scalar_select %p1171, %s25, 1
        %p1173 = scmp.lt.s32.totalorder %s27, 1
        %s1174 = scalar_select %p1173, %s27, 1
        %s1175 = smul.addr %s1172, 2
        %s1176 = sadd.s32 %s1174, %s1175
        %s1177 = scalar_lea.vmem %s3, %s1176
        %s1178 = smul.u32 8, %s26
        %p1179 = scmp.lt.s32.totalorder %s25, 1
        %s1180 = scalar_select %p1179, %s25, 1
        %p1181 = scmp.lt.s32.totalorder %s1178, 31
        %s1182 = scalar_select %p1181, %s1178, 31
        %s1183 = smul.addr %s1180, 32
        %s1184 = sadd.s32 %s1182, %s1183
        %s1185 = smul.addr %s1184, 8
        %s1186 = scalar_lea.vmem %s4, %s1185
        %s1187 = smul.u32 8, %s26
        %s1188 = smul.u32 8, %s26
        %p1189 = scmp.lt.s32.totalorder %s25, 1
        %s1190 = scalar_select %p1189, %s25, 1
        %p1191 = scmp.lt.s32.totalorder %s1188, 31
        %s1192 = scalar_select %p1191, %s1188, 31
        %s1193 = smul.addr %s1190, 32
        %s1194 = sadd.s32 %s1192, %s1193
        %s1195 = smul.addr %s1194, 8
        %s1196 = scalar_lea.vmem %s7, %s1195
        %s1197 = smul.u32 8, %s26
        %p1198 = scmp.eq.s32.totalorder %s27, 0
        // Predicated region
        $region171: #{ext_transformer_encoder_forward.8} parent=149 // pred_check
          %p1199 = pneg %p1198
        $region172: #{ext_transformer_encoder_forward.8} parent=149 // pred_check_branch
          %1201 = sbr.rel (%p1199) target = $region174
        $region173: #{ext_transformer_encoder_forward.8} parent=149 // pred_region
          %vm1202 = vcmask 7168
          %1203 = vst.msk [vmem:[#allocation2] sm:$0xff] %vm1202, -inf
          %1204 = vst.msk [vmem:[#allocation2 + $0x8] sm:$0xff] %vm1202, -inf
          %1205 = vst.msk [vmem:[#allocation2 + $0x10] sm:$0xff] %vm1202, -inf
          %1206 = vst.msk [vmem:[#allocation2 + $0x18] sm:$0xff] %vm1202, -inf
          %1207 = vst.msk [vmem:[#allocation2 + $0x20] sm:$0xff] %vm1202, -inf
          %1208 = vst.msk [vmem:[#allocation2 + $0x28] sm:$0xff] %vm1202, -inf
          %1209 = vst.msk [vmem:[#allocation2 + $0x30] sm:$0xff] %vm1202, -inf
          %1210 = vst.msk [vmem:[#allocation2 + $0x38] sm:$0xff] %vm1202, -inf
          %1211 = vst.msk [vmem:[#allocation2 + $0x40] sm:$0xff] %vm1202, -inf
          %1212 = vst.msk [vmem:[#allocation2 + $0x48] sm:$0xff] %vm1202, -inf
          %1213 = vst.msk [vmem:[#allocation2 + $0x50] sm:$0xff] %vm1202, -inf
          %1214 = vst.msk [vmem:[#allocation2 + $0x58] sm:$0xff] %vm1202, -inf
          %1215 = vst.msk [vmem:[#allocation2 + $0x60] sm:$0xff] %vm1202, -inf
          %1216 = vst.msk [vmem:[#allocation2 + $0x68] sm:$0xff] %vm1202, -inf
          %1217 = vst.msk [vmem:[#allocation2 + $0x70] sm:$0xff] %vm1202, -inf
          %1218 = vst.msk [vmem:[#allocation2 + $0x78] sm:$0xff] %vm1202, -inf
          %1219 = vst.msk [vmem:[#allocation2 + $0x80] sm:$0xff] %vm1202, -inf
          %1220 = vst.msk [vmem:[#allocation2 + $0x88] sm:$0xff] %vm1202, -inf
          %1221 = vst.msk [vmem:[#allocation2 + $0x90] sm:$0xff] %vm1202, -inf
          %1222 = vst.msk [vmem:[#allocation2 + $0x98] sm:$0xff] %vm1202, -inf
          %1223 = vst.msk [vmem:[#allocation2 + $0xa0] sm:$0xff] %vm1202, -inf
          %1224 = vst.msk [vmem:[#allocation2 + $0xa8] sm:$0xff] %vm1202, -inf
          %1225 = vst.msk [vmem:[#allocation2 + $0xb0] sm:$0xff] %vm1202, -inf
          %1226 = vst.msk [vmem:[#allocation2 + $0xb8] sm:$0xff] %vm1202, -inf
          %1227 = vst.msk [vmem:[#allocation2 + $0xc0] sm:$0xff] %vm1202, -inf
          %1228 = vst.msk [vmem:[#allocation2 + $0xc8] sm:$0xff] %vm1202, -inf
          %1229 = vst.msk [vmem:[#allocation2 + $0xd0] sm:$0xff] %vm1202, -inf
          %1230 = vst.msk [vmem:[#allocation2 + $0xd8] sm:$0xff] %vm1202, -inf
          %1231 = vst.msk [vmem:[#allocation2 + $0xe0] sm:$0xff] %vm1202, -inf
          %1232 = vst.msk [vmem:[#allocation2 + $0xe8] sm:$0xff] %vm1202, -inf
          %1233 = vst.msk [vmem:[#allocation2 + $0xf0] sm:$0xff] %vm1202, -inf
          %1234 = vst.msk [vmem:[#allocation2 + $0xf8] sm:$0xff] %vm1202, -inf
          %1235 = vst.msk [vmem:[#allocation3] sm:$0xff] %vm1202, 0.0
          %1236 = vst.msk [vmem:[#allocation3 + $0x8] sm:$0xff] %vm1202, 0.0
          %1237 = vst.msk [vmem:[#allocation3 + $0x10] sm:$0xff] %vm1202, 0.0
          %1238 = vst.msk [vmem:[#allocation3 + $0x18] sm:$0xff] %vm1202, 0.0
          %1239 = vst.msk [vmem:[#allocation3 + $0x20] sm:$0xff] %vm1202, 0.0
          %1240 = vst.msk [vmem:[#allocation3 + $0x28] sm:$0xff] %vm1202, 0.0
          %1241 = vst.msk [vmem:[#allocation3 + $0x30] sm:$0xff] %vm1202, 0.0
          %1242 = vst.msk [vmem:[#allocation3 + $0x38] sm:$0xff] %vm1202, 0.0
          %1243 = vst.msk [vmem:[#allocation3 + $0x40] sm:$0xff] %vm1202, 0.0
          %1244 = vst.msk [vmem:[#allocation3 + $0x48] sm:$0xff] %vm1202, 0.0
          %1245 = vst.msk [vmem:[#allocation3 + $0x50] sm:$0xff] %vm1202, 0.0
          %1246 = vst.msk [vmem:[#allocation3 + $0x58] sm:$0xff] %vm1202, 0.0
          %1247 = vst.msk [vmem:[#allocation3 + $0x60] sm:$0xff] %vm1202, 0.0
          %1248 = vst.msk [vmem:[#allocation3 + $0x68] sm:$0xff] %vm1202, 0.0
          %1249 = vst.msk [vmem:[#allocation3 + $0x70] sm:$0xff] %vm1202, 0.0
          %1250 = vst.msk [vmem:[#allocation3 + $0x78] sm:$0xff] %vm1202, 0.0
          %1251 = vst.msk [vmem:[#allocation3 + $0x80] sm:$0xff] %vm1202, 0.0
          %1252 = vst.msk [vmem:[#allocation3 + $0x88] sm:$0xff] %vm1202, 0.0
          %1253 = vst.msk [vmem:[#allocation3 + $0x90] sm:$0xff] %vm1202, 0.0
          %1254 = vst.msk [vmem:[#allocation3 + $0x98] sm:$0xff] %vm1202, 0.0
          %1255 = vst.msk [vmem:[#allocation3 + $0xa0] sm:$0xff] %vm1202, 0.0
          %1256 = vst.msk [vmem:[#allocation3 + $0xa8] sm:$0xff] %vm1202, 0.0
          %1257 = vst.msk [vmem:[#allocation3 + $0xb0] sm:$0xff] %vm1202, 0.0
          %1258 = vst.msk [vmem:[#allocation3 + $0xb8] sm:$0xff] %vm1202, 0.0
          %1259 = vst.msk [vmem:[#allocation3 + $0xc0] sm:$0xff] %vm1202, 0.0
          %1260 = vst.msk [vmem:[#allocation3 + $0xc8] sm:$0xff] %vm1202, 0.0
          %1261 = vst.msk [vmem:[#allocation3 + $0xd0] sm:$0xff] %vm1202, 0.0
          %1262 = vst.msk [vmem:[#allocation3 + $0xd8] sm:$0xff] %vm1202, 0.0
          %1263 = vst.msk [vmem:[#allocation3 + $0xe0] sm:$0xff] %vm1202, 0.0
          %1264 = vst.msk [vmem:[#allocation3 + $0xe8] sm:$0xff] %vm1202, 0.0
          %1265 = vst.msk [vmem:[#allocation3 + $0xf0] sm:$0xff] %vm1202, 0.0
          %1266 = vst.msk [vmem:[#allocation3 + $0xf8] sm:$0xff] %vm1202, 0.0
          %1267 = vst [vmem:[#allocation4] sm:$0xff] 0.0
          %1268 = vst [vmem:[#allocation4 + $0x8] sm:$0xff] 0.0
          %1269 = vst [vmem:[#allocation4 + $0x10] sm:$0xff] 0.0
          %1270 = vst [vmem:[#allocation4 + $0x18] sm:$0xff] 0.0
          %1271 = vst [vmem:[#allocation4 + $0x20] sm:$0xff] 0.0
          %1272 = vst [vmem:[#allocation4 + $0x28] sm:$0xff] 0.0
          %1273 = vst [vmem:[#allocation4 + $0x30] sm:$0xff] 0.0
          %1274 = vst [vmem:[#allocation4 + $0x38] sm:$0xff] 0.0
        $region174: #{ext_transformer_encoder_forward.8} parent=149 // pred_fallthru
          _
        %v1275 = vld [vmem:[%s1177] sm:$0x1]
        %v1276 = vld [vmem:[%s1087] sm:$0xff]
        %v1277 = vld [vmem:[%s1087 + $0x8] sm:$0xff]
        %v1278 = vld [vmem:[%s1087 + $0x10] sm:$0xff]
        %v1279 = vld [vmem:[%s1087 + $0x18] sm:$0xff]
        %v1280 = vld [vmem:[%s1087 + $0x20] sm:$0xff]
        %v1281 = vld [vmem:[%s1087 + $0x28] sm:$0xff]
        %v1282 = vld [vmem:[%s1087 + $0x30] sm:$0xff]
        %v1283 = vld [vmem:[%s1087 + $0x38] sm:$0xff]
        %v1284 = vld [vmem:[%s1094] sm:$0xff]
        %v1285 = vld [vmem:[%s1094 + $0x8] sm:$0xff]
        %v1286 = vld [vmem:[%s1094 + $0x10] sm:$0xff]
        %v1287 = vld [vmem:[%s1094 + $0x18] sm:$0xff]
        %v1288 = vld [vmem:[%s1094 + $0x20] sm:$0xff]
        %v1289 = vld [vmem:[%s1094 + $0x28] sm:$0xff]
        %v1290 = vld [vmem:[%s1094 + $0x30] sm:$0xff]
        %v1291 = vld [vmem:[%s1094 + $0x38] sm:$0xff]
        %v1292 = vld [vmem:[%s1094 + $0x40] sm:$0xff]
        %v1293 = vld [vmem:[%s1094 + $0x48] sm:$0xff]
        %v1294 = vld [vmem:[%s1094 + $0x50] sm:$0xff]
        %v1295 = vld [vmem:[%s1094 + $0x58] sm:$0xff]
        %v1296 = vld [vmem:[%s1094 + $0x60] sm:$0xff]
        %v1297 = vld [vmem:[%s1094 + $0x68] sm:$0xff]
        %v1298 = vld [vmem:[%s1094 + $0x70] sm:$0xff]
        %v1299 = vld [vmem:[%s1094 + $0x78] sm:$0xff]
        %v1300 = vld [vmem:[%s1101] sm:$0xff]
        %v1301 = vld [vmem:[%s1101 + $0x8] sm:$0xff]
        %v1302 = vld [vmem:[%s1101 + $0x10] sm:$0xff]
        %v1303 = vld [vmem:[%s1101 + $0x18] sm:$0xff]
        %v1304 = vld [vmem:[%s1101 + $0x20] sm:$0xff]
        %v1305 = vld [vmem:[%s1101 + $0x28] sm:$0xff]
        %v1306 = vld [vmem:[%s1101 + $0x30] sm:$0xff]
        %v1307 = vld [vmem:[%s1101 + $0x38] sm:$0xff]
        %v1308 = vld [vmem:[%s1101 + $0x40] sm:$0xff]
        %v1309 = vld [vmem:[%s1101 + $0x48] sm:$0xff]
        %v1310 = vld [vmem:[%s1101 + $0x50] sm:$0xff]
        %v1311 = vld [vmem:[%s1101 + $0x58] sm:$0xff]
        %v1312 = vld [vmem:[%s1101 + $0x60] sm:$0xff]
        %v1313 = vld [vmem:[%s1101 + $0x68] sm:$0xff]
        %v1314 = vld [vmem:[%s1101 + $0x70] sm:$0xff]
        %v1315 = vld [vmem:[%s1101 + $0x78] sm:$0xff]
        %v1317 = vperm.slane %v1275, 0
        %vm1319 = vcmask 261120
        %v1321 = vsel %vm1319, %v1276, 0
        %v1324 = vsel %vm1319, %v1277, 0
        %v1327 = vsel %vm1319, %v1278, 0
        %v1330 = vsel %vm1319, %v1279, 0
        %v1333 = vsel %vm1319, %v1280, 0
        %v1336 = vsel %vm1319, %v1281, 0
        %v1339 = vsel %vm1319, %v1282, 0
        %v1342 = vsel %vm1319, %v1283, 0
        %v1345 = vsel %vm1319, %v1284, 0
        %v1348 = vsel %vm1319, %v1285, 0
        %v1351 = vsel %vm1319, %v1286, 0
        %v1354 = vsel %vm1319, %v1287, 0
        %v1357 = vsel %vm1319, %v1288, 0
        %v1360 = vsel %vm1319, %v1289, 0
        %v1363 = vsel %vm1319, %v1290, 0
        %v1366 = vsel %vm1319, %v1291, 0
        %v1369 = vsel %vm1319, %v1292, 0
        %v1372 = vsel %vm1319, %v1293, 0
        %v1375 = vsel %vm1319, %v1294, 0
        %v1378 = vsel %vm1319, %v1295, 0
        %v1381 = vsel %vm1319, %v1296, 0
        %v1384 = vsel %vm1319, %v1297, 0
        %v1387 = vsel %vm1319, %v1298, 0
        %v1390 = vsel %vm1319, %v1299, 0
        %1392 = vmatpush.xpose.msra.mxu0 %v1390
        %1393 = vmatpush.xpose.msra.mxu0 %v1387
        %1394 = vmatpush.xpose.msra.mxu0 %v1384
        %1395 = vmatpush.xpose.msra.mxu0 %v1381
        %1396 = vmatpush.xpose.msra.mxu0 %v1378
        %1397 = vmatpush.xpose.msra.mxu0 %v1375
        %1398 = vmatpush.xpose.msra.mxu0 %v1372
        %1399 = vmatpush.xpose.msra.mxu0 %v1369
        %1400 = vmatpush.xpose.msra.mxu0 %v1366
        %1401 = vmatpush.xpose.msra.mxu0 %v1363
        %1402 = vmatpush.xpose.msra.mxu0 %v1360
        %1403 = vmatpush.xpose.msra.mxu0 %v1357
        %1404 = vmatpush.xpose.msra.mxu0 %v1354
        %1405 = vmatpush.xpose.msra.mxu0 %v1351
        %1406 = vmatpush.xpose.msra.mxu0 %v1348
        %1407 = vmatpush.xpose.msra.mxu0 %v1345
        %1408 = vmatmul.f32.gmra.mxu0 %v1321
        %v1409 = vpop.f32.mrf.mxu0
        %v1410 = vadd.f32 %v1317, %v1409
        %1411 = vmatmul.f32.gmra.mxu0 %v1324
        %v1412 = vpop.f32.mrf.mxu0
        %v1413 = vadd.f32 %v1317, %v1412
        %1414 = vmatmul.f32.gmra.mxu0 %v1327
        %v1415 = vpop.f32.mrf.mxu0
        %v1416 = vadd.f32 %v1317, %v1415
        %1417 = vmatmul.f32.gmra.mxu0 %v1330
        %v1418 = vpop.f32.mrf.mxu0
        %v1419 = vadd.f32 %v1317, %v1418
        %1420 = vmatmul.f32.gmra.mxu0 %v1333
        %v1421 = vpop.f32.mrf.mxu0
        %v1422 = vadd.f32 %v1317, %v1421
        %1423 = vmatmul.f32.gmra.mxu0 %v1336
        %v1424 = vpop.f32.mrf.mxu0
        %v1425 = vadd.f32 %v1317, %v1424
        %1426 = vmatmul.f32.gmra.mxu0 %v1339
        %v1427 = vpop.f32.mrf.mxu0
        %v1428 = vadd.f32 %v1317, %v1427
        %1429 = vmatmul.f32.gmra.mxu0 %v1342
        %v1430 = vpop.f32.mrf.mxu0
        %v1431 = vadd.f32 %v1317, %v1430
        %1432 = vdwg.mxu0
        %v1433 = vld [vmem:[#allocation2] sm:$0xff]
        %v1434 = vld [vmem:[#allocation2 + $0x8] sm:$0xff]
        %v1435 = vld [vmem:[#allocation2 + $0x10] sm:$0xff]
        %v1436 = vld [vmem:[#allocation2 + $0x18] sm:$0xff]
        %v1437 = vld [vmem:[#allocation2 + $0x20] sm:$0xff]
        %v1438 = vld [vmem:[#allocation2 + $0x28] sm:$0xff]
        %v1439 = vld [vmem:[#allocation2 + $0x30] sm:$0xff]
        %v1440 = vld [vmem:[#allocation2 + $0x38] sm:$0xff]
        %1441 = vmax.xlane.f32.xlu0 %v1410
        %v1442 = vpop.xlane.xlu0 %1441
        %1443 = vmax.xlane.f32.xlu0 %v1413
        %v1444 = vpop.xlane.xlu0 %1443
        %1445 = vmax.xlane.f32.xlu0 %v1416
        %v1446 = vpop.xlane.xlu0 %1445
        %1447 = vmax.xlane.f32.xlu0 %v1419
        %v1448 = vpop.xlane.xlu0 %1447
        %1449 = vmax.xlane.f32.xlu0 %v1422
        %v1450 = vpop.xlane.xlu0 %1449
        %1451 = vmax.xlane.f32.xlu0 %v1425
        %v1452 = vpop.xlane.xlu0 %1451
        %1453 = vmax.xlane.f32.xlu0 %v1428
        %v1454 = vpop.xlane.xlu0 %1453
        %1455 = vmax.xlane.f32.xlu0 %v1431
        %v1456 = vpop.xlane.xlu0 %1455
        %v1457 = vmax.f32 %v1433, %v1442
        %v1458 = vmax.f32 %v1434, %v1444
        %v1459 = vmax.f32 %v1435, %v1446
        %v1460 = vmax.f32 %v1436, %v1448
        %v1461 = vmax.f32 %v1437, %v1450
        %v1462 = vmax.f32 %v1438, %v1452
        %v1463 = vmax.f32 %v1439, %v1454
        %v1464 = vmax.f32 %v1440, %v1456
        %v1465 = vsub.f32 %v1433, %v1457
        %v1466 = vsub.f32 %v1434, %v1458
        %v1467 = vsub.f32 %v1435, %v1459
        %v1468 = vsub.f32 %v1436, %v1460
        %v1469 = vsub.f32 %v1437, %v1461
        %v1470 = vsub.f32 %v1438, %v1462
        %v1471 = vsub.f32 %v1439, %v1463
        %v1472 = vsub.f32 %v1440, %v1464
        %v1473 = vmul.f32 %v1465, 1.442695
        %v1474 = vpow.pop %v1473
        %v1475 = vmul.f32 %v1466, 1.442695
        %v1476 = vpow.pop %v1475
        %v1477 = vmul.f32 %v1467, 1.442695
        %v1478 = vpow.pop %v1477
        %v1479 = vmul.f32 %v1468, 1.442695
        %v1480 = vpow.pop %v1479
        %v1481 = vmul.f32 %v1469, 1.442695
        %v1482 = vpow.pop %v1481
        %v1483 = vmul.f32 %v1470, 1.442695
        %v1484 = vpow.pop %v1483
        %v1485 = vmul.f32 %v1471, 1.442695
        %v1486 = vpow.pop %v1485
        %v1487 = vmul.f32 %v1472, 1.442695
        %v1488 = vpow.pop %v1487
        %1490 = vset.pattern.permute.xlu0 0
        %1491 = vperm.xlu0 %1490, %v1457
        %v1492 = vpop.permute.xlu0 %1491
        %1495 = vset.pattern.permute.xlu0 0
        %1496 = vperm.xlu0 %1495, %v1458
        %v1497 = vpop.permute.xlu0 %1496
        %1500 = vset.pattern.permute.xlu0 0
        %1501 = vperm.xlu0 %1500, %v1459
        %v1502 = vpop.permute.xlu0 %1501
        %1505 = vset.pattern.permute.xlu0 0
        %1506 = vperm.xlu0 %1505, %v1460
        %v1507 = vpop.permute.xlu0 %1506
        %1510 = vset.pattern.permute.xlu0 0
        %1511 = vperm.xlu0 %1510, %v1461
        %v1512 = vpop.permute.xlu0 %1511
        %1515 = vset.pattern.permute.xlu0 0
        %1516 = vperm.xlu0 %1515, %v1462
        %v1517 = vpop.permute.xlu0 %1516
        %1520 = vset.pattern.permute.xlu0 0
        %1521 = vperm.xlu0 %1520, %v1463
        %v1522 = vpop.permute.xlu0 %1521
        %1525 = vset.pattern.permute.xlu0 0
        %1526 = vperm.xlu0 %1525, %v1464
        %v1527 = vpop.permute.xlu0 %1526
        %v1529 = vsub.f32 %v1410, %v1492
        %v1530 = vsub.f32 %v1413, %v1497
        %v1531 = vsub.f32 %v1416, %v1502
        %v1532 = vsub.f32 %v1419, %v1507
        %v1533 = vsub.f32 %v1422, %v1512
        %v1534 = vsub.f32 %v1425, %v1517
        %v1535 = vsub.f32 %v1428, %v1522
        %v1536 = vsub.f32 %v1431, %v1527
        %v1537 = vmul.f32 %v1529, 1.442695
        %v1538 = vpow.pop %v1537
        %v1539 = vmul.f32 %v1530, 1.442695
        %v1540 = vpow.pop %v1539
        %v1541 = vmul.f32 %v1531, 1.442695
        %v1542 = vpow.pop %v1541
        %v1543 = vmul.f32 %v1532, 1.442695
        %v1544 = vpow.pop %v1543
        %v1545 = vmul.f32 %v1533, 1.442695
        %v1546 = vpow.pop %v1545
        %v1547 = vmul.f32 %v1534, 1.442695
        %v1548 = vpow.pop %v1547
        %v1549 = vmul.f32 %v1535, 1.442695
        %v1550 = vpow.pop %v1549
        %v1551 = vmul.f32 %v1536, 1.442695
        %v1552 = vpow.pop %v1551
        %v1553 = vld [vmem:[#allocation3] sm:$0xff]
        %v1554 = vld [vmem:[#allocation3 + $0x8] sm:$0xff]
        %v1555 = vld [vmem:[#allocation3 + $0x10] sm:$0xff]
        %v1556 = vld [vmem:[#allocation3 + $0x18] sm:$0xff]
        %v1557 = vld [vmem:[#allocation3 + $0x20] sm:$0xff]
        %v1558 = vld [vmem:[#allocation3 + $0x28] sm:$0xff]
        %v1559 = vld [vmem:[#allocation3 + $0x30] sm:$0xff]
        %v1560 = vld [vmem:[#allocation3 + $0x38] sm:$0xff]
        %v1561 = vmul.f32 %v1474, %v1553
        %v1562 = vmul.f32 %v1476, %v1554
        %v1563 = vmul.f32 %v1478, %v1555
        %v1564 = vmul.f32 %v1480, %v1556
        %v1565 = vmul.f32 %v1482, %v1557
        %v1566 = vmul.f32 %v1484, %v1558
        %v1567 = vmul.f32 %v1486, %v1559
        %v1568 = vmul.f32 %v1488, %v1560
        %1569 = vadd.xlane.f32.xlu0 %v1538
        %v1570 = vpop.xlane.xlu0 %1569
        %1571 = vadd.xlane.f32.xlu0 %v1540
        %v1572 = vpop.xlane.xlu0 %1571
        %1573 = vadd.xlane.f32.xlu0 %v1542
        %v1574 = vpop.xlane.xlu0 %1573
        %1575 = vadd.xlane.f32.xlu0 %v1544
        %v1576 = vpop.xlane.xlu0 %1575
        %1577 = vadd.xlane.f32.xlu0 %v1546
        %v1578 = vpop.xlane.xlu0 %1577
        %1579 = vadd.xlane.f32.xlu0 %v1548
        %v1580 = vpop.xlane.xlu0 %1579
        %1581 = vadd.xlane.f32.xlu0 %v1550
        %v1582 = vpop.xlane.xlu0 %1581
        %1583 = vadd.xlane.f32.xlu0 %v1552
        %v1584 = vpop.xlane.xlu0 %1583
        %v1585 = vadd.f32 %v1561, %v1570
        %v1586 = vadd.f32 %v1562, %v1572
        %v1587 = vadd.f32 %v1563, %v1574
        %v1588 = vadd.f32 %v1564, %v1576
        %v1589 = vadd.f32 %v1565, %v1578
        %v1590 = vadd.f32 %v1566, %v1580
        %v1591 = vadd.f32 %v1567, %v1582
        %v1592 = vadd.f32 %v1568, %v1584
        %vm1593 = vcmask 7168
        %1594 = vst.msk [vmem:[#allocation3] sm:$0xff] %vm1593, %v1585
        %1595 = vst.msk [vmem:[#allocation3 + $0x8] sm:$0xff] %vm1593, %v1586
        %1596 = vst.msk [vmem:[#allocation3 + $0x10] sm:$0xff] %vm1593, %v1587
        %1597 = vst.msk [vmem:[#allocation3 + $0x18] sm:$0xff] %vm1593, %v1588
        %1598 = vst.msk [vmem:[#allocation3 + $0x20] sm:$0xff] %vm1593, %v1589
        %1599 = vst.msk [vmem:[#allocation3 + $0x28] sm:$0xff] %vm1593, %v1590
        %1600 = vst.msk [vmem:[#allocation3 + $0x30] sm:$0xff] %vm1593, %v1591
        %1601 = vst.msk [vmem:[#allocation3 + $0x38] sm:$0xff] %vm1593, %v1592
        %v1602 = vld [vmem:[#allocation4] sm:$0xff]
        %v1603 = vld [vmem:[#allocation4 + $0x8] sm:$0xff]
        %v1604 = vld [vmem:[#allocation4 + $0x10] sm:$0xff]
        %v1605 = vld [vmem:[#allocation4 + $0x18] sm:$0xff]
        %v1606 = vld [vmem:[#allocation4 + $0x20] sm:$0xff]
        %v1607 = vld [vmem:[#allocation4 + $0x28] sm:$0xff]
        %v1608 = vld [vmem:[#allocation4 + $0x30] sm:$0xff]
        %v1609 = vld [vmem:[#allocation4 + $0x38] sm:$0xff]
        %1611 = vset.pattern.permute.xlu0 0
        %1612 = vperm.xlu0 %1611, %v1474
        %v1613 = vpop.permute.xlu0 %1612
        %1616 = vset.pattern.permute.xlu0 0
        %1617 = vperm.xlu0 %1616, %v1476
        %v1618 = vpop.permute.xlu0 %1617
        %1621 = vset.pattern.permute.xlu0 0
        %1622 = vperm.xlu0 %1621, %v1478
        %v1623 = vpop.permute.xlu0 %1622
        %1626 = vset.pattern.permute.xlu0 0
        %1627 = vperm.xlu0 %1626, %v1480
        %v1628 = vpop.permute.xlu0 %1627
        %1631 = vset.pattern.permute.xlu0 0
        %1632 = vperm.xlu0 %1631, %v1482
        %v1633 = vpop.permute.xlu0 %1632
        %1636 = vset.pattern.permute.xlu0 0
        %1637 = vperm.xlu0 %1636, %v1484
        %v1638 = vpop.permute.xlu0 %1637
        %1641 = vset.pattern.permute.xlu0 0
        %1642 = vperm.xlu0 %1641, %v1486
        %v1643 = vpop.permute.xlu0 %1642
        %1646 = vset.pattern.permute.xlu0 0
        %1647 = vperm.xlu0 %1646, %v1488
        %v1648 = vpop.permute.xlu0 %1647
        %v1650 = vmul.f32 %v1613, %v1602
        %v1651 = vmul.f32 %v1618, %v1603
        %v1652 = vmul.f32 %v1623, %v1604
        %v1653 = vmul.f32 %v1628, %v1605
        %v1654 = vmul.f32 %v1633, %v1606
        %v1655 = vmul.f32 %v1638, %v1607
        %v1656 = vmul.f32 %v1643, %v1608
        %v1657 = vmul.f32 %v1648, %v1609
        %1658 = vmatpush.msra.mxu0 %v1315
        %1659 = vmatpush.msra.mxu0 %v1314
        %1660 = vmatpush.msra.mxu0 %v1313
        %1661 = vmatpush.msra.mxu0 %v1312
        %1662 = vmatpush.msra.mxu0 %v1311
        %1663 = vmatpush.msra.mxu0 %v1310
        %1664 = vmatpush.msra.mxu0 %v1309
        %1665 = vmatpush.msra.mxu0 %v1308
        %1666 = vmatpush.msra.mxu0 %v1307
        %1667 = vmatpush.msra.mxu0 %v1306
        %1668 = vmatpush.msra.mxu0 %v1305
        %1669 = vmatpush.msra.mxu0 %v1304
        %1670 = vmatpush.msra.mxu0 %v1303
        %1671 = vmatpush.msra.mxu0 %v1302
        %1672 = vmatpush.msra.mxu0 %v1301
        %1673 = vmatpush.msra.mxu0 %v1300
        %1674 = vmatmul.f32.gmra.mxu0 %v1538
        %v1675 = vpop.f32.mrf.mxu0
        %v1676 = vadd.f32 0.0, %v1675
        %1677 = vmatmul.f32.gmra.mxu0 %v1540
        %v1678 = vpop.f32.mrf.mxu0
        %v1679 = vadd.f32 0.0, %v1678
        %1680 = vmatmul.f32.gmra.mxu0 %v1542
        %v1681 = vpop.f32.mrf.mxu0
        %v1682 = vadd.f32 0.0, %v1681
        %1683 = vmatmul.f32.gmra.mxu0 %v1544
        %v1684 = vpop.f32.mrf.mxu0
        %v1685 = vadd.f32 0.0, %v1684
        %1686 = vmatmul.f32.gmra.mxu0 %v1546
        %v1687 = vpop.f32.mrf.mxu0
        %v1688 = vadd.f32 0.0, %v1687
        %1689 = vmatmul.f32.gmra.mxu0 %v1548
        %v1690 = vpop.f32.mrf.mxu0
        %v1691 = vadd.f32 0.0, %v1690
        %1692 = vmatmul.f32.gmra.mxu0 %v1550
        %v1693 = vpop.f32.mrf.mxu0
        %v1694 = vadd.f32 0.0, %v1693
        %1695 = vmatmul.f32.gmra.mxu0 %v1552
        %v1696 = vpop.f32.mrf.mxu0
        %v1697 = vadd.f32 0.0, %v1696
        %1698 = vdwg.mxu0
        %v1699 = vadd.f32 %v1650, %v1676
        %v1700 = vadd.f32 %v1651, %v1679
        %v1701 = vadd.f32 %v1652, %v1682
        %v1702 = vadd.f32 %v1653, %v1685
        %v1703 = vadd.f32 %v1654, %v1688
        %v1704 = vadd.f32 %v1655, %v1691
        %v1705 = vadd.f32 %v1656, %v1694
        %v1706 = vadd.f32 %v1657, %v1697
        %1707 = vst.msk [vmem:[#allocation4] sm:$0xff] %vm1319, %v1699
        %1708 = vst.msk [vmem:[#allocation4 + $0x8] sm:$0xff] %vm1319, %v1700
        %1709 = vst.msk [vmem:[#allocation4 + $0x10] sm:$0xff] %vm1319, %v1701
        %1710 = vst.msk [vmem:[#allocation4 + $0x18] sm:$0xff] %vm1319, %v1702
        %1711 = vst.msk [vmem:[#allocation4 + $0x20] sm:$0xff] %vm1319, %v1703
        %1712 = vst.msk [vmem:[#allocation4 + $0x28] sm:$0xff] %vm1319, %v1704
        %1713 = vst.msk [vmem:[#allocation4 + $0x30] sm:$0xff] %vm1319, %v1705
        %1714 = vst.msk [vmem:[#allocation4 + $0x38] sm:$0xff] %vm1319, %v1706
        %1715 = vst.msk [vmem:[#allocation2] sm:$0xff] %vm1593, %v1457
        %1716 = vst.msk [vmem:[#allocation2 + $0x8] sm:$0xff] %vm1593, %v1458
        %1717 = vst.msk [vmem:[#allocation2 + $0x10] sm:$0xff] %vm1593, %v1459
        %1718 = vst.msk [vmem:[#allocation2 + $0x18] sm:$0xff] %vm1593, %v1460
        %1719 = vst.msk [vmem:[#allocation2 + $0x20] sm:$0xff] %vm1593, %v1461
        %1720 = vst.msk [vmem:[#allocation2 + $0x28] sm:$0xff] %vm1593, %v1462
        %1721 = vst.msk [vmem:[#allocation2 + $0x30] sm:$0xff] %vm1593, %v1463
        %1722 = vst.msk [vmem:[#allocation2 + $0x38] sm:$0xff] %vm1593, %v1464
        %s1723 = scalar_lea.vmem %s1087, 64 [#allocation5]
        %v1724 = vld [vmem:[%s1723] sm:$0xff]
        %v1725 = vld [vmem:[%s1723 + $0x8] sm:$0xff]
        %v1726 = vld [vmem:[%s1723 + $0x10] sm:$0xff]
        %v1727 = vld [vmem:[%s1723 + $0x18] sm:$0xff]
        %v1728 = vld [vmem:[%s1723 + $0x20] sm:$0xff]
        %v1729 = vld [vmem:[%s1723 + $0x28] sm:$0xff]
        %v1730 = vld [vmem:[%s1723 + $0x30] sm:$0xff]
        %v1731 = vld [vmem:[%s1723 + $0x38] sm:$0xff]
        %s1732 = scalar_lea.vmem %s1094, 128 [#allocation6]
        %v1733 = vld [vmem:[%s1732] sm:$0xff]
        %v1734 = vld [vmem:[%s1732 + $0x8] sm:$0xff]
        %v1735 = vld [vmem:[%s1732 + $0x10] sm:$0xff]
        %v1736 = vld [vmem:[%s1732 + $0x18] sm:$0xff]
        %v1737 = vld [vmem:[%s1732 + $0x20] sm:$0xff]
        %v1738 = vld [vmem:[%s1732 + $0x28] sm:$0xff]
        %v1739 = vld [vmem:[%s1732 + $0x30] sm:$0xff]
        %v1740 = vld [vmem:[%s1732 + $0x38] sm:$0xff]
        %v1741 = vld [vmem:[%s1732 + $0x40] sm:$0xff]
        %v1742 = vld [vmem:[%s1732 + $0x48] sm:$0xff]
        %v1743 = vld [vmem:[%s1732 + $0x50] sm:$0xff]
        %v1744 = vld [vmem:[%s1732 + $0x58] sm:$0xff]
        %v1745 = vld [vmem:[%s1732 + $0x60] sm:$0xff]
        %v1746 = vld [vmem:[%s1732 + $0x68] sm:$0xff]
        %v1747 = vld [vmem:[%s1732 + $0x70] sm:$0xff]
        %v1748 = vld [vmem:[%s1732 + $0x78] sm:$0xff]
        %s1749 = scalar_lea.vmem %s1101, 128 [#allocation7]
        %v1750 = vld [vmem:[%s1749] sm:$0xff]
        %v1751 = vld [vmem:[%s1749 + $0x8] sm:$0xff]
        %v1752 = vld [vmem:[%s1749 + $0x10] sm:$0xff]
        %v1753 = vld [vmem:[%s1749 + $0x18] sm:$0xff]
        %v1754 = vld [vmem:[%s1749 + $0x20] sm:$0xff]
        %v1755 = vld [vmem:[%s1749 + $0x28] sm:$0xff]
        %v1756 = vld [vmem:[%s1749 + $0x30] sm:$0xff]
        %v1757 = vld [vmem:[%s1749 + $0x38] sm:$0xff]
        %v1758 = vld [vmem:[%s1749 + $0x40] sm:$0xff]
        %v1759 = vld [vmem:[%s1749 + $0x48] sm:$0xff]
        %v1760 = vld [vmem:[%s1749 + $0x50] sm:$0xff]
        %v1761 = vld [vmem:[%s1749 + $0x58] sm:$0xff]
        %v1762 = vld [vmem:[%s1749 + $0x60] sm:$0xff]
        %v1763 = vld [vmem:[%s1749 + $0x68] sm:$0xff]
        %v1764 = vld [vmem:[%s1749 + $0x70] sm:$0xff]
        %v1765 = vld [vmem:[%s1749 + $0x78] sm:$0xff]
        %v1767 = vsel %vm1319, %v1724, 0
        %v1770 = vsel %vm1319, %v1725, 0
        %v1773 = vsel %vm1319, %v1726, 0
        %v1776 = vsel %vm1319, %v1727, 0
        %v1779 = vsel %vm1319, %v1728, 0
        %v1782 = vsel %vm1319, %v1729, 0
        %v1785 = vsel %vm1319, %v1730, 0
        %v1788 = vsel %vm1319, %v1731, 0
        %v1791 = vsel %vm1319, %v1733, 0
        %v1794 = vsel %vm1319, %v1734, 0
        %v1797 = vsel %vm1319, %v1735, 0
        %v1800 = vsel %vm1319, %v1736, 0
        %v1803 = vsel %vm1319, %v1737, 0
        %v1806 = vsel %vm1319, %v1738, 0
        %v1809 = vsel %vm1319, %v1739, 0
        %v1812 = vsel %vm1319, %v1740, 0
        %v1815 = vsel %vm1319, %v1741, 0
        %v1818 = vsel %vm1319, %v1742, 0
        %v1821 = vsel %vm1319, %v1743, 0
        %v1824 = vsel %vm1319, %v1744, 0
        %v1827 = vsel %vm1319, %v1745, 0
        %v1830 = vsel %vm1319, %v1746, 0
        %v1833 = vsel %vm1319, %v1747, 0
        %v1836 = vsel %vm1319, %v1748, 0
        %1838 = vmatpush.xpose.msra.mxu0 %v1836
        %1839 = vmatpush.xpose.msra.mxu0 %v1833
        %1840 = vmatpush.xpose.msra.mxu0 %v1830
        %1841 = vmatpush.xpose.msra.mxu0 %v1827
        %1842 = vmatpush.xpose.msra.mxu0 %v1824
        %1843 = vmatpush.xpose.msra.mxu0 %v1821
        %1844 = vmatpush.xpose.msra.mxu0 %v1818
        %1845 = vmatpush.xpose.msra.mxu0 %v1815
        %1846 = vmatpush.xpose.msra.mxu0 %v1812
        %1847 = vmatpush.xpose.msra.mxu0 %v1809
        %1848 = vmatpush.xpose.msra.mxu0 %v1806
        %1849 = vmatpush.xpose.msra.mxu0 %v1803
        %1850 = vmatpush.xpose.msra.mxu0 %v1800
        %1851 = vmatpush.xpose.msra.mxu0 %v1797
        %1852 = vmatpush.xpose.msra.mxu0 %v1794
        %1853 = vmatpush.xpose.msra.mxu0 %v1791
        %1854 = vmatmul.f32.gmra.mxu0 %v1767
        %v1855 = vpop.f32.mrf.mxu0
        %v1856 = vadd.f32 %v1317, %v1855
        %1857 = vmatmul.f32.gmra.mxu0 %v1770
        %v1858 = vpop.f32.mrf.mxu0
        %v1859 = vadd.f32 %v1317, %v1858
        %1860 = vmatmul.f32.gmra.mxu0 %v1773
        %v1861 = vpop.f32.mrf.mxu0
        %v1862 = vadd.f32 %v1317, %v1861
        %1863 = vmatmul.f32.gmra.mxu0 %v1776
        %v1864 = vpop.f32.mrf.mxu0
        %v1865 = vadd.f32 %v1317, %v1864
        %1866 = vmatmul.f32.gmra.mxu0 %v1779
        %v1867 = vpop.f32.mrf.mxu0
        %v1868 = vadd.f32 %v1317, %v1867
        %1869 = vmatmul.f32.gmra.mxu0 %v1782
        %v1870 = vpop.f32.mrf.mxu0
        %v1871 = vadd.f32 %v1317, %v1870
        %1872 = vmatmul.f32.gmra.mxu0 %v1785
        %v1873 = vpop.f32.mrf.mxu0
        %v1874 = vadd.f32 %v1317, %v1873
        %1875 = vmatmul.f32.gmra.mxu0 %v1788
        %v1876 = vpop.f32.mrf.mxu0
        %v1877 = vadd.f32 %v1317, %v1876
        %1878 = vdwg.mxu0
        %s1879 = scalar_lea.vmem [#allocation2], 64
        %v1880 = vld [vmem:[%s1879] sm:$0xff]
        %v1881 = vld [vmem:[%s1879 + $0x8] sm:$0xff]
        %v1882 = vld [vmem:[%s1879 + $0x10] sm:$0xff]
        %v1883 = vld [vmem:[%s1879 + $0x18] sm:$0xff]
        %v1884 = vld [vmem:[%s1879 + $0x20] sm:$0xff]
        %v1885 = vld [vmem:[%s1879 + $0x28] sm:$0xff]
        %v1886 = vld [vmem:[%s1879 + $0x30] sm:$0xff]
        %v1887 = vld [vmem:[%s1879 + $0x38] sm:$0xff]
        %1888 = vmax.xlane.f32.xlu0 %v1856
        %v1889 = vpop.xlane.xlu0 %1888
        %1890 = vmax.xlane.f32.xlu0 %v1859
        %v1891 = vpop.xlane.xlu0 %1890
        %1892 = vmax.xlane.f32.xlu0 %v1862
        %v1893 = vpop.xlane.xlu0 %1892
        %1894 = vmax.xlane.f32.xlu0 %v1865
        %v1895 = vpop.xlane.xlu0 %1894
        %1896 = vmax.xlane.f32.xlu0 %v1868
        %v1897 = vpop.xlane.xlu0 %1896
        %1898 = vmax.xlane.f32.xlu0 %v1871
        %v1899 = vpop.xlane.xlu0 %1898
        %1900 = vmax.xlane.f32.xlu0 %v1874
        %v1901 = vpop.xlane.xlu0 %1900
        %1902 = vmax.xlane.f32.xlu0 %v1877
        %v1903 = vpop.xlane.xlu0 %1902
        %v1904 = vmax.f32 %v1880, %v1889
        %v1905 = vmax.f32 %v1881, %v1891
        %v1906 = vmax.f32 %v1882, %v1893
        %v1907 = vmax.f32 %v1883, %v1895
        %v1908 = vmax.f32 %v1884, %v1897
        %v1909 = vmax.f32 %v1885, %v1899
        %v1910 = vmax.f32 %v1886, %v1901
        %v1911 = vmax.f32 %v1887, %v1903
        %v1912 = vsub.f32 %v1880, %v1904
        %v1913 = vsub.f32 %v1881, %v1905
        %v1914 = vsub.f32 %v1882, %v1906
        %v1915 = vsub.f32 %v1883, %v1907
        %v1916 = vsub.f32 %v1884, %v1908
        %v1917 = vsub.f32 %v1885, %v1909
        %v1918 = vsub.f32 %v1886, %v1910
        %v1919 = vsub.f32 %v1887, %v1911
        %v1920 = vmul.f32 %v1912, 1.442695
        %v1921 = vpow.pop %v1920
        %v1922 = vmul.f32 %v1913, 1.442695
        %v1923 = vpow.pop %v1922
        %v1924 = vmul.f32 %v1914, 1.442695
        %v1925 = vpow.pop %v1924
        %v1926 = vmul.f32 %v1915, 1.442695
        %v1927 = vpow.pop %v1926
        %v1928 = vmul.f32 %v1916, 1.442695
        %v1929 = vpow.pop %v1928
        %v1930 = vmul.f32 %v1917, 1.442695
        %v1931 = vpow.pop %v1930
        %v1932 = vmul.f32 %v1918, 1.442695
        %v1933 = vpow.pop %v1932
        %v1934 = vmul.f32 %v1919, 1.442695
        %v1935 = vpow.pop %v1934
        %1937 = vset.pattern.permute.xlu0 0
        %1938 = vperm.xlu0 %1937, %v1904
        %v1939 = vpop.permute.xlu0 %1938
        %1942 = vset.pattern.permute.xlu0 0
        %1943 = vperm.xlu0 %1942, %v1905
        %v1944 = vpop.permute.xlu0 %1943
        %1947 = vset.pattern.permute.xlu0 0
        %1948 = vperm.xlu0 %1947, %v1906
        %v1949 = vpop.permute.xlu0 %1948
        %1952 = vset.pattern.permute.xlu0 0
        %1953 = vperm.xlu0 %1952, %v1907
        %v1954 = vpop.permute.xlu0 %1953
        %1957 = vset.pattern.permute.xlu0 0
        %1958 = vperm.xlu0 %1957, %v1908
        %v1959 = vpop.permute.xlu0 %1958
        %1962 = vset.pattern.permute.xlu0 0
        %1963 = vperm.xlu0 %1962, %v1909
        %v1964 = vpop.permute.xlu0 %1963
        %1967 = vset.pattern.permute.xlu0 0
        %1968 = vperm.xlu0 %1967, %v1910
        %v1969 = vpop.permute.xlu0 %1968
        %1972 = vset.pattern.permute.xlu0 0
        %1973 = vperm.xlu0 %1972, %v1911
        %v1974 = vpop.permute.xlu0 %1973
        %v1976 = vsub.f32 %v1856, %v1939
        %v1977 = vsub.f32 %v1859, %v1944
        %v1978 = vsub.f32 %v1862, %v1949
        %v1979 = vsub.f32 %v1865, %v1954
        %v1980 = vsub.f32 %v1868, %v1959
        %v1981 = vsub.f32 %v1871, %v1964
        %v1982 = vsub.f32 %v1874, %v1969
        %v1983 = vsub.f32 %v1877, %v1974
        %v1984 = vmul.f32 %v1976, 1.442695
        %v1985 = vpow.pop %v1984
        %v1986 = vmul.f32 %v1977, 1.442695
        %v1987 = vpow.pop %v1986
        %v1988 = vmul.f32 %v1978, 1.442695
        %v1989 = vpow.pop %v1988
        %v1990 = vmul.f32 %v1979, 1.442695
        %v1991 = vpow.pop %v1990
        %v1992 = vmul.f32 %v1980, 1.442695
        %v1993 = vpow.pop %v1992
        %v1994 = vmul.f32 %v1981, 1.442695
        %v1995 = vpow.pop %v1994
        %v1996 = vmul.f32 %v1982, 1.442695
        %v1997 = vpow.pop %v1996
        %v1998 = vmul.f32 %v1983, 1.442695
        %v1999 = vpow.pop %v1998
        %s2000 = scalar_lea.vmem [#allocation3], 64
        %v2001 = vld [vmem:[%s2000] sm:$0xff]
        %v2002 = vld [vmem:[%s2000 + $0x8] sm:$0xff]
        %v2003 = vld [vmem:[%s2000 + $0x10] sm:$0xff]
        %v2004 = vld [vmem:[%s2000 + $0x18] sm:$0xff]
        %v2005 = vld [vmem:[%s2000 + $0x20] sm:$0xff]
        %v2006 = vld [vmem:[%s2000 + $0x28] sm:$0xff]
        %v2007 = vld [vmem:[%s2000 + $0x30] sm:$0xff]
        %v2008 = vld [vmem:[%s2000 + $0x38] sm:$0xff]
        %v2009 = vmul.f32 %v1921, %v2001
        %v2010 = vmul.f32 %v1923, %v2002
        %v2011 = vmul.f32 %v1925, %v2003
        %v2012 = vmul.f32 %v1927, %v2004
        %v2013 = vmul.f32 %v1929, %v2005
        %v2014 = vmul.f32 %v1931, %v2006
        %v2015 = vmul.f32 %v1933, %v2007
        %v2016 = vmul.f32 %v1935, %v2008
        %2017 = vadd.xlane.f32.xlu0 %v1985
        %v2018 = vpop.xlane.xlu0 %2017
        %2019 = vadd.xlane.f32.xlu0 %v1987
        %v2020 = vpop.xlane.xlu0 %2019
        %2021 = vadd.xlane.f32.xlu0 %v1989
        %v2022 = vpop.xlane.xlu0 %2021
        %2023 = vadd.xlane.f32.xlu0 %v1991
        %v2024 = vpop.xlane.xlu0 %2023
        %2025 = vadd.xlane.f32.xlu0 %v1993
        %v2026 = vpop.xlane.xlu0 %2025
        %2027 = vadd.xlane.f32.xlu0 %v1995
        %v2028 = vpop.xlane.xlu0 %2027
        %2029 = vadd.xlane.f32.xlu0 %v1997
        %v2030 = vpop.xlane.xlu0 %2029
        %2031 = vadd.xlane.f32.xlu0 %v1999
        %v2032 = vpop.xlane.xlu0 %2031
        %v2033 = vadd.f32 %v2009, %v2018
        %v2034 = vadd.f32 %v2010, %v2020
        %v2035 = vadd.f32 %v2011, %v2022
        %v2036 = vadd.f32 %v2012, %v2024
        %v2037 = vadd.f32 %v2013, %v2026
        %v2038 = vadd.f32 %v2014, %v2028
        %v2039 = vadd.f32 %v2015, %v2030
        %v2040 = vadd.f32 %v2016, %v2032
        %2041 = vst.msk [vmem:[%s2000] sm:$0xff] %vm1593, %v2033
        %2042 = vst.msk [vmem:[%s2000 + $0x8] sm:$0xff] %vm1593, %v2034
        %2043 = vst.msk [vmem:[%s2000 + $0x10] sm:$0xff] %vm1593, %v2035
        %2044 = vst.msk [vmem:[%s2000 + $0x18] sm:$0xff] %vm1593, %v2036
        %2045 = vst.msk [vmem:[%s2000 + $0x20] sm:$0xff] %vm1593, %v2037
        %2046 = vst.msk [vmem:[%s2000 + $0x28] sm:$0xff] %vm1593, %v2038
        %2047 = vst.msk [vmem:[%s2000 + $0x30] sm:$0xff] %vm1593, %v2039
        %2048 = vst.msk [vmem:[%s2000 + $0x38] sm:$0xff] %vm1593, %v2040
        %v2049 = vld [vmem:[#allocation4] sm:$0xff]
        %v2050 = vld [vmem:[#allocation4 + $0x8] sm:$0xff]
        %v2051 = vld [vmem:[#allocation4 + $0x10] sm:$0xff]
        %v2052 = vld [vmem:[#allocation4 + $0x18] sm:$0xff]
        %v2053 = vld [vmem:[#allocation4 + $0x20] sm:$0xff]
        %v2054 = vld [vmem:[#allocation4 + $0x28] sm:$0xff]
        %v2055 = vld [vmem:[#allocation4 + $0x30] sm:$0xff]
        %v2056 = vld [vmem:[#allocation4 + $0x38] sm:$0xff]
        %2058 = vset.pattern.permute.xlu0 0
        %2059 = vperm.xlu0 %2058, %v1921
        %v2060 = vpop.permute.xlu0 %2059
        %2063 = vset.pattern.permute.xlu0 0
        %2064 = vperm.xlu0 %2063, %v1923
        %v2065 = vpop.permute.xlu0 %2064
        %2068 = vset.pattern.permute.xlu0 0
        %2069 = vperm.xlu0 %2068, %v1925
        %v2070 = vpop.permute.xlu0 %2069
        %2073 = vset.pattern.permute.xlu0 0
        %2074 = vperm.xlu0 %2073, %v1927
        %v2075 = vpop.permute.xlu0 %2074
        %2078 = vset.pattern.permute.xlu0 0
        %2079 = vperm.xlu0 %2078, %v1929
        %v2080 = vpop.permute.xlu0 %2079
        %2083 = vset.pattern.permute.xlu0 0
        %2084 = vperm.xlu0 %2083, %v1931
        %v2085 = vpop.permute.xlu0 %2084
        %2088 = vset.pattern.permute.xlu0 0
        %2089 = vperm.xlu0 %2088, %v1933
        %v2090 = vpop.permute.xlu0 %2089
        %2093 = vset.pattern.permute.xlu0 0
        %2094 = vperm.xlu0 %2093, %v1935
        %v2095 = vpop.permute.xlu0 %2094
        %v2097 = vmul.f32 %v2060, %v2049
        %v2098 = vmul.f32 %v2065, %v2050
        %v2099 = vmul.f32 %v2070, %v2051
        %v2100 = vmul.f32 %v2075, %v2052
        %v2101 = vmul.f32 %v2080, %v2053
        %v2102 = vmul.f32 %v2085, %v2054
        %v2103 = vmul.f32 %v2090, %v2055
        %v2104 = vmul.f32 %v2095, %v2056
        %2105 = vmatpush.msra.mxu0 %v1765
        %2106 = vmatpush.msra.mxu0 %v1764
        %2107 = vmatpush.msra.mxu0 %v1763
        %2108 = vmatpush.msra.mxu0 %v1762
        %2109 = vmatpush.msra.mxu0 %v1761
        %2110 = vmatpush.msra.mxu0 %v1760
        %2111 = vmatpush.msra.mxu0 %v1759
        %2112 = vmatpush.msra.mxu0 %v1758
        %2113 = vmatpush.msra.mxu0 %v1757
        %2114 = vmatpush.msra.mxu0 %v1756
        %2115 = vmatpush.msra.mxu0 %v1755
        %2116 = vmatpush.msra.mxu0 %v1754
        %2117 = vmatpush.msra.mxu0 %v1753
        %2118 = vmatpush.msra.mxu0 %v1752
        %2119 = vmatpush.msra.mxu0 %v1751
        %2120 = vmatpush.msra.mxu0 %v1750
        %2121 = vmatmul.f32.gmra.mxu0 %v1985
        %v2122 = vpop.f32.mrf.mxu0
        %v2123 = vadd.f32 0.0, %v2122
        %2124 = vmatmul.f32.gmra.mxu0 %v1987
        %v2125 = vpop.f32.mrf.mxu0
        %v2126 = vadd.f32 0.0, %v2125
        %2127 = vmatmul.f32.gmra.mxu0 %v1989
        %v2128 = vpop.f32.mrf.mxu0
        %v2129 = vadd.f32 0.0, %v2128
        %2130 = vmatmul.f32.gmra.mxu0 %v1991
        %v2131 = vpop.f32.mrf.mxu0
        %v2132 = vadd.f32 0.0, %v2131
        %2133 = vmatmul.f32.gmra.mxu0 %v1993
        %v2134 = vpop.f32.mrf.mxu0
        %v2135 = vadd.f32 0.0, %v2134
        %2136 = vmatmul.f32.gmra.mxu0 %v1995
        %v2137 = vpop.f32.mrf.mxu0
        %v2138 = vadd.f32 0.0, %v2137
        %2139 = vmatmul.f32.gmra.mxu0 %v1997
        %v2140 = vpop.f32.mrf.mxu0
        %v2141 = vadd.f32 0.0, %v2140
        %2142 = vmatmul.f32.gmra.mxu0 %v1999
        %v2143 = vpop.f32.mrf.mxu0
        %v2144 = vadd.f32 0.0, %v2143
        %2145 = vdwg.mxu0
        %2154 = vrot.lane.b32.xlu0 %v2123, 32
        %v2155 = vpop.permute.xlu0 %2154
        %2156 = vrot.lane.b32.xlu0 %v2126, 32
        %v2157 = vpop.permute.xlu0 %2156
        %2158 = vrot.lane.b32.xlu0 %v2129, 32
        %v2159 = vpop.permute.xlu0 %2158
        %2160 = vrot.lane.b32.xlu0 %v2132, 32
        %v2161 = vpop.permute.xlu0 %2160
        %2162 = vrot.lane.b32.xlu0 %v2135, 32
        %v2163 = vpop.permute.xlu0 %2162
        %2164 = vrot.lane.b32.xlu0 %v2138, 32
        %v2165 = vpop.permute.xlu0 %2164
        %2166 = vrot.lane.b32.xlu0 %v2141, 32
        %v2167 = vpop.permute.xlu0 %2166
        %2168 = vrot.lane.b32.xlu0 %v2144, 32
        %v2169 = vpop.permute.xlu0 %2168
        %v2178 = vadd.f32 %v2097, %v2155
        %v2179 = vadd.f32 %v2098, %v2157
        %v2180 = vadd.f32 %v2099, %v2159
        %v2181 = vadd.f32 %v2100, %v2161
        %v2182 = vadd.f32 %v2101, %v2163
        %v2183 = vadd.f32 %v2102, %v2165
        %v2184 = vadd.f32 %v2103, %v2167
        %v2185 = vadd.f32 %v2104, %v2169
        %vm2186 = vcmask 523520
        %2187 = vst.msk [vmem:[#allocation4] sm:$0xff] %vm2186, %v2178
        %2188 = vst.msk [vmem:[#allocation4 + $0x8] sm:$0xff] %vm2186, %v2179
        %2189 = vst.msk [vmem:[#allocation4 + $0x10] sm:$0xff] %vm2186, %v2180
        %2190 = vst.msk [vmem:[#allocation4 + $0x18] sm:$0xff] %vm2186, %v2181
        %2191 = vst.msk [vmem:[#allocation4 + $0x20] sm:$0xff] %vm2186, %v2182
        %2192 = vst.msk [vmem:[#allocation4 + $0x28] sm:$0xff] %vm2186, %v2183
        %2193 = vst.msk [vmem:[#allocation4 + $0x30] sm:$0xff] %vm2186, %v2184
        %2194 = vst.msk [vmem:[#allocation4 + $0x38] sm:$0xff] %vm2186, %v2185
        %2195 = vst.msk [vmem:[%s1879] sm:$0xff] %vm1593, %v1904
        %2196 = vst.msk [vmem:[%s1879 + $0x8] sm:$0xff] %vm1593, %v1905
        %2197 = vst.msk [vmem:[%s1879 + $0x10] sm:$0xff] %vm1593, %v1906
        %2198 = vst.msk [vmem:[%s1879 + $0x18] sm:$0xff] %vm1593, %v1907
        %2199 = vst.msk [vmem:[%s1879 + $0x20] sm:$0xff] %vm1593, %v1908
        %2200 = vst.msk [vmem:[%s1879 + $0x28] sm:$0xff] %vm1593, %v1909
        %2201 = vst.msk [vmem:[%s1879 + $0x30] sm:$0xff] %vm1593, %v1910
        %2202 = vst.msk [vmem:[%s1879 + $0x38] sm:$0xff] %vm1593, %v1911
        %s2203 = scalar_lea.vmem %s1087, 128 [#allocation5]
        %v2204 = vld [vmem:[%s2203] sm:$0xff]
        %v2205 = vld [vmem:[%s2203 + $0x8] sm:$0xff]
        %v2206 = vld [vmem:[%s2203 + $0x10] sm:$0xff]
        %v2207 = vld [vmem:[%s2203 + $0x18] sm:$0xff]
        %v2208 = vld [vmem:[%s2203 + $0x20] sm:$0xff]
        %v2209 = vld [vmem:[%s2203 + $0x28] sm:$0xff]
        %v2210 = vld [vmem:[%s2203 + $0x30] sm:$0xff]
        %v2211 = vld [vmem:[%s2203 + $0x38] sm:$0xff]
        %s2212 = scalar_lea.vmem %s1094, 256 [#allocation6]
        %v2213 = vld [vmem:[%s2212] sm:$0xff]
        %v2214 = vld [vmem:[%s2212 + $0x8] sm:$0xff]
        %v2215 = vld [vmem:[%s2212 + $0x10] sm:$0xff]
        %v2216 = vld [vmem:[%s2212 + $0x18] sm:$0xff]
        %v2217 = vld [vmem:[%s2212 + $0x20] sm:$0xff]
        %v2218 = vld [vmem:[%s2212 + $0x28] sm:$0xff]
        %v2219 = vld [vmem:[%s2212 + $0x30] sm:$0xff]
        %v2220 = vld [vmem:[%s2212 + $0x38] sm:$0xff]
        %v2221 = vld [vmem:[%s2212 + $0x40] sm:$0xff]
        %v2222 = vld [vmem:[%s2212 + $0x48] sm:$0xff]
        %v2223 = vld [vmem:[%s2212 + $0x50] sm:$0xff]
        %v2224 = vld [vmem:[%s2212 + $0x58] sm:$0xff]
        %v2225 = vld [vmem:[%s2212 + $0x60] sm:$0xff]
        %v2226 = vld [vmem:[%s2212 + $0x68] sm:$0xff]
        %v2227 = vld [vmem:[%s2212 + $0x70] sm:$0xff]
        %v2228 = vld [vmem:[%s2212 + $0x78] sm:$0xff]
        %s2229 = scalar_lea.vmem %s1101, 256 [#allocation7]
        %v2230 = vld [vmem:[%s2229] sm:$0xff]
        %v2231 = vld [vmem:[%s2229 + $0x8] sm:$0xff]
        %v2232 = vld [vmem:[%s2229 + $0x10] sm:$0xff]
        %v2233 = vld [vmem:[%s2229 + $0x18] sm:$0xff]
        %v2234 = vld [vmem:[%s2229 + $0x20] sm:$0xff]
        %v2235 = vld [vmem:[%s2229 + $0x28] sm:$0xff]
        %v2236 = vld [vmem:[%s2229 + $0x30] sm:$0xff]
        %v2237 = vld [vmem:[%s2229 + $0x38] sm:$0xff]
        %v2238 = vld [vmem:[%s2229 + $0x40] sm:$0xff]
        %v2239 = vld [vmem:[%s2229 + $0x48] sm:$0xff]
        %v2240 = vld [vmem:[%s2229 + $0x50] sm:$0xff]
        %v2241 = vld [vmem:[%s2229 + $0x58] sm:$0xff]
        %v2242 = vld [vmem:[%s2229 + $0x60] sm:$0xff]
        %v2243 = vld [vmem:[%s2229 + $0x68] sm:$0xff]
        %v2244 = vld [vmem:[%s2229 + $0x70] sm:$0xff]
        %v2245 = vld [vmem:[%s2229 + $0x78] sm:$0xff]
        %v2247 = vsel %vm1319, %v2204, 0
        %v2250 = vsel %vm1319, %v2205, 0
        %v2253 = vsel %vm1319, %v2206, 0
        %v2256 = vsel %vm1319, %v2207, 0
        %v2259 = vsel %vm1319, %v2208, 0
        %v2262 = vsel %vm1319, %v2209, 0
        %v2265 = vsel %vm1319, %v2210, 0
        %v2268 = vsel %vm1319, %v2211, 0
        %v2271 = vsel %vm1319, %v2213, 0
        %v2274 = vsel %vm1319, %v2214, 0
        %v2277 = vsel %vm1319, %v2215, 0
        %v2280 = vsel %vm1319, %v2216, 0
        %v2283 = vsel %vm1319, %v2217, 0
        %v2286 = vsel %vm1319, %v2218, 0
        %v2289 = vsel %vm1319, %v2219, 0
        %v2292 = vsel %vm1319, %v2220, 0
        %v2295 = vsel %vm1319, %v2221, 0
        %v2298 = vsel %vm1319, %v2222, 0
        %v2301 = vsel %vm1319, %v2223, 0
        %v2304 = vsel %vm1319, %v2224, 0
        %v2307 = vsel %vm1319, %v2225, 0
        %v2310 = vsel %vm1319, %v2226, 0
        %v2313 = vsel %vm1319, %v2227, 0
        %v2316 = vsel %vm1319, %v2228, 0
        %2318 = vmatpush.xpose.msra.mxu0 %v2316
        %2319 = vmatpush.xpose.msra.mxu0 %v2313
        %2320 = vmatpush.xpose.msra.mxu0 %v2310
        %2321 = vmatpush.xpose.msra.mxu0 %v2307
        %2322 = vmatpush.xpose.msra.mxu0 %v2304
        %2323 = vmatpush.xpose.msra.mxu0 %v2301
        %2324 = vmatpush.xpose.msra.mxu0 %v2298
        %2325 = vmatpush.xpose.msra.mxu0 %v2295
        %2326 = vmatpush.xpose.msra.mxu0 %v2292
        %2327 = vmatpush.xpose.msra.mxu0 %v2289
        %2328 = vmatpush.xpose.msra.mxu0 %v2286
        %2329 = vmatpush.xpose.msra.mxu0 %v2283
        %2330 = vmatpush.xpose.msra.mxu0 %v2280
        %2331 = vmatpush.xpose.msra.mxu0 %v2277
        %2332 = vmatpush.xpose.msra.mxu0 %v2274
        %2333 = vmatpush.xpose.msra.mxu0 %v2271
        %2334 = vmatmul.f32.gmra.mxu0 %v2247
        %v2335 = vpop.f32.mrf.mxu0
        %v2336 = vadd.f32 %v1317, %v2335
        %2337 = vmatmul.f32.gmra.mxu0 %v2250
        %v2338 = vpop.f32.mrf.mxu0
        %v2339 = vadd.f32 %v1317, %v2338
        %2340 = vmatmul.f32.gmra.mxu0 %v2253
        %v2341 = vpop.f32.mrf.mxu0
        %v2342 = vadd.f32 %v1317, %v2341
        %2343 = vmatmul.f32.gmra.mxu0 %v2256
        %v2344 = vpop.f32.mrf.mxu0
        %v2345 = vadd.f32 %v1317, %v2344
        %2346 = vmatmul.f32.gmra.mxu0 %v2259
        %v2347 = vpop.f32.mrf.mxu0
        %v2348 = vadd.f32 %v1317, %v2347
        %2349 = vmatmul.f32.gmra.mxu0 %v2262
        %v2350 = vpop.f32.mrf.mxu0
        %v2351 = vadd.f32 %v1317, %v2350
        %2352 = vmatmul.f32.gmra.mxu0 %v2265
        %v2353 = vpop.f32.mrf.mxu0
        %v2354 = vadd.f32 %v1317, %v2353
        %2355 = vmatmul.f32.gmra.mxu0 %v2268
        %v2356 = vpop.f32.mrf.mxu0
        %v2357 = vadd.f32 %v1317, %v2356
        %2358 = vdwg.mxu0
        %s2359 = scalar_lea.vmem [#allocation2], 128
        %v2360 = vld [vmem:[%s2359] sm:$0xff]
        %v2361 = vld [vmem:[%s2359 + $0x8] sm:$0xff]
        %v2362 = vld [vmem:[%s2359 + $0x10] sm:$0xff]
        %v2363 = vld [vmem:[%s2359 + $0x18] sm:$0xff]
        %v2364 = vld [vmem:[%s2359 + $0x20] sm:$0xff]
        %v2365 = vld [vmem:[%s2359 + $0x28] sm:$0xff]
        %v2366 = vld [vmem:[%s2359 + $0x30] sm:$0xff]
        %v2367 = vld [vmem:[%s2359 + $0x38] sm:$0xff]
        %2368 = vmax.xlane.f32.xlu0 %v2336
        %v2369 = vpop.xlane.xlu0 %2368
        %2370 = vmax.xlane.f32.xlu0 %v2339
        %v2371 = vpop.xlane.xlu0 %2370
        %2372 = vmax.xlane.f32.xlu0 %v2342
        %v2373 = vpop.xlane.xlu0 %2372
        %2374 = vmax.xlane.f32.xlu0 %v2345
        %v2375 = vpop.xlane.xlu0 %2374
        %2376 = vmax.xlane.f32.xlu0 %v2348
        %v2377 = vpop.xlane.xlu0 %2376
        %2378 = vmax.xlane.f32.xlu0 %v2351
        %v2379 = vpop.xlane.xlu0 %2378
        %2380 = vmax.xlane.f32.xlu0 %v2354
        %v2381 = vpop.xlane.xlu0 %2380
        %2382 = vmax.xlane.f32.xlu0 %v2357
        %v2383 = vpop.xlane.xlu0 %2382
        %v2384 = vmax.f32 %v2360, %v2369
        %v2385 = vmax.f32 %v2361, %v2371
        %v2386 = vmax.f32 %v2362, %v2373
        %v2387 = vmax.f32 %v2363, %v2375
        %v2388 = vmax.f32 %v2364, %v2377
        %v2389 = vmax.f32 %v2365, %v2379
        %v2390 = vmax.f32 %v2366, %v2381
        %v2391 = vmax.f32 %v2367, %v2383
        %v2392 = vsub.f32 %v2360, %v2384
        %v2393 = vsub.f32 %v2361, %v2385
        %v2394 = vsub.f32 %v2362, %v2386
        %v2395 = vsub.f32 %v2363, %v2387
        %v2396 = vsub.f32 %v2364, %v2388
        %v2397 = vsub.f32 %v2365, %v2389
        %v2398 = vsub.f32 %v2366, %v2390
        %v2399 = vsub.f32 %v2367, %v2391
        %v2400 = vmul.f32 %v2392, 1.442695
        %v2401 = vpow.pop %v2400
        %v2402 = vmul.f32 %v2393, 1.442695
        %v2403 = vpow.pop %v2402
        %v2404 = vmul.f32 %v2394, 1.442695
        %v2405 = vpow.pop %v2404
        %v2406 = vmul.f32 %v2395, 1.442695
        %v2407 = vpow.pop %v2406
        %v2408 = vmul.f32 %v2396, 1.442695
        %v2409 = vpow.pop %v2408
        %v2410 = vmul.f32 %v2397, 1.442695
        %v2411 = vpow.pop %v2410
        %v2412 = vmul.f32 %v2398, 1.442695
        %v2413 = vpow.pop %v2412
        %v2414 = vmul.f32 %v2399, 1.442695
        %v2415 = vpow.pop %v2414
        %2417 = vset.pattern.permute.xlu0 0
        %2418 = vperm.xlu0 %2417, %v2384
        %v2419 = vpop.permute.xlu0 %2418
        %2422 = vset.pattern.permute.xlu0 0
        %2423 = vperm.xlu0 %2422, %v2385
        %v2424 = vpop.permute.xlu0 %2423
        %2427 = vset.pattern.permute.xlu0 0
        %2428 = vperm.xlu0 %2427, %v2386
        %v2429 = vpop.permute.xlu0 %2428
        %2432 = vset.pattern.permute.xlu0 0
        %2433 = vperm.xlu0 %2432, %v2387
        %v2434 = vpop.permute.xlu0 %2433
        %2437 = vset.pattern.permute.xlu0 0
        %2438 = vperm.xlu0 %2437, %v2388
        %v2439 = vpop.permute.xlu0 %2438
        %2442 = vset.pattern.permute.xlu0 0
        %2443 = vperm.xlu0 %2442, %v2389
        %v2444 = vpop.permute.xlu0 %2443
        %2447 = vset.pattern.permute.xlu0 0
        %2448 = vperm.xlu0 %2447, %v2390
        %v2449 = vpop.permute.xlu0 %2448
        %2452 = vset.pattern.permute.xlu0 0
        %2453 = vperm.xlu0 %2452, %v2391
        %v2454 = vpop.permute.xlu0 %2453
        %v2456 = vsub.f32 %v2336, %v2419
        %v2457 = vsub.f32 %v2339, %v2424
        %v2458 = vsub.f32 %v2342, %v2429
        %v2459 = vsub.f32 %v2345, %v2434
        %v2460 = vsub.f32 %v2348, %v2439
        %v2461 = vsub.f32 %v2351, %v2444
        %v2462 = vsub.f32 %v2354, %v2449
        %v2463 = vsub.f32 %v2357, %v2454
        %v2464 = vmul.f32 %v2456, 1.442695
        %v2465 = vpow.pop %v2464
        %v2466 = vmul.f32 %v2457, 1.442695
        %v2467 = vpow.pop %v2466
        %v2468 = vmul.f32 %v2458, 1.442695
        %v2469 = vpow.pop %v2468
        %v2470 = vmul.f32 %v2459, 1.442695
        %v2471 = vpow.pop %v2470
        %v2472 = vmul.f32 %v2460, 1.442695
        %v2473 = vpow.pop %v2472
        %v2474 = vmul.f32 %v2461, 1.442695
        %v2475 = vpow.pop %v2474
        %v2476 = vmul.f32 %v2462, 1.442695
        %v2477 = vpow.pop %v2476
        %v2478 = vmul.f32 %v2463, 1.442695
        %v2479 = vpow.pop %v2478
        %s2480 = scalar_lea.vmem [#allocation3], 128
        %v2481 = vld [vmem:[%s2480] sm:$0xff]
        %v2482 = vld [vmem:[%s2480 + $0x8] sm:$0xff]
        %v2483 = vld [vmem:[%s2480 + $0x10] sm:$0xff]
        %v2484 = vld [vmem:[%s2480 + $0x18] sm:$0xff]
        %v2485 = vld [vmem:[%s2480 + $0x20] sm:$0xff]
        %v2486 = vld [vmem:[%s2480 + $0x28] sm:$0xff]
        %v2487 = vld [vmem:[%s2480 + $0x30] sm:$0xff]
        %v2488 = vld [vmem:[%s2480 + $0x38] sm:$0xff]
        %v2489 = vmul.f32 %v2401, %v2481
        %v2490 = vmul.f32 %v2403, %v2482
        %v2491 = vmul.f32 %v2405, %v2483
        %v2492 = vmul.f32 %v2407, %v2484
        %v2493 = vmul.f32 %v2409, %v2485
        %v2494 = vmul.f32 %v2411, %v2486
        %v2495 = vmul.f32 %v2413, %v2487
        %v2496 = vmul.f32 %v2415, %v2488
        %2497 = vadd.xlane.f32.xlu0 %v2465
        %v2498 = vpop.xlane.xlu0 %2497
        %2499 = vadd.xlane.f32.xlu0 %v2467
        %v2500 = vpop.xlane.xlu0 %2499
        %2501 = vadd.xlane.f32.xlu0 %v2469
        %v2502 = vpop.xlane.xlu0 %2501
        %2503 = vadd.xlane.f32.xlu0 %v2471
        %v2504 = vpop.xlane.xlu0 %2503
        %2505 = vadd.xlane.f32.xlu0 %v2473
        %v2506 = vpop.xlane.xlu0 %2505
        %2507 = vadd.xlane.f32.xlu0 %v2475
        %v2508 = vpop.xlane.xlu0 %2507
        %2509 = vadd.xlane.f32.xlu0 %v2477
        %v2510 = vpop.xlane.xlu0 %2509
        %2511 = vadd.xlane.f32.xlu0 %v2479
        %v2512 = vpop.xlane.xlu0 %2511
        %v2513 = vadd.f32 %v2489, %v2498
        %v2514 = vadd.f32 %v2490, %v2500
        %v2515 = vadd.f32 %v2491, %v2502
        %v2516 = vadd.f32 %v2492, %v2504
        %v2517 = vadd.f32 %v2493, %v2506
        %v2518 = vadd.f32 %v2494, %v2508
        %v2519 = vadd.f32 %v2495, %v2510
        %v2520 = vadd.f32 %v2496, %v2512
        %2521 = vst.msk [vmem:[%s2480] sm:$0xff] %vm1593, %v2513
        %2522 = vst.msk [vmem:[%s2480 + $0x8] sm:$0xff] %vm1593, %v2514
        %2523 = vst.msk [vmem:[%s2480 + $0x10] sm:$0xff] %vm1593, %v2515
        %2524 = vst.msk [vmem:[%s2480 + $0x18] sm:$0xff] %vm1593, %v2516
        %2525 = vst.msk [vmem:[%s2480 + $0x20] sm:$0xff] %vm1593, %v2517
        %2526 = vst.msk [vmem:[%s2480 + $0x28] sm:$0xff] %vm1593, %v2518
        %2527 = vst.msk [vmem:[%s2480 + $0x30] sm:$0xff] %vm1593, %v2519
        %2528 = vst.msk [vmem:[%s2480 + $0x38] sm:$0xff] %vm1593, %v2520
        %v2529 = vld [vmem:[#allocation4] sm:$0xff]
        %v2530 = vld [vmem:[#allocation4 + $0x8] sm:$0xff]
        %v2531 = vld [vmem:[#allocation4 + $0x10] sm:$0xff]
        %v2532 = vld [vmem:[#allocation4 + $0x18] sm:$0xff]
        %v2533 = vld [vmem:[#allocation4 + $0x20] sm:$0xff]
        %v2534 = vld [vmem:[#allocation4 + $0x28] sm:$0xff]
        %v2535 = vld [vmem:[#allocation4 + $0x30] sm:$0xff]
        %v2536 = vld [vmem:[#allocation4 + $0x38] sm:$0xff]
        %2538 = vset.pattern.permute.xlu0 0
        %2539 = vperm.xlu0 %2538, %v2401
        %v2540 = vpop.permute.xlu0 %2539
        %2543 = vset.pattern.permute.xlu0 0
        %2544 = vperm.xlu0 %2543, %v2403
        %v2545 = vpop.permute.xlu0 %2544
        %2548 = vset.pattern.permute.xlu0 0
        %2549 = vperm.xlu0 %2548, %v2405
        %v2550 = vpop.permute.xlu0 %2549
        %2553 = vset.pattern.permute.xlu0 0
        %2554 = vperm.xlu0 %2553, %v2407
        %v2555 = vpop.permute.xlu0 %2554
        %2558 = vset.pattern.permute.xlu0 0
        %2559 = vperm.xlu0 %2558, %v2409
        %v2560 = vpop.permute.xlu0 %2559
        %2563 = vset.pattern.permute.xlu0 0
        %2564 = vperm.xlu0 %2563, %v2411
        %v2565 = vpop.permute.xlu0 %2564
        %2568 = vset.pattern.permute.xlu0 0
        %2569 = vperm.xlu0 %2568, %v2413
        %v2570 = vpop.permute.xlu0 %2569
        %2573 = vset.pattern.permute.xlu0 0
        %2574 = vperm.xlu0 %2573, %v2415
        %v2575 = vpop.permute.xlu0 %2574
        %v2577 = vmul.f32 %v2540, %v2529
        %v2578 = vmul.f32 %v2545, %v2530
        %v2579 = vmul.f32 %v2550, %v2531
        %v2580 = vmul.f32 %v2555, %v2532
        %v2581 = vmul.f32 %v2560, %v2533
        %v2582 = vmul.f32 %v2565, %v2534
        %v2583 = vmul.f32 %v2570, %v2535
        %v2584 = vmul.f32 %v2575, %v2536
        %2585 = vmatpush.msra.mxu0 %v2245
        %2586 = vmatpush.msra.mxu0 %v2244
        %2587 = vmatpush.msra.mxu0 %v2243
        %2588 = vmatpush.msra.mxu0 %v2242
        %2589 = vmatpush.msra.mxu0 %v2241
        %2590 = vmatpush.msra.mxu0 %v2240
        %2591 = vmatpush.msra.mxu0 %v2239
        %2592 = vmatpush.msra.mxu0 %v2238
        %2593 = vmatpush.msra.mxu0 %v2237
        %2594 = vmatpush.msra.mxu0 %v2236
        %2595 = vmatpush.msra.mxu0 %v2235
        %2596 = vmatpush.msra.mxu0 %v2234
        %2597 = vmatpush.msra.mxu0 %v2233
        %2598 = vmatpush.msra.mxu0 %v2232
        %2599 = vmatpush.msra.mxu0 %v2231
        %2600 = vmatpush.msra.mxu0 %v2230
        %2601 = vmatmul.f32.gmra.mxu0 %v2465
        %v2602 = vpop.f32.mrf.mxu0
        %v2603 = vadd.f32 0.0, %v2602
        %2604 = vmatmul.f32.gmra.mxu0 %v2467
        %v2605 = vpop.f32.mrf.mxu0
        %v2606 = vadd.f32 0.0, %v2605
        %2607 = vmatmul.f32.gmra.mxu0 %v2469
        %v2608 = vpop.f32.mrf.mxu0
        %v2609 = vadd.f32 0.0, %v2608
        %2610 = vmatmul.f32.gmra.mxu0 %v2471
        %v2611 = vpop.f32.mrf.mxu0
        %v2612 = vadd.f32 0.0, %v2611
        %2613 = vmatmul.f32.gmra.mxu0 %v2473
        %v2614 = vpop.f32.mrf.mxu0
        %v2615 = vadd.f32 0.0, %v2614
        %2616 = vmatmul.f32.gmra.mxu0 %v2475
        %v2617 = vpop.f32.mrf.mxu0
        %v2618 = vadd.f32 0.0, %v2617
        %2619 = vmatmul.f32.gmra.mxu0 %v2477
        %v2620 = vpop.f32.mrf.mxu0
        %v2621 = vadd.f32 0.0, %v2620
        %2622 = vmatmul.f32.gmra.mxu0 %v2479
        %v2623 = vpop.f32.mrf.mxu0
        %v2624 = vadd.f32 0.0, %v2623
        %2625 = vdwg.mxu0
        %2634 = vrot.lane.b32.xlu0 %v2603, 64
        %v2635 = vpop.permute.xlu0 %2634
        %2636 = vrot.lane.b32.xlu0 %v2606, 64
        %v2637 = vpop.permute.xlu0 %2636
        %2638 = vrot.lane.b32.xlu0 %v2609, 64
        %v2639 = vpop.permute.xlu0 %2638
        %2640 = vrot.lane.b32.xlu0 %v2612, 64
        %v2641 = vpop.permute.xlu0 %2640
        %2642 = vrot.lane.b32.xlu0 %v2615, 64
        %v2643 = vpop.permute.xlu0 %2642
        %2644 = vrot.lane.b32.xlu0 %v2618, 64
        %v2645 = vpop.permute.xlu0 %2644
        %2646 = vrot.lane.b32.xlu0 %v2621, 64
        %v2647 = vpop.permute.xlu0 %2646
        %2648 = vrot.lane.b32.xlu0 %v2624, 64
        %v2649 = vpop.permute.xlu0 %2648
        %v2658 = vadd.f32 %v2577, %v2635
        %v2659 = vadd.f32 %v2578, %v2637
        %v2660 = vadd.f32 %v2579, %v2639
        %v2661 = vadd.f32 %v2580, %v2641
        %v2662 = vadd.f32 %v2581, %v2643
        %v2663 = vadd.f32 %v2582, %v2645
        %v2664 = vadd.f32 %v2583, %v2647
        %v2665 = vadd.f32 %v2584, %v2649
        %vm2666 = vcmask 785920
        %2667 = vst.msk [vmem:[#allocation4] sm:$0xff] %vm2666, %v2658
        %2668 = vst.msk [vmem:[#allocation4 + $0x8] sm:$0xff] %vm2666, %v2659
        %2669 = vst.msk [vmem:[#allocation4 + $0x10] sm:$0xff] %vm2666, %v2660
        %2670 = vst.msk [vmem:[#allocation4 + $0x18] sm:$0xff] %vm2666, %v2661
        %2671 = vst.msk [vmem:[#allocation4 + $0x20] sm:$0xff] %vm2666, %v2662
        %2672 = vst.msk [vmem:[#allocation4 + $0x28] sm:$0xff] %vm2666, %v2663
        %2673 = vst.msk [vmem:[#allocation4 + $0x30] sm:$0xff] %vm2666, %v2664
        %2674 = vst.msk [vmem:[#allocation4 + $0x38] sm:$0xff] %vm2666, %v2665
        %2675 = vst.msk [vmem:[%s2359] sm:$0xff] %vm1593, %v2384
        %2676 = vst.msk [vmem:[%s2359 + $0x8] sm:$0xff] %vm1593, %v2385
        %2677 = vst.msk [vmem:[%s2359 + $0x10] sm:$0xff] %vm1593, %v2386
        %2678 = vst.msk [vmem:[%s2359 + $0x18] sm:$0xff] %vm1593, %v2387
        %2679 = vst.msk [vmem:[%s2359 + $0x20] sm:$0xff] %vm1593, %v2388
        %2680 = vst.msk [vmem:[%s2359 + $0x28] sm:$0xff] %vm1593, %v2389
        %2681 = vst.msk [vmem:[%s2359 + $0x30] sm:$0xff] %vm1593, %v2390
        %2682 = vst.msk [vmem:[%s2359 + $0x38] sm:$0xff] %vm1593, %v2391
        %s2683 = scalar_lea.vmem %s1087, 192 [#allocation5]
        %v2684 = vld [vmem:[%s2683] sm:$0xff]
        %v2685 = vld [vmem:[%s2683 + $0x8] sm:$0xff]
        %v2686 = vld [vmem:[%s2683 + $0x10] sm:$0xff]
        %v2687 = vld [vmem:[%s2683 + $0x18] sm:$0xff]
        %v2688 = vld [vmem:[%s2683 + $0x20] sm:$0xff]
        %v2689 = vld [vmem:[%s2683 + $0x28] sm:$0xff]
        %v2690 = vld [vmem:[%s2683 + $0x30] sm:$0xff]
        %v2691 = vld [vmem:[%s2683 + $0x38] sm:$0xff]
        %s2692 = scalar_lea.vmem %s1094, 384 [#allocation6]
        %v2693 = vld [vmem:[%s2692] sm:$0xff]
        %v2694 = vld [vmem:[%s2692 + $0x8] sm:$0xff]
        %v2695 = vld [vmem:[%s2692 + $0x10] sm:$0xff]
        %v2696 = vld [vmem:[%s2692 + $0x18] sm:$0xff]
        %v2697 = vld [vmem:[%s2692 + $0x20] sm:$0xff]
        %v2698 = vld [vmem:[%s2692 + $0x28] sm:$0xff]
        %v2699 = vld [vmem:[%s2692 + $0x30] sm:$0xff]
        %v2700 = vld [vmem:[%s2692 + $0x38] sm:$0xff]
        %v2701 = vld [vmem:[%s2692 + $0x40] sm:$0xff]
        %v2702 = vld [vmem:[%s2692 + $0x48] sm:$0xff]
        %v2703 = vld [vmem:[%s2692 + $0x50] sm:$0xff]
        %v2704 = vld [vmem:[%s2692 + $0x58] sm:$0xff]
        %v2705 = vld [vmem:[%s2692 + $0x60] sm:$0xff]
        %v2706 = vld [vmem:[%s2692 + $0x68] sm:$0xff]
        %v2707 = vld [vmem:[%s2692 + $0x70] sm:$0xff]
        %v2708 = vld [vmem:[%s2692 + $0x78] sm:$0xff]
        %s2709 = scalar_lea.vmem %s1101, 384 [#allocation7]
        %v2710 = vld [vmem:[%s2709] sm:$0xff]
        %v2711 = vld [vmem:[%s2709 + $0x8] sm:$0xff]
        %v2712 = vld [vmem:[%s2709 + $0x10] sm:$0xff]
        %v2713 = vld [vmem:[%s2709 + $0x18] sm:$0xff]
        %v2714 = vld [vmem:[%s2709 + $0x20] sm:$0xff]
        %v2715 = vld [vmem:[%s2709 + $0x28] sm:$0xff]
        %v2716 = vld [vmem:[%s2709 + $0x30] sm:$0xff]
        %v2717 = vld [vmem:[%s2709 + $0x38] sm:$0xff]
        %v2718 = vld [vmem:[%s2709 + $0x40] sm:$0xff]
        %v2719 = vld [vmem:[%s2709 + $0x48] sm:$0xff]
        %v2720 = vld [vmem:[%s2709 + $0x50] sm:$0xff]
        %v2721 = vld [vmem:[%s2709 + $0x58] sm:$0xff]
        %v2722 = vld [vmem:[%s2709 + $0x60] sm:$0xff]
        %v2723 = vld [vmem:[%s2709 + $0x68] sm:$0xff]
        %v2724 = vld [vmem:[%s2709 + $0x70] sm:$0xff]
        %v2725 = vld [vmem:[%s2709 + $0x78] sm:$0xff]
        %v2727 = vsel %vm1319, %v2684, 0
        %v2730 = vsel %vm1319, %v2685, 0
        %v2733 = vsel %vm1319, %v2686, 0
        %v2736 = vsel %vm1319, %v2687, 0
        %v2739 = vsel %vm1319, %v2688, 0
        %v2742 = vsel %vm1319, %v2689, 0
        %v2745 = vsel %vm1319, %v2690, 0
        %v2748 = vsel %vm1319, %v2691, 0
        %v2751 = vsel %vm1319, %v2693, 0
        %v2754 = vsel %vm1319, %v2694, 0
        %v2757 = vsel %vm1319, %v2695, 0
        %v2760 = vsel %vm1319, %v2696, 0
        %v2763 = vsel %vm1319, %v2697, 0
        %v2766 = vsel %vm1319, %v2698, 0
        %v2769 = vsel %vm1319, %v2699, 0
        %v2772 = vsel %vm1319, %v2700, 0
        %v2775 = vsel %vm1319, %v2701, 0
        %v2778 = vsel %vm1319, %v2702, 0
        %v2781 = vsel %vm1319, %v2703, 0
        %v2784 = vsel %vm1319, %v2704, 0
        %v2787 = vsel %vm1319, %v2705, 0
        %v2790 = vsel %vm1319, %v2706, 0
        %v2793 = vsel %vm1319, %v2707, 0
        %v2796 = vsel %vm1319, %v2708, 0
        %2798 = vmatpush.xpose.msra.mxu0 %v2796
        %2799 = vmatpush.xpose.msra.mxu0 %v2793
        %2800 = vmatpush.xpose.msra.mxu0 %v2790
        %2801 = vmatpush.xpose.msra.mxu0 %v2787
        %2802 = vmatpush.xpose.msra.mxu0 %v2784
        %2803 = vmatpush.xpose.msra.mxu0 %v2781
        %2804 = vmatpush.xpose.msra.mxu0 %v2778
        %2805 = vmatpush.xpose.msra.mxu0 %v2775
        %2806 = vmatpush.xpose.msra.mxu0 %v2772
        %2807 = vmatpush.xpose.msra.mxu0 %v2769
        %2808 = vmatpush.xpose.msra.mxu0 %v2766
        %2809 = vmatpush.xpose.msra.mxu0 %v2763
        %2810 = vmatpush.xpose.msra.mxu0 %v2760
        %2811 = vmatpush.xpose.msra.mxu0 %v2757
        %2812 = vmatpush.xpose.msra.mxu0 %v2754
        %2813 = vmatpush.xpose.msra.mxu0 %v2751
        %2814 = vmatmul.f32.gmra.mxu0 %v2727
        %v2815 = vpop.f32.mrf.mxu0
        %v2816 = vadd.f32 %v1317, %v2815
        %2817 = vmatmul.f32.gmra.mxu0 %v2730
        %v2818 = vpop.f32.mrf.mxu0
        %v2819 = vadd.f32 %v1317, %v2818
        %2820 = vmatmul.f32.gmra.mxu0 %v2733
        %v2821 = vpop.f32.mrf.mxu0
        %v2822 = vadd.f32 %v1317, %v2821
        %2823 = vmatmul.f32.gmra.mxu0 %v2736
        %v2824 = vpop.f32.mrf.mxu0
        %v2825 = vadd.f32 %v1317, %v2824
        %2826 = vmatmul.f32.gmra.mxu0 %v2739
        %v2827 = vpop.f32.mrf.mxu0
        %v2828 = vadd.f32 %v1317, %v2827
        %2829 = vmatmul.f32.gmra.mxu0 %v2742
        %v2830 = vpop.f32.mrf.mxu0
        %v2831 = vadd.f32 %v1317, %v2830
        %2832 = vmatmul.f32.gmra.mxu0 %v2745
        %v2833 = vpop.f32.mrf.mxu0
        %v2834 = vadd.f32 %v1317, %v2833
        %2835 = vmatmul.f32.gmra.mxu0 %v2748
        %v2836 = vpop.f32.mrf.mxu0
        %v2837 = vadd.f32 %v1317, %v2836
        %2838 = vdwg.mxu0
        %s2839 = scalar_lea.vmem [#allocation2], 192
        %v2840 = vld [vmem:[%s2839] sm:$0xff]
        %v2841 = vld [vmem:[%s2839 + $0x8] sm:$0xff]
        %v2842 = vld [vmem:[%s2839 + $0x10] sm:$0xff]
        %v2843 = vld [vmem:[%s2839 + $0x18] sm:$0xff]
        %v2844 = vld [vmem:[%s2839 + $0x20] sm:$0xff]
        %v2845 = vld [vmem:[%s2839 + $0x28] sm:$0xff]
        %v2846 = vld [vmem:[%s2839 + $0x30] sm:$0xff]
        %v2847 = vld [vmem:[%s2839 + $0x38] sm:$0xff]
        %2848 = vmax.xlane.f32.xlu0 %v2816
        %v2849 = vpop.xlane.xlu0 %2848
        %2850 = vmax.xlane.f32.xlu0 %v2819
        %v2851 = vpop.xlane.xlu0 %2850
        %2852 = vmax.xlane.f32.xlu0 %v2822
        %v2853 = vpop.xlane.xlu0 %2852
        %2854 = vmax.xlane.f32.xlu0 %v2825
        %v2855 = vpop.xlane.xlu0 %2854
        %2856 = vmax.xlane.f32.xlu0 %v2828
        %v2857 = vpop.xlane.xlu0 %2856
        %2858 = vmax.xlane.f32.xlu0 %v2831
        %v2859 = vpop.xlane.xlu0 %2858
        %2860 = vmax.xlane.f32.xlu0 %v2834
        %v2861 = vpop.xlane.xlu0 %2860
        %2862 = vmax.xlane.f32.xlu0 %v2837
        %v2863 = vpop.xlane.xlu0 %2862
        %v2864 = vmax.f32 %v2840, %v2849
        %v2865 = vmax.f32 %v2841, %v2851
        %v2866 = vmax.f32 %v2842, %v2853
        %v2867 = vmax.f32 %v2843, %v2855
        %v2868 = vmax.f32 %v2844, %v2857
        %v2869 = vmax.f32 %v2845, %v2859
        %v2870 = vmax.f32 %v2846, %v2861
        %v2871 = vmax.f32 %v2847, %v2863
        %v2872 = vsub.f32 %v2840, %v2864
        %v2873 = vsub.f32 %v2841, %v2865
        %v2874 = vsub.f32 %v2842, %v2866
        %v2875 = vsub.f32 %v2843, %v2867
        %v2876 = vsub.f32 %v2844, %v2868
        %v2877 = vsub.f32 %v2845, %v2869
        %v2878 = vsub.f32 %v2846, %v2870
        %v2879 = vsub.f32 %v2847, %v2871
        %v2880 = vmul.f32 %v2872, 1.442695
        %v2881 = vpow.pop %v2880
        %v2882 = vmul.f32 %v2873, 1.442695
        %v2883 = vpow.pop %v2882
        %v2884 = vmul.f32 %v2874, 1.442695
        %v2885 = vpow.pop %v2884
        %v2886 = vmul.f32 %v2875, 1.442695
        %v2887 = vpow.pop %v2886
        %v2888 = vmul.f32 %v2876, 1.442695
        %v2889 = vpow.pop %v2888
        %v2890 = vmul.f32 %v2877, 1.442695
        %v2891 = vpow.pop %v2890
        %v2892 = vmul.f32 %v2878, 1.442695
        %v2893 = vpow.pop %v2892
        %v2894 = vmul.f32 %v2879, 1.442695
        %v2895 = vpow.pop %v2894
        %2897 = vset.pattern.permute.xlu0 0
        %2898 = vperm.xlu0 %2897, %v2864
        %v2899 = vpop.permute.xlu0 %2898
        %2902 = vset.pattern.permute.xlu0 0
        %2903 = vperm.xlu0 %2902, %v2865
        %v2904 = vpop.permute.xlu0 %2903
        %2907 = vset.pattern.permute.xlu0 0
        %2908 = vperm.xlu0 %2907, %v2866
        %v2909 = vpop.permute.xlu0 %2908
        %2912 = vset.pattern.permute.xlu0 0
        %2913 = vperm.xlu0 %2912, %v2867
        %v2914 = vpop.permute.xlu0 %2913
        %2917 = vset.pattern.permute.xlu0 0
        %2918 = vperm.xlu0 %2917, %v2868
        %v2919 = vpop.permute.xlu0 %2918
        %2922 = vset.pattern.permute.xlu0 0
        %2923 = vperm.xlu0 %2922, %v2869
        %v2924 = vpop.permute.xlu0 %2923
        %2927 = vset.pattern.permute.xlu0 0
        %2928 = vperm.xlu0 %2927, %v2870
        %v2929 = vpop.permute.xlu0 %2928
        %2932 = vset.pattern.permute.xlu0 0
        %2933 = vperm.xlu0 %2932, %v2871
        %v2934 = vpop.permute.xlu0 %2933
        %v2936 = vsub.f32 %v2816, %v2899
        %v2937 = vsub.f32 %v2819, %v2904
        %v2938 = vsub.f32 %v2822, %v2909
        %v2939 = vsub.f32 %v2825, %v2914
        %v2940 = vsub.f32 %v2828, %v2919
        %v2941 = vsub.f32 %v2831, %v2924
        %v2942 = vsub.f32 %v2834, %v2929
        %v2943 = vsub.f32 %v2837, %v2934
        %v2944 = vmul.f32 %v2936, 1.442695
        %v2945 = vpow.pop %v2944
        %v2946 = vmul.f32 %v2937, 1.442695
        %v2947 = vpow.pop %v2946
        %v2948 = vmul.f32 %v2938, 1.442695
        %v2949 = vpow.pop %v2948
        %v2950 = vmul.f32 %v2939, 1.442695
        %v2951 = vpow.pop %v2950
        %v2952 = vmul.f32 %v2940, 1.442695
        %v2953 = vpow.pop %v2952
        %v2954 = vmul.f32 %v2941, 1.442695
        %v2955 = vpow.pop %v2954
        %v2956 = vmul.f32 %v2942, 1.442695
        %v2957 = vpow.pop %v2956
        %v2958 = vmul.f32 %v2943, 1.442695
        %v2959 = vpow.pop %v2958
        %s2960 = scalar_lea.vmem [#allocation3], 192
        %v2961 = vld [vmem:[%s2960] sm:$0xff]
        %v2962 = vld [vmem:[%s2960 + $0x8] sm:$0xff]
        %v2963 = vld [vmem:[%s2960 + $0x10] sm:$0xff]
        %v2964 = vld [vmem:[%s2960 + $0x18] sm:$0xff]
        %v2965 = vld [vmem:[%s2960 + $0x20] sm:$0xff]
        %v2966 = vld [vmem:[%s2960 + $0x28] sm:$0xff]
        %v2967 = vld [vmem:[%s2960 + $0x30] sm:$0xff]
        %v2968 = vld [vmem:[%s2960 + $0x38] sm:$0xff]
        %v2969 = vmul.f32 %v2881, %v2961
        %v2970 = vmul.f32 %v2883, %v2962
        %v2971 = vmul.f32 %v2885, %v2963
        %v2972 = vmul.f32 %v2887, %v2964
        %v2973 = vmul.f32 %v2889, %v2965
        %v2974 = vmul.f32 %v2891, %v2966
        %v2975 = vmul.f32 %v2893, %v2967
        %v2976 = vmul.f32 %v2895, %v2968
        %2977 = vadd.xlane.f32.xlu0 %v2945
        %v2978 = vpop.xlane.xlu0 %2977
        %2979 = vadd.xlane.f32.xlu0 %v2947
        %v2980 = vpop.xlane.xlu0 %2979
        %2981 = vadd.xlane.f32.xlu0 %v2949
        %v2982 = vpop.xlane.xlu0 %2981
        %2983 = vadd.xlane.f32.xlu0 %v2951
        %v2984 = vpop.xlane.xlu0 %2983
        %2985 = vadd.xlane.f32.xlu0 %v2953
        %v2986 = vpop.xlane.xlu0 %2985
        %2987 = vadd.xlane.f32.xlu0 %v2955
        %v2988 = vpop.xlane.xlu0 %2987
        %2989 = vadd.xlane.f32.xlu0 %v2957
        %v2990 = vpop.xlane.xlu0 %2989
        %2991 = vadd.xlane.f32.xlu0 %v2959
        %v2992 = vpop.xlane.xlu0 %2991
        %v2993 = vadd.f32 %v2969, %v2978
        %v2994 = vadd.f32 %v2970, %v2980
        %v2995 = vadd.f32 %v2971, %v2982
        %v2996 = vadd.f32 %v2972, %v2984
        %v2997 = vadd.f32 %v2973, %v2986
        %v2998 = vadd.f32 %v2974, %v2988
        %v2999 = vadd.f32 %v2975, %v2990
        %v3000 = vadd.f32 %v2976, %v2992
        %3001 = vst.msk [vmem:[%s2960] sm:$0xff] %vm1593, %v2993
        %3002 = vst.msk [vmem:[%s2960 + $0x8] sm:$0xff] %vm1593, %v2994
        %3003 = vst.msk [vmem:[%s2960 + $0x10] sm:$0xff] %vm1593, %v2995
        %3004 = vst.msk [vmem:[%s2960 + $0x18] sm:$0xff] %vm1593, %v2996
        %3005 = vst.msk [vmem:[%s2960 + $0x20] sm:$0xff] %vm1593, %v2997
        %3006 = vst.msk [vmem:[%s2960 + $0x28] sm:$0xff] %vm1593, %v2998
        %3007 = vst.msk [vmem:[%s2960 + $0x30] sm:$0xff] %vm1593, %v2999
        %3008 = vst.msk [vmem:[%s2960 + $0x38] sm:$0xff] %vm1593, %v3000
        %v3009 = vld [vmem:[#allocation4] sm:$0xff]
        %v3010 = vld [vmem:[#allocation4 + $0x8] sm:$0xff]
        %v3011 = vld [vmem:[#allocation4 + $0x10] sm:$0xff]
        %v3012 = vld [vmem:[#allocation4 + $0x18] sm:$0xff]
        %v3013 = vld [vmem:[#allocation4 + $0x20] sm:$0xff]
        %v3014 = vld [vmem:[#allocation4 + $0x28] sm:$0xff]
        %v3015 = vld [vmem:[#allocation4 + $0x30] sm:$0xff]
        %v3016 = vld [vmem:[#allocation4 + $0x38] sm:$0xff]
        %3018 = vset.pattern.permute.xlu0 0
        %3019 = vperm.xlu0 %3018, %v2881
        %v3020 = vpop.permute.xlu0 %3019
        %3023 = vset.pattern.permute.xlu0 0
        %3024 = vperm.xlu0 %3023, %v2883
        %v3025 = vpop.permute.xlu0 %3024
        %3028 = vset.pattern.permute.xlu0 0
        %3029 = vperm.xlu0 %3028, %v2885
        %v3030 = vpop.permute.xlu0 %3029
        %3033 = vset.pattern.permute.xlu0 0
        %3034 = vperm.xlu0 %3033, %v2887
        %v3035 = vpop.permute.xlu0 %3034
        %3038 = vset.pattern.permute.xlu0 0
        %3039 = vperm.xlu0 %3038, %v2889
        %v3040 = vpop.permute.xlu0 %3039
        %3043 = vset.pattern.permute.xlu0 0
        %3044 = vperm.xlu0 %3043, %v2891
        %v3045 = vpop.permute.xlu0 %3044
        %3048 = vset.pattern.permute.xlu0 0
        %3049 = vperm.xlu0 %3048, %v2893
        %v3050 = vpop.permute.xlu0 %3049
        %3053 = vset.pattern.permute.xlu0 0
        %3054 = vperm.xlu0 %3053, %v2895
        %v3055 = vpop.permute.xlu0 %3054
        %v3057 = vmul.f32 %v3020, %v3009
        %v3058 = vmul.f32 %v3025, %v3010
        %v3059 = vmul.f32 %v3030, %v3011
        %v3060 = vmul.f32 %v3035, %v3012
        %v3061 = vmul.f32 %v3040, %v3013
        %v3062 = vmul.f32 %v3045, %v3014
        %v3063 = vmul.f32 %v3050, %v3015
        %v3064 = vmul.f32 %v3055, %v3016
        %3065 = vmatpush.msra.mxu0 %v2725
        %3066 = vmatpush.msra.mxu0 %v2724
        %3067 = vmatpush.msra.mxu0 %v2723
        %3068 = vmatpush.msra.mxu0 %v2722
        %3069 = vmatpush.msra.mxu0 %v2721
        %3070 = vmatpush.msra.mxu0 %v2720
        %3071 = vmatpush.msra.mxu0 %v2719
        %3072 = vmatpush.msra.mxu0 %v2718
        %3073 = vmatpush.msra.mxu0 %v2717
        %3074 = vmatpush.msra.mxu0 %v2716
        %3075 = vmatpush.msra.mxu0 %v2715
        %3076 = vmatpush.msra.mxu0 %v2714
        %3077 = vmatpush.msra.mxu0 %v2713
        %3078 = vmatpush.msra.mxu0 %v2712
        %3079 = vmatpush.msra.mxu0 %v2711
        %3080 = vmatpush.msra.mxu0 %v2710
        %3081 = vmatmul.f32.gmra.mxu0 %v2945
        %v3082 = vpop.f32.mrf.mxu0
        %v3083 = vadd.f32 0.0, %v3082
        %3084 = vmatmul.f32.gmra.mxu0 %v2947
        %v3085 = vpop.f32.mrf.mxu0
        %v3086 = vadd.f32 0.0, %v3085
        %3087 = vmatmul.f32.gmra.mxu0 %v2949
        %v3088 = vpop.f32.mrf.mxu0
        %v3089 = vadd.f32 0.0, %v3088
        %3090 = vmatmul.f32.gmra.mxu0 %v2951
        %v3091 = vpop.f32.mrf.mxu0
        %v3092 = vadd.f32 0.0, %v3091
        %3093 = vmatmul.f32.gmra.mxu0 %v2953
        %v3094 = vpop.f32.mrf.mxu0
        %v3095 = vadd.f32 0.0, %v3094
        %3096 = vmatmul.f32.gmra.mxu0 %v2955
        %v3097 = vpop.f32.mrf.mxu0
        %v3098 = vadd.f32 0.0, %v3097
        %3099 = vmatmul.f32.gmra.mxu0 %v2957
        %v3100 = vpop.f32.mrf.mxu0
        %v3101 = vadd.f32 0.0, %v3100
        %3102 = vmatmul.f32.gmra.mxu0 %v2959
        %v3103 = vpop.f32.mrf.mxu0
        %v3104 = vadd.f32 0.0, %v3103
        %3105 = vdwg.mxu0
        %3114 = vrot.lane.b32.xlu0 %v3083, 96
        %v3115 = vpop.permute.xlu0 %3114
        %3116 = vrot.lane.b32.xlu0 %v3086, 96
        %v3117 = vpop.permute.xlu0 %3116
        %3118 = vrot.lane.b32.xlu0 %v3089, 96
        %v3119 = vpop.permute.xlu0 %3118
        %3120 = vrot.lane.b32.xlu0 %v3092, 96
        %v3121 = vpop.permute.xlu0 %3120
        %3122 = vrot.lane.b32.xlu0 %v3095, 96
        %v3123 = vpop.permute.xlu0 %3122
        %3124 = vrot.lane.b32.xlu0 %v3098, 96
        %v3125 = vpop.permute.xlu0 %3124
        %3126 = vrot.lane.b32.xlu0 %v3101, 96
        %v3127 = vpop.permute.xlu0 %3126
        %3128 = vrot.lane.b32.xlu0 %v3104, 96
        %v3129 = vpop.permute.xlu0 %3128
        %v3138 = vadd.f32 %v3057, %v3115
        %v3139 = vadd.f32 %v3058, %v3117
        %v3140 = vadd.f32 %v3059, %v3119
        %v3141 = vadd.f32 %v3060, %v3121
        %v3142 = vadd.f32 %v3061, %v3123
        %v3143 = vadd.f32 %v3062, %v3125
        %v3144 = vadd.f32 %v3063, %v3127
        %v3145 = vadd.f32 %v3064, %v3129
        %vm3146 = vcmask 1048320
        %3147 = vst.msk [vmem:[#allocation4] sm:$0xff] %vm3146, %v3138
        %3148 = vst.msk [vmem:[#allocation4 + $0x8] sm:$0xff] %vm3146, %v3139
        %3149 = vst.msk [vmem:[#allocation4 + $0x10] sm:$0xff] %vm3146, %v3140
        %3150 = vst.msk [vmem:[#allocation4 + $0x18] sm:$0xff] %vm3146, %v3141
        %3151 = vst.msk [vmem:[#allocation4 + $0x20] sm:$0xff] %vm3146, %v3142
        %3152 = vst.msk [vmem:[#allocation4 + $0x28] sm:$0xff] %vm3146, %v3143
        %3153 = vst.msk [vmem:[#allocation4 + $0x30] sm:$0xff] %vm3146, %v3144
        %3154 = vst.msk [vmem:[#allocation4 + $0x38] sm:$0xff] %vm3146, %v3145
        %3155 = vst.msk [vmem:[%s2839] sm:$0xff] %vm1593, %v2864
        %3156 = vst.msk [vmem:[%s2839 + $0x8] sm:$0xff] %vm1593, %v2865
        %3157 = vst.msk [vmem:[%s2839 + $0x10] sm:$0xff] %vm1593, %v2866
        %3158 = vst.msk [vmem:[%s2839 + $0x18] sm:$0xff] %vm1593, %v2867
        %3159 = vst.msk [vmem:[%s2839 + $0x20] sm:$0xff] %vm1593, %v2868
        %3160 = vst.msk [vmem:[%s2839 + $0x28] sm:$0xff] %vm1593, %v2869
        %3161 = vst.msk [vmem:[%s2839 + $0x30] sm:$0xff] %vm1593, %v2870
        %3162 = vst.msk [vmem:[%s2839 + $0x38] sm:$0xff] %vm1593, %v2871
        %p3163 = scmp.eq.s32.totalorder %s27, 1
        // Predicated region
        $region175: #{ext_transformer_encoder_forward.8} parent=149 // pred_check
          %p3164 = pneg %p3163
        $region176: #{ext_transformer_encoder_forward.8} parent=149 // pred_check_branch
          %3166 = sbr.rel (%p3164) target = $region178
        $region177: #{ext_transformer_encoder_forward.8} parent=149 // pred_region
          %v3167 = vld [vmem:[#allocation4] sm:$0xff]
          %v3168 = vld [vmem:[#allocation4 + $0x8] sm:$0xff]
          %v3169 = vld [vmem:[#allocation4 + $0x10] sm:$0xff]
          %v3170 = vld [vmem:[#allocation4 + $0x18] sm:$0xff]
          %v3171 = vld [vmem:[#allocation4 + $0x20] sm:$0xff]
          %v3172 = vld [vmem:[#allocation4 + $0x28] sm:$0xff]
          %v3173 = vld [vmem:[#allocation4 + $0x30] sm:$0xff]
          %v3174 = vld [vmem:[#allocation4 + $0x38] sm:$0xff]
          %v3175 = vld [vmem:[#allocation3] sm:$0xff]
          %v3176 = vld [vmem:[#allocation3 + $0x8] sm:$0xff]
          %v3177 = vld [vmem:[#allocation3 + $0x10] sm:$0xff]
          %v3178 = vld [vmem:[#allocation3 + $0x18] sm:$0xff]
          %v3179 = vld [vmem:[#allocation3 + $0x20] sm:$0xff]
          %v3180 = vld [vmem:[#allocation3 + $0x28] sm:$0xff]
          %v3181 = vld [vmem:[#allocation3 + $0x30] sm:$0xff]
          %v3182 = vld [vmem:[#allocation3 + $0x38] sm:$0xff]
          %v3183 = vrcp.pop %v3175
          %v3184 = vmul.f32 %v3175, %v3183
          %v3185 = vsub.f32 1.0, %v3184
          %v3186 = vmul.f32 %v3183, %v3185
          %v3187 = vadd.f32 %v3183, %v3186
          %vm3188 = vweird.f32 %v3175
          %vm3189 = vweird.f32 %v3183
          %vm3190 = vmor %vm3188, %vm3189
          %v3191 = vsel %vm3190, %v3183, %v3187
          %v3192 = vand.u32 2147483647, %v3175
          %vm3193 = vcmp.eq.f32.partialorder %v3192, 8.507059e+37
          %v3194 = vand.u32 %v3175, 2147483648
          %v3195 = vor.u32 1.1754944e-38, %v3194
          %v3196 = vsel %vm3193, %v3195, %v3191
          %v3197 = vrcp.pop %v3176
          %v3198 = vmul.f32 %v3176, %v3197
          %v3199 = vsub.f32 1.0, %v3198
          %v3200 = vmul.f32 %v3197, %v3199
          %v3201 = vadd.f32 %v3197, %v3200
          %vm3202 = vweird.f32 %v3176
          %vm3203 = vweird.f32 %v3197
          %vm3204 = vmor %vm3202, %vm3203
          %v3205 = vsel %vm3204, %v3197, %v3201
          %v3206 = vand.u32 2147483647, %v3176
          %vm3207 = vcmp.eq.f32.partialorder %v3206, 8.507059e+37
          %v3208 = vand.u32 %v3176, 2147483648
          %v3209 = vor.u32 1.1754944e-38, %v3208
          %v3210 = vsel %vm3207, %v3209, %v3205
          %v3211 = vrcp.pop %v3177
          %v3212 = vmul.f32 %v3177, %v3211
          %v3213 = vsub.f32 1.0, %v3212
          %v3214 = vmul.f32 %v3211, %v3213
          %v3215 = vadd.f32 %v3211, %v3214
          %vm3216 = vweird.f32 %v3177
          %vm3217 = vweird.f32 %v3211
          %vm3218 = vmor %vm3216, %vm3217
          %v3219 = vsel %vm3218, %v3211, %v3215
          %v3220 = vand.u32 2147483647, %v3177
          %vm3221 = vcmp.eq.f32.partialorder %v3220, 8.507059e+37
          %v3222 = vand.u32 %v3177, 2147483648
          %v3223 = vor.u32 1.1754944e-38, %v3222
          %v3224 = vsel %vm3221, %v3223, %v3219
          %v3225 = vrcp.pop %v3178
          %v3226 = vmul.f32 %v3178, %v3225
          %v3227 = vsub.f32 1.0, %v3226
          %v3228 = vmul.f32 %v3225, %v3227
          %v3229 = vadd.f32 %v3225, %v3228
          %vm3230 = vweird.f32 %v3178
          %vm3231 = vweird.f32 %v3225
          %vm3232 = vmor %vm3230, %vm3231
          %v3233 = vsel %vm3232, %v3225, %v3229
          %v3234 = vand.u32 2147483647, %v3178
          %vm3235 = vcmp.eq.f32.partialorder %v3234, 8.507059e+37
          %v3236 = vand.u32 %v3178, 2147483648
          %v3237 = vor.u32 1.1754944e-38, %v3236
          %v3238 = vsel %vm3235, %v3237, %v3233
          %v3239 = vrcp.pop %v3179
          %v3240 = vmul.f32 %v3179, %v3239
          %v3241 = vsub.f32 1.0, %v3240
          %v3242 = vmul.f32 %v3239, %v3241
          %v3243 = vadd.f32 %v3239, %v3242
          %vm3244 = vweird.f32 %v3179
          %vm3245 = vweird.f32 %v3239
          %vm3246 = vmor %vm3244, %vm3245
          %v3247 = vsel %vm3246, %v3239, %v3243
          %v3248 = vand.u32 2147483647, %v3179
          %vm3249 = vcmp.eq.f32.partialorder %v3248, 8.507059e+37
          %v3250 = vand.u32 %v3179, 2147483648
          %v3251 = vor.u32 1.1754944e-38, %v3250
          %v3252 = vsel %vm3249, %v3251, %v3247
          %v3253 = vrcp.pop %v3180
          %v3254 = vmul.f32 %v3180, %v3253
          %v3255 = vsub.f32 1.0, %v3254
          %v3256 = vmul.f32 %v3253, %v3255
          %v3257 = vadd.f32 %v3253, %v3256
          %vm3258 = vweird.f32 %v3180
          %vm3259 = vweird.f32 %v3253
          %vm3260 = vmor %vm3258, %vm3259
          %v3261 = vsel %vm3260, %v3253, %v3257
          %v3262 = vand.u32 2147483647, %v3180
          %vm3263 = vcmp.eq.f32.partialorder %v3262, 8.507059e+37
          %v3264 = vand.u32 %v3180, 2147483648
          %v3265 = vor.u32 1.1754944e-38, %v3264
          %v3266 = vsel %vm3263, %v3265, %v3261
          %v3267 = vrcp.pop %v3181
          %v3268 = vmul.f32 %v3181, %v3267
          %v3269 = vsub.f32 1.0, %v3268
          %v3270 = vmul.f32 %v3267, %v3269
          %v3271 = vadd.f32 %v3267, %v3270
          %vm3272 = vweird.f32 %v3181
          %vm3273 = vweird.f32 %v3267
          %vm3274 = vmor %vm3272, %vm3273
          %v3275 = vsel %vm3274, %v3267, %v3271
          %v3276 = vand.u32 2147483647, %v3181
          %vm3277 = vcmp.eq.f32.partialorder %v3276, 8.507059e+37
          %v3278 = vand.u32 %v3181, 2147483648
          %v3279 = vor.u32 1.1754944e-38, %v3278
          %v3280 = vsel %vm3277, %v3279, %v3275
          %v3281 = vrcp.pop %v3182
          %v3282 = vmul.f32 %v3182, %v3281
          %v3283 = vsub.f32 1.0, %v3282
          %v3284 = vmul.f32 %v3281, %v3283
          %v3285 = vadd.f32 %v3281, %v3284
          %vm3286 = vweird.f32 %v3182
          %vm3287 = vweird.f32 %v3281
          %vm3288 = vmor %vm3286, %vm3287
          %v3289 = vsel %vm3288, %v3281, %v3285
          %v3290 = vand.u32 2147483647, %v3182
          %vm3291 = vcmp.eq.f32.partialorder %v3290, 8.507059e+37
          %v3292 = vand.u32 %v3182, 2147483648
          %v3293 = vor.u32 1.1754944e-38, %v3292
          %v3294 = vsel %vm3291, %v3293, %v3289
          %3296 = vset.pattern.permute.xlu0 0
          %3297 = vperm.xlu0 %3296, %v3196
          %v3298 = vpop.permute.xlu0 %3297
          %3301 = vset.pattern.permute.xlu0 0
          %3302 = vperm.xlu0 %3301, %v3210
          %v3303 = vpop.permute.xlu0 %3302
          %3306 = vset.pattern.permute.xlu0 0
          %3307 = vperm.xlu0 %3306, %v3224
          %v3308 = vpop.permute.xlu0 %3307
          %3311 = vset.pattern.permute.xlu0 0
          %3312 = vperm.xlu0 %3311, %v3238
          %v3313 = vpop.permute.xlu0 %3312
          %3316 = vset.pattern.permute.xlu0 0
          %3317 = vperm.xlu0 %3316, %v3252
          %v3318 = vpop.permute.xlu0 %3317
          %3321 = vset.pattern.permute.xlu0 0
          %3322 = vperm.xlu0 %3321, %v3266
          %v3323 = vpop.permute.xlu0 %3322
          %3326 = vset.pattern.permute.xlu0 0
          %3327 = vperm.xlu0 %3326, %v3280
          %v3328 = vpop.permute.xlu0 %3327
          %3331 = vset.pattern.permute.xlu0 0
          %3332 = vperm.xlu0 %3331, %v3294
          %v3333 = vpop.permute.xlu0 %3332
          %v3335 = vmul.f32 %v3167, %v3298
          %v3336 = vmul.f32 %v3168, %v3303
          %v3337 = vmul.f32 %v3169, %v3308
          %v3338 = vmul.f32 %v3170, %v3313
          %v3339 = vmul.f32 %v3171, %v3318
          %v3340 = vmul.f32 %v3172, %v3323
          %v3341 = vmul.f32 %v3173, %v3328
          %v3342 = vmul.f32 %v3174, %v3333
          %3343 = vst.msk [vmem:[#allocation4] sm:$0xff] %vm1319, %v3335
          %3344 = vst.msk [vmem:[#allocation4 + $0x8] sm:$0xff] %vm1319, %v3336
          %3345 = vst.msk [vmem:[#allocation4 + $0x10] sm:$0xff] %vm1319, %v3337
          %3346 = vst.msk [vmem:[#allocation4 + $0x18] sm:$0xff] %vm1319, %v3338
          %3347 = vst.msk [vmem:[#allocation4 + $0x20] sm:$0xff] %vm1319, %v3339
          %3348 = vst.msk [vmem:[#allocation4 + $0x28] sm:$0xff] %vm1319, %v3340
          %3349 = vst.msk [vmem:[#allocation4 + $0x30] sm:$0xff] %vm1319, %v3341
          %3350 = vst.msk [vmem:[#allocation4 + $0x38] sm:$0xff] %vm1319, %v3342
          %v3351 = vld [vmem:[#allocation4] sm:$0xff]
          %v3352 = vld [vmem:[#allocation4 + $0x8] sm:$0xff]
          %v3353 = vld [vmem:[#allocation4 + $0x10] sm:$0xff]
          %v3354 = vld [vmem:[#allocation4 + $0x18] sm:$0xff]
          %v3355 = vld [vmem:[#allocation4 + $0x20] sm:$0xff]
          %v3356 = vld [vmem:[#allocation4 + $0x28] sm:$0xff]
          %v3357 = vld [vmem:[#allocation4 + $0x30] sm:$0xff]
          %v3358 = vld [vmem:[#allocation4 + $0x38] sm:$0xff]
          %v3359 = vld [vmem:[%s2000] sm:$0xff]
          %v3360 = vld [vmem:[%s2000 + $0x8] sm:$0xff]
          %v3361 = vld [vmem:[%s2000 + $0x10] sm:$0xff]
          %v3362 = vld [vmem:[%s2000 + $0x18] sm:$0xff]
          %v3363 = vld [vmem:[%s2000 + $0x20] sm:$0xff]
          %v3364 = vld [vmem:[%s2000 + $0x28] sm:$0xff]
          %v3365 = vld [vmem:[%s2000 + $0x30] sm:$0xff]
          %v3366 = vld [vmem:[%s2000 + $0x38] sm:$0xff]
          %v3367 = vrcp.pop %v3359
          %v3368 = vmul.f32 %v3359, %v3367
          %v3369 = vsub.f32 1.0, %v3368
          %v3370 = vmul.f32 %v3367, %v3369
          %v3371 = vadd.f32 %v3367, %v3370
          %vm3372 = vweird.f32 %v3359
          %vm3373 = vweird.f32 %v3367
          %vm3374 = vmor %vm3372, %vm3373
          %v3375 = vsel %vm3374, %v3367, %v3371
          %v3376 = vand.u32 2147483647, %v3359
          %vm3377 = vcmp.eq.f32.partialorder %v3376, 8.507059e+37
          %v3378 = vand.u32 %v3359, 2147483648
          %v3379 = vor.u32 1.1754944e-38, %v3378
          %v3380 = vsel %vm3377, %v3379, %v3375
          %v3381 = vrcp.pop %v3360
          %v3382 = vmul.f32 %v3360, %v3381
          %v3383 = vsub.f32 1.0, %v3382
          %v3384 = vmul.f32 %v3381, %v3383
          %v3385 = vadd.f32 %v3381, %v3384
          %vm3386 = vweird.f32 %v3360
          %vm3387 = vweird.f32 %v3381
          %vm3388 = vmor %vm3386, %vm3387
          %v3389 = vsel %vm3388, %v3381, %v3385
          %v3390 = vand.u32 2147483647, %v3360
          %vm3391 = vcmp.eq.f32.partialorder %v3390, 8.507059e+37
          %v3392 = vand.u32 %v3360, 2147483648
          %v3393 = vor.u32 1.1754944e-38, %v3392
          %v3394 = vsel %vm3391, %v3393, %v3389
          %v3395 = vrcp.pop %v3361
          %v3396 = vmul.f32 %v3361, %v3395
          %v3397 = vsub.f32 1.0, %v3396
          %v3398 = vmul.f32 %v3395, %v3397
          %v3399 = vadd.f32 %v3395, %v3398
          %vm3400 = vweird.f32 %v3361
          %vm3401 = vweird.f32 %v3395
          %vm3402 = vmor %vm3400, %vm3401
          %v3403 = vsel %vm3402, %v3395, %v3399
          %v3404 = vand.u32 2147483647, %v3361
          %vm3405 = vcmp.eq.f32.partialorder %v3404, 8.507059e+37
          %v3406 = vand.u32 %v3361, 2147483648
          %v3407 = vor.u32 1.1754944e-38, %v3406
          %v3408 = vsel %vm3405, %v3407, %v3403
          %v3409 = vrcp.pop %v3362
          %v3410 = vmul.f32 %v3362, %v3409
          %v3411 = vsub.f32 1.0, %v3410
          %v3412 = vmul.f32 %v3409, %v3411
          %v3413 = vadd.f32 %v3409, %v3412
          %vm3414 = vweird.f32 %v3362
          %vm3415 = vweird.f32 %v3409
          %vm3416 = vmor %vm3414, %vm3415
          %v3417 = vsel %vm3416, %v3409, %v3413
          %v3418 = vand.u32 2147483647, %v3362
          %vm3419 = vcmp.eq.f32.partialorder %v3418, 8.507059e+37
          %v3420 = vand.u32 %v3362, 2147483648
          %v3421 = vor.u32 1.1754944e-38, %v3420
          %v3422 = vsel %vm3419, %v3421, %v3417
          %v3423 = vrcp.pop %v3363
          %v3424 = vmul.f32 %v3363, %v3423
          %v3425 = vsub.f32 1.0, %v3424
          %v3426 = vmul.f32 %v3423, %v3425
          %v3427 = vadd.f32 %v3423, %v3426
          %vm3428 = vweird.f32 %v3363
          %vm3429 = vweird.f32 %v3423
          %vm3430 = vmor %vm3428, %vm3429
          %v3431 = vsel %vm3430, %v3423, %v3427
          %v3432 = vand.u32 2147483647, %v3363
          %vm3433 = vcmp.eq.f32.partialorder %v3432, 8.507059e+37
          %v3434 = vand.u32 %v3363, 2147483648
          %v3435 = vor.u32 1.1754944e-38, %v3434
          %v3436 = vsel %vm3433, %v3435, %v3431
          %v3437 = vrcp.pop %v3364
          %v3438 = vmul.f32 %v3364, %v3437
          %v3439 = vsub.f32 1.0, %v3438
          %v3440 = vmul.f32 %v3437, %v3439
          %v3441 = vadd.f32 %v3437, %v3440
          %vm3442 = vweird.f32 %v3364
          %vm3443 = vweird.f32 %v3437
          %vm3444 = vmor %vm3442, %vm3443
          %v3445 = vsel %vm3444, %v3437, %v3441
          %v3446 = vand.u32 2147483647, %v3364
          %vm3447 = vcmp.eq.f32.partialorder %v3446, 8.507059e+37
          %v3448 = vand.u32 %v3364, 2147483648
          %v3449 = vor.u32 1.1754944e-38, %v3448
          %v3450 = vsel %vm3447, %v3449, %v3445
          %v3451 = vrcp.pop %v3365
          %v3452 = vmul.f32 %v3365, %v3451
          %v3453 = vsub.f32 1.0, %v3452
          %v3454 = vmul.f32 %v3451, %v3453
          %v3455 = vadd.f32 %v3451, %v3454
          %vm3456 = vweird.f32 %v3365
          %vm3457 = vweird.f32 %v3451
          %vm3458 = vmor %vm3456, %vm3457
          %v3459 = vsel %vm3458, %v3451, %v3455
          %v3460 = vand.u32 2147483647, %v3365
          %vm3461 = vcmp.eq.f32.partialorder %v3460, 8.507059e+37
          %v3462 = vand.u32 %v3365, 2147483648
          %v3463 = vor.u32 1.1754944e-38, %v3462
          %v3464 = vsel %vm3461, %v3463, %v3459
          %v3465 = vrcp.pop %v3366
          %v3466 = vmul.f32 %v3366, %v3465
          %v3467 = vsub.f32 1.0, %v3466
          %v3468 = vmul.f32 %v3465, %v3467
          %v3469 = vadd.f32 %v3465, %v3468
          %vm3470 = vweird.f32 %v3366
          %vm3471 = vweird.f32 %v3465
          %vm3472 = vmor %vm3470, %vm3471
          %v3473 = vsel %vm3472, %v3465, %v3469
          %v3474 = vand.u32 2147483647, %v3366
          %vm3475 = vcmp.eq.f32.partialorder %v3474, 8.507059e+37
          %v3476 = vand.u32 %v3366, 2147483648
          %v3477 = vor.u32 1.1754944e-38, %v3476
          %v3478 = vsel %vm3475, %v3477, %v3473
          %3480 = vset.pattern.permute.xlu0 0
          %3481 = vperm.xlu0 %3480, %v3380
          %v3482 = vpop.permute.xlu0 %3481
          %3485 = vset.pattern.permute.xlu0 0
          %3486 = vperm.xlu0 %3485, %v3394
          %v3487 = vpop.permute.xlu0 %3486
          %3490 = vset.pattern.permute.xlu0 0
          %3491 = vperm.xlu0 %3490, %v3408
          %v3492 = vpop.permute.xlu0 %3491
          %3495 = vset.pattern.permute.xlu0 0
          %3496 = vperm.xlu0 %3495, %v3422
          %v3497 = vpop.permute.xlu0 %3496
          %3500 = vset.pattern.permute.xlu0 0
          %3501 = vperm.xlu0 %3500, %v3436
          %v3502 = vpop.permute.xlu0 %3501
          %3505 = vset.pattern.permute.xlu0 0
          %3506 = vperm.xlu0 %3505, %v3450
          %v3507 = vpop.permute.xlu0 %3506
          %3510 = vset.pattern.permute.xlu0 0
          %3511 = vperm.xlu0 %3510, %v3464
          %v3512 = vpop.permute.xlu0 %3511
          %3515 = vset.pattern.permute.xlu0 0
          %3516 = vperm.xlu0 %3515, %v3478
          %v3517 = vpop.permute.xlu0 %3516
          %v3519 = vmul.f32 %v3351, %v3482
          %v3520 = vmul.f32 %v3352, %v3487
          %v3521 = vmul.f32 %v3353, %v3492
          %v3522 = vmul.f32 %v3354, %v3497
          %v3523 = vmul.f32 %v3355, %v3502
          %v3524 = vmul.f32 %v3356, %v3507
          %v3525 = vmul.f32 %v3357, %v3512
          %v3526 = vmul.f32 %v3358, %v3517
          %3527 = vst.msk [vmem:[#allocation4] sm:$0xff] %vm2186, %v3519
          %3528 = vst.msk [vmem:[#allocation4 + $0x8] sm:$0xff] %vm2186, %v3520
          %3529 = vst.msk [vmem:[#allocation4 + $0x10] sm:$0xff] %vm2186, %v3521
          %3530 = vst.msk [vmem:[#allocation4 + $0x18] sm:$0xff] %vm2186, %v3522
          %3531 = vst.msk [vmem:[#allocation4 + $0x20] sm:$0xff] %vm2186, %v3523
          %3532 = vst.msk [vmem:[#allocation4 + $0x28] sm:$0xff] %vm2186, %v3524
          %3533 = vst.msk [vmem:[#allocation4 + $0x30] sm:$0xff] %vm2186, %v3525
          %3534 = vst.msk [vmem:[#allocation4 + $0x38] sm:$0xff] %vm2186, %v3526
          %v3535 = vld [vmem:[#allocation4] sm:$0xff]
          %v3536 = vld [vmem:[#allocation4 + $0x8] sm:$0xff]
          %v3537 = vld [vmem:[#allocation4 + $0x10] sm:$0xff]
          %v3538 = vld [vmem:[#allocation4 + $0x18] sm:$0xff]
          %v3539 = vld [vmem:[#allocation4 + $0x20] sm:$0xff]
          %v3540 = vld [vmem:[#allocation4 + $0x28] sm:$0xff]
          %v3541 = vld [vmem:[#allocation4 + $0x30] sm:$0xff]
          %v3542 = vld [vmem:[#allocation4 + $0x38] sm:$0xff]
          %v3543 = vld [vmem:[%s2480] sm:$0xff]
          %v3544 = vld [vmem:[%s2480 + $0x8] sm:$0xff]
          %v3545 = vld [vmem:[%s2480 + $0x10] sm:$0xff]
          %v3546 = vld [vmem:[%s2480 + $0x18] sm:$0xff]
          %v3547 = vld [vmem:[%s2480 + $0x20] sm:$0xff]
          %v3548 = vld [vmem:[%s2480 + $0x28] sm:$0xff]
          %v3549 = vld [vmem:[%s2480 + $0x30] sm:$0xff]
          %v3550 = vld [vmem:[%s2480 + $0x38] sm:$0xff]
          %v3551 = vrcp.pop %v3543
          %v3552 = vmul.f32 %v3543, %v3551
          %v3553 = vsub.f32 1.0, %v3552
          %v3554 = vmul.f32 %v3551, %v3553
          %v3555 = vadd.f32 %v3551, %v3554
          %vm3556 = vweird.f32 %v3543
          %vm3557 = vweird.f32 %v3551
          %vm3558 = vmor %vm3556, %vm3557
          %v3559 = vsel %vm3558, %v3551, %v3555
          %v3560 = vand.u32 2147483647, %v3543
          %vm3561 = vcmp.eq.f32.partialorder %v3560, 8.507059e+37
          %v3562 = vand.u32 %v3543, 2147483648
          %v3563 = vor.u32 1.1754944e-38, %v3562
          %v3564 = vsel %vm3561, %v3563, %v3559
          %v3565 = vrcp.pop %v3544
          %v3566 = vmul.f32 %v3544, %v3565
          %v3567 = vsub.f32 1.0, %v3566
          %v3568 = vmul.f32 %v3565, %v3567
          %v3569 = vadd.f32 %v3565, %v3568
          %vm3570 = vweird.f32 %v3544
          %vm3571 = vweird.f32 %v3565
          %vm3572 = vmor %vm3570, %vm3571
          %v3573 = vsel %vm3572, %v3565, %v3569
          %v3574 = vand.u32 2147483647, %v3544
          %vm3575 = vcmp.eq.f32.partialorder %v3574, 8.507059e+37
          %v3576 = vand.u32 %v3544, 2147483648
          %v3577 = vor.u32 1.1754944e-38, %v3576
          %v3578 = vsel %vm3575, %v3577, %v3573
          %v3579 = vrcp.pop %v3545
          %v3580 = vmul.f32 %v3545, %v3579
          %v3581 = vsub.f32 1.0, %v3580
          %v3582 = vmul.f32 %v3579, %v3581
          %v3583 = vadd.f32 %v3579, %v3582
          %vm3584 = vweird.f32 %v3545
          %vm3585 = vweird.f32 %v3579
          %vm3586 = vmor %vm3584, %vm3585
          %v3587 = vsel %vm3586, %v3579, %v3583
          %v3588 = vand.u32 2147483647, %v3545
          %vm3589 = vcmp.eq.f32.partialorder %v3588, 8.507059e+37
          %v3590 = vand.u32 %v3545, 2147483648
          %v3591 = vor.u32 1.1754944e-38, %v3590
          %v3592 = vsel %vm3589, %v3591, %v3587
          %v3593 = vrcp.pop %v3546
          %v3594 = vmul.f32 %v3546, %v3593
          %v3595 = vsub.f32 1.0, %v3594
          %v3596 = vmul.f32 %v3593, %v3595
          %v3597 = vadd.f32 %v3593, %v3596
          %vm3598 = vweird.f32 %v3546
          %vm3599 = vweird.f32 %v3593
          %vm3600 = vmor %vm3598, %vm3599
          %v3601 = vsel %vm3600, %v3593, %v3597
          %v3602 = vand.u32 2147483647, %v3546
          %vm3603 = vcmp.eq.f32.partialorder %v3602, 8.507059e+37
          %v3604 = vand.u32 %v3546, 2147483648
          %v3605 = vor.u32 1.1754944e-38, %v3604
          %v3606 = vsel %vm3603, %v3605, %v3601
          %v3607 = vrcp.pop %v3547
          %v3608 = vmul.f32 %v3547, %v3607
          %v3609 = vsub.f32 1.0, %v3608
          %v3610 = vmul.f32 %v3607, %v3609
          %v3611 = vadd.f32 %v3607, %v3610
          %vm3612 = vweird.f32 %v3547
          %vm3613 = vweird.f32 %v3607
          %vm3614 = vmor %vm3612, %vm3613
          %v3615 = vsel %vm3614, %v3607, %v3611
          %v3616 = vand.u32 2147483647, %v3547
          %vm3617 = vcmp.eq.f32.partialorder %v3616, 8.507059e+37
          %v3618 = vand.u32 %v3547, 2147483648
          %v3619 = vor.u32 1.1754944e-38, %v3618
          %v3620 = vsel %vm3617, %v3619, %v3615
          %v3621 = vrcp.pop %v3548
          %v3622 = vmul.f32 %v3548, %v3621
          %v3623 = vsub.f32 1.0, %v3622
          %v3624 = vmul.f32 %v3621, %v3623
          %v3625 = vadd.f32 %v3621, %v3624
          %vm3626 = vweird.f32 %v3548
          %vm3627 = vweird.f32 %v3621
          %vm3628 = vmor %vm3626, %vm3627
          %v3629 = vsel %vm3628, %v3621, %v3625
          %v3630 = vand.u32 2147483647, %v3548
          %vm3631 = vcmp.eq.f32.partialorder %v3630, 8.507059e+37
          %v3632 = vand.u32 %v3548, 2147483648
          %v3633 = vor.u32 1.1754944e-38, %v3632
          %v3634 = vsel %vm3631, %v3633, %v3629
          %v3635 = vrcp.pop %v3549
          %v3636 = vmul.f32 %v3549, %v3635
          %v3637 = vsub.f32 1.0, %v3636
          %v3638 = vmul.f32 %v3635, %v3637
          %v3639 = vadd.f32 %v3635, %v3638
          %vm3640 = vweird.f32 %v3549
          %vm3641 = vweird.f32 %v3635
          %vm3642 = vmor %vm3640, %vm3641
          %v3643 = vsel %vm3642, %v3635, %v3639
          %v3644 = vand.u32 2147483647, %v3549
          %vm3645 = vcmp.eq.f32.partialorder %v3644, 8.507059e+37
          %v3646 = vand.u32 %v3549, 2147483648
          %v3647 = vor.u32 1.1754944e-38, %v3646
          %v3648 = vsel %vm3645, %v3647, %v3643
          %v3649 = vrcp.pop %v3550
          %v3650 = vmul.f32 %v3550, %v3649
          %v3651 = vsub.f32 1.0, %v3650
          %v3652 = vmul.f32 %v3649, %v3651
          %v3653 = vadd.f32 %v3649, %v3652
          %vm3654 = vweird.f32 %v3550
          %vm3655 = vweird.f32 %v3649
          %vm3656 = vmor %vm3654, %vm3655
          %v3657 = vsel %vm3656, %v3649, %v3653
          %v3658 = vand.u32 2147483647, %v3550
          %vm3659 = vcmp.eq.f32.partialorder %v3658, 8.507059e+37
          %v3660 = vand.u32 %v3550, 2147483648
          %v3661 = vor.u32 1.1754944e-38, %v3660
          %v3662 = vsel %vm3659, %v3661, %v3657
          %3664 = vset.pattern.permute.xlu0 0
          %3665 = vperm.xlu0 %3664, %v3564
          %v3666 = vpop.permute.xlu0 %3665
          %3669 = vset.pattern.permute.xlu0 0
          %3670 = vperm.xlu0 %3669, %v3578
          %v3671 = vpop.permute.xlu0 %3670
          %3674 = vset.pattern.permute.xlu0 0
          %3675 = vperm.xlu0 %3674, %v3592
          %v3676 = vpop.permute.xlu0 %3675
          %3679 = vset.pattern.permute.xlu0 0
          %3680 = vperm.xlu0 %3679, %v3606
          %v3681 = vpop.permute.xlu0 %3680
          %3684 = vset.pattern.permute.xlu0 0
          %3685 = vperm.xlu0 %3684, %v3620
          %v3686 = vpop.permute.xlu0 %3685
          %3689 = vset.pattern.permute.xlu0 0
          %3690 = vperm.xlu0 %3689, %v3634
          %v3691 = vpop.permute.xlu0 %3690
          %3694 = vset.pattern.permute.xlu0 0
          %3695 = vperm.xlu0 %3694, %v3648
          %v3696 = vpop.permute.xlu0 %3695
          %3699 = vset.pattern.permute.xlu0 0
          %3700 = vperm.xlu0 %3699, %v3662
          %v3701 = vpop.permute.xlu0 %3700
          %v3703 = vmul.f32 %v3535, %v3666
          %v3704 = vmul.f32 %v3536, %v3671
          %v3705 = vmul.f32 %v3537, %v3676
          %v3706 = vmul.f32 %v3538, %v3681
          %v3707 = vmul.f32 %v3539, %v3686
          %v3708 = vmul.f32 %v3540, %v3691
          %v3709 = vmul.f32 %v3541, %v3696
          %v3710 = vmul.f32 %v3542, %v3701
          %3711 = vst.msk [vmem:[#allocation4] sm:$0xff] %vm2666, %v3703
          %3712 = vst.msk [vmem:[#allocation4 + $0x8] sm:$0xff] %vm2666, %v3704
          %3713 = vst.msk [vmem:[#allocation4 + $0x10] sm:$0xff] %vm2666, %v3705
          %3714 = vst.msk [vmem:[#allocation4 + $0x18] sm:$0xff] %vm2666, %v3706
          %3715 = vst.msk [vmem:[#allocation4 + $0x20] sm:$0xff] %vm2666, %v3707
          %3716 = vst.msk [vmem:[#allocation4 + $0x28] sm:$0xff] %vm2666, %v3708
          %3717 = vst.msk [vmem:[#allocation4 + $0x30] sm:$0xff] %vm2666, %v3709
          %3718 = vst.msk [vmem:[#allocation4 + $0x38] sm:$0xff] %vm2666, %v3710
          %v3719 = vld [vmem:[#allocation4] sm:$0xff]
          %v3720 = vld [vmem:[#allocation4 + $0x8] sm:$0xff]
          %v3721 = vld [vmem:[#allocation4 + $0x10] sm:$0xff]
          %v3722 = vld [vmem:[#allocation4 + $0x18] sm:$0xff]
          %v3723 = vld [vmem:[#allocation4 + $0x20] sm:$0xff]
          %v3724 = vld [vmem:[#allocation4 + $0x28] sm:$0xff]
          %v3725 = vld [vmem:[#allocation4 + $0x30] sm:$0xff]
          %v3726 = vld [vmem:[#allocation4 + $0x38] sm:$0xff]
          %v3727 = vld [vmem:[%s2960] sm:$0xff]
          %v3728 = vld [vmem:[%s2960 + $0x8] sm:$0xff]
          %v3729 = vld [vmem:[%s2960 + $0x10] sm:$0xff]
          %v3730 = vld [vmem:[%s2960 + $0x18] sm:$0xff]
          %v3731 = vld [vmem:[%s2960 + $0x20] sm:$0xff]
          %v3732 = vld [vmem:[%s2960 + $0x28] sm:$0xff]
          %v3733 = vld [vmem:[%s2960 + $0x30] sm:$0xff]
          %v3734 = vld [vmem:[%s2960 + $0x38] sm:$0xff]
          %v3735 = vrcp.pop %v3727
          %v3736 = vmul.f32 %v3727, %v3735
          %v3737 = vsub.f32 1.0, %v3736
          %v3738 = vmul.f32 %v3735, %v3737
          %v3739 = vadd.f32 %v3735, %v3738
          %vm3740 = vweird.f32 %v3727
          %vm3741 = vweird.f32 %v3735
          %vm3742 = vmor %vm3740, %vm3741
          %v3743 = vsel %vm3742, %v3735, %v3739
          %v3744 = vand.u32 2147483647, %v3727
          %vm3745 = vcmp.eq.f32.partialorder %v3744, 8.507059e+37
          %v3746 = vand.u32 %v3727, 2147483648
          %v3747 = vor.u32 1.1754944e-38, %v3746
          %v3748 = vsel %vm3745, %v3747, %v3743
          %v3749 = vrcp.pop %v3728
          %v3750 = vmul.f32 %v3728, %v3749
          %v3751 = vsub.f32 1.0, %v3750
          %v3752 = vmul.f32 %v3749, %v3751
          %v3753 = vadd.f32 %v3749, %v3752
          %vm3754 = vweird.f32 %v3728
          %vm3755 = vweird.f32 %v3749
          %vm3756 = vmor %vm3754, %vm3755
          %v3757 = vsel %vm3756, %v3749, %v3753
          %v3758 = vand.u32 2147483647, %v3728
          %vm3759 = vcmp.eq.f32.partialorder %v3758, 8.507059e+37
          %v3760 = vand.u32 %v3728, 2147483648
          %v3761 = vor.u32 1.1754944e-38, %v3760
          %v3762 = vsel %vm3759, %v3761, %v3757
          %v3763 = vrcp.pop %v3729
          %v3764 = vmul.f32 %v3729, %v3763
          %v3765 = vsub.f32 1.0, %v3764
          %v3766 = vmul.f32 %v3763, %v3765
          %v3767 = vadd.f32 %v3763, %v3766
          %vm3768 = vweird.f32 %v3729
          %vm3769 = vweird.f32 %v3763
          %vm3770 = vmor %vm3768, %vm3769
          %v3771 = vsel %vm3770, %v3763, %v3767
          %v3772 = vand.u32 2147483647, %v3729
          %vm3773 = vcmp.eq.f32.partialorder %v3772, 8.507059e+37
          %v3774 = vand.u32 %v3729, 2147483648
          %v3775 = vor.u32 1.1754944e-38, %v3774
          %v3776 = vsel %vm3773, %v3775, %v3771
          %v3777 = vrcp.pop %v3730
          %v3778 = vmul.f32 %v3730, %v3777
          %v3779 = vsub.f32 1.0, %v3778
          %v3780 = vmul.f32 %v3777, %v3779
          %v3781 = vadd.f32 %v3777, %v3780
          %vm3782 = vweird.f32 %v3730
          %vm3783 = vweird.f32 %v3777
          %vm3784 = vmor %vm3782, %vm3783
          %v3785 = vsel %vm3784, %v3777, %v3781
          %v3786 = vand.u32 2147483647, %v3730
          %vm3787 = vcmp.eq.f32.partialorder %v3786, 8.507059e+37
          %v3788 = vand.u32 %v3730, 2147483648
          %v3789 = vor.u32 1.1754944e-38, %v3788
          %v3790 = vsel %vm3787, %v3789, %v3785
          %v3791 = vrcp.pop %v3731
          %v3792 = vmul.f32 %v3731, %v3791
          %v3793 = vsub.f32 1.0, %v3792
          %v3794 = vmul.f32 %v3791, %v3793
          %v3795 = vadd.f32 %v3791, %v3794
          %vm3796 = vweird.f32 %v3731
          %vm3797 = vweird.f32 %v3791
          %vm3798 = vmor %vm3796, %vm3797
          %v3799 = vsel %vm3798, %v3791, %v3795
          %v3800 = vand.u32 2147483647, %v3731
          %vm3801 = vcmp.eq.f32.partialorder %v3800, 8.507059e+37
          %v3802 = vand.u32 %v3731, 2147483648
          %v3803 = vor.u32 1.1754944e-38, %v3802
          %v3804 = vsel %vm3801, %v3803, %v3799
          %v3805 = vrcp.pop %v3732
          %v3806 = vmul.f32 %v3732, %v3805
          %v3807 = vsub.f32 1.0, %v3806
          %v3808 = vmul.f32 %v3805, %v3807
          %v3809 = vadd.f32 %v3805, %v3808
          %vm3810 = vweird.f32 %v3732
          %vm3811 = vweird.f32 %v3805
          %vm3812 = vmor %vm3810, %vm3811
          %v3813 = vsel %vm3812, %v3805, %v3809
          %v3814 = vand.u32 2147483647, %v3732
          %vm3815 = vcmp.eq.f32.partialorder %v3814, 8.507059e+37
          %v3816 = vand.u32 %v3732, 2147483648
          %v3817 = vor.u32 1.1754944e-38, %v3816
          %v3818 = vsel %vm3815, %v3817, %v3813
          %v3819 = vrcp.pop %v3733
          %v3820 = vmul.f32 %v3733, %v3819
          %v3821 = vsub.f32 1.0, %v3820
          %v3822 = vmul.f32 %v3819, %v3821
          %v3823 = vadd.f32 %v3819, %v3822
          %vm3824 = vweird.f32 %v3733
          %vm3825 = vweird.f32 %v3819
          %vm3826 = vmor %vm3824, %vm3825
          %v3827 = vsel %vm3826, %v3819, %v3823
          %v3828 = vand.u32 2147483647, %v3733
          %vm3829 = vcmp.eq.f32.partialorder %v3828, 8.507059e+37
          %v3830 = vand.u32 %v3733, 2147483648
          %v3831 = vor.u32 1.1754944e-38, %v3830
          %v3832 = vsel %vm3829, %v3831, %v3827
          %v3833 = vrcp.pop %v3734
          %v3834 = vmul.f32 %v3734, %v3833
          %v3835 = vsub.f32 1.0, %v3834
          %v3836 = vmul.f32 %v3833, %v3835
          %v3837 = vadd.f32 %v3833, %v3836
          %vm3838 = vweird.f32 %v3734
          %vm3839 = vweird.f32 %v3833
          %vm3840 = vmor %vm3838, %vm3839
          %v3841 = vsel %vm3840, %v3833, %v3837
          %v3842 = vand.u32 2147483647, %v3734
          %vm3843 = vcmp.eq.f32.partialorder %v3842, 8.507059e+37
          %v3844 = vand.u32 %v3734, 2147483648
          %v3845 = vor.u32 1.1754944e-38, %v3844
          %v3846 = vsel %vm3843, %v3845, %v3841
          %3848 = vset.pattern.permute.xlu0 0
          %3849 = vperm.xlu0 %3848, %v3748
          %v3850 = vpop.permute.xlu0 %3849
          %3853 = vset.pattern.permute.xlu0 0
          %3854 = vperm.xlu0 %3853, %v3762
          %v3855 = vpop.permute.xlu0 %3854
          %3858 = vset.pattern.permute.xlu0 0
          %3859 = vperm.xlu0 %3858, %v3776
          %v3860 = vpop.permute.xlu0 %3859
          %3863 = vset.pattern.permute.xlu0 0
          %3864 = vperm.xlu0 %3863, %v3790
          %v3865 = vpop.permute.xlu0 %3864
          %3868 = vset.pattern.permute.xlu0 0
          %3869 = vperm.xlu0 %3868, %v3804
          %v3870 = vpop.permute.xlu0 %3869
          %3873 = vset.pattern.permute.xlu0 0
          %3874 = vperm.xlu0 %3873, %v3818
          %v3875 = vpop.permute.xlu0 %3874
          %3878 = vset.pattern.permute.xlu0 0
          %3879 = vperm.xlu0 %3878, %v3832
          %v3880 = vpop.permute.xlu0 %3879
          %3883 = vset.pattern.permute.xlu0 0
          %3884 = vperm.xlu0 %3883, %v3846
          %v3885 = vpop.permute.xlu0 %3884
          %v3887 = vmul.f32 %v3719, %v3850
          %v3888 = vmul.f32 %v3720, %v3855
          %v3889 = vmul.f32 %v3721, %v3860
          %v3890 = vmul.f32 %v3722, %v3865
          %v3891 = vmul.f32 %v3723, %v3870
          %v3892 = vmul.f32 %v3724, %v3875
          %v3893 = vmul.f32 %v3725, %v3880
          %v3894 = vmul.f32 %v3726, %v3885
          %3895 = vst.msk [vmem:[#allocation4] sm:$0xff] %vm3146, %v3887
          %3896 = vst.msk [vmem:[#allocation4 + $0x8] sm:$0xff] %vm3146, %v3888
          %3897 = vst.msk [vmem:[#allocation4 + $0x10] sm:$0xff] %vm3146, %v3889
          %3898 = vst.msk [vmem:[#allocation4 + $0x18] sm:$0xff] %vm3146, %v3890
          %3899 = vst.msk [vmem:[#allocation4 + $0x20] sm:$0xff] %vm3146, %v3891
          %3900 = vst.msk [vmem:[#allocation4 + $0x28] sm:$0xff] %vm3146, %v3892
          %3901 = vst.msk [vmem:[#allocation4 + $0x30] sm:$0xff] %vm3146, %v3893
          %3902 = vst.msk [vmem:[#allocation4 + $0x38] sm:$0xff] %vm3146, %v3894
          %v3903 = vld [vmem:[#allocation4] sm:$0xff]
          %v3904 = vld [vmem:[#allocation4 + $0x8] sm:$0xff]
          %v3905 = vld [vmem:[#allocation4 + $0x10] sm:$0xff]
          %v3906 = vld [vmem:[#allocation4 + $0x18] sm:$0xff]
          %v3907 = vld [vmem:[#allocation4 + $0x20] sm:$0xff]
          %v3908 = vld [vmem:[#allocation4 + $0x28] sm:$0xff]
          %v3909 = vld [vmem:[#allocation4 + $0x30] sm:$0xff]
          %v3910 = vld [vmem:[#allocation4 + $0x38] sm:$0xff]
          %v3911 = vld [vmem:[#allocation8] sm:$0xff]
          %v3912 = vld [vmem:[#allocation8 + $0x8] sm:$0xff]
          %v3913 = vld [vmem:[#allocation8 + $0x10] sm:$0xff]
          %v3914 = vld [vmem:[#allocation8 + $0x18] sm:$0xff]
          %v3915 = vld [vmem:[#allocation8 + $0x20] sm:$0xff]
          %v3916 = vld [vmem:[#allocation8 + $0x28] sm:$0xff]
          %v3917 = vld [vmem:[#allocation8 + $0x30] sm:$0xff]
          %v3918 = vld [vmem:[#allocation8 + $0x38] sm:$0xff]
          %v3919 = vld [vmem:[#allocation8 + $0x40] sm:$0xff]
          %v3920 = vld [vmem:[#allocation8 + $0x48] sm:$0xff]
          %v3921 = vld [vmem:[#allocation8 + $0x50] sm:$0xff]
          %v3922 = vld [vmem:[#allocation8 + $0x58] sm:$0xff]
          %v3923 = vld [vmem:[#allocation8 + $0x60] sm:$0xff]
          %v3924 = vld [vmem:[#allocation8 + $0x68] sm:$0xff]
          %v3925 = vld [vmem:[#allocation8 + $0x70] sm:$0xff]
          %v3926 = vld [vmem:[#allocation8 + $0x78] sm:$0xff]
          %v3927 = vld [vmem:[#allocation10] sm:$0x1]
          %v3929 = vperm.slane %v3927, 0
          %3931 = vmatpush.msra.mxu0 %v3926
          %3932 = vmatpush.msra.mxu0 %v3925
          %3933 = vmatpush.msra.mxu0 %v3924
          %3934 = vmatpush.msra.mxu0 %v3923
          %3935 = vmatpush.msra.mxu0 %v3922
          %3936 = vmatpush.msra.mxu0 %v3921
          %3937 = vmatpush.msra.mxu0 %v3920
          %3938 = vmatpush.msra.mxu0 %v3919
          %3939 = vmatpush.msra.mxu0 %v3918
          %3940 = vmatpush.msra.mxu0 %v3917
          %3941 = vmatpush.msra.mxu0 %v3916
          %3942 = vmatpush.msra.mxu0 %v3915
          %3943 = vmatpush.msra.mxu0 %v3914
          %3944 = vmatpush.msra.mxu0 %v3913
          %3945 = vmatpush.msra.mxu0 %v3912
          %3946 = vmatpush.msra.mxu0 %v3911
          %3947 = vmatmul.f32.gmra.mxu0 %v3903
          %v3948 = vpop.f32.mrf.mxu0
          %v3949 = vadd.f32 %v3929, %v3948
          %3950 = vmatmul.f32.gmra.mxu0 %v3904
          %v3951 = vpop.f32.mrf.mxu0
          %v3952 = vadd.f32 %v3929, %v3951
          %3953 = vmatmul.f32.gmra.mxu0 %v3905
          %v3954 = vpop.f32.mrf.mxu0
          %v3955 = vadd.f32 %v3929, %v3954
          %3956 = vmatmul.f32.gmra.mxu0 %v3906
          %v3957 = vpop.f32.mrf.mxu0
          %v3958 = vadd.f32 %v3929, %v3957
          %3959 = vmatmul.f32.gmra.mxu0 %v3907
          %v3960 = vpop.f32.mrf.mxu0
          %v3961 = vadd.f32 %v3929, %v3960
          %3962 = vmatmul.f32.gmra.mxu0 %v3908
          %v3963 = vpop.f32.mrf.mxu0
          %v3964 = vadd.f32 %v3929, %v3963
          %3965 = vmatmul.f32.gmra.mxu0 %v3909
          %v3966 = vpop.f32.mrf.mxu0
          %v3967 = vadd.f32 %v3929, %v3966
          %3968 = vmatmul.f32.gmra.mxu0 %v3910
          %v3969 = vpop.f32.mrf.mxu0
          %v3970 = vadd.f32 %v3929, %v3969
          %3971 = vdwg.mxu0
          %v3972 = vld [vmem:[%s1186] sm:$0xff]
          %v3973 = vld [vmem:[%s1186 + $0x8] sm:$0xff]
          %v3974 = vld [vmem:[%s1186 + $0x10] sm:$0xff]
          %v3975 = vld [vmem:[%s1186 + $0x18] sm:$0xff]
          %v3976 = vld [vmem:[%s1186 + $0x20] sm:$0xff]
          %v3977 = vld [vmem:[%s1186 + $0x28] sm:$0xff]
          %v3978 = vld [vmem:[%s1186 + $0x30] sm:$0xff]
          %v3979 = vld [vmem:[%s1186 + $0x38] sm:$0xff]
          %v3980 = vadd.f32 %v3949, %v3972
          %v3981 = vadd.f32 %v3952, %v3973
          %v3982 = vadd.f32 %v3955, %v3974
          %v3983 = vadd.f32 %v3958, %v3975
          %v3984 = vadd.f32 %v3961, %v3976
          %v3985 = vadd.f32 %v3964, %v3977
          %v3986 = vadd.f32 %v3967, %v3978
          %v3987 = vadd.f32 %v3970, %v3979
          %3988 = vst [vmem:[%s1196] sm:$0xff] %v3980
          %3989 = vst [vmem:[%s1196 + $0x8] sm:$0xff] %v3981
          %3990 = vst [vmem:[%s1196 + $0x10] sm:$0xff] %v3982
          %3991 = vst [vmem:[%s1196 + $0x18] sm:$0xff] %v3983
          %3992 = vst [vmem:[%s1196 + $0x20] sm:$0xff] %v3984
          %3993 = vst [vmem:[%s1196 + $0x28] sm:$0xff] %v3985
          %3994 = vst [vmem:[%s1196 + $0x30] sm:$0xff] %v3986
          %3995 = vst [vmem:[%s1196 + $0x38] sm:$0xff] %v3987
        $region178: #{ext_transformer_encoder_forward.8} parent=149 // pred_fallthru
          _
        %s3996 = smul.u32 8, %s26
        %p3997 = scmp.lt.s32.totalorder %s25, 1
        %s3998 = scalar_select %p3997, %s25, 1
        %p3999 = scmp.lt.s32.totalorder %s3996, 31
        %s4000 = scalar_select %p3999, %s3996, 31
        %s4001 = smul.addr %s3998, 32
        %s4002 = sadd.s32 %s4000, %s4001
        %s4003 = smul.addr %s4002, 8
        %s4004 = scalar_lea.vmem %s7, %s4003
        // Predicated region
        $region179: #{ext_transformer_encoder_forward.8} parent=149 // pred_check
          %p4005 = pneg %p241
        $region180: #{ext_transformer_encoder_forward.8} parent=149 // pred_check_branch
          %4007 = sbr.rel (%p4005) target = $region182
        $region181: #{ext_transformer_encoder_forward.8} parent=149 // pred_region
          %s4008 = smul.u32 8, %s26
        $region182: #{ext_transformer_encoder_forward.8} parent=149 // pred_fallthru
          _
      $region150: #{ext_transformer_encoder_forward.8} parent=5 // pred_fallthru
        _
      %p4009 = scmp.le.s32.totalorder 2, %s15
      // Predicated region
      $region183: #{ext_transformer_encoder_forward.8} parent=5 // pred_check
        %p4010 = pneg %p4009
      $region184: #{ext_transformer_encoder_forward.8} parent=5 // pred_check_branch
        %4012 = sbr.rel (%p4010) target = $region186
      $region185: #{ext_transformer_encoder_forward.8} parent=5 // pred_region
        %s4013 = ssub.s32 %s15, 2
        // Predicated region
        $region187: #{ext_transformer_encoder_forward.8} parent=185 // pred_check
          %p4014 = pneg %p247
        $region188: #{ext_transformer_encoder_forward.8} parent=185 // pred_check_branch
          %4016 = sbr.rel (%p4014) target = $region190
        $region189: #{ext_transformer_encoder_forward.8} parent=185 // pred_region
          %s4017 = smul.u32 8, %s29
          %p4018 = scmp.lt.s32.totalorder %s28, 1
          %s4019 = scalar_select %p4018, %s28, 1
          %p4020 = scmp.lt.s32.totalorder %s4017, 31
          %s4021 = scalar_select %p4020, %s4017, 31
          %s4022 = smul.addr %s4019, 32
          %s4023 = sadd.s32 %s4021, %s4022
          %s4024 = smul.addr %s4023, 8
          %s4025 = scalar_lea.vmem %s7, %s4024
        $region190: #{ext_transformer_encoder_forward.8} parent=185 // pred_fallthru
          _
      $region186: #{ext_transformer_encoder_forward.8} parent=5 // pred_fallthru
        _
    $region6: #{ext_transformer_encoder_forward.8} parent=1 // loop_footer
      %s19 = sadd.s32 1, %s15
    $region7: #{ext_transformer_encoder_forward.8} parent=1 // loop_footer_branch
      %14 = sbr.rel target = $region3
    $region8: #{ext_transformer_encoder_forward.8} parent=1 // loop_exit
      _
    %4026 = vsyncpa [#allocation9], 1
    %s4027 = scalar_lea.sflag [#allocation9], 1
    %4028 = vsyncpa %s4027, 1
    %4029 = vsyncpa [#allocation11], 1

</llo_original>
